<compile_context>
chip_gen: v7x
topology: tpu7x:2x2x1
jax: 0.10.0
libtpu: 0.0.40
codegen_flags: <defaults>
</compile_context>

<pallas_src>
import jax
import jax.numpy as jnp
from jax import lax
from jax.experimental import pallas as pl
from jax.experimental.pallas import tpu as pltpu

# ---- small shapes consistent with the module ----
B = 2            # batch
CIN = 4          # input channels
H = W = 16       # spatial
KH = KW = 3      # conv kernel
CCONV = 32       # stem conv channels
FEAT_DIM = 1024  # fixed by fc2 = nn.Linear(1024, 1024)
PARAM_DIM = 64   # opt.total_params_dim
N_ITER = 3       # regressor refinement iterations

KCOLS = KH * KW * CIN   # 36 im2col columns (kept exact; no zero padding)
CPAD = 128              # conv channels padded to a full lane width
PPAD = 128              # param dim padded to a full lane width (lane-dense output)


def h3dw_kernel(xpad_ref, pool_ref, mean_ref,
                wconv_ref, bconv_ref,
                wfc0_ref, bfc0_ref,
                wfc2_hbm_ref, bfc2_ref,
                wrf_ref, a3_ref, s_ref, br_ref,
                out_ref,
                patches_ref, wfc2_vmem_ref, dma_sem):
    # Start streaming the dominant fc2 weight (2 MiB bf16) HBM -> VMEM now; the
    # stem / pool / fc0 compute below runs underneath this DMA.
    fc2_copy = pltpu.make_async_copy(wfc2_hbm_ref, wfc2_vmem_ref, dma_sem)
    fc2_copy.start()

    # ---- stem conv: im2col built in a VMEM scratch (no HBM patch matrix) ----
    # patches_ref: (B, H, W, KCOLS) f32; 9 static shifted windows of the padded
    # input are written side by side along the last dim, then one MXU dot.
    for t in range(KH * KW):
        dy, dx = t // KW, t % KW
        patches_ref[:, :, :, t * CIN:(t + 1) * CIN] = \
            xpad_ref[:, dy:dy + H, dx:dx + W, :]
    patches = patches_ref[...].reshape(B * H * W, KCOLS).astype(jnp.bfloat16)
    conv = jnp.dot(patches, wconv_ref[...],
                   preferred_element_type=jnp.float32) + bconv_ref[...]
    conv = jnp.maximum(conv, 0.0)                          # (B*H*W, CPAD) lane-dense

    # ---- per-batch global average pool as one tiny (B, B*H*W) MXU dot ----
    gap = jnp.dot(pool_ref[...], conv,
                  preferred_element_type=jnp.float32)      # (B, CPAD), pad cols = 0

    # ---- backbone FC -> 1024-d main_feat (tiny weight, f32) ----
    main_feat = jnp.dot(gap[:, :CCONV], wfc0_ref[...],
                        preferred_element_type=jnp.float32) + bfc0_ref[...]

    # ---- feat_encoder: ReLU -> Linear(1024,1024) -> ReLU (bf16 weight, f32 acc) ----
    h = jnp.maximum(main_feat, 0.0).astype(jnp.bfloat16)
    fc2_copy.wait()                                        # fc2 weight now resident
    h = jnp.dot(h, wfc2_vmem_ref[...],
                preferred_element_type=jnp.float32) + bfc2_ref[...]
    feat = jnp.maximum(h, 0.0)                             # (B, FEAT_DIM) f32

    # ---- regressor: 3-step affine recurrence folded into two dots ----
    # pred3 = mean @ (I+Wrp)^3 + (feat @ Wrf + br) @ (I + (I+Wrp) + (I+Wrp)^2)
    base = jnp.dot(feat.astype(jnp.bfloat16), wrf_ref[...],
                   preferred_element_type=jnp.float32) + br_ref[...]   # (B, PPAD)
    out_ref[...] = (jnp.dot(mean_ref[...], a3_ref[...],
                            preferred_element_type=jnp.float32)
                    + jnp.dot(base, s_ref[...],
                              preferred_element_type=jnp.float32))


def h3dw_forward(x_nchw, mean_params, p):
    # The only activation tensor shipped to the kernel: padded NHWC input (~10 KiB).
    xpad = jnp.pad(jnp.transpose(x_nchw, (0, 2, 3, 1)).astype(jnp.float32),
                   ((0, 0), (1, 1), (1, 1), (0, 0)))                # (B, H+2, W+2, CIN)

    # --- weight plumbing (would be done once at load time in a real deployment) ---
    wconv_p = jnp.pad(p["wconv"].reshape(KCOLS, CCONV),
                      ((0, 0), (0, CPAD - CCONV))).astype(jnp.bfloat16)   # (36, 128)
    bconv_p = jnp.pad(p["bconv"], ((0, 0), (0, CPAD - CCONV)))            # (1, 128)
    wfc2_bf = p["wfc2"].astype(jnp.bfloat16)                              # (1024, 1024)
    wrf_bf = jnp.pad(p["wrf"],
                     ((0, 0), (0, PPAD - PARAM_DIM))).astype(jnp.bfloat16)  # (1024, 128)
    br_p = jnp.pad(p["br"], ((0, 0), (0, PPAD - PARAM_DIM)))
    mean_p = jnp.pad(mean_params, ((0, 0), (0, PPAD - PARAM_DIM)))

    # Fold the 3-step affine recurrence (f32, full precision).
    eye = jnp.eye(PARAM_DIM, dtype=jnp.float32)
    t_mat = eye + p["wrp"]
    t2 = jnp.dot(t_mat, t_mat, precision=lax.Precision.HIGHEST)
    a3 = jnp.dot(t2, t_mat, precision=lax.Precision.HIGHEST)
    s_mat = eye + t_mat + t2
    pad2 = ((0, PPAD - PARAM_DIM), (0, PPAD - PARAM_DIM))
    a3_p = jnp.pad(a3, pad2)
    s_p = jnp.pad(s_mat, pad2)

    # Global-average-pool as a (B, B*H*W) averaging matrix (1/(H*W) = 2^-8 exact).
    pool = jnp.repeat(jnp.eye(B, dtype=jnp.float32), H * W, axis=1) / float(H * W)

    vmem = pl.BlockSpec(memory_space=pltpu.MemorySpace.VMEM)
    hbm = pl.BlockSpec(memory_space=pl.ANY)      # fc2 weight stays in HBM, manual DMA
    out = pl.pallas_call(
        h3dw_kernel,
        out_shape=jax.ShapeDtypeStruct((B, PPAD), jnp.float32),
        in_specs=[vmem, vmem, vmem,              # xpad, pool, mean
                  vmem, vmem,                    # wconv, bconv
                  vmem, vmem,                    # wfc0, bfc0
                  hbm, vmem,                     # wfc2 (HBM), bfc2
                  vmem, vmem, vmem, vmem],       # wrf, a3, s, br
        out_specs=vmem,
        scratch_shapes=[
            pltpu.VMEM((B, H, W, KCOLS), jnp.float32),       # im2col patches
            pltpu.VMEM((FEAT_DIM, FEAT_DIM), jnp.bfloat16),  # fc2 weight landing buffer
            pltpu.SemaphoreType.DMA(()),
        ],
        compiler_params=pltpu.CompilerParams(vmem_limit_bytes=16 << 20),
    )(xpad, pool, mean_p,
      wconv_p, bconv_p,
      p["wfc0"], p["bfc0"],
      wfc2_bf, p["bfc2"],
      wrf_bf, a3_p, s_p, br_p)
    return out[:, :PARAM_DIM]


def reference_forward(x_nchw, mean_params, p):
    """Pure-JAX reference mirroring the PyTorch forward (conv -> ReLU -> GAP ->
    FC backbone stand-in, feat_encoder, 3-step regressor loop), with the same
    bf16 operand choices as the kernel for the conv stem, fc2 and the regressor
    feat-half.  The regressor is kept as the explicit 3-iteration loop so the
    kernel's folded recurrence is validated against it."""
    x = jnp.transpose(x_nchw, (0, 2, 3, 1)).astype(jnp.float32)
    xp = jnp.pad(x, ((0, 0), (1, 1), (1, 1), (0, 0)))
    wconv_bf = p["wconv"].astype(jnp.bfloat16)
    out = jnp.zeros((B, H, W, CCONV), jnp.float32)
    for dy in range(KH):
        for dx in range(KW):
            out = out + jnp.einsum('bhwc,co->bhwo',
                                   xp[:, dy:dy + H, dx:dx + W, :].astype(jnp.bfloat16),
                                   wconv_bf[dy, dx],
                                   preferred_element_type=jnp.float32)
    out = jnp.maximum(out + p["bconv"], 0.0)
    gap = out.mean(axis=(1, 2))                                     # (B, CCONV)
    main_feat = jnp.dot(gap, p["wfc0"],
                        precision=lax.Precision.HIGHEST) + p["bfc0"]

    wfc2_bf = p["wfc2"].astype(jnp.bfloat16)
    wrf_bf = p["wrf"].astype(jnp.bfloat16)

    h = jnp.maximum(main_feat, 0.0)
    h = jnp.dot(h.astype(jnp.bfloat16), wfc2_bf,
                preferred_element_type=jnp.float32) + p["bfc2"]
    feat = jnp.maximum(h, 0.0)

    pred = mean_params
    for _ in range(N_ITER):
        # cat([feat, pred]) @ W == feat @ W_feat + pred @ W_pred
        step = (jnp.dot(feat.astype(jnp.bfloat16), wrf_bf,
                        preferred_element_type=jnp.float32)
                + jnp.dot(pred, p["wrp"], precision=lax.Precision.HIGHEST)
                + p["br"])
        pred = pred + step
    return pred


def init_params(key):
    ks = jax.random.split(key, 8)

    def lin(k, fan_in, shape):
        return (jax.random.normal(k, shape, jnp.float32) / jnp.sqrt(fan_in))

    return {
        "wconv": lin(ks[0], KH * KW * CIN, (KH, KW, CIN, CCONV)),
        "bconv": jnp.zeros((1, CCONV), jnp.float32),
        "wfc0": lin(ks[1], CCONV, (CCONV, FEAT_DIM)),
        "bfc0": 0.01 * jax.random.normal(ks[2], (1, FEAT_DIM), jnp.float32),
        "wfc2": lin(ks[3], FEAT_DIM, (FEAT_DIM, FEAT_DIM)),
        "bfc2": 0.01 * jax.random.normal(ks[4], (1, FEAT_DIM), jnp.float32),
        "wrf": lin(ks[5], FEAT_DIM + PARAM_DIM, (FEAT_DIM, PARAM_DIM)),
        "wrp": lin(ks[6], FEAT_DIM + PARAM_DIM, (PARAM_DIM, PARAM_DIM)),
        "br": 0.01 * jax.random.normal(ks[7], (1, PARAM_DIM), jnp.float32),
    }


if __name__ == "__main__":
    key = jax.random.PRNGKey(0)
    k_x, k_m, k_p = jax.random.split(key, 3)

    x = jax.random.normal(k_x, (B, CIN, H, W), jnp.float32)            # NCHW input
    mean_params = jnp.tile(
        0.1 * jax.random.normal(k_m, (1, PARAM_DIM), jnp.float32), (B, 1))
    params = init_params(k_p)

    pred = h3dw_forward(x, mean_params, params)
    pred = jax.block_until_ready(pred)

    ref = reference_forward(x, mean_params, params)
    assert pred.shape == (B, PARAM_DIM)
    max_err = float(jnp.max(jnp.abs(pred - ref)))
    assert jnp.allclose(pred, ref, atol=3e-3, rtol=3e-3), max_err

    print("KERNEL_OK")
</pallas_src>

<mosaic_0001>
module attributes {stable_mosaic.version = 11 : i64} {
  func.func @h3dw_kernel(%arg0: memref<2x18x18x4xf32, #tpu.memory_space<vmem>>, %arg1: memref<2x512xf32, #tpu.memory_space<vmem>>, %arg2: memref<2x128xf32, #tpu.memory_space<vmem>>, %arg3: memref<36x128xbf16, #tpu.memory_space<vmem>>, %arg4: memref<1x128xf32, #tpu.memory_space<vmem>>, %arg5: memref<32x1024xf32, #tpu.memory_space<vmem>>, %arg6: memref<1x1024xf32, #tpu.memory_space<vmem>>, %arg7: memref<1024x1024xbf16, #tpu.memory_space<any>>, %arg8: memref<1x1024xf32, #tpu.memory_space<vmem>>, %arg9: memref<1024x128xbf16, #tpu.memory_space<vmem>>, %arg10: memref<128x128xf32, #tpu.memory_space<vmem>>, %arg11: memref<128x128xf32, #tpu.memory_space<vmem>>, %arg12: memref<1x128xf32, #tpu.memory_space<vmem>>, %arg13: memref<2x128xf32, #tpu.memory_space<vmem>>, %arg14: memref<2x16x16x36xf32, #tpu.memory_space<vmem>>, %arg15: memref<1024x1024xbf16, #tpu.memory_space<vmem>>, %arg16: memref<!tpu.dma_semaphore, #tpu.memory_space<semaphore_mem>>) attributes {dimension_semantics = [], scalar_prefetch = 0 : i64, scratch_operands = 3 : i64, tpu.core_type = #tpu.core_type<tc>} {
    tpu.enqueue_dma source(%arg7 : memref<1024x1024xbf16, #tpu.memory_space<any>>) target(%arg15 : memref<1024x1024xbf16, #tpu.memory_space<vmem>>) target_semaphore(%arg16 : memref<!tpu.dma_semaphore, #tpu.memory_space<semaphore_mem>>)
    %c0 = arith.constant 0 : index
    %c0_0 = arith.constant 0 : index
    %c0_1 = arith.constant 0 : index
    %c0_2 = arith.constant 0 : index
    %0 = vector.load %arg0[%c0, %c0_0, %c0_1, %c0_2] : memref<2x18x18x4xf32, #tpu.memory_space<vmem>>, vector<2x16x16x4xf32>
    %c0_3 = arith.constant 0 : index
    %c0_4 = arith.constant 0 : index
    %c0_5 = arith.constant 0 : index
    %c0_6 = arith.constant 0 : index
    %1 = vector.load %arg14[%c0_3, %c0_4, %c0_5, %c0_6] : memref<2x16x16x36xf32, #tpu.memory_space<vmem>>, vector<2x16x16x4xf32>
    tpu.vector_store %arg14[%c0_3, %c0_4, %c0_5, %c0_6], %0 {strides = array<i32>} : memref<2x16x16x36xf32, #tpu.memory_space<vmem>>, vector<2x16x16x4xf32>,
    %c0_7 = arith.constant 0 : index
    %c0_8 = arith.constant 0 : index
    %c1 = arith.constant 1 : index
    %c0_9 = arith.constant 0 : index
    %2 = vector.load %arg0[%c0_7, %c0_8, %c1, %c0_9] : memref<2x18x18x4xf32, #tpu.memory_space<vmem>>, vector<2x16x16x4xf32>
    %c0_10 = arith.constant 0 : index
    %c0_11 = arith.constant 0 : index
    %c0_12 = arith.constant 0 : index
    %c4 = arith.constant 4 : index
    %3 = vector.load %arg14[%c0_10, %c0_11, %c0_12, %c4] : memref<2x16x16x36xf32, #tpu.memory_space<vmem>>, vector<2x16x16x4xf32>
    tpu.vector_store %arg14[%c0_10, %c0_11, %c0_12, %c4], %2 {strides = array<i32>} : memref<2x16x16x36xf32, #tpu.memory_space<vmem>>, vector<2x16x16x4xf32>,
    %c0_13 = arith.constant 0 : index
    %c0_14 = arith.constant 0 : index
    %c2 = arith.constant 2 : index
    %c0_15 = arith.constant 0 : index
    %4 = vector.load %arg0[%c0_13, %c0_14, %c2, %c0_15] : memref<2x18x18x4xf32, #tpu.memory_space<vmem>>, vector<2x16x16x4xf32>
    %c0_16 = arith.constant 0 : index
    %c0_17 = arith.constant 0 : index
    %c0_18 = arith.constant 0 : index
    %c8 = arith.constant 8 : index
    %5 = vector.load %arg14[%c0_16, %c0_17, %c0_18, %c8] : memref<2x16x16x36xf32, #tpu.memory_space<vmem>>, vector<2x16x16x4xf32>
    tpu.vector_store %arg14[%c0_16, %c0_17, %c0_18, %c8], %4 {strides = array<i32>} : memref<2x16x16x36xf32, #tpu.memory_space<vmem>>, vector<2x16x16x4xf32>,
    %c0_19 = arith.constant 0 : index
    %c1_20 = arith.constant 1 : index
    %c0_21 = arith.constant 0 : index
    %c0_22 = arith.constant 0 : index
    %6 = vector.load %arg0[%c0_19, %c1_20, %c0_21, %c0_22] : memref<2x18x18x4xf32, #tpu.memory_space<vmem>>, vector<2x16x16x4xf32>
    %c0_23 = arith.constant 0 : index
    %c0_24 = arith.constant 0 : index
    %c0_25 = arith.constant 0 : index
    %c12 = arith.constant 12 : index
    %7 = vector.load %arg14[%c0_23, %c0_24, %c0_25, %c12] : memref<2x16x16x36xf32, #tpu.memory_space<vmem>>, vector<2x16x16x4xf32>
    tpu.vector_store %arg14[%c0_23, %c0_24, %c0_25, %c12], %6 {strides = array<i32>} : memref<2x16x16x36xf32, #tpu.memory_space<vmem>>, vector<2x16x16x4xf32>,
    %c0_26 = arith.constant 0 : index
    %c1_27 = arith.constant 1 : index
    %c1_28 = arith.constant 1 : index
    %c0_29 = arith.constant 0 : index
    %8 = vector.load %arg0[%c0_26, %c1_27, %c1_28, %c0_29] : memref<2x18x18x4xf32, #tpu.memory_space<vmem>>, vector<2x16x16x4xf32>
    %c0_30 = arith.constant 0 : index
    %c0_31 = arith.constant 0 : index
    %c0_32 = arith.constant 0 : index
    %c16 = arith.constant 16 : index
    %9 = vector.load %arg14[%c0_30, %c0_31, %c0_32, %c16] : memref<2x16x16x36xf32, #tpu.memory_space<vmem>>, vector<2x16x16x4xf32>
    tpu.vector_store %arg14[%c0_30, %c0_31, %c0_32, %c16], %8 {strides = array<i32>} : memref<2x16x16x36xf32, #tpu.memory_space<vmem>>, vector<2x16x16x4xf32>,
    %c0_33 = arith.constant 0 : index
    %c1_34 = arith.constant 1 : index
    %c2_35 = arith.constant 2 : index
    %c0_36 = arith.constant 0 : index
    %10 = vector.load %arg0[%c0_33, %c1_34, %c2_35, %c0_36] : memref<2x18x18x4xf32, #tpu.memory_space<vmem>>, vector<2x16x16x4xf32>
    %c0_37 = arith.constant 0 : index
    %c0_38 = arith.constant 0 : index
    %c0_39 = arith.constant 0 : index
    %c20 = arith.constant 20 : index
    %11 = vector.load %arg14[%c0_37, %c0_38, %c0_39, %c20] : memref<2x16x16x36xf32, #tpu.memory_space<vmem>>, vector<2x16x16x4xf32>
    tpu.vector_store %arg14[%c0_37, %c0_38, %c0_39, %c20], %10 {strides = array<i32>} : memref<2x16x16x36xf32, #tpu.memory_space<vmem>>, vector<2x16x16x4xf32>,
    %c0_40 = arith.constant 0 : index
    %c2_41 = arith.constant 2 : index
    %c0_42 = arith.constant 0 : index
    %c0_43 = arith.constant 0 : index
    %12 = vector.load %arg0[%c0_40, %c2_41, %c0_42, %c0_43] : memref<2x18x18x4xf32, #tpu.memory_space<vmem>>, vector<2x16x16x4xf32>
    %c0_44 = arith.constant 0 : index
    %c0_45 = arith.constant 0 : index
    %c0_46 = arith.constant 0 : index
    %c24 = arith.constant 24 : index
    %13 = vector.load %arg14[%c0_44, %c0_45, %c0_46, %c24] : memref<2x16x16x36xf32, #tpu.memory_space<vmem>>, vector<2x16x16x4xf32>
    tpu.vector_store %arg14[%c0_44, %c0_45, %c0_46, %c24], %12 {strides = array<i32>} : memref<2x16x16x36xf32, #tpu.memory_space<vmem>>, vector<2x16x16x4xf32>,
    %c0_47 = arith.constant 0 : index
    %c2_48 = arith.constant 2 : index
    %c1_49 = arith.constant 1 : index
    %c0_50 = arith.constant 0 : index
    %14 = vector.load %arg0[%c0_47, %c2_48, %c1_49, %c0_50] : memref<2x18x18x4xf32, #tpu.memory_space<vmem>>, vector<2x16x16x4xf32>
    %c0_51 = arith.constant 0 : index
    %c0_52 = arith.constant 0 : index
    %c0_53 = arith.constant 0 : index
    %c28 = arith.constant 28 : index
    %15 = vector.load %arg14[%c0_51, %c0_52, %c0_53, %c28] : memref<2x16x16x36xf32, #tpu.memory_space<vmem>>, vector<2x16x16x4xf32>
    tpu.vector_store %arg14[%c0_51, %c0_52, %c0_53, %c28], %14 {strides = array<i32>} : memref<2x16x16x36xf32, #tpu.memory_space<vmem>>, vector<2x16x16x4xf32>,
    %c0_54 = arith.constant 0 : index
    %c2_55 = arith.constant 2 : index
    %c2_56 = arith.constant 2 : index
    %c0_57 = arith.constant 0 : index
    %16 = vector.load %arg0[%c0_54, %c2_55, %c2_56, %c0_57] : memref<2x18x18x4xf32, #tpu.memory_space<vmem>>, vector<2x16x16x4xf32>
    %c0_58 = arith.constant 0 : index
    %c0_59 = arith.constant 0 : index
    %c0_60 = arith.constant 0 : index
    %c32 = arith.constant 32 : index
    %17 = vector.load %arg14[%c0_58, %c0_59, %c0_60, %c32] : memref<2x16x16x36xf32, #tpu.memory_space<vmem>>, vector<2x16x16x4xf32>
    tpu.vector_store %arg14[%c0_58, %c0_59, %c0_60, %c32], %16 {strides = array<i32>} : memref<2x16x16x36xf32, #tpu.memory_space<vmem>>, vector<2x16x16x4xf32>,
    %c0_61 = arith.constant 0 : index
    %c0_62 = arith.constant 0 : index
    %c0_63 = arith.constant 0 : index
    %c0_64 = arith.constant 0 : index
    %18 = vector.load %arg14[%c0_61, %c0_62, %c0_63, %c0_64] : memref<2x16x16x36xf32, #tpu.memory_space<vmem>>, vector<2x16x16x36xf32>
    %19 = vector.shape_cast %18 : vector<2x16x16x36xf32> to vector<512x36xf32>
    %20 = arith.truncf %19 : vector<512x36xf32> to vector<512x36xbf16>
    %c0_65 = arith.constant 0 : index
    %c0_66 = arith.constant 0 : index
    %21 = vector.load %arg3[%c0_65, %c0_66] : memref<36x128xbf16, #tpu.memory_space<vmem>>, vector<36x128xbf16>
    %cst = arith.constant dense<0.000000e+00> : vector<512x128xf32>
    %22 = tpu.matmul %20, %21, %cst {dimension_numbers = #tpu.dot_dimension_numbers<[1], [0], [0], [1], [0, 0, 1, 1], [], []>} : vector<512x36xbf16>, vector<36x128xbf16>, vector<512x128xf32> -> vector<512x128xf32>
    %c0_67 = arith.constant 0 : index
    %c0_68 = arith.constant 0 : index
    %23 = vector.load %arg4[%c0_67, %c0_68] : memref<1x128xf32, #tpu.memory_space<vmem>>, vector<1x128xf32>
    %24 = vector.broadcast %23 : vector<1x128xf32> to vector<512x128xf32>
    %25 = arith.addf %22, %24 : vector<512x128xf32>
    %cst_69 = arith.constant 0.000000e+00 : f32
    %26 = vector.broadcast %cst_69 : f32 to vector<512x128xf32>
    %27 = arith.maximumf %25, %26 : vector<512x128xf32>
    %c0_70 = arith.constant 0 : index
    %c0_71 = arith.constant 0 : index
    %28 = vector.load %arg1[%c0_70, %c0_71] : memref<2x512xf32, #tpu.memory_space<vmem>>, vector<2x512xf32>
    %cst_72 = arith.constant dense<0.000000e+00> : vector<2x128xf32>
    %29 = tpu.matmul %28, %27, %cst_72 {dimension_numbers = #tpu.dot_dimension_numbers<[1], [0], [0], [1], [0, 0, 1, 1], [], []>} : vector<2x512xf32>, vector<512x128xf32>, vector<2x128xf32> -> vector<2x128xf32>
    %30 = vector.extract_strided_slice %29 {offsets = [0, 0], sizes = [2, 32], strides = [1, 1]} : vector<2x128xf32> to vector<2x32xf32>
    %c0_73 = arith.constant 0 : index
    %c0_74 = arith.constant 0 : index
    %31 = vector.load %arg5[%c0_73, %c0_74] : memref<32x1024xf32, #tpu.memory_space<vmem>>, vector<32x1024xf32>
    %cst_75 = arith.constant dense<0.000000e+00> : vector<2x1024xf32>
    %32 = tpu.matmul %30, %31, %cst_75 {dimension_numbers = #tpu.dot_dimension_numbers<[1], [0], [0], [1], [0, 0, 1, 1], [], []>} : vector<2x32xf32>, vector<32x1024xf32>, vector<2x1024xf32> -> vector<2x1024xf32>
    %c0_76 = arith.constant 0 : index
    %c0_77 = arith.constant 0 : index
    %33 = vector.load %arg6[%c0_76, %c0_77] : memref<1x1024xf32, #tpu.memory_space<vmem>>, vector<1x1024xf32>
    %34 = vector.broadcast %33 : vector<1x1024xf32> to vector<2x1024xf32>
    %35 = arith.addf %32, %34 : vector<2x1024xf32>
    %cst_78 = arith.constant 0.000000e+00 : f32
    %36 = vector.broadcast %cst_78 : f32 to vector<2x1024xf32>
    %37 = arith.maximumf %35, %36 : vector<2x1024xf32>
    %38 = arith.truncf %37 : vector<2x1024xf32> to vector<2x1024xbf16>
    tpu.wait_dma2 semaphore(%arg16 : memref<!tpu.dma_semaphore, #tpu.memory_space<semaphore_mem>>) src(%arg7 : memref<1024x1024xbf16, #tpu.memory_space<any>>) dst(%arg15 : memref<1024x1024xbf16, #tpu.memory_space<vmem>>)
    %c0_79 = arith.constant 0 : index
    %c0_80 = arith.constant 0 : index
    %39 = vector.load %arg15[%c0_79, %c0_80] : memref<1024x1024xbf16, #tpu.memory_space<vmem>>, vector<1024x1024xbf16>
    %cst_81 = arith.constant dense<0.000000e+00> : vector<2x1024xf32>
    %40 = tpu.matmul %38, %39, %cst_81 {dimension_numbers = #tpu.dot_dimension_numbers<[1], [0], [0], [1], [0, 0, 1, 1], [], []>} : vector<2x1024xbf16>, vector<1024x1024xbf16>, vector<2x1024xf32> -> vector<2x1024xf32>
    %c0_82 = arith.constant 0 : index
    %c0_83 = arith.constant 0 : index
    %41 = vector.load %arg8[%c0_82, %c0_83] : memref<1x1024xf32, #tpu.memory_space<vmem>>, vector<1x1024xf32>
    %42 = vector.broadcast %41 : vector<1x1024xf32> to vector<2x1024xf32>
    %43 = arith.addf %40, %42 : vector<2x1024xf32>
    %cst_84 = arith.constant 0.000000e+00 : f32
    %44 = vector.broadcast %cst_84 : f32 to vector<2x1024xf32>
    %45 = arith.maximumf %43, %44 : vector<2x1024xf32>
    %46 = arith.truncf %45 : vector<2x1024xf32> to vector<2x1024xbf16>
    %c0_85 = arith.constant 0 : index
    %c0_86 = arith.constant 0 : index
    %47 = vector.load %arg9[%c0_85, %c0_86] : memref<1024x128xbf16, #tpu.memory_space<vmem>>, vector<1024x128xbf16>
    %cst_87 = arith.constant dense<0.000000e+00> : vector<2x128xf32>
    %48 = tpu.matmul %46, %47, %cst_87 {dimension_numbers = #tpu.dot_dimension_numbers<[1], [0], [0], [1], [0, 0, 1, 1], [], []>} : vector<2x1024xbf16>, vector<1024x128xbf16>, vector<2x128xf32> -> vector<2x128xf32>
    %c0_88 = arith.constant 0 : index
    %c0_89 = arith.constant 0 : index
    %49 = vector.load %arg12[%c0_88, %c0_89] : memref<1x128xf32, #tpu.memory_space<vmem>>, vector<1x128xf32>
    %50 = vector.broadcast %49 : vector<1x128xf32> to vector<2x128xf32>
    %51 = arith.addf %48, %50 : vector<2x128xf32>
    %c0_90 = arith.constant 0 : index
    %c0_91 = arith.constant 0 : index
    %52 = vector.load %arg2[%c0_90, %c0_91] : memref<2x128xf32, #tpu.memory_space<vmem>>, vector<2x128xf32>
    %c0_92 = arith.constant 0 : index
    %c0_93 = arith.constant 0 : index
    %53 = vector.load %arg10[%c0_92, %c0_93] : memref<128x128xf32, #tpu.memory_space<vmem>>, vector<128x128xf32>
    %cst_94 = arith.constant dense<0.000000e+00> : vector<2x128xf32>
    %54 = tpu.matmul %52, %53, %cst_94 {dimension_numbers = #tpu.dot_dimension_numbers<[1], [0], [0], [1], [0, 0, 1, 1], [], []>} : vector<2x128xf32>, vector<128x128xf32>, vector<2x128xf32> -> vector<2x128xf32>
    %c0_95 = arith.constant 0 : index
    %c0_96 = arith.constant 0 : index
    %55 = vector.load %arg11[%c0_95, %c0_96] : memref<128x128xf32, #tpu.memory_space<vmem>>, vector<128x128xf32>
    %cst_97 = arith.constant dense<0.000000e+00> : vector<2x128xf32>
    %56 = tpu.matmul %51, %55, %cst_97 {dimension_numbers = #tpu.dot_dimension_numbers<[1], [0], [0], [1], [0, 0, 1, 1], [], []>} : vector<2x128xf32>, vector<128x128xf32>, vector<2x128xf32> -> vector<2x128xf32>
    %57 = arith.addf %54, %56 : vector<2x128xf32>
    %c0_98 = arith.constant 0 : index
    %c0_99 = arith.constant 0 : index
    %58 = vector.load %arg13[%c0_98, %c0_99] : memref<2x128xf32, #tpu.memory_space<vmem>>, vector<2x128xf32>
    tpu.vector_store %arg13[%c0_98, %c0_99], %57 {strides = array<i32>} : memref<2x128xf32, #tpu.memory_space<vmem>>, vector<2x128xf32>,
    return
  }
}

</mosaic_0001>

<llo_original>
// kernel: tpu_custom_call.1
$region0: #{tpu_custom_call.1}
  #allocation0 [shape = 'u32[]', space=smem, size = 0x4, offset = 0x4, fixed_abs, tag = 'smem constant byte address 0x4 - core index']
  #allocation1 [shape = 'u32[144,128]{1,0:T(1,128)}', space=vmem, size = 0x12000, scoped, tag = 'internal scratch']
  #allocation2 [shape = 'f32[2,16,16,36]{3,2,1,0:T(8,128)}', space=vmem, size = 0x40000, scoped, tag = 'scratch operand']
  #allocation3 [shape = 'bf16[1024,1024]{1,0:T(16,128)(2,1)}', space=vmem, size = 0x200000, scoped, tag = 'scratch operand']
  #allocation4 [shape = 's32[1]{0}', space=sflag, size = 0x4, scoped, tag = 'scratch operand']
  #allocation24 [shape = 's32[]', space=sflag, size = 0x4, offset = 0, fixed_abs, tag = 'sflag constant byte address 0x0 - dummy sync flag']
  %s0 = inlined_call_operand.vmem [shape: f32[2,18,18,4], index: 0, kind: input, shape index: {}]
  %s1 = inlined_call_operand.hbm [shape: f32[2,512], index: 1, kind: input, shape index: {}]
  %s2 = inlined_call_operand.hbm [shape: f32[2,128], index: 2, kind: input, shape index: {}]
  %s3 = inlined_call_operand.hbm [shape: bf16[36,128], index: 3, kind: input, shape index: {}]
  %s4 = inlined_call_operand.hbm [shape: f32[1,128], index: 4, kind: input, shape index: {}]
  %s5 = inlined_call_operand.hbm [shape: f32[32,1024], index: 5, kind: input, shape index: {}]
  %s6 = inlined_call_operand.hbm [shape: f32[1,1024], index: 6, kind: input, shape index: {}]
  %s7 = inlined_call_operand.hbm [shape: bf16[1024,1024], index: 7, kind: input, shape index: {}]
  %s8 = inlined_call_operand.hbm [shape: f32[1,1024], index: 8, kind: input, shape index: {}]
  %s9 = inlined_call_operand.hbm [shape: bf16[1024,128], index: 9, kind: input, shape index: {}]
  %s10 = inlined_call_operand.hbm [shape: f32[128,128], index: 10, kind: input, shape index: {}]
  %s11 = inlined_call_operand.hbm [shape: f32[128,128], index: 11, kind: input, shape index: {}]
  %s12 = inlined_call_operand.hbm [shape: f32[1,128], index: 12, kind: input, shape index: {}]
  %s13 = inlined_call_operand.hbm [shape: f32[2,128], index: 13, kind: output, shape index: {}]
  %s14 = sld [smem:[#allocation0]]
  $region102: #{tpu_custom_call.1} parent=0
    _
  %s16 = ssub.s32 1, %s14
  %s17 = scalar_select 0, %s16, %s14
  $region1: #{tpu_custom_call.1} parent=0
    #allocation5 [shape = 'u8[4096]{0}', space=vmem, size = 0x1000, scoped, tag = 'input window, operand 1, single buffered']
    #allocation6 [shape = 's32[1]{0}', space=sflag, size = 0x4, scoped, tag = 'scoped memory for tpu_custom_call.1']
    #allocation7 [shape = 's32[1]{0}', space=sflag, size = 0x4, scoped, tag = 'scoped memory for tpu_custom_call.1']
    #allocation8 [shape = 'u8[1024]{0}', space=vmem, size = 0x400, scoped, tag = 'input window, operand 2, single buffered']
    #allocation9 [shape = 's32[1]{0}', space=sflag, size = 0x4, scoped, tag = 'scoped memory for tpu_custom_call.1']
    #allocation10 [shape = 'u8[10240]{0}', space=vmem, size = 0x2800, scoped, tag = 'input window, operand 3, single buffered']
    #allocation11 [shape = 'u8[512]{0}', space=vmem, size = 0x400, scoped, tag = 'input window, operand 4, single buffered']
    #allocation12 [shape = 's32[1]{0}', space=sflag, size = 0x4, scoped, tag = 'scoped memory for tpu_custom_call.1']
    #allocation13 [shape = 'u8[131072]{0}', space=vmem, size = 0x20000, scoped, tag = 'input window, operand 5, single buffered']
    #allocation14 [shape = 'u8[4096]{0}', space=vmem, size = 0x1000, scoped, tag = 'input window, operand 6, single buffered']
    #allocation15 [shape = 's32[1]{0}', space=sflag, size = 0x4, scoped, tag = 'scoped memory for tpu_custom_call.1']
    #allocation16 [shape = 'u8[4096]{0}', space=vmem, size = 0x1000, scoped, tag = 'input window, operand 8, single buffered']
    #allocation17 [shape = 'u8[262144]{0}', space=vmem, size = 0x40000, scoped, tag = 'input window, operand 9, single buffered']
    #allocation18 [shape = 's32[1]{0}', space=sflag, size = 0x4, scoped, tag = 'scoped memory for tpu_custom_call.1']
    #allocation19 [shape = 'u8[65536]{0}', space=vmem, size = 0x10000, scoped, tag = 'input window, operand 10, single buffered']
    #allocation20 [shape = 'u8[65536]{0}', space=vmem, size = 0x10000, scoped, tag = 'input window, operand 11, single buffered']
    #allocation21 [shape = 's32[1]{0}', space=sflag, size = 0x4, scoped, tag = 'scoped memory for tpu_custom_call.1']
    #allocation22 [shape = 'u8[512]{0}', space=vmem, size = 0x400, scoped, tag = 'input window, operand 12, single buffered']
    #allocation23 [shape = 'u8[1024]{0}', space=vmem, size = 0x400, scoped, tag = 'output window, operand 0, single buffered']
    #allocation25 [shape = 'u32[9]{0}', space=smem, size = 0x24, scoped, tag = 'DMA stride descriptor']
    %18 = vsyncpa [#allocation6], 0
    %19 = vsyncpa [#allocation9], 0
    %20 = vsyncpa [#allocation12], 0
    %21 = vsyncpa [#allocation15], 0
    %22 = vsyncpa [#allocation18], 0
    %23 = vsyncpa [#allocation21], 0
    %24 = vsyncpa [#allocation7], 0
    // Predicated region
    $region2: #{tpu_custom_call.1} parent=1 // pred_check
      _
    $region3: #{tpu_custom_call.1} parent=1 // pred_check_branch
      %26 = sbr.rel (0) target = $region5
    $region4: #{tpu_custom_call.1} parent=1 // pred_region
      _
    $region5: #{tpu_custom_call.1} parent=1 // pred_fallthru
      _
    // Predicated region
    $region6: #{tpu_custom_call.1} parent=1 // pred_check
      _
    $region7: #{tpu_custom_call.1} parent=1 // pred_check_branch
      %28 = sbr.rel (0) target = $region9
    $region8: #{tpu_custom_call.1} parent=1 // pred_region
      %s30 = ssub.s32 128, 128
      %31 = vsyncadd [#allocation6], %s30
      %s33 = sshll.u32 [#allocation5], 4
      %s34 = int_to_ptr.vmem [resolvable:$true] %s33
      %36 = dma.hbm_to_vmem [thread:$0]  %s1, 128, %s34, [#allocation6]
    $region9: #{tpu_custom_call.1} parent=1 // pred_fallthru
      _
    // Predicated region
    $region10: #{tpu_custom_call.1} parent=1 // pred_check
      _
    $region11: #{tpu_custom_call.1} parent=1 // pred_check_branch
      %38 = sbr.rel (0) target = $region13
    $region12: #{tpu_custom_call.1} parent=1 // pred_region
      %s40 = ssub.s32 32, 32
      %41 = vsyncadd [#allocation9], %s40
      %s43 = sshll.u32 [#allocation8], 4
      %s44 = int_to_ptr.vmem [resolvable:$true] %s43
      %46 = dma.hbm_to_vmem [thread:$0]  %s2, 32, %s44, [#allocation9]
    $region13: #{tpu_custom_call.1} parent=1 // pred_fallthru
      _
    // Predicated region
    $region14: #{tpu_custom_call.1} parent=1 // pred_check
      _
    $region15: #{tpu_custom_call.1} parent=1 // pred_check_branch
      %48 = sbr.rel (0) target = $region17
    $region16: #{tpu_custom_call.1} parent=1 // pred_region
      %s50 = ssub.s32 320, 320
      %51 = vsyncadd [#allocation9], %s50
      %s52 = sshll.u32 [#allocation10], 4
      %s53 = int_to_ptr.vmem [resolvable:$true] %s52
      %58 = dma.hbm_to_vmem [thread:$0]  %s3, 320, %s53, [#allocation9], 64, 64, 4
    $region17: #{tpu_custom_call.1} parent=1 // pred_fallthru
      _
    // Predicated region
    $region18: #{tpu_custom_call.1} parent=1 // pred_check
      _
    $region19: #{tpu_custom_call.1} parent=1 // pred_check_branch
      %60 = sbr.rel (0) target = $region21
    $region20: #{tpu_custom_call.1} parent=1 // pred_region
      %s62 = ssub.s32 16, 16
      %63 = vsyncadd [#allocation12], %s62
      %s65 = sshll.u32 [#allocation11], 4
      %s66 = int_to_ptr.vmem [resolvable:$true] %s65
      %68 = dma.hbm_to_vmem [thread:$0]  %s4, 16, %s66, [#allocation12]
    $region21: #{tpu_custom_call.1} parent=1 // pred_fallthru
      _
    // Predicated region
    $region22: #{tpu_custom_call.1} parent=1 // pred_check
      _
    $region23: #{tpu_custom_call.1} parent=1 // pred_check_branch
      %70 = sbr.rel (0) target = $region25
    $region24: #{tpu_custom_call.1} parent=1 // pred_region
      %s72 = ssub.s32 4096, 4096
      %73 = vsyncadd [#allocation12], %s72
      %s74 = sshll.u32 [#allocation13], 4
      %s75 = int_to_ptr.vmem [resolvable:$true] %s74
      %80 = dma.hbm_to_vmem [thread:$0]  %s5, 4096, %s75, [#allocation12], 1024, 1024, 64
    $region25: #{tpu_custom_call.1} parent=1 // pred_fallthru
      _
    // Predicated region
    $region26: #{tpu_custom_call.1} parent=1 // pred_check
      _
    $region27: #{tpu_custom_call.1} parent=1 // pred_check_branch
      %82 = sbr.rel (0) target = $region29
    $region28: #{tpu_custom_call.1} parent=1 // pred_region
      %s84 = ssub.s32 128, 128
      %85 = vsyncadd [#allocation15], %s84
      %s87 = sshll.u32 [#allocation14], 4
      %s88 = int_to_ptr.vmem [resolvable:$true] %s87
      %90 = dma.hbm_to_vmem [thread:$0]  %s6, 128, %s88, [#allocation15]
    $region29: #{tpu_custom_call.1} parent=1 // pred_fallthru
      _
    // Predicated region
    $region30: #{tpu_custom_call.1} parent=1 // pred_check
      _
    $region31: #{tpu_custom_call.1} parent=1 // pred_check_branch
      %92 = sbr.rel (0) target = $region33
    $region32: #{tpu_custom_call.1} parent=1 // pred_region
      %s94 = ssub.s32 128, 128
      %95 = vsyncadd [#allocation15], %s94
      %s97 = sshll.u32 [#allocation16], 4
      %s98 = int_to_ptr.vmem [resolvable:$true] %s97
      %100 = dma.hbm_to_vmem [thread:$0]  %s8, 128, %s98, [#allocation15]
    $region33: #{tpu_custom_call.1} parent=1 // pred_fallthru
      _
    // Predicated region
    $region34: #{tpu_custom_call.1} parent=1 // pred_check
      _
    $region35: #{tpu_custom_call.1} parent=1 // pred_check_branch
      %102 = sbr.rel (0) target = $region37
    $region36: #{tpu_custom_call.1} parent=1 // pred_region
      %s104 = ssub.s32 8192, 8192
      %105 = vsyncadd [#allocation18], %s104
      %s106 = sshll.u32 [#allocation17], 4
      %s107 = int_to_ptr.vmem [resolvable:$true] %s106
      %112 = dma.hbm_to_vmem [thread:$0]  %s9, 8192, %s107, [#allocation18], 64, 64, 4
    $region37: #{tpu_custom_call.1} parent=1 // pred_fallthru
      _
    // Predicated region
    $region38: #{tpu_custom_call.1} parent=1 // pred_check
      _
    $region39: #{tpu_custom_call.1} parent=1 // pred_check_branch
      %114 = sbr.rel (0) target = $region41
    $region40: #{tpu_custom_call.1} parent=1 // pred_region
      %s116 = ssub.s32 2048, 2048
      %117 = vsyncadd [#allocation18], %s116
      %s118 = sshll.u32 [#allocation19], 4
      %s119 = int_to_ptr.vmem [resolvable:$true] %s118
      %124 = dma.hbm_to_vmem [thread:$0]  %s10, 2048, %s119, [#allocation18], 128, 128, 8
    $region41: #{tpu_custom_call.1} parent=1 // pred_fallthru
      _
    // Predicated region
    $region42: #{tpu_custom_call.1} parent=1 // pred_check
      _
    $region43: #{tpu_custom_call.1} parent=1 // pred_check_branch
      %126 = sbr.rel (0) target = $region45
    $region44: #{tpu_custom_call.1} parent=1 // pred_region
      %s128 = ssub.s32 2048, 2048
      %129 = vsyncadd [#allocation21], %s128
      %s130 = sshll.u32 [#allocation20], 4
      %s131 = int_to_ptr.vmem [resolvable:$true] %s130
      %136 = dma.hbm_to_vmem [thread:$0]  %s11, 2048, %s131, [#allocation21], 128, 128, 8
    $region45: #{tpu_custom_call.1} parent=1 // pred_fallthru
      _
    // Predicated region
    $region46: #{tpu_custom_call.1} parent=1 // pred_check
      _
    $region47: #{tpu_custom_call.1} parent=1 // pred_check_branch
      %138 = sbr.rel (0) target = $region49
    $region48: #{tpu_custom_call.1} parent=1 // pred_region
      %s140 = ssub.s32 16, 16
      %141 = vsyncadd [#allocation21], %s140
      %s143 = sshll.u32 [#allocation22], 4
      %s144 = int_to_ptr.vmem [resolvable:$true] %s143
      %146 = dma.hbm_to_vmem [thread:$0]  %s12, 16, %s144, [#allocation21]
    $region49: #{tpu_custom_call.1} parent=1 // pred_fallthru
      _
    // Predicated region
    $region50: #{tpu_custom_call.1} parent=1 // pred_check
      _
    $region51: #{tpu_custom_call.1} parent=1 // pred_check_branch
      %148 = sbr.rel (0) target = $region53
    $region52: #{tpu_custom_call.1} parent=1 // pred_region
      %149 = dma.done [#allocation6], 128
    $region53: #{tpu_custom_call.1} parent=1 // pred_fallthru
      _
    // Predicated region
    $region54: #{tpu_custom_call.1} parent=1 // pred_check
      _
    $region55: #{tpu_custom_call.1} parent=1 // pred_check_branch
      %151 = sbr.rel (0) target = $region57
    $region56: #{tpu_custom_call.1} parent=1 // pred_region
      %152 = dma.done [#allocation9], 32
    $region57: #{tpu_custom_call.1} parent=1 // pred_fallthru
      _
    // Predicated region
    $region58: #{tpu_custom_call.1} parent=1 // pred_check
      _
    $region59: #{tpu_custom_call.1} parent=1 // pred_check_branch
      %154 = sbr.rel (0) target = $region61
    $region60: #{tpu_custom_call.1} parent=1 // pred_region
      %155 = dma.done [#allocation9], 320
    $region61: #{tpu_custom_call.1} parent=1 // pred_fallthru
      _
    // Predicated region
    $region62: #{tpu_custom_call.1} parent=1 // pred_check
      _
    $region63: #{tpu_custom_call.1} parent=1 // pred_check_branch
      %157 = sbr.rel (0) target = $region65
    $region64: #{tpu_custom_call.1} parent=1 // pred_region
      %158 = dma.done [#allocation12], 16
    $region65: #{tpu_custom_call.1} parent=1 // pred_fallthru
      _
    // Predicated region
    $region66: #{tpu_custom_call.1} parent=1 // pred_check
      _
    $region67: #{tpu_custom_call.1} parent=1 // pred_check_branch
      %160 = sbr.rel (0) target = $region69
    $region68: #{tpu_custom_call.1} parent=1 // pred_region
      %161 = dma.done [#allocation12], 4096
    $region69: #{tpu_custom_call.1} parent=1 // pred_fallthru
      _
    // Predicated region
    $region70: #{tpu_custom_call.1} parent=1 // pred_check
      _
    $region71: #{tpu_custom_call.1} parent=1 // pred_check_branch
      %163 = sbr.rel (0) target = $region73
    $region72: #{tpu_custom_call.1} parent=1 // pred_region
      %164 = dma.done [#allocation15], 128
    $region73: #{tpu_custom_call.1} parent=1 // pred_fallthru
      _
    // Predicated region
    $region74: #{tpu_custom_call.1} parent=1 // pred_check
      _
    $region75: #{tpu_custom_call.1} parent=1 // pred_check_branch
      %166 = sbr.rel (0) target = $region77
    $region76: #{tpu_custom_call.1} parent=1 // pred_region
      %167 = dma.done [#allocation15], 128
    $region77: #{tpu_custom_call.1} parent=1 // pred_fallthru
      _
    // Predicated region
    $region78: #{tpu_custom_call.1} parent=1 // pred_check
      _
    $region79: #{tpu_custom_call.1} parent=1 // pred_check_branch
      %169 = sbr.rel (0) target = $region81
    $region80: #{tpu_custom_call.1} parent=1 // pred_region
      %170 = dma.done [#allocation18], 8192
    $region81: #{tpu_custom_call.1} parent=1 // pred_fallthru
      _
    // Predicated region
    $region82: #{tpu_custom_call.1} parent=1 // pred_check
      _
    $region83: #{tpu_custom_call.1} parent=1 // pred_check_branch
      %172 = sbr.rel (0) target = $region85
    $region84: #{tpu_custom_call.1} parent=1 // pred_region
      %173 = dma.done [#allocation18], 2048
    $region85: #{tpu_custom_call.1} parent=1 // pred_fallthru
      _
    // Predicated region
    $region86: #{tpu_custom_call.1} parent=1 // pred_check
      _
    $region87: #{tpu_custom_call.1} parent=1 // pred_check_branch
      %175 = sbr.rel (0) target = $region89
    $region88: #{tpu_custom_call.1} parent=1 // pred_region
      %176 = dma.done [#allocation21], 2048
    $region89: #{tpu_custom_call.1} parent=1 // pred_fallthru
      _
    // Predicated region
    $region90: #{tpu_custom_call.1} parent=1 // pred_check
      _
    $region91: #{tpu_custom_call.1} parent=1 // pred_check_branch
      %178 = sbr.rel (0) target = $region93
    $region92: #{tpu_custom_call.1} parent=1 // pred_region
      %179 = dma.done [#allocation21], 16
    $region93: #{tpu_custom_call.1} parent=1 // pred_fallthru
      _
    %s182 = sshll.u32 1, 14
    %s183 = sxor.u32 4294967295, %s182
    %s185 = sld [smem:[#allocation0]]
    %s186 = sadd.s32 2, %s185
    %s188 = sshll.u32 7, 26
    %s189 = sxor.u32 4294967295, %s188
    %s190 = sand.u32 0, %s189
    %s191 = sshll.u32 %s186, 26
    %s192 = sor.u32 %s190, %s191
    %s193 = sshll.u32 [#allocation3], 4
    %s194 = int_to_ptr.vmem [resolvable:$true] %s193
    %197 = sst [smem:[#allocation25]] 1024
    %s198 = scalar_lea.smem [#allocation25], 1
    %199 = sst [smem:[%s198]] 1024
    %s200 = scalar_lea.smem [#allocation25], 2
    %201 = sst [smem:[%s200]] 8
    %s202 = scalar_lea.smem [#allocation25], 3
    %203 = sst [smem:[%s202]] 64
    %s204 = scalar_lea.smem [#allocation25], 4
    %205 = sst [smem:[%s204]] 128
    %s206 = scalar_lea.smem [#allocation25], 5
    %207 = sst [smem:[%s206]] 2
    %s208 = scalar_lea.smem [#allocation25], 6
    %209 = sst [smem:[%s208]] 512
    %s210 = scalar_lea.smem [#allocation25], 7
    %211 = sst [smem:[%s210]] 64
    %s212 = scalar_lea.smem [#allocation25], 8
    %213 = sst [smem:[%s212]] 4
    %215 = dma.general %s7, 65536, %s194, [#allocation4], [#allocation24], [#allocation25], %s192, 0
    %v216 = vld [vmem:[%s0] sm:$0xff]
    %v217 = vld [vmem:[%s0 + $0x8] sm:$0xff]
    %v218 = vld [vmem:[%s0 + $0x18] sm:$0xff]
    %v219 = vld [vmem:[%s0 + $0x20] sm:$0xff]
    %v220 = vld [vmem:[%s0 + $0x30] sm:$0xff]
    %v221 = vld [vmem:[%s0 + $0x38] sm:$0xff]
    %v222 = vld [vmem:[%s0 + $0x48] sm:$0xff]
    %v223 = vld [vmem:[%s0 + $0x50] sm:$0xff]
    %v224 = vld [vmem:[%s0 + $0x60] sm:$0xff]
    %v225 = vld [vmem:[%s0 + $0x68] sm:$0xff]
    %v226 = vld [vmem:[%s0 + $0x78] sm:$0xff]
    %v227 = vld [vmem:[%s0 + $0x80] sm:$0xff]
    %v228 = vld [vmem:[%s0 + $0x90] sm:$0xff]
    %v229 = vld [vmem:[%s0 + $0x98] sm:$0xff]
    %v230 = vld [vmem:[%s0 + $0xa8] sm:$0xff]
    %v231 = vld [vmem:[%s0 + $0xb0] sm:$0xff]
    %v232 = vld [vmem:[%s0 + $0xc0] sm:$0xff]
    %v233 = vld [vmem:[%s0 + $0xc8] sm:$0xff]
    %v234 = vld [vmem:[%s0 + $0xd8] sm:$0xff]
    %v235 = vld [vmem:[%s0 + $0xe0] sm:$0xff]
    %v236 = vld [vmem:[%s0 + $0xf0] sm:$0xff]
    %v237 = vld [vmem:[%s0 + $0xf8] sm:$0xff]
    %v238 = vld [vmem:[%s0 + $0x108] sm:$0xff]
    %v239 = vld [vmem:[%s0 + $0x110] sm:$0xff]
    %v240 = vld [vmem:[%s0 + $0x120] sm:$0xff]
    %v241 = vld [vmem:[%s0 + $0x128] sm:$0xff]
    %v242 = vld [vmem:[%s0 + $0x138] sm:$0xff]
    %v243 = vld [vmem:[%s0 + $0x140] sm:$0xff]
    %v244 = vld [vmem:[%s0 + $0x150] sm:$0xff]
    %v245 = vld [vmem:[%s0 + $0x158] sm:$0xff]
    %v246 = vld [vmem:[%s0 + $0x168] sm:$0xff]
    %v247 = vld [vmem:[%s0 + $0x170] sm:$0xff]
    %v248 = vld [vmem:[%s0 + $0x1b0] sm:$0xff]
    %v249 = vld [vmem:[%s0 + $0x1b8] sm:$0xff]
    %v250 = vld [vmem:[%s0 + $0x1c8] sm:$0xff]
    %v251 = vld [vmem:[%s0 + $0x1d0] sm:$0xff]
    %v252 = vld [vmem:[%s0 + $0x1e0] sm:$0xff]
    %v253 = vld [vmem:[%s0 + $0x1e8] sm:$0xff]
    %v254 = vld [vmem:[%s0 + $0x1f8] sm:$0xff]
    %v255 = vld [vmem:[%s0 + $0x200] sm:$0xff]
    %v256 = vld [vmem:[%s0 + $0x210] sm:$0xff]
    %v257 = vld [vmem:[%s0 + $0x218] sm:$0xff]
    %v258 = vld [vmem:[%s0 + $0x228] sm:$0xff]
    %v259 = vld [vmem:[%s0 + $0x230] sm:$0xff]
    %v260 = vld [vmem:[%s0 + $0x240] sm:$0xff]
    %v261 = vld [vmem:[%s0 + $0x248] sm:$0xff]
    %v262 = vld [vmem:[%s0 + $0x258] sm:$0xff]
    %v263 = vld [vmem:[%s0 + $0x260] sm:$0xff]
    %v264 = vld [vmem:[%s0 + $0x270] sm:$0xff]
    %v265 = vld [vmem:[%s0 + $0x278] sm:$0xff]
    %v266 = vld [vmem:[%s0 + $0x288] sm:$0xff]
    %v267 = vld [vmem:[%s0 + $0x290] sm:$0xff]
    %v268 = vld [vmem:[%s0 + $0x2a0] sm:$0xff]
    %v269 = vld [vmem:[%s0 + $0x2a8] sm:$0xff]
    %v270 = vld [vmem:[%s0 + $0x2b8] sm:$0xff]
    %v271 = vld [vmem:[%s0 + $0x2c0] sm:$0xff]
    %v272 = vld [vmem:[%s0 + $0x2d0] sm:$0xff]
    %v273 = vld [vmem:[%s0 + $0x2d8] sm:$0xff]
    %v274 = vld [vmem:[%s0 + $0x2e8] sm:$0xff]
    %v275 = vld [vmem:[%s0 + $0x2f0] sm:$0xff]
    %v276 = vld [vmem:[%s0 + $0x300] sm:$0xff]
    %v277 = vld [vmem:[%s0 + $0x308] sm:$0xff]
    %v278 = vld [vmem:[%s0 + $0x318] sm:$0xff]
    %v279 = vld [vmem:[%s0 + $0x320] sm:$0xff]
    %vm280 = vcmask 31744
    %281 = vst.msk [vmem:[#allocation2] sm:$0xff] %vm280, %v216
    %282 = vst.msk [vmem:[#allocation2 + $0x8] sm:$0xff] %vm280, %v217
    %283 = vst.msk [vmem:[#allocation2 + $0x10] sm:$0xff] %vm280, %v218
    %284 = vst.msk [vmem:[#allocation2 + $0x18] sm:$0xff] %vm280, %v219
    %285 = vst.msk [vmem:[#allocation2 + $0x20] sm:$0xff] %vm280, %v220
    %286 = vst.msk [vmem:[#allocation2 + $0x28] sm:$0xff] %vm280, %v221
    %287 = vst.msk [vmem:[#allocation2 + $0x30] sm:$0xff] %vm280, %v222
    %288 = vst.msk [vmem:[#allocation2 + $0x38] sm:$0xff] %vm280, %v223
    %289 = vst.msk [vmem:[#allocation2 + $0x40] sm:$0xff] %vm280, %v224
    %290 = vst.msk [vmem:[#allocation2 + $0x48] sm:$0xff] %vm280, %v225
    %291 = vst.msk [vmem:[#allocation2 + $0x50] sm:$0xff] %vm280, %v226
    %292 = vst.msk [vmem:[#allocation2 + $0x58] sm:$0xff] %vm280, %v227
    %293 = vst.msk [vmem:[#allocation2 + $0x60] sm:$0xff] %vm280, %v228
    %294 = vst.msk [vmem:[#allocation2 + $0x68] sm:$0xff] %vm280, %v229
    %295 = vst.msk [vmem:[#allocation2 + $0x70] sm:$0xff] %vm280, %v230
    %296 = vst.msk [vmem:[#allocation2 + $0x78] sm:$0xff] %vm280, %v231
    %297 = vst.msk [vmem:[#allocation2 + $0x80] sm:$0xff] %vm280, %v232
    %298 = vst.msk [vmem:[#allocation2 + $0x88] sm:$0xff] %vm280, %v233
    %299 = vst.msk [vmem:[#allocation2 + $0x90] sm:$0xff] %vm280, %v234
    %300 = vst.msk [vmem:[#allocation2 + $0x98] sm:$0xff] %vm280, %v235
    %301 = vst.msk [vmem:[#allocation2 + $0xa0] sm:$0xff] %vm280, %v236
    %302 = vst.msk [vmem:[#allocation2 + $0xa8] sm:$0xff] %vm280, %v237
    %303 = vst.msk [vmem:[#allocation2 + $0xb0] sm:$0xff] %vm280, %v238
    %304 = vst.msk [vmem:[#allocation2 + $0xb8] sm:$0xff] %vm280, %v239
    %305 = vst.msk [vmem:[#allocation2 + $0xc0] sm:$0xff] %vm280, %v240
    %306 = vst.msk [vmem:[#allocation2 + $0xc8] sm:$0xff] %vm280, %v241
    %307 = vst.msk [vmem:[#allocation2 + $0xd0] sm:$0xff] %vm280, %v242
    %308 = vst.msk [vmem:[#allocation2 + $0xd8] sm:$0xff] %vm280, %v243
    %309 = vst.msk [vmem:[#allocation2 + $0xe0] sm:$0xff] %vm280, %v244
    %310 = vst.msk [vmem:[#allocation2 + $0xe8] sm:$0xff] %vm280, %v245
    %311 = vst.msk [vmem:[#allocation2 + $0xf0] sm:$0xff] %vm280, %v246
    %312 = vst.msk [vmem:[#allocation2 + $0xf8] sm:$0xff] %vm280, %v247
    %313 = vst.msk [vmem:[#allocation2 + $0x100] sm:$0xff] %vm280, %v248
    %314 = vst.msk [vmem:[#allocation2 + $0x108] sm:$0xff] %vm280, %v249
    %315 = vst.msk [vmem:[#allocation2 + $0x110] sm:$0xff] %vm280, %v250
    %316 = vst.msk [vmem:[#allocation2 + $0x118] sm:$0xff] %vm280, %v251
    %317 = vst.msk [vmem:[#allocation2 + $0x120] sm:$0xff] %vm280, %v252
    %318 = vst.msk [vmem:[#allocation2 + $0x128] sm:$0xff] %vm280, %v253
    %319 = vst.msk [vmem:[#allocation2 + $0x130] sm:$0xff] %vm280, %v254
    %320 = vst.msk [vmem:[#allocation2 + $0x138] sm:$0xff] %vm280, %v255
    %321 = vst.msk [vmem:[#allocation2 + $0x140] sm:$0xff] %vm280, %v256
    %322 = vst.msk [vmem:[#allocation2 + $0x148] sm:$0xff] %vm280, %v257
    %323 = vst.msk [vmem:[#allocation2 + $0x150] sm:$0xff] %vm280, %v258
    %324 = vst.msk [vmem:[#allocation2 + $0x158] sm:$0xff] %vm280, %v259
    %325 = vst.msk [vmem:[#allocation2 + $0x160] sm:$0xff] %vm280, %v260
    %326 = vst.msk [vmem:[#allocation2 + $0x168] sm:$0xff] %vm280, %v261
    %327 = vst.msk [vmem:[#allocation2 + $0x170] sm:$0xff] %vm280, %v262
    %328 = vst.msk [vmem:[#allocation2 + $0x178] sm:$0xff] %vm280, %v263
    %329 = vst.msk [vmem:[#allocation2 + $0x180] sm:$0xff] %vm280, %v264
    %330 = vst.msk [vmem:[#allocation2 + $0x188] sm:$0xff] %vm280, %v265
    %331 = vst.msk [vmem:[#allocation2 + $0x190] sm:$0xff] %vm280, %v266
    %332 = vst.msk [vmem:[#allocation2 + $0x198] sm:$0xff] %vm280, %v267
    %333 = vst.msk [vmem:[#allocation2 + $0x1a0] sm:$0xff] %vm280, %v268
    %334 = vst.msk [vmem:[#allocation2 + $0x1a8] sm:$0xff] %vm280, %v269
    %335 = vst.msk [vmem:[#allocation2 + $0x1b0] sm:$0xff] %vm280, %v270
    %336 = vst.msk [vmem:[#allocation2 + $0x1b8] sm:$0xff] %vm280, %v271
    %337 = vst.msk [vmem:[#allocation2 + $0x1c0] sm:$0xff] %vm280, %v272
    %338 = vst.msk [vmem:[#allocation2 + $0x1c8] sm:$0xff] %vm280, %v273
    %339 = vst.msk [vmem:[#allocation2 + $0x1d0] sm:$0xff] %vm280, %v274
    %340 = vst.msk [vmem:[#allocation2 + $0x1d8] sm:$0xff] %vm280, %v275
    %341 = vst.msk [vmem:[#allocation2 + $0x1e0] sm:$0xff] %vm280, %v276
    %342 = vst.msk [vmem:[#allocation2 + $0x1e8] sm:$0xff] %vm280, %v277
    %343 = vst.msk [vmem:[#allocation2 + $0x1f0] sm:$0xff] %vm280, %v278
    %344 = vst.msk [vmem:[#allocation2 + $0x1f8] sm:$0xff] %vm280, %v279
    %v345 = vld [vmem:[%s0 + $0x1] sm:$0xff]
    %v346 = vld [vmem:[%s0 + $0x9] sm:$0xff]
    %v347 = vld [vmem:[%s0 + $0x19] sm:$0xff]
    %v348 = vld [vmem:[%s0 + $0x21] sm:$0xff]
    %v349 = vld [vmem:[%s0 + $0x31] sm:$0xff]
    %v350 = vld [vmem:[%s0 + $0x39] sm:$0xff]
    %v351 = vld [vmem:[%s0 + $0x49] sm:$0xff]
    %v352 = vld [vmem:[%s0 + $0x51] sm:$0xff]
    %v353 = vld [vmem:[%s0 + $0x61] sm:$0xff]
    %v354 = vld [vmem:[%s0 + $0x69] sm:$0xff]
    %v355 = vld [vmem:[%s0 + $0x79] sm:$0xff]
    %v356 = vld [vmem:[%s0 + $0x81] sm:$0xff]
    %v357 = vld [vmem:[%s0 + $0x91] sm:$0xff]
    %v358 = vld [vmem:[%s0 + $0x99] sm:$0xff]
    %v359 = vld [vmem:[%s0 + $0xa9] sm:$0xff]
    %v360 = vld [vmem:[%s0 + $0xb1] sm:$0xff]
    %v361 = vld [vmem:[%s0 + $0xc1] sm:$0xff]
    %v362 = vld [vmem:[%s0 + $0xc9] sm:$0xff]
    %v363 = vld [vmem:[%s0 + $0xd9] sm:$0xff]
    %v364 = vld [vmem:[%s0 + $0xe1] sm:$0xff]
    %v365 = vld [vmem:[%s0 + $0xf1] sm:$0xff]
    %v366 = vld [vmem:[%s0 + $0xf9] sm:$0xff]
    %v367 = vld [vmem:[%s0 + $0x109] sm:$0xff]
    %v368 = vld [vmem:[%s0 + $0x111] sm:$0xff]
    %v369 = vld [vmem:[%s0 + $0x121] sm:$0xff]
    %v370 = vld [vmem:[%s0 + $0x129] sm:$0xff]
    %v371 = vld [vmem:[%s0 + $0x139] sm:$0xff]
    %v372 = vld [vmem:[%s0 + $0x141] sm:$0xff]
    %v373 = vld [vmem:[%s0 + $0x151] sm:$0xff]
    %v374 = vld [vmem:[%s0 + $0x159] sm:$0xff]
    %v375 = vld [vmem:[%s0 + $0x169] sm:$0xff]
    %v376 = vld [vmem:[%s0 + $0x171] sm:$0xff]
    %v377 = vld [vmem:[%s0 + $0x1b1] sm:$0xff]
    %v378 = vld [vmem:[%s0 + $0x1b9] sm:$0xff]
    %v379 = vld [vmem:[%s0 + $0x1c9] sm:$0xff]
    %v380 = vld [vmem:[%s0 + $0x1d1] sm:$0xff]
    %v381 = vld [vmem:[%s0 + $0x1e1] sm:$0xff]
    %v382 = vld [vmem:[%s0 + $0x1e9] sm:$0xff]
    %v383 = vld [vmem:[%s0 + $0x1f9] sm:$0xff]
    %v384 = vld [vmem:[%s0 + $0x201] sm:$0xff]
    %v385 = vld [vmem:[%s0 + $0x211] sm:$0xff]
    %v386 = vld [vmem:[%s0 + $0x219] sm:$0xff]
    %v387 = vld [vmem:[%s0 + $0x229] sm:$0xff]
    %v388 = vld [vmem:[%s0 + $0x231] sm:$0xff]
    %v389 = vld [vmem:[%s0 + $0x241] sm:$0xff]
    %v390 = vld [vmem:[%s0 + $0x249] sm:$0xff]
    %v391 = vld [vmem:[%s0 + $0x259] sm:$0xff]
    %v392 = vld [vmem:[%s0 + $0x261] sm:$0xff]
    %v393 = vld [vmem:[%s0 + $0x271] sm:$0xff]
    %v394 = vld [vmem:[%s0 + $0x279] sm:$0xff]
    %v395 = vld [vmem:[%s0 + $0x289] sm:$0xff]
    %v396 = vld [vmem:[%s0 + $0x291] sm:$0xff]
    %v397 = vld [vmem:[%s0 + $0x2a1] sm:$0xff]
    %v398 = vld [vmem:[%s0 + $0x2a9] sm:$0xff]
    %v399 = vld [vmem:[%s0 + $0x2b9] sm:$0xff]
    %v400 = vld [vmem:[%s0 + $0x2c1] sm:$0xff]
    %v401 = vld [vmem:[%s0 + $0x2d1] sm:$0xff]
    %v402 = vld [vmem:[%s0 + $0x2d9] sm:$0xff]
    %v403 = vld [vmem:[%s0 + $0x2e9] sm:$0xff]
    %v404 = vld [vmem:[%s0 + $0x2f1] sm:$0xff]
    %v405 = vld [vmem:[%s0 + $0x301] sm:$0xff]
    %v406 = vld [vmem:[%s0 + $0x309] sm:$0xff]
    %v407 = vld [vmem:[%s0 + $0x319] sm:$0xff]
    %v408 = vld [vmem:[%s0 + $0x321] sm:$0xff]
    %473 = vrot.lane.b32.xlu0 %v345, 4
    %v474 = vpop.permute.xlu0 %473
    %475 = vrot.lane.b32.xlu0 %v346, 4
    %v476 = vpop.permute.xlu0 %475
    %477 = vrot.lane.b32.xlu0 %v347, 4
    %v478 = vpop.permute.xlu0 %477
    %479 = vrot.lane.b32.xlu0 %v348, 4
    %v480 = vpop.permute.xlu0 %479
    %481 = vrot.lane.b32.xlu0 %v349, 4
    %v482 = vpop.permute.xlu0 %481
    %483 = vrot.lane.b32.xlu0 %v350, 4
    %v484 = vpop.permute.xlu0 %483
    %485 = vrot.lane.b32.xlu0 %v351, 4
    %v486 = vpop.permute.xlu0 %485
    %487 = vrot.lane.b32.xlu0 %v352, 4
    %v488 = vpop.permute.xlu0 %487
    %489 = vrot.lane.b32.xlu0 %v353, 4
    %v490 = vpop.permute.xlu0 %489
    %491 = vrot.lane.b32.xlu0 %v354, 4
    %v492 = vpop.permute.xlu0 %491
    %493 = vrot.lane.b32.xlu0 %v355, 4
    %v494 = vpop.permute.xlu0 %493
    %495 = vrot.lane.b32.xlu0 %v356, 4
    %v496 = vpop.permute.xlu0 %495
    %497 = vrot.lane.b32.xlu0 %v357, 4
    %v498 = vpop.permute.xlu0 %497
    %499 = vrot.lane.b32.xlu0 %v358, 4
    %v500 = vpop.permute.xlu0 %499
    %501 = vrot.lane.b32.xlu0 %v359, 4
    %v502 = vpop.permute.xlu0 %501
    %503 = vrot.lane.b32.xlu0 %v360, 4
    %v504 = vpop.permute.xlu0 %503
    %505 = vrot.lane.b32.xlu0 %v361, 4
    %v506 = vpop.permute.xlu0 %505
    %507 = vrot.lane.b32.xlu0 %v362, 4
    %v508 = vpop.permute.xlu0 %507
    %509 = vrot.lane.b32.xlu0 %v363, 4
    %v510 = vpop.permute.xlu0 %509
    %511 = vrot.lane.b32.xlu0 %v364, 4
    %v512 = vpop.permute.xlu0 %511
    %513 = vrot.lane.b32.xlu0 %v365, 4
    %v514 = vpop.permute.xlu0 %513
    %515 = vrot.lane.b32.xlu0 %v366, 4
    %v516 = vpop.permute.xlu0 %515
    %517 = vrot.lane.b32.xlu0 %v367, 4
    %v518 = vpop.permute.xlu0 %517
    %519 = vrot.lane.b32.xlu0 %v368, 4
    %v520 = vpop.permute.xlu0 %519
    %521 = vrot.lane.b32.xlu0 %v369, 4
    %v522 = vpop.permute.xlu0 %521
    %523 = vrot.lane.b32.xlu0 %v370, 4
    %v524 = vpop.permute.xlu0 %523
    %525 = vrot.lane.b32.xlu0 %v371, 4
    %v526 = vpop.permute.xlu0 %525
    %527 = vrot.lane.b32.xlu0 %v372, 4
    %v528 = vpop.permute.xlu0 %527
    %529 = vrot.lane.b32.xlu0 %v373, 4
    %v530 = vpop.permute.xlu0 %529
    %531 = vrot.lane.b32.xlu0 %v374, 4
    %v532 = vpop.permute.xlu0 %531
    %533 = vrot.lane.b32.xlu0 %v375, 4
    %v534 = vpop.permute.xlu0 %533
    %535 = vrot.lane.b32.xlu0 %v376, 4
    %v536 = vpop.permute.xlu0 %535
    %537 = vrot.lane.b32.xlu0 %v377, 4
    %v538 = vpop.permute.xlu0 %537
    %539 = vrot.lane.b32.xlu0 %v378, 4
    %v540 = vpop.permute.xlu0 %539
    %541 = vrot.lane.b32.xlu0 %v379, 4
    %v542 = vpop.permute.xlu0 %541
    %543 = vrot.lane.b32.xlu0 %v380, 4
    %v544 = vpop.permute.xlu0 %543
    %545 = vrot.lane.b32.xlu0 %v381, 4
    %v546 = vpop.permute.xlu0 %545
    %547 = vrot.lane.b32.xlu0 %v382, 4
    %v548 = vpop.permute.xlu0 %547
    %549 = vrot.lane.b32.xlu0 %v383, 4
    %v550 = vpop.permute.xlu0 %549
    %551 = vrot.lane.b32.xlu0 %v384, 4
    %v552 = vpop.permute.xlu0 %551
    %553 = vrot.lane.b32.xlu0 %v385, 4
    %v554 = vpop.permute.xlu0 %553
    %555 = vrot.lane.b32.xlu0 %v386, 4
    %v556 = vpop.permute.xlu0 %555
    %557 = vrot.lane.b32.xlu0 %v387, 4
    %v558 = vpop.permute.xlu0 %557
    %559 = vrot.lane.b32.xlu0 %v388, 4
    %v560 = vpop.permute.xlu0 %559
    %561 = vrot.lane.b32.xlu0 %v389, 4
    %v562 = vpop.permute.xlu0 %561
    %563 = vrot.lane.b32.xlu0 %v390, 4
    %v564 = vpop.permute.xlu0 %563
    %565 = vrot.lane.b32.xlu0 %v391, 4
    %v566 = vpop.permute.xlu0 %565
    %567 = vrot.lane.b32.xlu0 %v392, 4
    %v568 = vpop.permute.xlu0 %567
    %569 = vrot.lane.b32.xlu0 %v393, 4
    %v570 = vpop.permute.xlu0 %569
    %571 = vrot.lane.b32.xlu0 %v394, 4
    %v572 = vpop.permute.xlu0 %571
    %573 = vrot.lane.b32.xlu0 %v395, 4
    %v574 = vpop.permute.xlu0 %573
    %575 = vrot.lane.b32.xlu0 %v396, 4
    %v576 = vpop.permute.xlu0 %575
    %577 = vrot.lane.b32.xlu0 %v397, 4
    %v578 = vpop.permute.xlu0 %577
    %579 = vrot.lane.b32.xlu0 %v398, 4
    %v580 = vpop.permute.xlu0 %579
    %581 = vrot.lane.b32.xlu0 %v399, 4
    %v582 = vpop.permute.xlu0 %581
    %583 = vrot.lane.b32.xlu0 %v400, 4
    %v584 = vpop.permute.xlu0 %583
    %585 = vrot.lane.b32.xlu0 %v401, 4
    %v586 = vpop.permute.xlu0 %585
    %587 = vrot.lane.b32.xlu0 %v402, 4
    %v588 = vpop.permute.xlu0 %587
    %589 = vrot.lane.b32.xlu0 %v403, 4
    %v590 = vpop.permute.xlu0 %589
    %591 = vrot.lane.b32.xlu0 %v404, 4
    %v592 = vpop.permute.xlu0 %591
    %593 = vrot.lane.b32.xlu0 %v405, 4
    %v594 = vpop.permute.xlu0 %593
    %595 = vrot.lane.b32.xlu0 %v406, 4
    %v596 = vpop.permute.xlu0 %595
    %597 = vrot.lane.b32.xlu0 %v407, 4
    %v598 = vpop.permute.xlu0 %597
    %599 = vrot.lane.b32.xlu0 %v408, 4
    %v600 = vpop.permute.xlu0 %599
    %vm665 = vcmask 64544
    %666 = vst.msk [vmem:[#allocation2] sm:$0xff] %vm665, %v474
    %667 = vst.msk [vmem:[#allocation2 + $0x8] sm:$0xff] %vm665, %v476
    %668 = vst.msk [vmem:[#allocation2 + $0x10] sm:$0xff] %vm665, %v478
    %669 = vst.msk [vmem:[#allocation2 + $0x18] sm:$0xff] %vm665, %v480
    %670 = vst.msk [vmem:[#allocation2 + $0x20] sm:$0xff] %vm665, %v482
    %671 = vst.msk [vmem:[#allocation2 + $0x28] sm:$0xff] %vm665, %v484
    %672 = vst.msk [vmem:[#allocation2 + $0x30] sm:$0xff] %vm665, %v486
    %673 = vst.msk [vmem:[#allocation2 + $0x38] sm:$0xff] %vm665, %v488
    %674 = vst.msk [vmem:[#allocation2 + $0x40] sm:$0xff] %vm665, %v490
    %675 = vst.msk [vmem:[#allocation2 + $0x48] sm:$0xff] %vm665, %v492
    %676 = vst.msk [vmem:[#allocation2 + $0x50] sm:$0xff] %vm665, %v494
    %677 = vst.msk [vmem:[#allocation2 + $0x58] sm:$0xff] %vm665, %v496
    %678 = vst.msk [vmem:[#allocation2 + $0x60] sm:$0xff] %vm665, %v498
    %679 = vst.msk [vmem:[#allocation2 + $0x68] sm:$0xff] %vm665, %v500
    %680 = vst.msk [vmem:[#allocation2 + $0x70] sm:$0xff] %vm665, %v502
    %681 = vst.msk [vmem:[#allocation2 + $0x78] sm:$0xff] %vm665, %v504
    %682 = vst.msk [vmem:[#allocation2 + $0x80] sm:$0xff] %vm665, %v506
    %683 = vst.msk [vmem:[#allocation2 + $0x88] sm:$0xff] %vm665, %v508
    %684 = vst.msk [vmem:[#allocation2 + $0x90] sm:$0xff] %vm665, %v510
    %685 = vst.msk [vmem:[#allocation2 + $0x98] sm:$0xff] %vm665, %v512
    %686 = vst.msk [vmem:[#allocation2 + $0xa0] sm:$0xff] %vm665, %v514
    %687 = vst.msk [vmem:[#allocation2 + $0xa8] sm:$0xff] %vm665, %v516
    %688 = vst.msk [vmem:[#allocation2 + $0xb0] sm:$0xff] %vm665, %v518
    %689 = vst.msk [vmem:[#allocation2 + $0xb8] sm:$0xff] %vm665, %v520
    %690 = vst.msk [vmem:[#allocation2 + $0xc0] sm:$0xff] %vm665, %v522
    %691 = vst.msk [vmem:[#allocation2 + $0xc8] sm:$0xff] %vm665, %v524
    %692 = vst.msk [vmem:[#allocation2 + $0xd0] sm:$0xff] %vm665, %v526
    %693 = vst.msk [vmem:[#allocation2 + $0xd8] sm:$0xff] %vm665, %v528
    %694 = vst.msk [vmem:[#allocation2 + $0xe0] sm:$0xff] %vm665, %v530
    %695 = vst.msk [vmem:[#allocation2 + $0xe8] sm:$0xff] %vm665, %v532
    %696 = vst.msk [vmem:[#allocation2 + $0xf0] sm:$0xff] %vm665, %v534
    %697 = vst.msk [vmem:[#allocation2 + $0xf8] sm:$0xff] %vm665, %v536
    %698 = vst.msk [vmem:[#allocation2 + $0x100] sm:$0xff] %vm665, %v538
    %699 = vst.msk [vmem:[#allocation2 + $0x108] sm:$0xff] %vm665, %v540
    %700 = vst.msk [vmem:[#allocation2 + $0x110] sm:$0xff] %vm665, %v542
    %701 = vst.msk [vmem:[#allocation2 + $0x118] sm:$0xff] %vm665, %v544
    %702 = vst.msk [vmem:[#allocation2 + $0x120] sm:$0xff] %vm665, %v546
    %703 = vst.msk [vmem:[#allocation2 + $0x128] sm:$0xff] %vm665, %v548
    %704 = vst.msk [vmem:[#allocation2 + $0x130] sm:$0xff] %vm665, %v550
    %705 = vst.msk [vmem:[#allocation2 + $0x138] sm:$0xff] %vm665, %v552
    %706 = vst.msk [vmem:[#allocation2 + $0x140] sm:$0xff] %vm665, %v554
    %707 = vst.msk [vmem:[#allocation2 + $0x148] sm:$0xff] %vm665, %v556
    %708 = vst.msk [vmem:[#allocation2 + $0x150] sm:$0xff] %vm665, %v558
    %709 = vst.msk [vmem:[#allocation2 + $0x158] sm:$0xff] %vm665, %v560
    %710 = vst.msk [vmem:[#allocation2 + $0x160] sm:$0xff] %vm665, %v562
    %711 = vst.msk [vmem:[#allocation2 + $0x168] sm:$0xff] %vm665, %v564
    %712 = vst.msk [vmem:[#allocation2 + $0x170] sm:$0xff] %vm665, %v566
    %713 = vst.msk [vmem:[#allocation2 + $0x178] sm:$0xff] %vm665, %v568
    %714 = vst.msk [vmem:[#allocation2 + $0x180] sm:$0xff] %vm665, %v570
    %715 = vst.msk [vmem:[#allocation2 + $0x188] sm:$0xff] %vm665, %v572
    %716 = vst.msk [vmem:[#allocation2 + $0x190] sm:$0xff] %vm665, %v574
    %717 = vst.msk [vmem:[#allocation2 + $0x198] sm:$0xff] %vm665, %v576
    %718 = vst.msk [vmem:[#allocation2 + $0x1a0] sm:$0xff] %vm665, %v578
    %719 = vst.msk [vmem:[#allocation2 + $0x1a8] sm:$0xff] %vm665, %v580
    %720 = vst.msk [vmem:[#allocation2 + $0x1b0] sm:$0xff] %vm665, %v582
    %721 = vst.msk [vmem:[#allocation2 + $0x1b8] sm:$0xff] %vm665, %v584
    %722 = vst.msk [vmem:[#allocation2 + $0x1c0] sm:$0xff] %vm665, %v586
    %723 = vst.msk [vmem:[#allocation2 + $0x1c8] sm:$0xff] %vm665, %v588
    %724 = vst.msk [vmem:[#allocation2 + $0x1d0] sm:$0xff] %vm665, %v590
    %725 = vst.msk [vmem:[#allocation2 + $0x1d8] sm:$0xff] %vm665, %v592
    %726 = vst.msk [vmem:[#allocation2 + $0x1e0] sm:$0xff] %vm665, %v594
    %727 = vst.msk [vmem:[#allocation2 + $0x1e8] sm:$0xff] %vm665, %v596
    %728 = vst.msk [vmem:[#allocation2 + $0x1f0] sm:$0xff] %vm665, %v598
    %729 = vst.msk [vmem:[#allocation2 + $0x1f8] sm:$0xff] %vm665, %v600
    %v730 = vld [vmem:[%s0 + $0x2] sm:$0xff]
    %v731 = vld [vmem:[%s0 + $0xa] sm:$0xff]
    %v732 = vld [vmem:[%s0 + $0x1a] sm:$0xff]
    %v733 = vld [vmem:[%s0 + $0x22] sm:$0xff]
    %v734 = vld [vmem:[%s0 + $0x32] sm:$0xff]
    %v735 = vld [vmem:[%s0 + $0x3a] sm:$0xff]
    %v736 = vld [vmem:[%s0 + $0x4a] sm:$0xff]
    %v737 = vld [vmem:[%s0 + $0x52] sm:$0xff]
    %v738 = vld [vmem:[%s0 + $0x62] sm:$0xff]
    %v739 = vld [vmem:[%s0 + $0x6a] sm:$0xff]
    %v740 = vld [vmem:[%s0 + $0x7a] sm:$0xff]
    %v741 = vld [vmem:[%s0 + $0x82] sm:$0xff]
    %v742 = vld [vmem:[%s0 + $0x92] sm:$0xff]
    %v743 = vld [vmem:[%s0 + $0x9a] sm:$0xff]
    %v744 = vld [vmem:[%s0 + $0xaa] sm:$0xff]
    %v745 = vld [vmem:[%s0 + $0xb2] sm:$0xff]
    %v746 = vld [vmem:[%s0 + $0xc2] sm:$0xff]
    %v747 = vld [vmem:[%s0 + $0xca] sm:$0xff]
    %v748 = vld [vmem:[%s0 + $0xda] sm:$0xff]
    %v749 = vld [vmem:[%s0 + $0xe2] sm:$0xff]
    %v750 = vld [vmem:[%s0 + $0xf2] sm:$0xff]
    %v751 = vld [vmem:[%s0 + $0xfa] sm:$0xff]
    %v752 = vld [vmem:[%s0 + $0x10a] sm:$0xff]
    %v753 = vld [vmem:[%s0 + $0x112] sm:$0xff]
    %v754 = vld [vmem:[%s0 + $0x122] sm:$0xff]
    %v755 = vld [vmem:[%s0 + $0x12a] sm:$0xff]
    %v756 = vld [vmem:[%s0 + $0x13a] sm:$0xff]
    %v757 = vld [vmem:[%s0 + $0x142] sm:$0xff]
    %v758 = vld [vmem:[%s0 + $0x152] sm:$0xff]
    %v759 = vld [vmem:[%s0 + $0x15a] sm:$0xff]
    %v760 = vld [vmem:[%s0 + $0x16a] sm:$0xff]
    %v761 = vld [vmem:[%s0 + $0x172] sm:$0xff]
    %v762 = vld [vmem:[%s0 + $0x1b2] sm:$0xff]
    %v763 = vld [vmem:[%s0 + $0x1ba] sm:$0xff]
    %v764 = vld [vmem:[%s0 + $0x1ca] sm:$0xff]
    %v765 = vld [vmem:[%s0 + $0x1d2] sm:$0xff]
    %v766 = vld [vmem:[%s0 + $0x1e2] sm:$0xff]
    %v767 = vld [vmem:[%s0 + $0x1ea] sm:$0xff]
    %v768 = vld [vmem:[%s0 + $0x1fa] sm:$0xff]
    %v769 = vld [vmem:[%s0 + $0x202] sm:$0xff]
    %v770 = vld [vmem:[%s0 + $0x212] sm:$0xff]
    %v771 = vld [vmem:[%s0 + $0x21a] sm:$0xff]
    %v772 = vld [vmem:[%s0 + $0x22a] sm:$0xff]
    %v773 = vld [vmem:[%s0 + $0x232] sm:$0xff]
    %v774 = vld [vmem:[%s0 + $0x242] sm:$0xff]
    %v775 = vld [vmem:[%s0 + $0x24a] sm:$0xff]
    %v776 = vld [vmem:[%s0 + $0x25a] sm:$0xff]
    %v777 = vld [vmem:[%s0 + $0x262] sm:$0xff]
    %v778 = vld [vmem:[%s0 + $0x272] sm:$0xff]
    %v779 = vld [vmem:[%s0 + $0x27a] sm:$0xff]
    %v780 = vld [vmem:[%s0 + $0x28a] sm:$0xff]
    %v781 = vld [vmem:[%s0 + $0x292] sm:$0xff]
    %v782 = vld [vmem:[%s0 + $0x2a2] sm:$0xff]
    %v783 = vld [vmem:[%s0 + $0x2aa] sm:$0xff]
    %v784 = vld [vmem:[%s0 + $0x2ba] sm:$0xff]
    %v785 = vld [vmem:[%s0 + $0x2c2] sm:$0xff]
    %v786 = vld [vmem:[%s0 + $0x2d2] sm:$0xff]
    %v787 = vld [vmem:[%s0 + $0x2da] sm:$0xff]
    %v788 = vld [vmem:[%s0 + $0x2ea] sm:$0xff]
    %v789 = vld [vmem:[%s0 + $0x2f2] sm:$0xff]
    %v790 = vld [vmem:[%s0 + $0x302] sm:$0xff]
    %v791 = vld [vmem:[%s0 + $0x30a] sm:$0xff]
    %v792 = vld [vmem:[%s0 + $0x31a] sm:$0xff]
    %v793 = vld [vmem:[%s0 + $0x322] sm:$0xff]
    %858 = vrot.lane.b32.xlu0 %v730, 8
    %v859 = vpop.permute.xlu0 %858
    %860 = vrot.lane.b32.xlu0 %v731, 8
    %v861 = vpop.permute.xlu0 %860
    %862 = vrot.lane.b32.xlu0 %v732, 8
    %v863 = vpop.permute.xlu0 %862
    %864 = vrot.lane.b32.xlu0 %v733, 8
    %v865 = vpop.permute.xlu0 %864
    %866 = vrot.lane.b32.xlu0 %v734, 8
    %v867 = vpop.permute.xlu0 %866
    %868 = vrot.lane.b32.xlu0 %v735, 8
    %v869 = vpop.permute.xlu0 %868
    %870 = vrot.lane.b32.xlu0 %v736, 8
    %v871 = vpop.permute.xlu0 %870
    %872 = vrot.lane.b32.xlu0 %v737, 8
    %v873 = vpop.permute.xlu0 %872
    %874 = vrot.lane.b32.xlu0 %v738, 8
    %v875 = vpop.permute.xlu0 %874
    %876 = vrot.lane.b32.xlu0 %v739, 8
    %v877 = vpop.permute.xlu0 %876
    %878 = vrot.lane.b32.xlu0 %v740, 8
    %v879 = vpop.permute.xlu0 %878
    %880 = vrot.lane.b32.xlu0 %v741, 8
    %v881 = vpop.permute.xlu0 %880
    %882 = vrot.lane.b32.xlu0 %v742, 8
    %v883 = vpop.permute.xlu0 %882
    %884 = vrot.lane.b32.xlu0 %v743, 8
    %v885 = vpop.permute.xlu0 %884
    %886 = vrot.lane.b32.xlu0 %v744, 8
    %v887 = vpop.permute.xlu0 %886
    %888 = vrot.lane.b32.xlu0 %v745, 8
    %v889 = vpop.permute.xlu0 %888
    %890 = vrot.lane.b32.xlu0 %v746, 8
    %v891 = vpop.permute.xlu0 %890
    %892 = vrot.lane.b32.xlu0 %v747, 8
    %v893 = vpop.permute.xlu0 %892
    %894 = vrot.lane.b32.xlu0 %v748, 8
    %v895 = vpop.permute.xlu0 %894
    %896 = vrot.lane.b32.xlu0 %v749, 8
    %v897 = vpop.permute.xlu0 %896
    %898 = vrot.lane.b32.xlu0 %v750, 8
    %v899 = vpop.permute.xlu0 %898
    %900 = vrot.lane.b32.xlu0 %v751, 8
    %v901 = vpop.permute.xlu0 %900
    %902 = vrot.lane.b32.xlu0 %v752, 8
    %v903 = vpop.permute.xlu0 %902
    %904 = vrot.lane.b32.xlu0 %v753, 8
    %v905 = vpop.permute.xlu0 %904
    %906 = vrot.lane.b32.xlu0 %v754, 8
    %v907 = vpop.permute.xlu0 %906
    %908 = vrot.lane.b32.xlu0 %v755, 8
    %v909 = vpop.permute.xlu0 %908
    %910 = vrot.lane.b32.xlu0 %v756, 8
    %v911 = vpop.permute.xlu0 %910
    %912 = vrot.lane.b32.xlu0 %v757, 8
    %v913 = vpop.permute.xlu0 %912
    %914 = vrot.lane.b32.xlu0 %v758, 8
    %v915 = vpop.permute.xlu0 %914
    %916 = vrot.lane.b32.xlu0 %v759, 8
    %v917 = vpop.permute.xlu0 %916
    %918 = vrot.lane.b32.xlu0 %v760, 8
    %v919 = vpop.permute.xlu0 %918
    %920 = vrot.lane.b32.xlu0 %v761, 8
    %v921 = vpop.permute.xlu0 %920
    %922 = vrot.lane.b32.xlu0 %v762, 8
    %v923 = vpop.permute.xlu0 %922
    %924 = vrot.lane.b32.xlu0 %v763, 8
    %v925 = vpop.permute.xlu0 %924
    %926 = vrot.lane.b32.xlu0 %v764, 8
    %v927 = vpop.permute.xlu0 %926
    %928 = vrot.lane.b32.xlu0 %v765, 8
    %v929 = vpop.permute.xlu0 %928
    %930 = vrot.lane.b32.xlu0 %v766, 8
    %v931 = vpop.permute.xlu0 %930
    %932 = vrot.lane.b32.xlu0 %v767, 8
    %v933 = vpop.permute.xlu0 %932
    %934 = vrot.lane.b32.xlu0 %v768, 8
    %v935 = vpop.permute.xlu0 %934
    %936 = vrot.lane.b32.xlu0 %v769, 8
    %v937 = vpop.permute.xlu0 %936
    %938 = vrot.lane.b32.xlu0 %v770, 8
    %v939 = vpop.permute.xlu0 %938
    %940 = vrot.lane.b32.xlu0 %v771, 8
    %v941 = vpop.permute.xlu0 %940
    %942 = vrot.lane.b32.xlu0 %v772, 8
    %v943 = vpop.permute.xlu0 %942
    %944 = vrot.lane.b32.xlu0 %v773, 8
    %v945 = vpop.permute.xlu0 %944
    %946 = vrot.lane.b32.xlu0 %v774, 8
    %v947 = vpop.permute.xlu0 %946
    %948 = vrot.lane.b32.xlu0 %v775, 8
    %v949 = vpop.permute.xlu0 %948
    %950 = vrot.lane.b32.xlu0 %v776, 8
    %v951 = vpop.permute.xlu0 %950
    %952 = vrot.lane.b32.xlu0 %v777, 8
    %v953 = vpop.permute.xlu0 %952
    %954 = vrot.lane.b32.xlu0 %v778, 8
    %v955 = vpop.permute.xlu0 %954
    %956 = vrot.lane.b32.xlu0 %v779, 8
    %v957 = vpop.permute.xlu0 %956
    %958 = vrot.lane.b32.xlu0 %v780, 8
    %v959 = vpop.permute.xlu0 %958
    %960 = vrot.lane.b32.xlu0 %v781, 8
    %v961 = vpop.permute.xlu0 %960
    %962 = vrot.lane.b32.xlu0 %v782, 8
    %v963 = vpop.permute.xlu0 %962
    %964 = vrot.lane.b32.xlu0 %v783, 8
    %v965 = vpop.permute.xlu0 %964
    %966 = vrot.lane.b32.xlu0 %v784, 8
    %v967 = vpop.permute.xlu0 %966
    %968 = vrot.lane.b32.xlu0 %v785, 8
    %v969 = vpop.permute.xlu0 %968
    %970 = vrot.lane.b32.xlu0 %v786, 8
    %v971 = vpop.permute.xlu0 %970
    %972 = vrot.lane.b32.xlu0 %v787, 8
    %v973 = vpop.permute.xlu0 %972
    %974 = vrot.lane.b32.xlu0 %v788, 8
    %v975 = vpop.permute.xlu0 %974
    %976 = vrot.lane.b32.xlu0 %v789, 8
    %v977 = vpop.permute.xlu0 %976
    %978 = vrot.lane.b32.xlu0 %v790, 8
    %v979 = vpop.permute.xlu0 %978
    %980 = vrot.lane.b32.xlu0 %v791, 8
    %v981 = vpop.permute.xlu0 %980
    %982 = vrot.lane.b32.xlu0 %v792, 8
    %v983 = vpop.permute.xlu0 %982
    %984 = vrot.lane.b32.xlu0 %v793, 8
    %v985 = vpop.permute.xlu0 %984
    %vm1050 = vcmask 97344
    %1051 = vst.msk [vmem:[#allocation2] sm:$0xff] %vm1050, %v859
    %1052 = vst.msk [vmem:[#allocation2 + $0x8] sm:$0xff] %vm1050, %v861
    %1053 = vst.msk [vmem:[#allocation2 + $0x10] sm:$0xff] %vm1050, %v863
    %1054 = vst.msk [vmem:[#allocation2 + $0x18] sm:$0xff] %vm1050, %v865
    %1055 = vst.msk [vmem:[#allocation2 + $0x20] sm:$0xff] %vm1050, %v867
    %1056 = vst.msk [vmem:[#allocation2 + $0x28] sm:$0xff] %vm1050, %v869
    %1057 = vst.msk [vmem:[#allocation2 + $0x30] sm:$0xff] %vm1050, %v871
    %1058 = vst.msk [vmem:[#allocation2 + $0x38] sm:$0xff] %vm1050, %v873
    %1059 = vst.msk [vmem:[#allocation2 + $0x40] sm:$0xff] %vm1050, %v875
    %1060 = vst.msk [vmem:[#allocation2 + $0x48] sm:$0xff] %vm1050, %v877
    %1061 = vst.msk [vmem:[#allocation2 + $0x50] sm:$0xff] %vm1050, %v879
    %1062 = vst.msk [vmem:[#allocation2 + $0x58] sm:$0xff] %vm1050, %v881
    %1063 = vst.msk [vmem:[#allocation2 + $0x60] sm:$0xff] %vm1050, %v883
    %1064 = vst.msk [vmem:[#allocation2 + $0x68] sm:$0xff] %vm1050, %v885
    %1065 = vst.msk [vmem:[#allocation2 + $0x70] sm:$0xff] %vm1050, %v887
    %1066 = vst.msk [vmem:[#allocation2 + $0x78] sm:$0xff] %vm1050, %v889
    %1067 = vst.msk [vmem:[#allocation2 + $0x80] sm:$0xff] %vm1050, %v891
    %1068 = vst.msk [vmem:[#allocation2 + $0x88] sm:$0xff] %vm1050, %v893
    %1069 = vst.msk [vmem:[#allocation2 + $0x90] sm:$0xff] %vm1050, %v895
    %1070 = vst.msk [vmem:[#allocation2 + $0x98] sm:$0xff] %vm1050, %v897
    %1071 = vst.msk [vmem:[#allocation2 + $0xa0] sm:$0xff] %vm1050, %v899
    %1072 = vst.msk [vmem:[#allocation2 + $0xa8] sm:$0xff] %vm1050, %v901
    %1073 = vst.msk [vmem:[#allocation2 + $0xb0] sm:$0xff] %vm1050, %v903
    %1074 = vst.msk [vmem:[#allocation2 + $0xb8] sm:$0xff] %vm1050, %v905
    %1075 = vst.msk [vmem:[#allocation2 + $0xc0] sm:$0xff] %vm1050, %v907
    %1076 = vst.msk [vmem:[#allocation2 + $0xc8] sm:$0xff] %vm1050, %v909
    %1077 = vst.msk [vmem:[#allocation2 + $0xd0] sm:$0xff] %vm1050, %v911
    %1078 = vst.msk [vmem:[#allocation2 + $0xd8] sm:$0xff] %vm1050, %v913
    %1079 = vst.msk [vmem:[#allocation2 + $0xe0] sm:$0xff] %vm1050, %v915
    %1080 = vst.msk [vmem:[#allocation2 + $0xe8] sm:$0xff] %vm1050, %v917
    %1081 = vst.msk [vmem:[#allocation2 + $0xf0] sm:$0xff] %vm1050, %v919
    %1082 = vst.msk [vmem:[#allocation2 + $0xf8] sm:$0xff] %vm1050, %v921
    %1083 = vst.msk [vmem:[#allocation2 + $0x100] sm:$0xff] %vm1050, %v923
    %1084 = vst.msk [vmem:[#allocation2 + $0x108] sm:$0xff] %vm1050, %v925
    %1085 = vst.msk [vmem:[#allocation2 + $0x110] sm:$0xff] %vm1050, %v927
    %1086 = vst.msk [vmem:[#allocation2 + $0x118] sm:$0xff] %vm1050, %v929
    %1087 = vst.msk [vmem:[#allocation2 + $0x120] sm:$0xff] %vm1050, %v931
    %1088 = vst.msk [vmem:[#allocation2 + $0x128] sm:$0xff] %vm1050, %v933
    %1089 = vst.msk [vmem:[#allocation2 + $0x130] sm:$0xff] %vm1050, %v935
    %1090 = vst.msk [vmem:[#allocation2 + $0x138] sm:$0xff] %vm1050, %v937
    %1091 = vst.msk [vmem:[#allocation2 + $0x140] sm:$0xff] %vm1050, %v939
    %1092 = vst.msk [vmem:[#allocation2 + $0x148] sm:$0xff] %vm1050, %v941
    %1093 = vst.msk [vmem:[#allocation2 + $0x150] sm:$0xff] %vm1050, %v943
    %1094 = vst.msk [vmem:[#allocation2 + $0x158] sm:$0xff] %vm1050, %v945
    %1095 = vst.msk [vmem:[#allocation2 + $0x160] sm:$0xff] %vm1050, %v947
    %1096 = vst.msk [vmem:[#allocation2 + $0x168] sm:$0xff] %vm1050, %v949
    %1097 = vst.msk [vmem:[#allocation2 + $0x170] sm:$0xff] %vm1050, %v951
    %1098 = vst.msk [vmem:[#allocation2 + $0x178] sm:$0xff] %vm1050, %v953
    %1099 = vst.msk [vmem:[#allocation2 + $0x180] sm:$0xff] %vm1050, %v955
    %1100 = vst.msk [vmem:[#allocation2 + $0x188] sm:$0xff] %vm1050, %v957
    %1101 = vst.msk [vmem:[#allocation2 + $0x190] sm:$0xff] %vm1050, %v959
    %1102 = vst.msk [vmem:[#allocation2 + $0x198] sm:$0xff] %vm1050, %v961
    %1103 = vst.msk [vmem:[#allocation2 + $0x1a0] sm:$0xff] %vm1050, %v963
    %1104 = vst.msk [vmem:[#allocation2 + $0x1a8] sm:$0xff] %vm1050, %v965
    %1105 = vst.msk [vmem:[#allocation2 + $0x1b0] sm:$0xff] %vm1050, %v967
    %1106 = vst.msk [vmem:[#allocation2 + $0x1b8] sm:$0xff] %vm1050, %v969
    %1107 = vst.msk [vmem:[#allocation2 + $0x1c0] sm:$0xff] %vm1050, %v971
    %1108 = vst.msk [vmem:[#allocation2 + $0x1c8] sm:$0xff] %vm1050, %v973
    %1109 = vst.msk [vmem:[#allocation2 + $0x1d0] sm:$0xff] %vm1050, %v975
    %1110 = vst.msk [vmem:[#allocation2 + $0x1d8] sm:$0xff] %vm1050, %v977
    %1111 = vst.msk [vmem:[#allocation2 + $0x1e0] sm:$0xff] %vm1050, %v979
    %1112 = vst.msk [vmem:[#allocation2 + $0x1e8] sm:$0xff] %vm1050, %v981
    %1113 = vst.msk [vmem:[#allocation2 + $0x1f0] sm:$0xff] %vm1050, %v983
    %1114 = vst.msk [vmem:[#allocation2 + $0x1f8] sm:$0xff] %vm1050, %v985
    %s1115 = scalar_lea.vmem %s0, 24
    %v1116 = vld [vmem:[%s1115] sm:$0xff]
    %v1117 = vld [vmem:[%s1115 + $0x8] sm:$0xff]
    %v1118 = vld [vmem:[%s1115 + $0x18] sm:$0xff]
    %v1119 = vld [vmem:[%s1115 + $0x20] sm:$0xff]
    %v1120 = vld [vmem:[%s1115 + $0x30] sm:$0xff]
    %v1121 = vld [vmem:[%s1115 + $0x38] sm:$0xff]
    %v1122 = vld [vmem:[%s1115 + $0x48] sm:$0xff]
    %v1123 = vld [vmem:[%s1115 + $0x50] sm:$0xff]
    %v1124 = vld [vmem:[%s1115 + $0x60] sm:$0xff]
    %v1125 = vld [vmem:[%s1115 + $0x68] sm:$0xff]
    %v1126 = vld [vmem:[%s1115 + $0x78] sm:$0xff]
    %v1127 = vld [vmem:[%s1115 + $0x80] sm:$0xff]
    %v1128 = vld [vmem:[%s1115 + $0x90] sm:$0xff]
    %v1129 = vld [vmem:[%s1115 + $0x98] sm:$0xff]
    %v1130 = vld [vmem:[%s1115 + $0xa8] sm:$0xff]
    %v1131 = vld [vmem:[%s1115 + $0xb0] sm:$0xff]
    %v1132 = vld [vmem:[%s1115 + $0xc0] sm:$0xff]
    %v1133 = vld [vmem:[%s1115 + $0xc8] sm:$0xff]
    %v1134 = vld [vmem:[%s1115 + $0xd8] sm:$0xff]
    %v1135 = vld [vmem:[%s1115 + $0xe0] sm:$0xff]
    %v1136 = vld [vmem:[%s1115 + $0xf0] sm:$0xff]
    %v1137 = vld [vmem:[%s1115 + $0xf8] sm:$0xff]
    %v1138 = vld [vmem:[%s1115 + $0x108] sm:$0xff]
    %v1139 = vld [vmem:[%s1115 + $0x110] sm:$0xff]
    %v1140 = vld [vmem:[%s1115 + $0x120] sm:$0xff]
    %v1141 = vld [vmem:[%s1115 + $0x128] sm:$0xff]
    %v1142 = vld [vmem:[%s1115 + $0x138] sm:$0xff]
    %v1143 = vld [vmem:[%s1115 + $0x140] sm:$0xff]
    %v1144 = vld [vmem:[%s1115 + $0x150] sm:$0xff]
    %v1145 = vld [vmem:[%s1115 + $0x158] sm:$0xff]
    %v1146 = vld [vmem:[%s1115 + $0x168] sm:$0xff]
    %v1147 = vld [vmem:[%s1115 + $0x170] sm:$0xff]
    %v1148 = vld [vmem:[%s1115 + $0x1b0] sm:$0xff]
    %v1149 = vld [vmem:[%s1115 + $0x1b8] sm:$0xff]
    %v1150 = vld [vmem:[%s1115 + $0x1c8] sm:$0xff]
    %v1151 = vld [vmem:[%s1115 + $0x1d0] sm:$0xff]
    %v1152 = vld [vmem:[%s1115 + $0x1e0] sm:$0xff]
    %v1153 = vld [vmem:[%s1115 + $0x1e8] sm:$0xff]
    %v1154 = vld [vmem:[%s1115 + $0x1f8] sm:$0xff]
    %v1155 = vld [vmem:[%s1115 + $0x200] sm:$0xff]
    %v1156 = vld [vmem:[%s1115 + $0x210] sm:$0xff]
    %v1157 = vld [vmem:[%s1115 + $0x218] sm:$0xff]
    %v1158 = vld [vmem:[%s1115 + $0x228] sm:$0xff]
    %v1159 = vld [vmem:[%s1115 + $0x230] sm:$0xff]
    %v1160 = vld [vmem:[%s1115 + $0x240] sm:$0xff]
    %v1161 = vld [vmem:[%s1115 + $0x248] sm:$0xff]
    %v1162 = vld [vmem:[%s1115 + $0x258] sm:$0xff]
    %v1163 = vld [vmem:[%s1115 + $0x260] sm:$0xff]
    %v1164 = vld [vmem:[%s1115 + $0x270] sm:$0xff]
    %v1165 = vld [vmem:[%s1115 + $0x278] sm:$0xff]
    %v1166 = vld [vmem:[%s1115 + $0x288] sm:$0xff]
    %v1167 = vld [vmem:[%s1115 + $0x290] sm:$0xff]
    %v1168 = vld [vmem:[%s1115 + $0x2a0] sm:$0xff]
    %v1169 = vld [vmem:[%s1115 + $0x2a8] sm:$0xff]
    %v1170 = vld [vmem:[%s1115 + $0x2b8] sm:$0xff]
    %v1171 = vld [vmem:[%s1115 + $0x2c0] sm:$0xff]
    %v1172 = vld [vmem:[%s1115 + $0x2d0] sm:$0xff]
    %v1173 = vld [vmem:[%s1115 + $0x2d8] sm:$0xff]
    %v1174 = vld [vmem:[%s1115 + $0x2e8] sm:$0xff]
    %v1175 = vld [vmem:[%s1115 + $0x2f0] sm:$0xff]
    %v1176 = vld [vmem:[%s1115 + $0x300] sm:$0xff]
    %v1177 = vld [vmem:[%s1115 + $0x308] sm:$0xff]
    %v1178 = vld [vmem:[%s1115 + $0x318] sm:$0xff]
    %v1179 = vld [vmem:[%s1115 + $0x320] sm:$0xff]
    %1244 = vrot.lane.b32.xlu0 %v1116, 12
    %v1245 = vpop.permute.xlu0 %1244
    %1246 = vrot.lane.b32.xlu0 %v1117, 12
    %v1247 = vpop.permute.xlu0 %1246
    %1248 = vrot.lane.b32.xlu0 %v1118, 12
    %v1249 = vpop.permute.xlu0 %1248
    %1250 = vrot.lane.b32.xlu0 %v1119, 12
    %v1251 = vpop.permute.xlu0 %1250
    %1252 = vrot.lane.b32.xlu0 %v1120, 12
    %v1253 = vpop.permute.xlu0 %1252
    %1254 = vrot.lane.b32.xlu0 %v1121, 12
    %v1255 = vpop.permute.xlu0 %1254
    %1256 = vrot.lane.b32.xlu0 %v1122, 12
    %v1257 = vpop.permute.xlu0 %1256
    %1258 = vrot.lane.b32.xlu0 %v1123, 12
    %v1259 = vpop.permute.xlu0 %1258
    %1260 = vrot.lane.b32.xlu0 %v1124, 12
    %v1261 = vpop.permute.xlu0 %1260
    %1262 = vrot.lane.b32.xlu0 %v1125, 12
    %v1263 = vpop.permute.xlu0 %1262
    %1264 = vrot.lane.b32.xlu0 %v1126, 12
    %v1265 = vpop.permute.xlu0 %1264
    %1266 = vrot.lane.b32.xlu0 %v1127, 12
    %v1267 = vpop.permute.xlu0 %1266
    %1268 = vrot.lane.b32.xlu0 %v1128, 12
    %v1269 = vpop.permute.xlu0 %1268
    %1270 = vrot.lane.b32.xlu0 %v1129, 12
    %v1271 = vpop.permute.xlu0 %1270
    %1272 = vrot.lane.b32.xlu0 %v1130, 12
    %v1273 = vpop.permute.xlu0 %1272
    %1274 = vrot.lane.b32.xlu0 %v1131, 12
    %v1275 = vpop.permute.xlu0 %1274
    %1276 = vrot.lane.b32.xlu0 %v1132, 12
    %v1277 = vpop.permute.xlu0 %1276
    %1278 = vrot.lane.b32.xlu0 %v1133, 12
    %v1279 = vpop.permute.xlu0 %1278
    %1280 = vrot.lane.b32.xlu0 %v1134, 12
    %v1281 = vpop.permute.xlu0 %1280
    %1282 = vrot.lane.b32.xlu0 %v1135, 12
    %v1283 = vpop.permute.xlu0 %1282
    %1284 = vrot.lane.b32.xlu0 %v1136, 12
    %v1285 = vpop.permute.xlu0 %1284
    %1286 = vrot.lane.b32.xlu0 %v1137, 12
    %v1287 = vpop.permute.xlu0 %1286
    %1288 = vrot.lane.b32.xlu0 %v1138, 12
    %v1289 = vpop.permute.xlu0 %1288
    %1290 = vrot.lane.b32.xlu0 %v1139, 12
    %v1291 = vpop.permute.xlu0 %1290
    %1292 = vrot.lane.b32.xlu0 %v1140, 12
    %v1293 = vpop.permute.xlu0 %1292
    %1294 = vrot.lane.b32.xlu0 %v1141, 12
    %v1295 = vpop.permute.xlu0 %1294
    %1296 = vrot.lane.b32.xlu0 %v1142, 12
    %v1297 = vpop.permute.xlu0 %1296
    %1298 = vrot.lane.b32.xlu0 %v1143, 12
    %v1299 = vpop.permute.xlu0 %1298
    %1300 = vrot.lane.b32.xlu0 %v1144, 12
    %v1301 = vpop.permute.xlu0 %1300
    %1302 = vrot.lane.b32.xlu0 %v1145, 12
    %v1303 = vpop.permute.xlu0 %1302
    %1304 = vrot.lane.b32.xlu0 %v1146, 12
    %v1305 = vpop.permute.xlu0 %1304
    %1306 = vrot.lane.b32.xlu0 %v1147, 12
    %v1307 = vpop.permute.xlu0 %1306
    %1308 = vrot.lane.b32.xlu0 %v1148, 12
    %v1309 = vpop.permute.xlu0 %1308
    %1310 = vrot.lane.b32.xlu0 %v1149, 12
    %v1311 = vpop.permute.xlu0 %1310
    %1312 = vrot.lane.b32.xlu0 %v1150, 12
    %v1313 = vpop.permute.xlu0 %1312
    %1314 = vrot.lane.b32.xlu0 %v1151, 12
    %v1315 = vpop.permute.xlu0 %1314
    %1316 = vrot.lane.b32.xlu0 %v1152, 12
    %v1317 = vpop.permute.xlu0 %1316
    %1318 = vrot.lane.b32.xlu0 %v1153, 12
    %v1319 = vpop.permute.xlu0 %1318
    %1320 = vrot.lane.b32.xlu0 %v1154, 12
    %v1321 = vpop.permute.xlu0 %1320
    %1322 = vrot.lane.b32.xlu0 %v1155, 12
    %v1323 = vpop.permute.xlu0 %1322
    %1324 = vrot.lane.b32.xlu0 %v1156, 12
    %v1325 = vpop.permute.xlu0 %1324
    %1326 = vrot.lane.b32.xlu0 %v1157, 12
    %v1327 = vpop.permute.xlu0 %1326
    %1328 = vrot.lane.b32.xlu0 %v1158, 12
    %v1329 = vpop.permute.xlu0 %1328
    %1330 = vrot.lane.b32.xlu0 %v1159, 12
    %v1331 = vpop.permute.xlu0 %1330
    %1332 = vrot.lane.b32.xlu0 %v1160, 12
    %v1333 = vpop.permute.xlu0 %1332
    %1334 = vrot.lane.b32.xlu0 %v1161, 12
    %v1335 = vpop.permute.xlu0 %1334
    %1336 = vrot.lane.b32.xlu0 %v1162, 12
    %v1337 = vpop.permute.xlu0 %1336
    %1338 = vrot.lane.b32.xlu0 %v1163, 12
    %v1339 = vpop.permute.xlu0 %1338
    %1340 = vrot.lane.b32.xlu0 %v1164, 12
    %v1341 = vpop.permute.xlu0 %1340
    %1342 = vrot.lane.b32.xlu0 %v1165, 12
    %v1343 = vpop.permute.xlu0 %1342
    %1344 = vrot.lane.b32.xlu0 %v1166, 12
    %v1345 = vpop.permute.xlu0 %1344
    %1346 = vrot.lane.b32.xlu0 %v1167, 12
    %v1347 = vpop.permute.xlu0 %1346
    %1348 = vrot.lane.b32.xlu0 %v1168, 12
    %v1349 = vpop.permute.xlu0 %1348
    %1350 = vrot.lane.b32.xlu0 %v1169, 12
    %v1351 = vpop.permute.xlu0 %1350
    %1352 = vrot.lane.b32.xlu0 %v1170, 12
    %v1353 = vpop.permute.xlu0 %1352
    %1354 = vrot.lane.b32.xlu0 %v1171, 12
    %v1355 = vpop.permute.xlu0 %1354
    %1356 = vrot.lane.b32.xlu0 %v1172, 12
    %v1357 = vpop.permute.xlu0 %1356
    %1358 = vrot.lane.b32.xlu0 %v1173, 12
    %v1359 = vpop.permute.xlu0 %1358
    %1360 = vrot.lane.b32.xlu0 %v1174, 12
    %v1361 = vpop.permute.xlu0 %1360
    %1362 = vrot.lane.b32.xlu0 %v1175, 12
    %v1363 = vpop.permute.xlu0 %1362
    %1364 = vrot.lane.b32.xlu0 %v1176, 12
    %v1365 = vpop.permute.xlu0 %1364
    %1366 = vrot.lane.b32.xlu0 %v1177, 12
    %v1367 = vpop.permute.xlu0 %1366
    %1368 = vrot.lane.b32.xlu0 %v1178, 12
    %v1369 = vpop.permute.xlu0 %1368
    %1370 = vrot.lane.b32.xlu0 %v1179, 12
    %v1371 = vpop.permute.xlu0 %1370
    %vm1436 = vcmask 130144
    %1437 = vst.msk [vmem:[#allocation2] sm:$0xff] %vm1436, %v1245
    %1438 = vst.msk [vmem:[#allocation2 + $0x8] sm:$0xff] %vm1436, %v1247
    %1439 = vst.msk [vmem:[#allocation2 + $0x10] sm:$0xff] %vm1436, %v1249
    %1440 = vst.msk [vmem:[#allocation2 + $0x18] sm:$0xff] %vm1436, %v1251
    %1441 = vst.msk [vmem:[#allocation2 + $0x20] sm:$0xff] %vm1436, %v1253
    %1442 = vst.msk [vmem:[#allocation2 + $0x28] sm:$0xff] %vm1436, %v1255
    %1443 = vst.msk [vmem:[#allocation2 + $0x30] sm:$0xff] %vm1436, %v1257
    %1444 = vst.msk [vmem:[#allocation2 + $0x38] sm:$0xff] %vm1436, %v1259
    %1445 = vst.msk [vmem:[#allocation2 + $0x40] sm:$0xff] %vm1436, %v1261
    %1446 = vst.msk [vmem:[#allocation2 + $0x48] sm:$0xff] %vm1436, %v1263
    %1447 = vst.msk [vmem:[#allocation2 + $0x50] sm:$0xff] %vm1436, %v1265
    %1448 = vst.msk [vmem:[#allocation2 + $0x58] sm:$0xff] %vm1436, %v1267
    %1449 = vst.msk [vmem:[#allocation2 + $0x60] sm:$0xff] %vm1436, %v1269
    %1450 = vst.msk [vmem:[#allocation2 + $0x68] sm:$0xff] %vm1436, %v1271
    %1451 = vst.msk [vmem:[#allocation2 + $0x70] sm:$0xff] %vm1436, %v1273
    %1452 = vst.msk [vmem:[#allocation2 + $0x78] sm:$0xff] %vm1436, %v1275
    %1453 = vst.msk [vmem:[#allocation2 + $0x80] sm:$0xff] %vm1436, %v1277
    %1454 = vst.msk [vmem:[#allocation2 + $0x88] sm:$0xff] %vm1436, %v1279
    %1455 = vst.msk [vmem:[#allocation2 + $0x90] sm:$0xff] %vm1436, %v1281
    %1456 = vst.msk [vmem:[#allocation2 + $0x98] sm:$0xff] %vm1436, %v1283
    %1457 = vst.msk [vmem:[#allocation2 + $0xa0] sm:$0xff] %vm1436, %v1285
    %1458 = vst.msk [vmem:[#allocation2 + $0xa8] sm:$0xff] %vm1436, %v1287
    %1459 = vst.msk [vmem:[#allocation2 + $0xb0] sm:$0xff] %vm1436, %v1289
    %1460 = vst.msk [vmem:[#allocation2 + $0xb8] sm:$0xff] %vm1436, %v1291
    %1461 = vst.msk [vmem:[#allocation2 + $0xc0] sm:$0xff] %vm1436, %v1293
    %1462 = vst.msk [vmem:[#allocation2 + $0xc8] sm:$0xff] %vm1436, %v1295
    %1463 = vst.msk [vmem:[#allocation2 + $0xd0] sm:$0xff] %vm1436, %v1297
    %1464 = vst.msk [vmem:[#allocation2 + $0xd8] sm:$0xff] %vm1436, %v1299
    %1465 = vst.msk [vmem:[#allocation2 + $0xe0] sm:$0xff] %vm1436, %v1301
    %1466 = vst.msk [vmem:[#allocation2 + $0xe8] sm:$0xff] %vm1436, %v1303
    %1467 = vst.msk [vmem:[#allocation2 + $0xf0] sm:$0xff] %vm1436, %v1305
    %1468 = vst.msk [vmem:[#allocation2 + $0xf8] sm:$0xff] %vm1436, %v1307
    %1469 = vst.msk [vmem:[#allocation2 + $0x100] sm:$0xff] %vm1436, %v1309
    %1470 = vst.msk [vmem:[#allocation2 + $0x108] sm:$0xff] %vm1436, %v1311
    %1471 = vst.msk [vmem:[#allocation2 + $0x110] sm:$0xff] %vm1436, %v1313
    %1472 = vst.msk [vmem:[#allocation2 + $0x118] sm:$0xff] %vm1436, %v1315
    %1473 = vst.msk [vmem:[#allocation2 + $0x120] sm:$0xff] %vm1436, %v1317
    %1474 = vst.msk [vmem:[#allocation2 + $0x128] sm:$0xff] %vm1436, %v1319
    %1475 = vst.msk [vmem:[#allocation2 + $0x130] sm:$0xff] %vm1436, %v1321
    %1476 = vst.msk [vmem:[#allocation2 + $0x138] sm:$0xff] %vm1436, %v1323
    %1477 = vst.msk [vmem:[#allocation2 + $0x140] sm:$0xff] %vm1436, %v1325
    %1478 = vst.msk [vmem:[#allocation2 + $0x148] sm:$0xff] %vm1436, %v1327
    %1479 = vst.msk [vmem:[#allocation2 + $0x150] sm:$0xff] %vm1436, %v1329
    %1480 = vst.msk [vmem:[#allocation2 + $0x158] sm:$0xff] %vm1436, %v1331
    %1481 = vst.msk [vmem:[#allocation2 + $0x160] sm:$0xff] %vm1436, %v1333
    %1482 = vst.msk [vmem:[#allocation2 + $0x168] sm:$0xff] %vm1436, %v1335
    %1483 = vst.msk [vmem:[#allocation2 + $0x170] sm:$0xff] %vm1436, %v1337
    %1484 = vst.msk [vmem:[#allocation2 + $0x178] sm:$0xff] %vm1436, %v1339
    %1485 = vst.msk [vmem:[#allocation2 + $0x180] sm:$0xff] %vm1436, %v1341
    %1486 = vst.msk [vmem:[#allocation2 + $0x188] sm:$0xff] %vm1436, %v1343
    %1487 = vst.msk [vmem:[#allocation2 + $0x190] sm:$0xff] %vm1436, %v1345
    %1488 = vst.msk [vmem:[#allocation2 + $0x198] sm:$0xff] %vm1436, %v1347
    %1489 = vst.msk [vmem:[#allocation2 + $0x1a0] sm:$0xff] %vm1436, %v1349
    %1490 = vst.msk [vmem:[#allocation2 + $0x1a8] sm:$0xff] %vm1436, %v1351
    %1491 = vst.msk [vmem:[#allocation2 + $0x1b0] sm:$0xff] %vm1436, %v1353
    %1492 = vst.msk [vmem:[#allocation2 + $0x1b8] sm:$0xff] %vm1436, %v1355
    %1493 = vst.msk [vmem:[#allocation2 + $0x1c0] sm:$0xff] %vm1436, %v1357
    %1494 = vst.msk [vmem:[#allocation2 + $0x1c8] sm:$0xff] %vm1436, %v1359
    %1495 = vst.msk [vmem:[#allocation2 + $0x1d0] sm:$0xff] %vm1436, %v1361
    %1496 = vst.msk [vmem:[#allocation2 + $0x1d8] sm:$0xff] %vm1436, %v1363
    %1497 = vst.msk [vmem:[#allocation2 + $0x1e0] sm:$0xff] %vm1436, %v1365
    %1498 = vst.msk [vmem:[#allocation2 + $0x1e8] sm:$0xff] %vm1436, %v1367
    %1499 = vst.msk [vmem:[#allocation2 + $0x1f0] sm:$0xff] %vm1436, %v1369
    %1500 = vst.msk [vmem:[#allocation2 + $0x1f8] sm:$0xff] %vm1436, %v1371
    %v1501 = vld [vmem:[%s1115 + $0x1] sm:$0xff]
    %v1502 = vld [vmem:[%s1115 + $0x9] sm:$0xff]
    %v1503 = vld [vmem:[%s1115 + $0x19] sm:$0xff]
    %v1504 = vld [vmem:[%s1115 + $0x21] sm:$0xff]
    %v1505 = vld [vmem:[%s1115 + $0x31] sm:$0xff]
    %v1506 = vld [vmem:[%s1115 + $0x39] sm:$0xff]
    %v1507 = vld [vmem:[%s1115 + $0x49] sm:$0xff]
    %v1508 = vld [vmem:[%s1115 + $0x51] sm:$0xff]
    %v1509 = vld [vmem:[%s1115 + $0x61] sm:$0xff]
    %v1510 = vld [vmem:[%s1115 + $0x69] sm:$0xff]
    %v1511 = vld [vmem:[%s1115 + $0x79] sm:$0xff]
    %v1512 = vld [vmem:[%s1115 + $0x81] sm:$0xff]
    %v1513 = vld [vmem:[%s1115 + $0x91] sm:$0xff]
    %v1514 = vld [vmem:[%s1115 + $0x99] sm:$0xff]
    %v1515 = vld [vmem:[%s1115 + $0xa9] sm:$0xff]
    %v1516 = vld [vmem:[%s1115 + $0xb1] sm:$0xff]
    %v1517 = vld [vmem:[%s1115 + $0xc1] sm:$0xff]
    %v1518 = vld [vmem:[%s1115 + $0xc9] sm:$0xff]
    %v1519 = vld [vmem:[%s1115 + $0xd9] sm:$0xff]
    %v1520 = vld [vmem:[%s1115 + $0xe1] sm:$0xff]
    %v1521 = vld [vmem:[%s1115 + $0xf1] sm:$0xff]
    %v1522 = vld [vmem:[%s1115 + $0xf9] sm:$0xff]
    %v1523 = vld [vmem:[%s1115 + $0x109] sm:$0xff]
    %v1524 = vld [vmem:[%s1115 + $0x111] sm:$0xff]
    %v1525 = vld [vmem:[%s1115 + $0x121] sm:$0xff]
    %v1526 = vld [vmem:[%s1115 + $0x129] sm:$0xff]
    %v1527 = vld [vmem:[%s1115 + $0x139] sm:$0xff]
    %v1528 = vld [vmem:[%s1115 + $0x141] sm:$0xff]
    %v1529 = vld [vmem:[%s1115 + $0x151] sm:$0xff]
    %v1530 = vld [vmem:[%s1115 + $0x159] sm:$0xff]
    %v1531 = vld [vmem:[%s1115 + $0x169] sm:$0xff]
    %v1532 = vld [vmem:[%s1115 + $0x171] sm:$0xff]
    %v1533 = vld [vmem:[%s1115 + $0x1b1] sm:$0xff]
    %v1534 = vld [vmem:[%s1115 + $0x1b9] sm:$0xff]
    %v1535 = vld [vmem:[%s1115 + $0x1c9] sm:$0xff]
    %v1536 = vld [vmem:[%s1115 + $0x1d1] sm:$0xff]
    %v1537 = vld [vmem:[%s1115 + $0x1e1] sm:$0xff]
    %v1538 = vld [vmem:[%s1115 + $0x1e9] sm:$0xff]
    %v1539 = vld [vmem:[%s1115 + $0x1f9] sm:$0xff]
    %v1540 = vld [vmem:[%s1115 + $0x201] sm:$0xff]
    %v1541 = vld [vmem:[%s1115 + $0x211] sm:$0xff]
    %v1542 = vld [vmem:[%s1115 + $0x219] sm:$0xff]
    %v1543 = vld [vmem:[%s1115 + $0x229] sm:$0xff]
    %v1544 = vld [vmem:[%s1115 + $0x231] sm:$0xff]
    %v1545 = vld [vmem:[%s1115 + $0x241] sm:$0xff]
    %v1546 = vld [vmem:[%s1115 + $0x249] sm:$0xff]
    %v1547 = vld [vmem:[%s1115 + $0x259] sm:$0xff]
    %v1548 = vld [vmem:[%s1115 + $0x261] sm:$0xff]
    %v1549 = vld [vmem:[%s1115 + $0x271] sm:$0xff]
    %v1550 = vld [vmem:[%s1115 + $0x279] sm:$0xff]
    %v1551 = vld [vmem:[%s1115 + $0x289] sm:$0xff]
    %v1552 = vld [vmem:[%s1115 + $0x291] sm:$0xff]
    %v1553 = vld [vmem:[%s1115 + $0x2a1] sm:$0xff]
    %v1554 = vld [vmem:[%s1115 + $0x2a9] sm:$0xff]
    %v1555 = vld [vmem:[%s1115 + $0x2b9] sm:$0xff]
    %v1556 = vld [vmem:[%s1115 + $0x2c1] sm:$0xff]
    %v1557 = vld [vmem:[%s1115 + $0x2d1] sm:$0xff]
    %v1558 = vld [vmem:[%s1115 + $0x2d9] sm:$0xff]
    %v1559 = vld [vmem:[%s1115 + $0x2e9] sm:$0xff]
    %v1560 = vld [vmem:[%s1115 + $0x2f1] sm:$0xff]
    %v1561 = vld [vmem:[%s1115 + $0x301] sm:$0xff]
    %v1562 = vld [vmem:[%s1115 + $0x309] sm:$0xff]
    %v1563 = vld [vmem:[%s1115 + $0x319] sm:$0xff]
    %v1564 = vld [vmem:[%s1115 + $0x321] sm:$0xff]
    %1629 = vrot.lane.b32.xlu0 %v1501, 16
    %v1630 = vpop.permute.xlu0 %1629
    %1631 = vrot.lane.b32.xlu0 %v1502, 16
    %v1632 = vpop.permute.xlu0 %1631
    %1633 = vrot.lane.b32.xlu0 %v1503, 16
    %v1634 = vpop.permute.xlu0 %1633
    %1635 = vrot.lane.b32.xlu0 %v1504, 16
    %v1636 = vpop.permute.xlu0 %1635
    %1637 = vrot.lane.b32.xlu0 %v1505, 16
    %v1638 = vpop.permute.xlu0 %1637
    %1639 = vrot.lane.b32.xlu0 %v1506, 16
    %v1640 = vpop.permute.xlu0 %1639
    %1641 = vrot.lane.b32.xlu0 %v1507, 16
    %v1642 = vpop.permute.xlu0 %1641
    %1643 = vrot.lane.b32.xlu0 %v1508, 16
    %v1644 = vpop.permute.xlu0 %1643
    %1645 = vrot.lane.b32.xlu0 %v1509, 16
    %v1646 = vpop.permute.xlu0 %1645
    %1647 = vrot.lane.b32.xlu0 %v1510, 16
    %v1648 = vpop.permute.xlu0 %1647
    %1649 = vrot.lane.b32.xlu0 %v1511, 16
    %v1650 = vpop.permute.xlu0 %1649
    %1651 = vrot.lane.b32.xlu0 %v1512, 16
    %v1652 = vpop.permute.xlu0 %1651
    %1653 = vrot.lane.b32.xlu0 %v1513, 16
    %v1654 = vpop.permute.xlu0 %1653
    %1655 = vrot.lane.b32.xlu0 %v1514, 16
    %v1656 = vpop.permute.xlu0 %1655
    %1657 = vrot.lane.b32.xlu0 %v1515, 16
    %v1658 = vpop.permute.xlu0 %1657
    %1659 = vrot.lane.b32.xlu0 %v1516, 16
    %v1660 = vpop.permute.xlu0 %1659
    %1661 = vrot.lane.b32.xlu0 %v1517, 16
    %v1662 = vpop.permute.xlu0 %1661
    %1663 = vrot.lane.b32.xlu0 %v1518, 16
    %v1664 = vpop.permute.xlu0 %1663
    %1665 = vrot.lane.b32.xlu0 %v1519, 16
    %v1666 = vpop.permute.xlu0 %1665
    %1667 = vrot.lane.b32.xlu0 %v1520, 16
    %v1668 = vpop.permute.xlu0 %1667
    %1669 = vrot.lane.b32.xlu0 %v1521, 16
    %v1670 = vpop.permute.xlu0 %1669
    %1671 = vrot.lane.b32.xlu0 %v1522, 16
    %v1672 = vpop.permute.xlu0 %1671
    %1673 = vrot.lane.b32.xlu0 %v1523, 16
    %v1674 = vpop.permute.xlu0 %1673
    %1675 = vrot.lane.b32.xlu0 %v1524, 16
    %v1676 = vpop.permute.xlu0 %1675
    %1677 = vrot.lane.b32.xlu0 %v1525, 16
    %v1678 = vpop.permute.xlu0 %1677
    %1679 = vrot.lane.b32.xlu0 %v1526, 16
    %v1680 = vpop.permute.xlu0 %1679
    %1681 = vrot.lane.b32.xlu0 %v1527, 16
    %v1682 = vpop.permute.xlu0 %1681
    %1683 = vrot.lane.b32.xlu0 %v1528, 16
    %v1684 = vpop.permute.xlu0 %1683
    %1685 = vrot.lane.b32.xlu0 %v1529, 16
    %v1686 = vpop.permute.xlu0 %1685
    %1687 = vrot.lane.b32.xlu0 %v1530, 16
    %v1688 = vpop.permute.xlu0 %1687
    %1689 = vrot.lane.b32.xlu0 %v1531, 16
    %v1690 = vpop.permute.xlu0 %1689
    %1691 = vrot.lane.b32.xlu0 %v1532, 16
    %v1692 = vpop.permute.xlu0 %1691
    %1693 = vrot.lane.b32.xlu0 %v1533, 16
    %v1694 = vpop.permute.xlu0 %1693
    %1695 = vrot.lane.b32.xlu0 %v1534, 16
    %v1696 = vpop.permute.xlu0 %1695
    %1697 = vrot.lane.b32.xlu0 %v1535, 16
    %v1698 = vpop.permute.xlu0 %1697
    %1699 = vrot.lane.b32.xlu0 %v1536, 16
    %v1700 = vpop.permute.xlu0 %1699
    %1701 = vrot.lane.b32.xlu0 %v1537, 16
    %v1702 = vpop.permute.xlu0 %1701
    %1703 = vrot.lane.b32.xlu0 %v1538, 16
    %v1704 = vpop.permute.xlu0 %1703
    %1705 = vrot.lane.b32.xlu0 %v1539, 16
    %v1706 = vpop.permute.xlu0 %1705
    %1707 = vrot.lane.b32.xlu0 %v1540, 16
    %v1708 = vpop.permute.xlu0 %1707
    %1709 = vrot.lane.b32.xlu0 %v1541, 16
    %v1710 = vpop.permute.xlu0 %1709
    %1711 = vrot.lane.b32.xlu0 %v1542, 16
    %v1712 = vpop.permute.xlu0 %1711
    %1713 = vrot.lane.b32.xlu0 %v1543, 16
    %v1714 = vpop.permute.xlu0 %1713
    %1715 = vrot.lane.b32.xlu0 %v1544, 16
    %v1716 = vpop.permute.xlu0 %1715
    %1717 = vrot.lane.b32.xlu0 %v1545, 16
    %v1718 = vpop.permute.xlu0 %1717
    %1719 = vrot.lane.b32.xlu0 %v1546, 16
    %v1720 = vpop.permute.xlu0 %1719
    %1721 = vrot.lane.b32.xlu0 %v1547, 16
    %v1722 = vpop.permute.xlu0 %1721
    %1723 = vrot.lane.b32.xlu0 %v1548, 16
    %v1724 = vpop.permute.xlu0 %1723
    %1725 = vrot.lane.b32.xlu0 %v1549, 16
    %v1726 = vpop.permute.xlu0 %1725
    %1727 = vrot.lane.b32.xlu0 %v1550, 16
    %v1728 = vpop.permute.xlu0 %1727
    %1729 = vrot.lane.b32.xlu0 %v1551, 16
    %v1730 = vpop.permute.xlu0 %1729
    %1731 = vrot.lane.b32.xlu0 %v1552, 16
    %v1732 = vpop.permute.xlu0 %1731
    %1733 = vrot.lane.b32.xlu0 %v1553, 16
    %v1734 = vpop.permute.xlu0 %1733
    %1735 = vrot.lane.b32.xlu0 %v1554, 16
    %v1736 = vpop.permute.xlu0 %1735
    %1737 = vrot.lane.b32.xlu0 %v1555, 16
    %v1738 = vpop.permute.xlu0 %1737
    %1739 = vrot.lane.b32.xlu0 %v1556, 16
    %v1740 = vpop.permute.xlu0 %1739
    %1741 = vrot.lane.b32.xlu0 %v1557, 16
    %v1742 = vpop.permute.xlu0 %1741
    %1743 = vrot.lane.b32.xlu0 %v1558, 16
    %v1744 = vpop.permute.xlu0 %1743
    %1745 = vrot.lane.b32.xlu0 %v1559, 16
    %v1746 = vpop.permute.xlu0 %1745
    %1747 = vrot.lane.b32.xlu0 %v1560, 16
    %v1748 = vpop.permute.xlu0 %1747
    %1749 = vrot.lane.b32.xlu0 %v1561, 16
    %v1750 = vpop.permute.xlu0 %1749
    %1751 = vrot.lane.b32.xlu0 %v1562, 16
    %v1752 = vpop.permute.xlu0 %1751
    %1753 = vrot.lane.b32.xlu0 %v1563, 16
    %v1754 = vpop.permute.xlu0 %1753
    %1755 = vrot.lane.b32.xlu0 %v1564, 16
    %v1756 = vpop.permute.xlu0 %1755
    %vm1821 = vcmask 162944
    %1822 = vst.msk [vmem:[#allocation2] sm:$0xff] %vm1821, %v1630
    %1823 = vst.msk [vmem:[#allocation2 + $0x8] sm:$0xff] %vm1821, %v1632
    %1824 = vst.msk [vmem:[#allocation2 + $0x10] sm:$0xff] %vm1821, %v1634
    %1825 = vst.msk [vmem:[#allocation2 + $0x18] sm:$0xff] %vm1821, %v1636
    %1826 = vst.msk [vmem:[#allocation2 + $0x20] sm:$0xff] %vm1821, %v1638
    %1827 = vst.msk [vmem:[#allocation2 + $0x28] sm:$0xff] %vm1821, %v1640
    %1828 = vst.msk [vmem:[#allocation2 + $0x30] sm:$0xff] %vm1821, %v1642
    %1829 = vst.msk [vmem:[#allocation2 + $0x38] sm:$0xff] %vm1821, %v1644
    %1830 = vst.msk [vmem:[#allocation2 + $0x40] sm:$0xff] %vm1821, %v1646
    %1831 = vst.msk [vmem:[#allocation2 + $0x48] sm:$0xff] %vm1821, %v1648
    %1832 = vst.msk [vmem:[#allocation2 + $0x50] sm:$0xff] %vm1821, %v1650
    %1833 = vst.msk [vmem:[#allocation2 + $0x58] sm:$0xff] %vm1821, %v1652
    %1834 = vst.msk [vmem:[#allocation2 + $0x60] sm:$0xff] %vm1821, %v1654
    %1835 = vst.msk [vmem:[#allocation2 + $0x68] sm:$0xff] %vm1821, %v1656
    %1836 = vst.msk [vmem:[#allocation2 + $0x70] sm:$0xff] %vm1821, %v1658
    %1837 = vst.msk [vmem:[#allocation2 + $0x78] sm:$0xff] %vm1821, %v1660
    %1838 = vst.msk [vmem:[#allocation2 + $0x80] sm:$0xff] %vm1821, %v1662
    %1839 = vst.msk [vmem:[#allocation2 + $0x88] sm:$0xff] %vm1821, %v1664
    %1840 = vst.msk [vmem:[#allocation2 + $0x90] sm:$0xff] %vm1821, %v1666
    %1841 = vst.msk [vmem:[#allocation2 + $0x98] sm:$0xff] %vm1821, %v1668
    %1842 = vst.msk [vmem:[#allocation2 + $0xa0] sm:$0xff] %vm1821, %v1670
    %1843 = vst.msk [vmem:[#allocation2 + $0xa8] sm:$0xff] %vm1821, %v1672
    %1844 = vst.msk [vmem:[#allocation2 + $0xb0] sm:$0xff] %vm1821, %v1674
    %1845 = vst.msk [vmem:[#allocation2 + $0xb8] sm:$0xff] %vm1821, %v1676
    %1846 = vst.msk [vmem:[#allocation2 + $0xc0] sm:$0xff] %vm1821, %v1678
    %1847 = vst.msk [vmem:[#allocation2 + $0xc8] sm:$0xff] %vm1821, %v1680
    %1848 = vst.msk [vmem:[#allocation2 + $0xd0] sm:$0xff] %vm1821, %v1682
    %1849 = vst.msk [vmem:[#allocation2 + $0xd8] sm:$0xff] %vm1821, %v1684
    %1850 = vst.msk [vmem:[#allocation2 + $0xe0] sm:$0xff] %vm1821, %v1686
    %1851 = vst.msk [vmem:[#allocation2 + $0xe8] sm:$0xff] %vm1821, %v1688
    %1852 = vst.msk [vmem:[#allocation2 + $0xf0] sm:$0xff] %vm1821, %v1690
    %1853 = vst.msk [vmem:[#allocation2 + $0xf8] sm:$0xff] %vm1821, %v1692
    %1854 = vst.msk [vmem:[#allocation2 + $0x100] sm:$0xff] %vm1821, %v1694
    %1855 = vst.msk [vmem:[#allocation2 + $0x108] sm:$0xff] %vm1821, %v1696
    %1856 = vst.msk [vmem:[#allocation2 + $0x110] sm:$0xff] %vm1821, %v1698
    %1857 = vst.msk [vmem:[#allocation2 + $0x118] sm:$0xff] %vm1821, %v1700
    %1858 = vst.msk [vmem:[#allocation2 + $0x120] sm:$0xff] %vm1821, %v1702
    %1859 = vst.msk [vmem:[#allocation2 + $0x128] sm:$0xff] %vm1821, %v1704
    %1860 = vst.msk [vmem:[#allocation2 + $0x130] sm:$0xff] %vm1821, %v1706
    %1861 = vst.msk [vmem:[#allocation2 + $0x138] sm:$0xff] %vm1821, %v1708
    %1862 = vst.msk [vmem:[#allocation2 + $0x140] sm:$0xff] %vm1821, %v1710
    %1863 = vst.msk [vmem:[#allocation2 + $0x148] sm:$0xff] %vm1821, %v1712
    %1864 = vst.msk [vmem:[#allocation2 + $0x150] sm:$0xff] %vm1821, %v1714
    %1865 = vst.msk [vmem:[#allocation2 + $0x158] sm:$0xff] %vm1821, %v1716
    %1866 = vst.msk [vmem:[#allocation2 + $0x160] sm:$0xff] %vm1821, %v1718
    %1867 = vst.msk [vmem:[#allocation2 + $0x168] sm:$0xff] %vm1821, %v1720
    %1868 = vst.msk [vmem:[#allocation2 + $0x170] sm:$0xff] %vm1821, %v1722
    %1869 = vst.msk [vmem:[#allocation2 + $0x178] sm:$0xff] %vm1821, %v1724
    %1870 = vst.msk [vmem:[#allocation2 + $0x180] sm:$0xff] %vm1821, %v1726
    %1871 = vst.msk [vmem:[#allocation2 + $0x188] sm:$0xff] %vm1821, %v1728
    %1872 = vst.msk [vmem:[#allocation2 + $0x190] sm:$0xff] %vm1821, %v1730
    %1873 = vst.msk [vmem:[#allocation2 + $0x198] sm:$0xff] %vm1821, %v1732
    %1874 = vst.msk [vmem:[#allocation2 + $0x1a0] sm:$0xff] %vm1821, %v1734
    %1875 = vst.msk [vmem:[#allocation2 + $0x1a8] sm:$0xff] %vm1821, %v1736
    %1876 = vst.msk [vmem:[#allocation2 + $0x1b0] sm:$0xff] %vm1821, %v1738
    %1877 = vst.msk [vmem:[#allocation2 + $0x1b8] sm:$0xff] %vm1821, %v1740
    %1878 = vst.msk [vmem:[#allocation2 + $0x1c0] sm:$0xff] %vm1821, %v1742
    %1879 = vst.msk [vmem:[#allocation2 + $0x1c8] sm:$0xff] %vm1821, %v1744
    %1880 = vst.msk [vmem:[#allocation2 + $0x1d0] sm:$0xff] %vm1821, %v1746
    %1881 = vst.msk [vmem:[#allocation2 + $0x1d8] sm:$0xff] %vm1821, %v1748
    %1882 = vst.msk [vmem:[#allocation2 + $0x1e0] sm:$0xff] %vm1821, %v1750
    %1883 = vst.msk [vmem:[#allocation2 + $0x1e8] sm:$0xff] %vm1821, %v1752
    %1884 = vst.msk [vmem:[#allocation2 + $0x1f0] sm:$0xff] %vm1821, %v1754
    %1885 = vst.msk [vmem:[#allocation2 + $0x1f8] sm:$0xff] %vm1821, %v1756
    %v1886 = vld [vmem:[%s1115 + $0x2] sm:$0xff]
    %v1887 = vld [vmem:[%s1115 + $0xa] sm:$0xff]
    %v1888 = vld [vmem:[%s1115 + $0x1a] sm:$0xff]
    %v1889 = vld [vmem:[%s1115 + $0x22] sm:$0xff]
    %v1890 = vld [vmem:[%s1115 + $0x32] sm:$0xff]
    %v1891 = vld [vmem:[%s1115 + $0x3a] sm:$0xff]
    %v1892 = vld [vmem:[%s1115 + $0x4a] sm:$0xff]
    %v1893 = vld [vmem:[%s1115 + $0x52] sm:$0xff]
    %v1894 = vld [vmem:[%s1115 + $0x62] sm:$0xff]
    %v1895 = vld [vmem:[%s1115 + $0x6a] sm:$0xff]
    %v1896 = vld [vmem:[%s1115 + $0x7a] sm:$0xff]
    %v1897 = vld [vmem:[%s1115 + $0x82] sm:$0xff]
    %v1898 = vld [vmem:[%s1115 + $0x92] sm:$0xff]
    %v1899 = vld [vmem:[%s1115 + $0x9a] sm:$0xff]
    %v1900 = vld [vmem:[%s1115 + $0xaa] sm:$0xff]
    %v1901 = vld [vmem:[%s1115 + $0xb2] sm:$0xff]
    %v1902 = vld [vmem:[%s1115 + $0xc2] sm:$0xff]
    %v1903 = vld [vmem:[%s1115 + $0xca] sm:$0xff]
    %v1904 = vld [vmem:[%s1115 + $0xda] sm:$0xff]
    %v1905 = vld [vmem:[%s1115 + $0xe2] sm:$0xff]
    %v1906 = vld [vmem:[%s1115 + $0xf2] sm:$0xff]
    %v1907 = vld [vmem:[%s1115 + $0xfa] sm:$0xff]
    %v1908 = vld [vmem:[%s1115 + $0x10a] sm:$0xff]
    %v1909 = vld [vmem:[%s1115 + $0x112] sm:$0xff]
    %v1910 = vld [vmem:[%s1115 + $0x122] sm:$0xff]
    %v1911 = vld [vmem:[%s1115 + $0x12a] sm:$0xff]
    %v1912 = vld [vmem:[%s1115 + $0x13a] sm:$0xff]
    %v1913 = vld [vmem:[%s1115 + $0x142] sm:$0xff]
    %v1914 = vld [vmem:[%s1115 + $0x152] sm:$0xff]
    %v1915 = vld [vmem:[%s1115 + $0x15a] sm:$0xff]
    %v1916 = vld [vmem:[%s1115 + $0x16a] sm:$0xff]
    %v1917 = vld [vmem:[%s1115 + $0x172] sm:$0xff]
    %v1918 = vld [vmem:[%s1115 + $0x1b2] sm:$0xff]
    %v1919 = vld [vmem:[%s1115 + $0x1ba] sm:$0xff]
    %v1920 = vld [vmem:[%s1115 + $0x1ca] sm:$0xff]
    %v1921 = vld [vmem:[%s1115 + $0x1d2] sm:$0xff]
    %v1922 = vld [vmem:[%s1115 + $0x1e2] sm:$0xff]
    %v1923 = vld [vmem:[%s1115 + $0x1ea] sm:$0xff]
    %v1924 = vld [vmem:[%s1115 + $0x1fa] sm:$0xff]
    %v1925 = vld [vmem:[%s1115 + $0x202] sm:$0xff]
    %v1926 = vld [vmem:[%s1115 + $0x212] sm:$0xff]
    %v1927 = vld [vmem:[%s1115 + $0x21a] sm:$0xff]
    %v1928 = vld [vmem:[%s1115 + $0x22a] sm:$0xff]
    %v1929 = vld [vmem:[%s1115 + $0x232] sm:$0xff]
    %v1930 = vld [vmem:[%s1115 + $0x242] sm:$0xff]
    %v1931 = vld [vmem:[%s1115 + $0x24a] sm:$0xff]
    %v1932 = vld [vmem:[%s1115 + $0x25a] sm:$0xff]
    %v1933 = vld [vmem:[%s1115 + $0x262] sm:$0xff]
    %v1934 = vld [vmem:[%s1115 + $0x272] sm:$0xff]
    %v1935 = vld [vmem:[%s1115 + $0x27a] sm:$0xff]
    %v1936 = vld [vmem:[%s1115 + $0x28a] sm:$0xff]
    %v1937 = vld [vmem:[%s1115 + $0x292] sm:$0xff]
    %v1938 = vld [vmem:[%s1115 + $0x2a2] sm:$0xff]
    %v1939 = vld [vmem:[%s1115 + $0x2aa] sm:$0xff]
    %v1940 = vld [vmem:[%s1115 + $0x2ba] sm:$0xff]
    %v1941 = vld [vmem:[%s1115 + $0x2c2] sm:$0xff]
    %v1942 = vld [vmem:[%s1115 + $0x2d2] sm:$0xff]
    %v1943 = vld [vmem:[%s1115 + $0x2da] sm:$0xff]
    %v1944 = vld [vmem:[%s1115 + $0x2ea] sm:$0xff]
    %v1945 = vld [vmem:[%s1115 + $0x2f2] sm:$0xff]
    %v1946 = vld [vmem:[%s1115 + $0x302] sm:$0xff]
    %v1947 = vld [vmem:[%s1115 + $0x30a] sm:$0xff]
    %v1948 = vld [vmem:[%s1115 + $0x31a] sm:$0xff]
    %v1949 = vld [vmem:[%s1115 + $0x322] sm:$0xff]
    %2014 = vrot.lane.b32.xlu0 %v1886, 20
    %v2015 = vpop.permute.xlu0 %2014
    %2016 = vrot.lane.b32.xlu0 %v1887, 20
    %v2017 = vpop.permute.xlu0 %2016
    %2018 = vrot.lane.b32.xlu0 %v1888, 20
    %v2019 = vpop.permute.xlu0 %2018
    %2020 = vrot.lane.b32.xlu0 %v1889, 20
    %v2021 = vpop.permute.xlu0 %2020
    %2022 = vrot.lane.b32.xlu0 %v1890, 20
    %v2023 = vpop.permute.xlu0 %2022
    %2024 = vrot.lane.b32.xlu0 %v1891, 20
    %v2025 = vpop.permute.xlu0 %2024
    %2026 = vrot.lane.b32.xlu0 %v1892, 20
    %v2027 = vpop.permute.xlu0 %2026
    %2028 = vrot.lane.b32.xlu0 %v1893, 20
    %v2029 = vpop.permute.xlu0 %2028
    %2030 = vrot.lane.b32.xlu0 %v1894, 20
    %v2031 = vpop.permute.xlu0 %2030
    %2032 = vrot.lane.b32.xlu0 %v1895, 20
    %v2033 = vpop.permute.xlu0 %2032
    %2034 = vrot.lane.b32.xlu0 %v1896, 20
    %v2035 = vpop.permute.xlu0 %2034
    %2036 = vrot.lane.b32.xlu0 %v1897, 20
    %v2037 = vpop.permute.xlu0 %2036
    %2038 = vrot.lane.b32.xlu0 %v1898, 20
    %v2039 = vpop.permute.xlu0 %2038
    %2040 = vrot.lane.b32.xlu0 %v1899, 20
    %v2041 = vpop.permute.xlu0 %2040
    %2042 = vrot.lane.b32.xlu0 %v1900, 20
    %v2043 = vpop.permute.xlu0 %2042
    %2044 = vrot.lane.b32.xlu0 %v1901, 20
    %v2045 = vpop.permute.xlu0 %2044
    %2046 = vrot.lane.b32.xlu0 %v1902, 20
    %v2047 = vpop.permute.xlu0 %2046
    %2048 = vrot.lane.b32.xlu0 %v1903, 20
    %v2049 = vpop.permute.xlu0 %2048
    %2050 = vrot.lane.b32.xlu0 %v1904, 20
    %v2051 = vpop.permute.xlu0 %2050
    %2052 = vrot.lane.b32.xlu0 %v1905, 20
    %v2053 = vpop.permute.xlu0 %2052
    %2054 = vrot.lane.b32.xlu0 %v1906, 20
    %v2055 = vpop.permute.xlu0 %2054
    %2056 = vrot.lane.b32.xlu0 %v1907, 20
    %v2057 = vpop.permute.xlu0 %2056
    %2058 = vrot.lane.b32.xlu0 %v1908, 20
    %v2059 = vpop.permute.xlu0 %2058
    %2060 = vrot.lane.b32.xlu0 %v1909, 20
    %v2061 = vpop.permute.xlu0 %2060
    %2062 = vrot.lane.b32.xlu0 %v1910, 20
    %v2063 = vpop.permute.xlu0 %2062
    %2064 = vrot.lane.b32.xlu0 %v1911, 20
    %v2065 = vpop.permute.xlu0 %2064
    %2066 = vrot.lane.b32.xlu0 %v1912, 20
    %v2067 = vpop.permute.xlu0 %2066
    %2068 = vrot.lane.b32.xlu0 %v1913, 20
    %v2069 = vpop.permute.xlu0 %2068
    %2070 = vrot.lane.b32.xlu0 %v1914, 20
    %v2071 = vpop.permute.xlu0 %2070
    %2072 = vrot.lane.b32.xlu0 %v1915, 20
    %v2073 = vpop.permute.xlu0 %2072
    %2074 = vrot.lane.b32.xlu0 %v1916, 20
    %v2075 = vpop.permute.xlu0 %2074
    %2076 = vrot.lane.b32.xlu0 %v1917, 20
    %v2077 = vpop.permute.xlu0 %2076
    %2078 = vrot.lane.b32.xlu0 %v1918, 20
    %v2079 = vpop.permute.xlu0 %2078
    %2080 = vrot.lane.b32.xlu0 %v1919, 20
    %v2081 = vpop.permute.xlu0 %2080
    %2082 = vrot.lane.b32.xlu0 %v1920, 20
    %v2083 = vpop.permute.xlu0 %2082
    %2084 = vrot.lane.b32.xlu0 %v1921, 20
    %v2085 = vpop.permute.xlu0 %2084
    %2086 = vrot.lane.b32.xlu0 %v1922, 20
    %v2087 = vpop.permute.xlu0 %2086
    %2088 = vrot.lane.b32.xlu0 %v1923, 20
    %v2089 = vpop.permute.xlu0 %2088
    %2090 = vrot.lane.b32.xlu0 %v1924, 20
    %v2091 = vpop.permute.xlu0 %2090
    %2092 = vrot.lane.b32.xlu0 %v1925, 20
    %v2093 = vpop.permute.xlu0 %2092
    %2094 = vrot.lane.b32.xlu0 %v1926, 20
    %v2095 = vpop.permute.xlu0 %2094
    %2096 = vrot.lane.b32.xlu0 %v1927, 20
    %v2097 = vpop.permute.xlu0 %2096
    %2098 = vrot.lane.b32.xlu0 %v1928, 20
    %v2099 = vpop.permute.xlu0 %2098
    %2100 = vrot.lane.b32.xlu0 %v1929, 20
    %v2101 = vpop.permute.xlu0 %2100
    %2102 = vrot.lane.b32.xlu0 %v1930, 20
    %v2103 = vpop.permute.xlu0 %2102
    %2104 = vrot.lane.b32.xlu0 %v1931, 20
    %v2105 = vpop.permute.xlu0 %2104
    %2106 = vrot.lane.b32.xlu0 %v1932, 20
    %v2107 = vpop.permute.xlu0 %2106
    %2108 = vrot.lane.b32.xlu0 %v1933, 20
    %v2109 = vpop.permute.xlu0 %2108
    %2110 = vrot.lane.b32.xlu0 %v1934, 20
    %v2111 = vpop.permute.xlu0 %2110
    %2112 = vrot.lane.b32.xlu0 %v1935, 20
    %v2113 = vpop.permute.xlu0 %2112
    %2114 = vrot.lane.b32.xlu0 %v1936, 20
    %v2115 = vpop.permute.xlu0 %2114
    %2116 = vrot.lane.b32.xlu0 %v1937, 20
    %v2117 = vpop.permute.xlu0 %2116
    %2118 = vrot.lane.b32.xlu0 %v1938, 20
    %v2119 = vpop.permute.xlu0 %2118
    %2120 = vrot.lane.b32.xlu0 %v1939, 20
    %v2121 = vpop.permute.xlu0 %2120
    %2122 = vrot.lane.b32.xlu0 %v1940, 20
    %v2123 = vpop.permute.xlu0 %2122
    %2124 = vrot.lane.b32.xlu0 %v1941, 20
    %v2125 = vpop.permute.xlu0 %2124
    %2126 = vrot.lane.b32.xlu0 %v1942, 20
    %v2127 = vpop.permute.xlu0 %2126
    %2128 = vrot.lane.b32.xlu0 %v1943, 20
    %v2129 = vpop.permute.xlu0 %2128
    %2130 = vrot.lane.b32.xlu0 %v1944, 20
    %v2131 = vpop.permute.xlu0 %2130
    %2132 = vrot.lane.b32.xlu0 %v1945, 20
    %v2133 = vpop.permute.xlu0 %2132
    %2134 = vrot.lane.b32.xlu0 %v1946, 20
    %v2135 = vpop.permute.xlu0 %2134
    %2136 = vrot.lane.b32.xlu0 %v1947, 20
    %v2137 = vpop.permute.xlu0 %2136
    %2138 = vrot.lane.b32.xlu0 %v1948, 20
    %v2139 = vpop.permute.xlu0 %2138
    %2140 = vrot.lane.b32.xlu0 %v1949, 20
    %v2141 = vpop.permute.xlu0 %2140
    %vm2206 = vcmask 195744
    %2207 = vst.msk [vmem:[#allocation2] sm:$0xff] %vm2206, %v2015
    %2208 = vst.msk [vmem:[#allocation2 + $0x8] sm:$0xff] %vm2206, %v2017
    %2209 = vst.msk [vmem:[#allocation2 + $0x10] sm:$0xff] %vm2206, %v2019
    %2210 = vst.msk [vmem:[#allocation2 + $0x18] sm:$0xff] %vm2206, %v2021
    %2211 = vst.msk [vmem:[#allocation2 + $0x20] sm:$0xff] %vm2206, %v2023
    %2212 = vst.msk [vmem:[#allocation2 + $0x28] sm:$0xff] %vm2206, %v2025
    %2213 = vst.msk [vmem:[#allocation2 + $0x30] sm:$0xff] %vm2206, %v2027
    %2214 = vst.msk [vmem:[#allocation2 + $0x38] sm:$0xff] %vm2206, %v2029
    %2215 = vst.msk [vmem:[#allocation2 + $0x40] sm:$0xff] %vm2206, %v2031
    %2216 = vst.msk [vmem:[#allocation2 + $0x48] sm:$0xff] %vm2206, %v2033
    %2217 = vst.msk [vmem:[#allocation2 + $0x50] sm:$0xff] %vm2206, %v2035
    %2218 = vst.msk [vmem:[#allocation2 + $0x58] sm:$0xff] %vm2206, %v2037
    %2219 = vst.msk [vmem:[#allocation2 + $0x60] sm:$0xff] %vm2206, %v2039
    %2220 = vst.msk [vmem:[#allocation2 + $0x68] sm:$0xff] %vm2206, %v2041
    %2221 = vst.msk [vmem:[#allocation2 + $0x70] sm:$0xff] %vm2206, %v2043
    %2222 = vst.msk [vmem:[#allocation2 + $0x78] sm:$0xff] %vm2206, %v2045
    %2223 = vst.msk [vmem:[#allocation2 + $0x80] sm:$0xff] %vm2206, %v2047
    %2224 = vst.msk [vmem:[#allocation2 + $0x88] sm:$0xff] %vm2206, %v2049
    %2225 = vst.msk [vmem:[#allocation2 + $0x90] sm:$0xff] %vm2206, %v2051
    %2226 = vst.msk [vmem:[#allocation2 + $0x98] sm:$0xff] %vm2206, %v2053
    %2227 = vst.msk [vmem:[#allocation2 + $0xa0] sm:$0xff] %vm2206, %v2055
    %2228 = vst.msk [vmem:[#allocation2 + $0xa8] sm:$0xff] %vm2206, %v2057
    %2229 = vst.msk [vmem:[#allocation2 + $0xb0] sm:$0xff] %vm2206, %v2059
    %2230 = vst.msk [vmem:[#allocation2 + $0xb8] sm:$0xff] %vm2206, %v2061
    %2231 = vst.msk [vmem:[#allocation2 + $0xc0] sm:$0xff] %vm2206, %v2063
    %2232 = vst.msk [vmem:[#allocation2 + $0xc8] sm:$0xff] %vm2206, %v2065
    %2233 = vst.msk [vmem:[#allocation2 + $0xd0] sm:$0xff] %vm2206, %v2067
    %2234 = vst.msk [vmem:[#allocation2 + $0xd8] sm:$0xff] %vm2206, %v2069
    %2235 = vst.msk [vmem:[#allocation2 + $0xe0] sm:$0xff] %vm2206, %v2071
    %2236 = vst.msk [vmem:[#allocation2 + $0xe8] sm:$0xff] %vm2206, %v2073
    %2237 = vst.msk [vmem:[#allocation2 + $0xf0] sm:$0xff] %vm2206, %v2075
    %2238 = vst.msk [vmem:[#allocation2 + $0xf8] sm:$0xff] %vm2206, %v2077
    %2239 = vst.msk [vmem:[#allocation2 + $0x100] sm:$0xff] %vm2206, %v2079
    %2240 = vst.msk [vmem:[#allocation2 + $0x108] sm:$0xff] %vm2206, %v2081
    %2241 = vst.msk [vmem:[#allocation2 + $0x110] sm:$0xff] %vm2206, %v2083
    %2242 = vst.msk [vmem:[#allocation2 + $0x118] sm:$0xff] %vm2206, %v2085
    %2243 = vst.msk [vmem:[#allocation2 + $0x120] sm:$0xff] %vm2206, %v2087
    %2244 = vst.msk [vmem:[#allocation2 + $0x128] sm:$0xff] %vm2206, %v2089
    %2245 = vst.msk [vmem:[#allocation2 + $0x130] sm:$0xff] %vm2206, %v2091
    %2246 = vst.msk [vmem:[#allocation2 + $0x138] sm:$0xff] %vm2206, %v2093
    %2247 = vst.msk [vmem:[#allocation2 + $0x140] sm:$0xff] %vm2206, %v2095
    %2248 = vst.msk [vmem:[#allocation2 + $0x148] sm:$0xff] %vm2206, %v2097
    %2249 = vst.msk [vmem:[#allocation2 + $0x150] sm:$0xff] %vm2206, %v2099
    %2250 = vst.msk [vmem:[#allocation2 + $0x158] sm:$0xff] %vm2206, %v2101
    %2251 = vst.msk [vmem:[#allocation2 + $0x160] sm:$0xff] %vm2206, %v2103
    %2252 = vst.msk [vmem:[#allocation2 + $0x168] sm:$0xff] %vm2206, %v2105
    %2253 = vst.msk [vmem:[#allocation2 + $0x170] sm:$0xff] %vm2206, %v2107
    %2254 = vst.msk [vmem:[#allocation2 + $0x178] sm:$0xff] %vm2206, %v2109
    %2255 = vst.msk [vmem:[#allocation2 + $0x180] sm:$0xff] %vm2206, %v2111
    %2256 = vst.msk [vmem:[#allocation2 + $0x188] sm:$0xff] %vm2206, %v2113
    %2257 = vst.msk [vmem:[#allocation2 + $0x190] sm:$0xff] %vm2206, %v2115
    %2258 = vst.msk [vmem:[#allocation2 + $0x198] sm:$0xff] %vm2206, %v2117
    %2259 = vst.msk [vmem:[#allocation2 + $0x1a0] sm:$0xff] %vm2206, %v2119
    %2260 = vst.msk [vmem:[#allocation2 + $0x1a8] sm:$0xff] %vm2206, %v2121
    %2261 = vst.msk [vmem:[#allocation2 + $0x1b0] sm:$0xff] %vm2206, %v2123
    %2262 = vst.msk [vmem:[#allocation2 + $0x1b8] sm:$0xff] %vm2206, %v2125
    %2263 = vst.msk [vmem:[#allocation2 + $0x1c0] sm:$0xff] %vm2206, %v2127
    %2264 = vst.msk [vmem:[#allocation2 + $0x1c8] sm:$0xff] %vm2206, %v2129
    %2265 = vst.msk [vmem:[#allocation2 + $0x1d0] sm:$0xff] %vm2206, %v2131
    %2266 = vst.msk [vmem:[#allocation2 + $0x1d8] sm:$0xff] %vm2206, %v2133
    %2267 = vst.msk [vmem:[#allocation2 + $0x1e0] sm:$0xff] %vm2206, %v2135
    %2268 = vst.msk [vmem:[#allocation2 + $0x1e8] sm:$0xff] %vm2206, %v2137
    %2269 = vst.msk [vmem:[#allocation2 + $0x1f0] sm:$0xff] %vm2206, %v2139
    %2270 = vst.msk [vmem:[#allocation2 + $0x1f8] sm:$0xff] %vm2206, %v2141
    %s2271 = scalar_lea.vmem %s0, 48
    %v2272 = vld [vmem:[%s2271] sm:$0xff]
    %v2273 = vld [vmem:[%s2271 + $0x8] sm:$0xff]
    %v2274 = vld [vmem:[%s2271 + $0x18] sm:$0xff]
    %v2275 = vld [vmem:[%s2271 + $0x20] sm:$0xff]
    %v2276 = vld [vmem:[%s2271 + $0x30] sm:$0xff]
    %v2277 = vld [vmem:[%s2271 + $0x38] sm:$0xff]
    %v2278 = vld [vmem:[%s2271 + $0x48] sm:$0xff]
    %v2279 = vld [vmem:[%s2271 + $0x50] sm:$0xff]
    %v2280 = vld [vmem:[%s2271 + $0x60] sm:$0xff]
    %v2281 = vld [vmem:[%s2271 + $0x68] sm:$0xff]
    %v2282 = vld [vmem:[%s2271 + $0x78] sm:$0xff]
    %v2283 = vld [vmem:[%s2271 + $0x80] sm:$0xff]
    %v2284 = vld [vmem:[%s2271 + $0x90] sm:$0xff]
    %v2285 = vld [vmem:[%s2271 + $0x98] sm:$0xff]
    %v2286 = vld [vmem:[%s2271 + $0xa8] sm:$0xff]
    %v2287 = vld [vmem:[%s2271 + $0xb0] sm:$0xff]
    %v2288 = vld [vmem:[%s2271 + $0xc0] sm:$0xff]
    %v2289 = vld [vmem:[%s2271 + $0xc8] sm:$0xff]
    %v2290 = vld [vmem:[%s2271 + $0xd8] sm:$0xff]
    %v2291 = vld [vmem:[%s2271 + $0xe0] sm:$0xff]
    %v2292 = vld [vmem:[%s2271 + $0xf0] sm:$0xff]
    %v2293 = vld [vmem:[%s2271 + $0xf8] sm:$0xff]
    %v2294 = vld [vmem:[%s2271 + $0x108] sm:$0xff]
    %v2295 = vld [vmem:[%s2271 + $0x110] sm:$0xff]
    %v2296 = vld [vmem:[%s2271 + $0x120] sm:$0xff]
    %v2297 = vld [vmem:[%s2271 + $0x128] sm:$0xff]
    %v2298 = vld [vmem:[%s2271 + $0x138] sm:$0xff]
    %v2299 = vld [vmem:[%s2271 + $0x140] sm:$0xff]
    %v2300 = vld [vmem:[%s2271 + $0x150] sm:$0xff]
    %v2301 = vld [vmem:[%s2271 + $0x158] sm:$0xff]
    %v2302 = vld [vmem:[%s2271 + $0x168] sm:$0xff]
    %v2303 = vld [vmem:[%s2271 + $0x170] sm:$0xff]
    %v2304 = vld [vmem:[%s2271 + $0x1b0] sm:$0xff]
    %v2305 = vld [vmem:[%s2271 + $0x1b8] sm:$0xff]
    %v2306 = vld [vmem:[%s2271 + $0x1c8] sm:$0xff]
    %v2307 = vld [vmem:[%s2271 + $0x1d0] sm:$0xff]
    %v2308 = vld [vmem:[%s2271 + $0x1e0] sm:$0xff]
    %v2309 = vld [vmem:[%s2271 + $0x1e8] sm:$0xff]
    %v2310 = vld [vmem:[%s2271 + $0x1f8] sm:$0xff]
    %v2311 = vld [vmem:[%s2271 + $0x200] sm:$0xff]
    %v2312 = vld [vmem:[%s2271 + $0x210] sm:$0xff]
    %v2313 = vld [vmem:[%s2271 + $0x218] sm:$0xff]
    %v2314 = vld [vmem:[%s2271 + $0x228] sm:$0xff]
    %v2315 = vld [vmem:[%s2271 + $0x230] sm:$0xff]
    %v2316 = vld [vmem:[%s2271 + $0x240] sm:$0xff]
    %v2317 = vld [vmem:[%s2271 + $0x248] sm:$0xff]
    %v2318 = vld [vmem:[%s2271 + $0x258] sm:$0xff]
    %v2319 = vld [vmem:[%s2271 + $0x260] sm:$0xff]
    %v2320 = vld [vmem:[%s2271 + $0x270] sm:$0xff]
    %v2321 = vld [vmem:[%s2271 + $0x278] sm:$0xff]
    %v2322 = vld [vmem:[%s2271 + $0x288] sm:$0xff]
    %v2323 = vld [vmem:[%s2271 + $0x290] sm:$0xff]
    %v2324 = vld [vmem:[%s2271 + $0x2a0] sm:$0xff]
    %v2325 = vld [vmem:[%s2271 + $0x2a8] sm:$0xff]
    %v2326 = vld [vmem:[%s2271 + $0x2b8] sm:$0xff]
    %v2327 = vld [vmem:[%s2271 + $0x2c0] sm:$0xff]
    %v2328 = vld [vmem:[%s2271 + $0x2d0] sm:$0xff]
    %v2329 = vld [vmem:[%s2271 + $0x2d8] sm:$0xff]
    %v2330 = vld [vmem:[%s2271 + $0x2e8] sm:$0xff]
    %v2331 = vld [vmem:[%s2271 + $0x2f0] sm:$0xff]
    %v2332 = vld [vmem:[%s2271 + $0x300] sm:$0xff]
    %v2333 = vld [vmem:[%s2271 + $0x308] sm:$0xff]
    %v2334 = vld [vmem:[%s2271 + $0x318] sm:$0xff]
    %v2335 = vld [vmem:[%s2271 + $0x320] sm:$0xff]
    %2400 = vrot.lane.b32.xlu0 %v2272, 24
    %v2401 = vpop.permute.xlu0 %2400
    %2402 = vrot.lane.b32.xlu0 %v2273, 24
    %v2403 = vpop.permute.xlu0 %2402
    %2404 = vrot.lane.b32.xlu0 %v2274, 24
    %v2405 = vpop.permute.xlu0 %2404
    %2406 = vrot.lane.b32.xlu0 %v2275, 24
    %v2407 = vpop.permute.xlu0 %2406
    %2408 = vrot.lane.b32.xlu0 %v2276, 24
    %v2409 = vpop.permute.xlu0 %2408
    %2410 = vrot.lane.b32.xlu0 %v2277, 24
    %v2411 = vpop.permute.xlu0 %2410
    %2412 = vrot.lane.b32.xlu0 %v2278, 24
    %v2413 = vpop.permute.xlu0 %2412
    %2414 = vrot.lane.b32.xlu0 %v2279, 24
    %v2415 = vpop.permute.xlu0 %2414
    %2416 = vrot.lane.b32.xlu0 %v2280, 24
    %v2417 = vpop.permute.xlu0 %2416
    %2418 = vrot.lane.b32.xlu0 %v2281, 24
    %v2419 = vpop.permute.xlu0 %2418
    %2420 = vrot.lane.b32.xlu0 %v2282, 24
    %v2421 = vpop.permute.xlu0 %2420
    %2422 = vrot.lane.b32.xlu0 %v2283, 24
    %v2423 = vpop.permute.xlu0 %2422
    %2424 = vrot.lane.b32.xlu0 %v2284, 24
    %v2425 = vpop.permute.xlu0 %2424
    %2426 = vrot.lane.b32.xlu0 %v2285, 24
    %v2427 = vpop.permute.xlu0 %2426
    %2428 = vrot.lane.b32.xlu0 %v2286, 24
    %v2429 = vpop.permute.xlu0 %2428
    %2430 = vrot.lane.b32.xlu0 %v2287, 24
    %v2431 = vpop.permute.xlu0 %2430
    %2432 = vrot.lane.b32.xlu0 %v2288, 24
    %v2433 = vpop.permute.xlu0 %2432
    %2434 = vrot.lane.b32.xlu0 %v2289, 24
    %v2435 = vpop.permute.xlu0 %2434
    %2436 = vrot.lane.b32.xlu0 %v2290, 24
    %v2437 = vpop.permute.xlu0 %2436
    %2438 = vrot.lane.b32.xlu0 %v2291, 24
    %v2439 = vpop.permute.xlu0 %2438
    %2440 = vrot.lane.b32.xlu0 %v2292, 24
    %v2441 = vpop.permute.xlu0 %2440
    %2442 = vrot.lane.b32.xlu0 %v2293, 24
    %v2443 = vpop.permute.xlu0 %2442
    %2444 = vrot.lane.b32.xlu0 %v2294, 24
    %v2445 = vpop.permute.xlu0 %2444
    %2446 = vrot.lane.b32.xlu0 %v2295, 24
    %v2447 = vpop.permute.xlu0 %2446
    %2448 = vrot.lane.b32.xlu0 %v2296, 24
    %v2449 = vpop.permute.xlu0 %2448
    %2450 = vrot.lane.b32.xlu0 %v2297, 24
    %v2451 = vpop.permute.xlu0 %2450
    %2452 = vrot.lane.b32.xlu0 %v2298, 24
    %v2453 = vpop.permute.xlu0 %2452
    %2454 = vrot.lane.b32.xlu0 %v2299, 24
    %v2455 = vpop.permute.xlu0 %2454
    %2456 = vrot.lane.b32.xlu0 %v2300, 24
    %v2457 = vpop.permute.xlu0 %2456
    %2458 = vrot.lane.b32.xlu0 %v2301, 24
    %v2459 = vpop.permute.xlu0 %2458
    %2460 = vrot.lane.b32.xlu0 %v2302, 24
    %v2461 = vpop.permute.xlu0 %2460
    %2462 = vrot.lane.b32.xlu0 %v2303, 24
    %v2463 = vpop.permute.xlu0 %2462
    %2464 = vrot.lane.b32.xlu0 %v2304, 24
    %v2465 = vpop.permute.xlu0 %2464
    %2466 = vrot.lane.b32.xlu0 %v2305, 24
    %v2467 = vpop.permute.xlu0 %2466
    %2468 = vrot.lane.b32.xlu0 %v2306, 24
    %v2469 = vpop.permute.xlu0 %2468
    %2470 = vrot.lane.b32.xlu0 %v2307, 24
    %v2471 = vpop.permute.xlu0 %2470
    %2472 = vrot.lane.b32.xlu0 %v2308, 24
    %v2473 = vpop.permute.xlu0 %2472
    %2474 = vrot.lane.b32.xlu0 %v2309, 24
    %v2475 = vpop.permute.xlu0 %2474
    %2476 = vrot.lane.b32.xlu0 %v2310, 24
    %v2477 = vpop.permute.xlu0 %2476
    %2478 = vrot.lane.b32.xlu0 %v2311, 24
    %v2479 = vpop.permute.xlu0 %2478
    %2480 = vrot.lane.b32.xlu0 %v2312, 24
    %v2481 = vpop.permute.xlu0 %2480
    %2482 = vrot.lane.b32.xlu0 %v2313, 24
    %v2483 = vpop.permute.xlu0 %2482
    %2484 = vrot.lane.b32.xlu0 %v2314, 24
    %v2485 = vpop.permute.xlu0 %2484
    %2486 = vrot.lane.b32.xlu0 %v2315, 24
    %v2487 = vpop.permute.xlu0 %2486
    %2488 = vrot.lane.b32.xlu0 %v2316, 24
    %v2489 = vpop.permute.xlu0 %2488
    %2490 = vrot.lane.b32.xlu0 %v2317, 24
    %v2491 = vpop.permute.xlu0 %2490
    %2492 = vrot.lane.b32.xlu0 %v2318, 24
    %v2493 = vpop.permute.xlu0 %2492
    %2494 = vrot.lane.b32.xlu0 %v2319, 24
    %v2495 = vpop.permute.xlu0 %2494
    %2496 = vrot.lane.b32.xlu0 %v2320, 24
    %v2497 = vpop.permute.xlu0 %2496
    %2498 = vrot.lane.b32.xlu0 %v2321, 24
    %v2499 = vpop.permute.xlu0 %2498
    %2500 = vrot.lane.b32.xlu0 %v2322, 24
    %v2501 = vpop.permute.xlu0 %2500
    %2502 = vrot.lane.b32.xlu0 %v2323, 24
    %v2503 = vpop.permute.xlu0 %2502
    %2504 = vrot.lane.b32.xlu0 %v2324, 24
    %v2505 = vpop.permute.xlu0 %2504
    %2506 = vrot.lane.b32.xlu0 %v2325, 24
    %v2507 = vpop.permute.xlu0 %2506
    %2508 = vrot.lane.b32.xlu0 %v2326, 24
    %v2509 = vpop.permute.xlu0 %2508
    %2510 = vrot.lane.b32.xlu0 %v2327, 24
    %v2511 = vpop.permute.xlu0 %2510
    %2512 = vrot.lane.b32.xlu0 %v2328, 24
    %v2513 = vpop.permute.xlu0 %2512
    %2514 = vrot.lane.b32.xlu0 %v2329, 24
    %v2515 = vpop.permute.xlu0 %2514
    %2516 = vrot.lane.b32.xlu0 %v2330, 24
    %v2517 = vpop.permute.xlu0 %2516
    %2518 = vrot.lane.b32.xlu0 %v2331, 24
    %v2519 = vpop.permute.xlu0 %2518
    %2520 = vrot.lane.b32.xlu0 %v2332, 24
    %v2521 = vpop.permute.xlu0 %2520
    %2522 = vrot.lane.b32.xlu0 %v2333, 24
    %v2523 = vpop.permute.xlu0 %2522
    %2524 = vrot.lane.b32.xlu0 %v2334, 24
    %v2525 = vpop.permute.xlu0 %2524
    %2526 = vrot.lane.b32.xlu0 %v2335, 24
    %v2527 = vpop.permute.xlu0 %2526
    %vm2592 = vcmask 228544
    %2593 = vst.msk [vmem:[#allocation2] sm:$0xff] %vm2592, %v2401
    %2594 = vst.msk [vmem:[#allocation2 + $0x8] sm:$0xff] %vm2592, %v2403
    %2595 = vst.msk [vmem:[#allocation2 + $0x10] sm:$0xff] %vm2592, %v2405
    %2596 = vst.msk [vmem:[#allocation2 + $0x18] sm:$0xff] %vm2592, %v2407
    %2597 = vst.msk [vmem:[#allocation2 + $0x20] sm:$0xff] %vm2592, %v2409
    %2598 = vst.msk [vmem:[#allocation2 + $0x28] sm:$0xff] %vm2592, %v2411
    %2599 = vst.msk [vmem:[#allocation2 + $0x30] sm:$0xff] %vm2592, %v2413
    %2600 = vst.msk [vmem:[#allocation2 + $0x38] sm:$0xff] %vm2592, %v2415
    %2601 = vst.msk [vmem:[#allocation2 + $0x40] sm:$0xff] %vm2592, %v2417
    %2602 = vst.msk [vmem:[#allocation2 + $0x48] sm:$0xff] %vm2592, %v2419
    %2603 = vst.msk [vmem:[#allocation2 + $0x50] sm:$0xff] %vm2592, %v2421
    %2604 = vst.msk [vmem:[#allocation2 + $0x58] sm:$0xff] %vm2592, %v2423
    %2605 = vst.msk [vmem:[#allocation2 + $0x60] sm:$0xff] %vm2592, %v2425
    %2606 = vst.msk [vmem:[#allocation2 + $0x68] sm:$0xff] %vm2592, %v2427
    %2607 = vst.msk [vmem:[#allocation2 + $0x70] sm:$0xff] %vm2592, %v2429
    %2608 = vst.msk [vmem:[#allocation2 + $0x78] sm:$0xff] %vm2592, %v2431
    %2609 = vst.msk [vmem:[#allocation2 + $0x80] sm:$0xff] %vm2592, %v2433
    %2610 = vst.msk [vmem:[#allocation2 + $0x88] sm:$0xff] %vm2592, %v2435
    %2611 = vst.msk [vmem:[#allocation2 + $0x90] sm:$0xff] %vm2592, %v2437
    %2612 = vst.msk [vmem:[#allocation2 + $0x98] sm:$0xff] %vm2592, %v2439
    %2613 = vst.msk [vmem:[#allocation2 + $0xa0] sm:$0xff] %vm2592, %v2441
    %2614 = vst.msk [vmem:[#allocation2 + $0xa8] sm:$0xff] %vm2592, %v2443
    %2615 = vst.msk [vmem:[#allocation2 + $0xb0] sm:$0xff] %vm2592, %v2445
    %2616 = vst.msk [vmem:[#allocation2 + $0xb8] sm:$0xff] %vm2592, %v2447
    %2617 = vst.msk [vmem:[#allocation2 + $0xc0] sm:$0xff] %vm2592, %v2449
    %2618 = vst.msk [vmem:[#allocation2 + $0xc8] sm:$0xff] %vm2592, %v2451
    %2619 = vst.msk [vmem:[#allocation2 + $0xd0] sm:$0xff] %vm2592, %v2453
    %2620 = vst.msk [vmem:[#allocation2 + $0xd8] sm:$0xff] %vm2592, %v2455
    %2621 = vst.msk [vmem:[#allocation2 + $0xe0] sm:$0xff] %vm2592, %v2457
    %2622 = vst.msk [vmem:[#allocation2 + $0xe8] sm:$0xff] %vm2592, %v2459
    %2623 = vst.msk [vmem:[#allocation2 + $0xf0] sm:$0xff] %vm2592, %v2461
    %2624 = vst.msk [vmem:[#allocation2 + $0xf8] sm:$0xff] %vm2592, %v2463
    %2625 = vst.msk [vmem:[#allocation2 + $0x100] sm:$0xff] %vm2592, %v2465
    %2626 = vst.msk [vmem:[#allocation2 + $0x108] sm:$0xff] %vm2592, %v2467
    %2627 = vst.msk [vmem:[#allocation2 + $0x110] sm:$0xff] %vm2592, %v2469
    %2628 = vst.msk [vmem:[#allocation2 + $0x118] sm:$0xff] %vm2592, %v2471
    %2629 = vst.msk [vmem:[#allocation2 + $0x120] sm:$0xff] %vm2592, %v2473
    %2630 = vst.msk [vmem:[#allocation2 + $0x128] sm:$0xff] %vm2592, %v2475
    %2631 = vst.msk [vmem:[#allocation2 + $0x130] sm:$0xff] %vm2592, %v2477
    %2632 = vst.msk [vmem:[#allocation2 + $0x138] sm:$0xff] %vm2592, %v2479
    %2633 = vst.msk [vmem:[#allocation2 + $0x140] sm:$0xff] %vm2592, %v2481
    %2634 = vst.msk [vmem:[#allocation2 + $0x148] sm:$0xff] %vm2592, %v2483
    %2635 = vst.msk [vmem:[#allocation2 + $0x150] sm:$0xff] %vm2592, %v2485
    %2636 = vst.msk [vmem:[#allocation2 + $0x158] sm:$0xff] %vm2592, %v2487
    %2637 = vst.msk [vmem:[#allocation2 + $0x160] sm:$0xff] %vm2592, %v2489
    %2638 = vst.msk [vmem:[#allocation2 + $0x168] sm:$0xff] %vm2592, %v2491
    %2639 = vst.msk [vmem:[#allocation2 + $0x170] sm:$0xff] %vm2592, %v2493
    %2640 = vst.msk [vmem:[#allocation2 + $0x178] sm:$0xff] %vm2592, %v2495
    %2641 = vst.msk [vmem:[#allocation2 + $0x180] sm:$0xff] %vm2592, %v2497
    %2642 = vst.msk [vmem:[#allocation2 + $0x188] sm:$0xff] %vm2592, %v2499
    %2643 = vst.msk [vmem:[#allocation2 + $0x190] sm:$0xff] %vm2592, %v2501
    %2644 = vst.msk [vmem:[#allocation2 + $0x198] sm:$0xff] %vm2592, %v2503
    %2645 = vst.msk [vmem:[#allocation2 + $0x1a0] sm:$0xff] %vm2592, %v2505
    %2646 = vst.msk [vmem:[#allocation2 + $0x1a8] sm:$0xff] %vm2592, %v2507
    %2647 = vst.msk [vmem:[#allocation2 + $0x1b0] sm:$0xff] %vm2592, %v2509
    %2648 = vst.msk [vmem:[#allocation2 + $0x1b8] sm:$0xff] %vm2592, %v2511
    %2649 = vst.msk [vmem:[#allocation2 + $0x1c0] sm:$0xff] %vm2592, %v2513
    %2650 = vst.msk [vmem:[#allocation2 + $0x1c8] sm:$0xff] %vm2592, %v2515
    %2651 = vst.msk [vmem:[#allocation2 + $0x1d0] sm:$0xff] %vm2592, %v2517
    %2652 = vst.msk [vmem:[#allocation2 + $0x1d8] sm:$0xff] %vm2592, %v2519
    %2653 = vst.msk [vmem:[#allocation2 + $0x1e0] sm:$0xff] %vm2592, %v2521
    %2654 = vst.msk [vmem:[#allocation2 + $0x1e8] sm:$0xff] %vm2592, %v2523
    %2655 = vst.msk [vmem:[#allocation2 + $0x1f0] sm:$0xff] %vm2592, %v2525
    %2656 = vst.msk [vmem:[#allocation2 + $0x1f8] sm:$0xff] %vm2592, %v2527
    %v2657 = vld [vmem:[%s2271 + $0x1] sm:$0xff]
    %v2658 = vld [vmem:[%s2271 + $0x9] sm:$0xff]
    %v2659 = vld [vmem:[%s2271 + $0x19] sm:$0xff]
    %v2660 = vld [vmem:[%s2271 + $0x21] sm:$0xff]
    %v2661 = vld [vmem:[%s2271 + $0x31] sm:$0xff]
    %v2662 = vld [vmem:[%s2271 + $0x39] sm:$0xff]
    %v2663 = vld [vmem:[%s2271 + $0x49] sm:$0xff]
    %v2664 = vld [vmem:[%s2271 + $0x51] sm:$0xff]
    %v2665 = vld [vmem:[%s2271 + $0x61] sm:$0xff]
    %v2666 = vld [vmem:[%s2271 + $0x69] sm:$0xff]
    %v2667 = vld [vmem:[%s2271 + $0x79] sm:$0xff]
    %v2668 = vld [vmem:[%s2271 + $0x81] sm:$0xff]
    %v2669 = vld [vmem:[%s2271 + $0x91] sm:$0xff]
    %v2670 = vld [vmem:[%s2271 + $0x99] sm:$0xff]
    %v2671 = vld [vmem:[%s2271 + $0xa9] sm:$0xff]
    %v2672 = vld [vmem:[%s2271 + $0xb1] sm:$0xff]
    %v2673 = vld [vmem:[%s2271 + $0xc1] sm:$0xff]
    %v2674 = vld [vmem:[%s2271 + $0xc9] sm:$0xff]
    %v2675 = vld [vmem:[%s2271 + $0xd9] sm:$0xff]
    %v2676 = vld [vmem:[%s2271 + $0xe1] sm:$0xff]
    %v2677 = vld [vmem:[%s2271 + $0xf1] sm:$0xff]
    %v2678 = vld [vmem:[%s2271 + $0xf9] sm:$0xff]
    %v2679 = vld [vmem:[%s2271 + $0x109] sm:$0xff]
    %v2680 = vld [vmem:[%s2271 + $0x111] sm:$0xff]
    %v2681 = vld [vmem:[%s2271 + $0x121] sm:$0xff]
    %v2682 = vld [vmem:[%s2271 + $0x129] sm:$0xff]
    %v2683 = vld [vmem:[%s2271 + $0x139] sm:$0xff]
    %v2684 = vld [vmem:[%s2271 + $0x141] sm:$0xff]
    %v2685 = vld [vmem:[%s2271 + $0x151] sm:$0xff]
    %v2686 = vld [vmem:[%s2271 + $0x159] sm:$0xff]
    %v2687 = vld [vmem:[%s2271 + $0x169] sm:$0xff]
    %v2688 = vld [vmem:[%s2271 + $0x171] sm:$0xff]
    %v2689 = vld [vmem:[%s2271 + $0x1b1] sm:$0xff]
    %v2690 = vld [vmem:[%s2271 + $0x1b9] sm:$0xff]
    %v2691 = vld [vmem:[%s2271 + $0x1c9] sm:$0xff]
    %v2692 = vld [vmem:[%s2271 + $0x1d1] sm:$0xff]
    %v2693 = vld [vmem:[%s2271 + $0x1e1] sm:$0xff]
    %v2694 = vld [vmem:[%s2271 + $0x1e9] sm:$0xff]
    %v2695 = vld [vmem:[%s2271 + $0x1f9] sm:$0xff]
    %v2696 = vld [vmem:[%s2271 + $0x201] sm:$0xff]
    %v2697 = vld [vmem:[%s2271 + $0x211] sm:$0xff]
    %v2698 = vld [vmem:[%s2271 + $0x219] sm:$0xff]
    %v2699 = vld [vmem:[%s2271 + $0x229] sm:$0xff]
    %v2700 = vld [vmem:[%s2271 + $0x231] sm:$0xff]
    %v2701 = vld [vmem:[%s2271 + $0x241] sm:$0xff]
    %v2702 = vld [vmem:[%s2271 + $0x249] sm:$0xff]
    %v2703 = vld [vmem:[%s2271 + $0x259] sm:$0xff]
    %v2704 = vld [vmem:[%s2271 + $0x261] sm:$0xff]
    %v2705 = vld [vmem:[%s2271 + $0x271] sm:$0xff]
    %v2706 = vld [vmem:[%s2271 + $0x279] sm:$0xff]
    %v2707 = vld [vmem:[%s2271 + $0x289] sm:$0xff]
    %v2708 = vld [vmem:[%s2271 + $0x291] sm:$0xff]
    %v2709 = vld [vmem:[%s2271 + $0x2a1] sm:$0xff]
    %v2710 = vld [vmem:[%s2271 + $0x2a9] sm:$0xff]
    %v2711 = vld [vmem:[%s2271 + $0x2b9] sm:$0xff]
    %v2712 = vld [vmem:[%s2271 + $0x2c1] sm:$0xff]
    %v2713 = vld [vmem:[%s2271 + $0x2d1] sm:$0xff]
    %v2714 = vld [vmem:[%s2271 + $0x2d9] sm:$0xff]
    %v2715 = vld [vmem:[%s2271 + $0x2e9] sm:$0xff]
    %v2716 = vld [vmem:[%s2271 + $0x2f1] sm:$0xff]
    %v2717 = vld [vmem:[%s2271 + $0x301] sm:$0xff]
    %v2718 = vld [vmem:[%s2271 + $0x309] sm:$0xff]
    %v2719 = vld [vmem:[%s2271 + $0x319] sm:$0xff]
    %v2720 = vld [vmem:[%s2271 + $0x321] sm:$0xff]
    %2785 = vrot.lane.b32.xlu0 %v2657, 28
    %v2786 = vpop.permute.xlu0 %2785
    %2787 = vrot.lane.b32.xlu0 %v2658, 28
    %v2788 = vpop.permute.xlu0 %2787
    %2789 = vrot.lane.b32.xlu0 %v2659, 28
    %v2790 = vpop.permute.xlu0 %2789
    %2791 = vrot.lane.b32.xlu0 %v2660, 28
    %v2792 = vpop.permute.xlu0 %2791
    %2793 = vrot.lane.b32.xlu0 %v2661, 28
    %v2794 = vpop.permute.xlu0 %2793
    %2795 = vrot.lane.b32.xlu0 %v2662, 28
    %v2796 = vpop.permute.xlu0 %2795
    %2797 = vrot.lane.b32.xlu0 %v2663, 28
    %v2798 = vpop.permute.xlu0 %2797
    %2799 = vrot.lane.b32.xlu0 %v2664, 28
    %v2800 = vpop.permute.xlu0 %2799
    %2801 = vrot.lane.b32.xlu0 %v2665, 28
    %v2802 = vpop.permute.xlu0 %2801
    %2803 = vrot.lane.b32.xlu0 %v2666, 28
    %v2804 = vpop.permute.xlu0 %2803
    %2805 = vrot.lane.b32.xlu0 %v2667, 28
    %v2806 = vpop.permute.xlu0 %2805
    %2807 = vrot.lane.b32.xlu0 %v2668, 28
    %v2808 = vpop.permute.xlu0 %2807
    %2809 = vrot.lane.b32.xlu0 %v2669, 28
    %v2810 = vpop.permute.xlu0 %2809
    %2811 = vrot.lane.b32.xlu0 %v2670, 28
    %v2812 = vpop.permute.xlu0 %2811
    %2813 = vrot.lane.b32.xlu0 %v2671, 28
    %v2814 = vpop.permute.xlu0 %2813
    %2815 = vrot.lane.b32.xlu0 %v2672, 28
    %v2816 = vpop.permute.xlu0 %2815
    %2817 = vrot.lane.b32.xlu0 %v2673, 28
    %v2818 = vpop.permute.xlu0 %2817
    %2819 = vrot.lane.b32.xlu0 %v2674, 28
    %v2820 = vpop.permute.xlu0 %2819
    %2821 = vrot.lane.b32.xlu0 %v2675, 28
    %v2822 = vpop.permute.xlu0 %2821
    %2823 = vrot.lane.b32.xlu0 %v2676, 28
    %v2824 = vpop.permute.xlu0 %2823
    %2825 = vrot.lane.b32.xlu0 %v2677, 28
    %v2826 = vpop.permute.xlu0 %2825
    %2827 = vrot.lane.b32.xlu0 %v2678, 28
    %v2828 = vpop.permute.xlu0 %2827
    %2829 = vrot.lane.b32.xlu0 %v2679, 28
    %v2830 = vpop.permute.xlu0 %2829
    %2831 = vrot.lane.b32.xlu0 %v2680, 28
    %v2832 = vpop.permute.xlu0 %2831
    %2833 = vrot.lane.b32.xlu0 %v2681, 28
    %v2834 = vpop.permute.xlu0 %2833
    %2835 = vrot.lane.b32.xlu0 %v2682, 28
    %v2836 = vpop.permute.xlu0 %2835
    %2837 = vrot.lane.b32.xlu0 %v2683, 28
    %v2838 = vpop.permute.xlu0 %2837
    %2839 = vrot.lane.b32.xlu0 %v2684, 28
    %v2840 = vpop.permute.xlu0 %2839
    %2841 = vrot.lane.b32.xlu0 %v2685, 28
    %v2842 = vpop.permute.xlu0 %2841
    %2843 = vrot.lane.b32.xlu0 %v2686, 28
    %v2844 = vpop.permute.xlu0 %2843
    %2845 = vrot.lane.b32.xlu0 %v2687, 28
    %v2846 = vpop.permute.xlu0 %2845
    %2847 = vrot.lane.b32.xlu0 %v2688, 28
    %v2848 = vpop.permute.xlu0 %2847
    %2849 = vrot.lane.b32.xlu0 %v2689, 28
    %v2850 = vpop.permute.xlu0 %2849
    %2851 = vrot.lane.b32.xlu0 %v2690, 28
    %v2852 = vpop.permute.xlu0 %2851
    %2853 = vrot.lane.b32.xlu0 %v2691, 28
    %v2854 = vpop.permute.xlu0 %2853
    %2855 = vrot.lane.b32.xlu0 %v2692, 28
    %v2856 = vpop.permute.xlu0 %2855
    %2857 = vrot.lane.b32.xlu0 %v2693, 28
    %v2858 = vpop.permute.xlu0 %2857
    %2859 = vrot.lane.b32.xlu0 %v2694, 28
    %v2860 = vpop.permute.xlu0 %2859
    %2861 = vrot.lane.b32.xlu0 %v2695, 28
    %v2862 = vpop.permute.xlu0 %2861
    %2863 = vrot.lane.b32.xlu0 %v2696, 28
    %v2864 = vpop.permute.xlu0 %2863
    %2865 = vrot.lane.b32.xlu0 %v2697, 28
    %v2866 = vpop.permute.xlu0 %2865
    %2867 = vrot.lane.b32.xlu0 %v2698, 28
    %v2868 = vpop.permute.xlu0 %2867
    %2869 = vrot.lane.b32.xlu0 %v2699, 28
    %v2870 = vpop.permute.xlu0 %2869
    %2871 = vrot.lane.b32.xlu0 %v2700, 28
    %v2872 = vpop.permute.xlu0 %2871
    %2873 = vrot.lane.b32.xlu0 %v2701, 28
    %v2874 = vpop.permute.xlu0 %2873
    %2875 = vrot.lane.b32.xlu0 %v2702, 28
    %v2876 = vpop.permute.xlu0 %2875
    %2877 = vrot.lane.b32.xlu0 %v2703, 28
    %v2878 = vpop.permute.xlu0 %2877
    %2879 = vrot.lane.b32.xlu0 %v2704, 28
    %v2880 = vpop.permute.xlu0 %2879
    %2881 = vrot.lane.b32.xlu0 %v2705, 28
    %v2882 = vpop.permute.xlu0 %2881
    %2883 = vrot.lane.b32.xlu0 %v2706, 28
    %v2884 = vpop.permute.xlu0 %2883
    %2885 = vrot.lane.b32.xlu0 %v2707, 28
    %v2886 = vpop.permute.xlu0 %2885
    %2887 = vrot.lane.b32.xlu0 %v2708, 28
    %v2888 = vpop.permute.xlu0 %2887
    %2889 = vrot.lane.b32.xlu0 %v2709, 28
    %v2890 = vpop.permute.xlu0 %2889
    %2891 = vrot.lane.b32.xlu0 %v2710, 28
    %v2892 = vpop.permute.xlu0 %2891
    %2893 = vrot.lane.b32.xlu0 %v2711, 28
    %v2894 = vpop.permute.xlu0 %2893
    %2895 = vrot.lane.b32.xlu0 %v2712, 28
    %v2896 = vpop.permute.xlu0 %2895
    %2897 = vrot.lane.b32.xlu0 %v2713, 28
    %v2898 = vpop.permute.xlu0 %2897
    %2899 = vrot.lane.b32.xlu0 %v2714, 28
    %v2900 = vpop.permute.xlu0 %2899
    %2901 = vrot.lane.b32.xlu0 %v2715, 28
    %v2902 = vpop.permute.xlu0 %2901
    %2903 = vrot.lane.b32.xlu0 %v2716, 28
    %v2904 = vpop.permute.xlu0 %2903
    %2905 = vrot.lane.b32.xlu0 %v2717, 28
    %v2906 = vpop.permute.xlu0 %2905
    %2907 = vrot.lane.b32.xlu0 %v2718, 28
    %v2908 = vpop.permute.xlu0 %2907
    %2909 = vrot.lane.b32.xlu0 %v2719, 28
    %v2910 = vpop.permute.xlu0 %2909
    %2911 = vrot.lane.b32.xlu0 %v2720, 28
    %v2912 = vpop.permute.xlu0 %2911
    %vm2977 = vcmask 261344
    %2978 = vst.msk [vmem:[#allocation2] sm:$0xff] %vm2977, %v2786
    %2979 = vst.msk [vmem:[#allocation2 + $0x8] sm:$0xff] %vm2977, %v2788
    %2980 = vst.msk [vmem:[#allocation2 + $0x10] sm:$0xff] %vm2977, %v2790
    %2981 = vst.msk [vmem:[#allocation2 + $0x18] sm:$0xff] %vm2977, %v2792
    %2982 = vst.msk [vmem:[#allocation2 + $0x20] sm:$0xff] %vm2977, %v2794
    %2983 = vst.msk [vmem:[#allocation2 + $0x28] sm:$0xff] %vm2977, %v2796
    %2984 = vst.msk [vmem:[#allocation2 + $0x30] sm:$0xff] %vm2977, %v2798
    %2985 = vst.msk [vmem:[#allocation2 + $0x38] sm:$0xff] %vm2977, %v2800
    %2986 = vst.msk [vmem:[#allocation2 + $0x40] sm:$0xff] %vm2977, %v2802
    %2987 = vst.msk [vmem:[#allocation2 + $0x48] sm:$0xff] %vm2977, %v2804
    %2988 = vst.msk [vmem:[#allocation2 + $0x50] sm:$0xff] %vm2977, %v2806
    %2989 = vst.msk [vmem:[#allocation2 + $0x58] sm:$0xff] %vm2977, %v2808
    %2990 = vst.msk [vmem:[#allocation2 + $0x60] sm:$0xff] %vm2977, %v2810
    %2991 = vst.msk [vmem:[#allocation2 + $0x68] sm:$0xff] %vm2977, %v2812
    %2992 = vst.msk [vmem:[#allocation2 + $0x70] sm:$0xff] %vm2977, %v2814
    %2993 = vst.msk [vmem:[#allocation2 + $0x78] sm:$0xff] %vm2977, %v2816
    %2994 = vst.msk [vmem:[#allocation2 + $0x80] sm:$0xff] %vm2977, %v2818
    %2995 = vst.msk [vmem:[#allocation2 + $0x88] sm:$0xff] %vm2977, %v2820
    %2996 = vst.msk [vmem:[#allocation2 + $0x90] sm:$0xff] %vm2977, %v2822
    %2997 = vst.msk [vmem:[#allocation2 + $0x98] sm:$0xff] %vm2977, %v2824
    %2998 = vst.msk [vmem:[#allocation2 + $0xa0] sm:$0xff] %vm2977, %v2826
    %2999 = vst.msk [vmem:[#allocation2 + $0xa8] sm:$0xff] %vm2977, %v2828
    %3000 = vst.msk [vmem:[#allocation2 + $0xb0] sm:$0xff] %vm2977, %v2830
    %3001 = vst.msk [vmem:[#allocation2 + $0xb8] sm:$0xff] %vm2977, %v2832
    %3002 = vst.msk [vmem:[#allocation2 + $0xc0] sm:$0xff] %vm2977, %v2834
    %3003 = vst.msk [vmem:[#allocation2 + $0xc8] sm:$0xff] %vm2977, %v2836
    %3004 = vst.msk [vmem:[#allocation2 + $0xd0] sm:$0xff] %vm2977, %v2838
    %3005 = vst.msk [vmem:[#allocation2 + $0xd8] sm:$0xff] %vm2977, %v2840
    %3006 = vst.msk [vmem:[#allocation2 + $0xe0] sm:$0xff] %vm2977, %v2842
    %3007 = vst.msk [vmem:[#allocation2 + $0xe8] sm:$0xff] %vm2977, %v2844
    %3008 = vst.msk [vmem:[#allocation2 + $0xf0] sm:$0xff] %vm2977, %v2846
    %3009 = vst.msk [vmem:[#allocation2 + $0xf8] sm:$0xff] %vm2977, %v2848
    %3010 = vst.msk [vmem:[#allocation2 + $0x100] sm:$0xff] %vm2977, %v2850
    %3011 = vst.msk [vmem:[#allocation2 + $0x108] sm:$0xff] %vm2977, %v2852
    %3012 = vst.msk [vmem:[#allocation2 + $0x110] sm:$0xff] %vm2977, %v2854
    %3013 = vst.msk [vmem:[#allocation2 + $0x118] sm:$0xff] %vm2977, %v2856
    %3014 = vst.msk [vmem:[#allocation2 + $0x120] sm:$0xff] %vm2977, %v2858
    %3015 = vst.msk [vmem:[#allocation2 + $0x128] sm:$0xff] %vm2977, %v2860
    %3016 = vst.msk [vmem:[#allocation2 + $0x130] sm:$0xff] %vm2977, %v2862
    %3017 = vst.msk [vmem:[#allocation2 + $0x138] sm:$0xff] %vm2977, %v2864
    %3018 = vst.msk [vmem:[#allocation2 + $0x140] sm:$0xff] %vm2977, %v2866
    %3019 = vst.msk [vmem:[#allocation2 + $0x148] sm:$0xff] %vm2977, %v2868
    %3020 = vst.msk [vmem:[#allocation2 + $0x150] sm:$0xff] %vm2977, %v2870
    %3021 = vst.msk [vmem:[#allocation2 + $0x158] sm:$0xff] %vm2977, %v2872
    %3022 = vst.msk [vmem:[#allocation2 + $0x160] sm:$0xff] %vm2977, %v2874
    %3023 = vst.msk [vmem:[#allocation2 + $0x168] sm:$0xff] %vm2977, %v2876
    %3024 = vst.msk [vmem:[#allocation2 + $0x170] sm:$0xff] %vm2977, %v2878
    %3025 = vst.msk [vmem:[#allocation2 + $0x178] sm:$0xff] %vm2977, %v2880
    %3026 = vst.msk [vmem:[#allocation2 + $0x180] sm:$0xff] %vm2977, %v2882
    %3027 = vst.msk [vmem:[#allocation2 + $0x188] sm:$0xff] %vm2977, %v2884
    %3028 = vst.msk [vmem:[#allocation2 + $0x190] sm:$0xff] %vm2977, %v2886
    %3029 = vst.msk [vmem:[#allocation2 + $0x198] sm:$0xff] %vm2977, %v2888
    %3030 = vst.msk [vmem:[#allocation2 + $0x1a0] sm:$0xff] %vm2977, %v2890
    %3031 = vst.msk [vmem:[#allocation2 + $0x1a8] sm:$0xff] %vm2977, %v2892
    %3032 = vst.msk [vmem:[#allocation2 + $0x1b0] sm:$0xff] %vm2977, %v2894
    %3033 = vst.msk [vmem:[#allocation2 + $0x1b8] sm:$0xff] %vm2977, %v2896
    %3034 = vst.msk [vmem:[#allocation2 + $0x1c0] sm:$0xff] %vm2977, %v2898
    %3035 = vst.msk [vmem:[#allocation2 + $0x1c8] sm:$0xff] %vm2977, %v2900
    %3036 = vst.msk [vmem:[#allocation2 + $0x1d0] sm:$0xff] %vm2977, %v2902
    %3037 = vst.msk [vmem:[#allocation2 + $0x1d8] sm:$0xff] %vm2977, %v2904
    %3038 = vst.msk [vmem:[#allocation2 + $0x1e0] sm:$0xff] %vm2977, %v2906
    %3039 = vst.msk [vmem:[#allocation2 + $0x1e8] sm:$0xff] %vm2977, %v2908
    %3040 = vst.msk [vmem:[#allocation2 + $0x1f0] sm:$0xff] %vm2977, %v2910
    %3041 = vst.msk [vmem:[#allocation2 + $0x1f8] sm:$0xff] %vm2977, %v2912
    %v3042 = vld [vmem:[%s2271 + $0x2] sm:$0xff]
    %v3043 = vld [vmem:[%s2271 + $0xa] sm:$0xff]
    %v3044 = vld [vmem:[%s2271 + $0x1a] sm:$0xff]
    %v3045 = vld [vmem:[%s2271 + $0x22] sm:$0xff]
    %v3046 = vld [vmem:[%s2271 + $0x32] sm:$0xff]
    %v3047 = vld [vmem:[%s2271 + $0x3a] sm:$0xff]
    %v3048 = vld [vmem:[%s2271 + $0x4a] sm:$0xff]
    %v3049 = vld [vmem:[%s2271 + $0x52] sm:$0xff]
    %v3050 = vld [vmem:[%s2271 + $0x62] sm:$0xff]
    %v3051 = vld [vmem:[%s2271 + $0x6a] sm:$0xff]
    %v3052 = vld [vmem:[%s2271 + $0x7a] sm:$0xff]
    %v3053 = vld [vmem:[%s2271 + $0x82] sm:$0xff]
    %v3054 = vld [vmem:[%s2271 + $0x92] sm:$0xff]
    %v3055 = vld [vmem:[%s2271 + $0x9a] sm:$0xff]
    %v3056 = vld [vmem:[%s2271 + $0xaa] sm:$0xff]
    %v3057 = vld [vmem:[%s2271 + $0xb2] sm:$0xff]
    %v3058 = vld [vmem:[%s2271 + $0xc2] sm:$0xff]
    %v3059 = vld [vmem:[%s2271 + $0xca] sm:$0xff]
    %v3060 = vld [vmem:[%s2271 + $0xda] sm:$0xff]
    %v3061 = vld [vmem:[%s2271 + $0xe2] sm:$0xff]
    %v3062 = vld [vmem:[%s2271 + $0xf2] sm:$0xff]
    %v3063 = vld [vmem:[%s2271 + $0xfa] sm:$0xff]
    %v3064 = vld [vmem:[%s2271 + $0x10a] sm:$0xff]
    %v3065 = vld [vmem:[%s2271 + $0x112] sm:$0xff]
    %v3066 = vld [vmem:[%s2271 + $0x122] sm:$0xff]
    %v3067 = vld [vmem:[%s2271 + $0x12a] sm:$0xff]
    %v3068 = vld [vmem:[%s2271 + $0x13a] sm:$0xff]
    %v3069 = vld [vmem:[%s2271 + $0x142] sm:$0xff]
    %v3070 = vld [vmem:[%s2271 + $0x152] sm:$0xff]
    %v3071 = vld [vmem:[%s2271 + $0x15a] sm:$0xff]
    %v3072 = vld [vmem:[%s2271 + $0x16a] sm:$0xff]
    %v3073 = vld [vmem:[%s2271 + $0x172] sm:$0xff]
    %v3074 = vld [vmem:[%s2271 + $0x1b2] sm:$0xff]
    %v3075 = vld [vmem:[%s2271 + $0x1ba] sm:$0xff]
    %v3076 = vld [vmem:[%s2271 + $0x1ca] sm:$0xff]
    %v3077 = vld [vmem:[%s2271 + $0x1d2] sm:$0xff]
    %v3078 = vld [vmem:[%s2271 + $0x1e2] sm:$0xff]
    %v3079 = vld [vmem:[%s2271 + $0x1ea] sm:$0xff]
    %v3080 = vld [vmem:[%s2271 + $0x1fa] sm:$0xff]
    %v3081 = vld [vmem:[%s2271 + $0x202] sm:$0xff]
    %v3082 = vld [vmem:[%s2271 + $0x212] sm:$0xff]
    %v3083 = vld [vmem:[%s2271 + $0x21a] sm:$0xff]
    %v3084 = vld [vmem:[%s2271 + $0x22a] sm:$0xff]
    %v3085 = vld [vmem:[%s2271 + $0x232] sm:$0xff]
    %v3086 = vld [vmem:[%s2271 + $0x242] sm:$0xff]
    %v3087 = vld [vmem:[%s2271 + $0x24a] sm:$0xff]
    %v3088 = vld [vmem:[%s2271 + $0x25a] sm:$0xff]
    %v3089 = vld [vmem:[%s2271 + $0x262] sm:$0xff]
    %v3090 = vld [vmem:[%s2271 + $0x272] sm:$0xff]
    %v3091 = vld [vmem:[%s2271 + $0x27a] sm:$0xff]
    %v3092 = vld [vmem:[%s2271 + $0x28a] sm:$0xff]
    %v3093 = vld [vmem:[%s2271 + $0x292] sm:$0xff]
    %v3094 = vld [vmem:[%s2271 + $0x2a2] sm:$0xff]
    %v3095 = vld [vmem:[%s2271 + $0x2aa] sm:$0xff]
    %v3096 = vld [vmem:[%s2271 + $0x2ba] sm:$0xff]
    %v3097 = vld [vmem:[%s2271 + $0x2c2] sm:$0xff]
    %v3098 = vld [vmem:[%s2271 + $0x2d2] sm:$0xff]
    %v3099 = vld [vmem:[%s2271 + $0x2da] sm:$0xff]
    %v3100 = vld [vmem:[%s2271 + $0x2ea] sm:$0xff]
    %v3101 = vld [vmem:[%s2271 + $0x2f2] sm:$0xff]
    %v3102 = vld [vmem:[%s2271 + $0x302] sm:$0xff]
    %v3103 = vld [vmem:[%s2271 + $0x30a] sm:$0xff]
    %v3104 = vld [vmem:[%s2271 + $0x31a] sm:$0xff]
    %v3105 = vld [vmem:[%s2271 + $0x322] sm:$0xff]
    %3170 = vrot.lane.b32.xlu0 %v3042, 32
    %v3171 = vpop.permute.xlu0 %3170
    %3172 = vrot.lane.b32.xlu0 %v3043, 32
    %v3173 = vpop.permute.xlu0 %3172
    %3174 = vrot.lane.b32.xlu0 %v3044, 32
    %v3175 = vpop.permute.xlu0 %3174
    %3176 = vrot.lane.b32.xlu0 %v3045, 32
    %v3177 = vpop.permute.xlu0 %3176
    %3178 = vrot.lane.b32.xlu0 %v3046, 32
    %v3179 = vpop.permute.xlu0 %3178
    %3180 = vrot.lane.b32.xlu0 %v3047, 32
    %v3181 = vpop.permute.xlu0 %3180
    %3182 = vrot.lane.b32.xlu0 %v3048, 32
    %v3183 = vpop.permute.xlu0 %3182
    %3184 = vrot.lane.b32.xlu0 %v3049, 32
    %v3185 = vpop.permute.xlu0 %3184
    %3186 = vrot.lane.b32.xlu0 %v3050, 32
    %v3187 = vpop.permute.xlu0 %3186
    %3188 = vrot.lane.b32.xlu0 %v3051, 32
    %v3189 = vpop.permute.xlu0 %3188
    %3190 = vrot.lane.b32.xlu0 %v3052, 32
    %v3191 = vpop.permute.xlu0 %3190
    %3192 = vrot.lane.b32.xlu0 %v3053, 32
    %v3193 = vpop.permute.xlu0 %3192
    %3194 = vrot.lane.b32.xlu0 %v3054, 32
    %v3195 = vpop.permute.xlu0 %3194
    %3196 = vrot.lane.b32.xlu0 %v3055, 32
    %v3197 = vpop.permute.xlu0 %3196
    %3198 = vrot.lane.b32.xlu0 %v3056, 32
    %v3199 = vpop.permute.xlu0 %3198
    %3200 = vrot.lane.b32.xlu0 %v3057, 32
    %v3201 = vpop.permute.xlu0 %3200
    %3202 = vrot.lane.b32.xlu0 %v3058, 32
    %v3203 = vpop.permute.xlu0 %3202
    %3204 = vrot.lane.b32.xlu0 %v3059, 32
    %v3205 = vpop.permute.xlu0 %3204
    %3206 = vrot.lane.b32.xlu0 %v3060, 32
    %v3207 = vpop.permute.xlu0 %3206
    %3208 = vrot.lane.b32.xlu0 %v3061, 32
    %v3209 = vpop.permute.xlu0 %3208
    %3210 = vrot.lane.b32.xlu0 %v3062, 32
    %v3211 = vpop.permute.xlu0 %3210
    %3212 = vrot.lane.b32.xlu0 %v3063, 32
    %v3213 = vpop.permute.xlu0 %3212
    %3214 = vrot.lane.b32.xlu0 %v3064, 32
    %v3215 = vpop.permute.xlu0 %3214
    %3216 = vrot.lane.b32.xlu0 %v3065, 32
    %v3217 = vpop.permute.xlu0 %3216
    %3218 = vrot.lane.b32.xlu0 %v3066, 32
    %v3219 = vpop.permute.xlu0 %3218
    %3220 = vrot.lane.b32.xlu0 %v3067, 32
    %v3221 = vpop.permute.xlu0 %3220
    %3222 = vrot.lane.b32.xlu0 %v3068, 32
    %v3223 = vpop.permute.xlu0 %3222
    %3224 = vrot.lane.b32.xlu0 %v3069, 32
    %v3225 = vpop.permute.xlu0 %3224
    %3226 = vrot.lane.b32.xlu0 %v3070, 32
    %v3227 = vpop.permute.xlu0 %3226
    %3228 = vrot.lane.b32.xlu0 %v3071, 32
    %v3229 = vpop.permute.xlu0 %3228
    %3230 = vrot.lane.b32.xlu0 %v3072, 32
    %v3231 = vpop.permute.xlu0 %3230
    %3232 = vrot.lane.b32.xlu0 %v3073, 32
    %v3233 = vpop.permute.xlu0 %3232
    %3234 = vrot.lane.b32.xlu0 %v3074, 32
    %v3235 = vpop.permute.xlu0 %3234
    %3236 = vrot.lane.b32.xlu0 %v3075, 32
    %v3237 = vpop.permute.xlu0 %3236
    %3238 = vrot.lane.b32.xlu0 %v3076, 32
    %v3239 = vpop.permute.xlu0 %3238
    %3240 = vrot.lane.b32.xlu0 %v3077, 32
    %v3241 = vpop.permute.xlu0 %3240
    %3242 = vrot.lane.b32.xlu0 %v3078, 32
    %v3243 = vpop.permute.xlu0 %3242
    %3244 = vrot.lane.b32.xlu0 %v3079, 32
    %v3245 = vpop.permute.xlu0 %3244
    %3246 = vrot.lane.b32.xlu0 %v3080, 32
    %v3247 = vpop.permute.xlu0 %3246
    %3248 = vrot.lane.b32.xlu0 %v3081, 32
    %v3249 = vpop.permute.xlu0 %3248
    %3250 = vrot.lane.b32.xlu0 %v3082, 32
    %v3251 = vpop.permute.xlu0 %3250
    %3252 = vrot.lane.b32.xlu0 %v3083, 32
    %v3253 = vpop.permute.xlu0 %3252
    %3254 = vrot.lane.b32.xlu0 %v3084, 32
    %v3255 = vpop.permute.xlu0 %3254
    %3256 = vrot.lane.b32.xlu0 %v3085, 32
    %v3257 = vpop.permute.xlu0 %3256
    %3258 = vrot.lane.b32.xlu0 %v3086, 32
    %v3259 = vpop.permute.xlu0 %3258
    %3260 = vrot.lane.b32.xlu0 %v3087, 32
    %v3261 = vpop.permute.xlu0 %3260
    %3262 = vrot.lane.b32.xlu0 %v3088, 32
    %v3263 = vpop.permute.xlu0 %3262
    %3264 = vrot.lane.b32.xlu0 %v3089, 32
    %v3265 = vpop.permute.xlu0 %3264
    %3266 = vrot.lane.b32.xlu0 %v3090, 32
    %v3267 = vpop.permute.xlu0 %3266
    %3268 = vrot.lane.b32.xlu0 %v3091, 32
    %v3269 = vpop.permute.xlu0 %3268
    %3270 = vrot.lane.b32.xlu0 %v3092, 32
    %v3271 = vpop.permute.xlu0 %3270
    %3272 = vrot.lane.b32.xlu0 %v3093, 32
    %v3273 = vpop.permute.xlu0 %3272
    %3274 = vrot.lane.b32.xlu0 %v3094, 32
    %v3275 = vpop.permute.xlu0 %3274
    %3276 = vrot.lane.b32.xlu0 %v3095, 32
    %v3277 = vpop.permute.xlu0 %3276
    %3278 = vrot.lane.b32.xlu0 %v3096, 32
    %v3279 = vpop.permute.xlu0 %3278
    %3280 = vrot.lane.b32.xlu0 %v3097, 32
    %v3281 = vpop.permute.xlu0 %3280
    %3282 = vrot.lane.b32.xlu0 %v3098, 32
    %v3283 = vpop.permute.xlu0 %3282
    %3284 = vrot.lane.b32.xlu0 %v3099, 32
    %v3285 = vpop.permute.xlu0 %3284
    %3286 = vrot.lane.b32.xlu0 %v3100, 32
    %v3287 = vpop.permute.xlu0 %3286
    %3288 = vrot.lane.b32.xlu0 %v3101, 32
    %v3289 = vpop.permute.xlu0 %3288
    %3290 = vrot.lane.b32.xlu0 %v3102, 32
    %v3291 = vpop.permute.xlu0 %3290
    %3292 = vrot.lane.b32.xlu0 %v3103, 32
    %v3293 = vpop.permute.xlu0 %3292
    %3294 = vrot.lane.b32.xlu0 %v3104, 32
    %v3295 = vpop.permute.xlu0 %3294
    %3296 = vrot.lane.b32.xlu0 %v3105, 32
    %v3297 = vpop.permute.xlu0 %3296
    %vm3362 = vcmask 294144
    %3363 = vst.msk [vmem:[#allocation2] sm:$0xff] %vm3362, %v3171
    %3364 = vst.msk [vmem:[#allocation2 + $0x8] sm:$0xff] %vm3362, %v3173
    %3365 = vst.msk [vmem:[#allocation2 + $0x10] sm:$0xff] %vm3362, %v3175
    %3366 = vst.msk [vmem:[#allocation2 + $0x18] sm:$0xff] %vm3362, %v3177
    %3367 = vst.msk [vmem:[#allocation2 + $0x20] sm:$0xff] %vm3362, %v3179
    %3368 = vst.msk [vmem:[#allocation2 + $0x28] sm:$0xff] %vm3362, %v3181
    %3369 = vst.msk [vmem:[#allocation2 + $0x30] sm:$0xff] %vm3362, %v3183
    %3370 = vst.msk [vmem:[#allocation2 + $0x38] sm:$0xff] %vm3362, %v3185
    %3371 = vst.msk [vmem:[#allocation2 + $0x40] sm:$0xff] %vm3362, %v3187
    %3372 = vst.msk [vmem:[#allocation2 + $0x48] sm:$0xff] %vm3362, %v3189
    %3373 = vst.msk [vmem:[#allocation2 + $0x50] sm:$0xff] %vm3362, %v3191
    %3374 = vst.msk [vmem:[#allocation2 + $0x58] sm:$0xff] %vm3362, %v3193
    %3375 = vst.msk [vmem:[#allocation2 + $0x60] sm:$0xff] %vm3362, %v3195
    %3376 = vst.msk [vmem:[#allocation2 + $0x68] sm:$0xff] %vm3362, %v3197
    %3377 = vst.msk [vmem:[#allocation2 + $0x70] sm:$0xff] %vm3362, %v3199
    %3378 = vst.msk [vmem:[#allocation2 + $0x78] sm:$0xff] %vm3362, %v3201
    %3379 = vst.msk [vmem:[#allocation2 + $0x80] sm:$0xff] %vm3362, %v3203
    %3380 = vst.msk [vmem:[#allocation2 + $0x88] sm:$0xff] %vm3362, %v3205
    %3381 = vst.msk [vmem:[#allocation2 + $0x90] sm:$0xff] %vm3362, %v3207
    %3382 = vst.msk [vmem:[#allocation2 + $0x98] sm:$0xff] %vm3362, %v3209
    %3383 = vst.msk [vmem:[#allocation2 + $0xa0] sm:$0xff] %vm3362, %v3211
    %3384 = vst.msk [vmem:[#allocation2 + $0xa8] sm:$0xff] %vm3362, %v3213
    %3385 = vst.msk [vmem:[#allocation2 + $0xb0] sm:$0xff] %vm3362, %v3215
    %3386 = vst.msk [vmem:[#allocation2 + $0xb8] sm:$0xff] %vm3362, %v3217
    %3387 = vst.msk [vmem:[#allocation2 + $0xc0] sm:$0xff] %vm3362, %v3219
    %3388 = vst.msk [vmem:[#allocation2 + $0xc8] sm:$0xff] %vm3362, %v3221
    %3389 = vst.msk [vmem:[#allocation2 + $0xd0] sm:$0xff] %vm3362, %v3223
    %3390 = vst.msk [vmem:[#allocation2 + $0xd8] sm:$0xff] %vm3362, %v3225
    %3391 = vst.msk [vmem:[#allocation2 + $0xe0] sm:$0xff] %vm3362, %v3227
    %3392 = vst.msk [vmem:[#allocation2 + $0xe8] sm:$0xff] %vm3362, %v3229
    %3393 = vst.msk [vmem:[#allocation2 + $0xf0] sm:$0xff] %vm3362, %v3231
    %3394 = vst.msk [vmem:[#allocation2 + $0xf8] sm:$0xff] %vm3362, %v3233
    %3395 = vst.msk [vmem:[#allocation2 + $0x100] sm:$0xff] %vm3362, %v3235
    %3396 = vst.msk [vmem:[#allocation2 + $0x108] sm:$0xff] %vm3362, %v3237
    %3397 = vst.msk [vmem:[#allocation2 + $0x110] sm:$0xff] %vm3362, %v3239
    %3398 = vst.msk [vmem:[#allocation2 + $0x118] sm:$0xff] %vm3362, %v3241
    %3399 = vst.msk [vmem:[#allocation2 + $0x120] sm:$0xff] %vm3362, %v3243
    %3400 = vst.msk [vmem:[#allocation2 + $0x128] sm:$0xff] %vm3362, %v3245
    %3401 = vst.msk [vmem:[#allocation2 + $0x130] sm:$0xff] %vm3362, %v3247
    %3402 = vst.msk [vmem:[#allocation2 + $0x138] sm:$0xff] %vm3362, %v3249
    %3403 = vst.msk [vmem:[#allocation2 + $0x140] sm:$0xff] %vm3362, %v3251
    %3404 = vst.msk [vmem:[#allocation2 + $0x148] sm:$0xff] %vm3362, %v3253
    %3405 = vst.msk [vmem:[#allocation2 + $0x150] sm:$0xff] %vm3362, %v3255
    %3406 = vst.msk [vmem:[#allocation2 + $0x158] sm:$0xff] %vm3362, %v3257
    %3407 = vst.msk [vmem:[#allocation2 + $0x160] sm:$0xff] %vm3362, %v3259
    %3408 = vst.msk [vmem:[#allocation2 + $0x168] sm:$0xff] %vm3362, %v3261
    %3409 = vst.msk [vmem:[#allocation2 + $0x170] sm:$0xff] %vm3362, %v3263
    %3410 = vst.msk [vmem:[#allocation2 + $0x178] sm:$0xff] %vm3362, %v3265
    %3411 = vst.msk [vmem:[#allocation2 + $0x180] sm:$0xff] %vm3362, %v3267
    %3412 = vst.msk [vmem:[#allocation2 + $0x188] sm:$0xff] %vm3362, %v3269
    %3413 = vst.msk [vmem:[#allocation2 + $0x190] sm:$0xff] %vm3362, %v3271
    %3414 = vst.msk [vmem:[#allocation2 + $0x198] sm:$0xff] %vm3362, %v3273
    %3415 = vst.msk [vmem:[#allocation2 + $0x1a0] sm:$0xff] %vm3362, %v3275
    %3416 = vst.msk [vmem:[#allocation2 + $0x1a8] sm:$0xff] %vm3362, %v3277
    %3417 = vst.msk [vmem:[#allocation2 + $0x1b0] sm:$0xff] %vm3362, %v3279
    %3418 = vst.msk [vmem:[#allocation2 + $0x1b8] sm:$0xff] %vm3362, %v3281
    %3419 = vst.msk [vmem:[#allocation2 + $0x1c0] sm:$0xff] %vm3362, %v3283
    %3420 = vst.msk [vmem:[#allocation2 + $0x1c8] sm:$0xff] %vm3362, %v3285
    %3421 = vst.msk [vmem:[#allocation2 + $0x1d0] sm:$0xff] %vm3362, %v3287
    %3422 = vst.msk [vmem:[#allocation2 + $0x1d8] sm:$0xff] %vm3362, %v3289
    %3423 = vst.msk [vmem:[#allocation2 + $0x1e0] sm:$0xff] %vm3362, %v3291
    %3424 = vst.msk [vmem:[#allocation2 + $0x1e8] sm:$0xff] %vm3362, %v3293
    %3425 = vst.msk [vmem:[#allocation2 + $0x1f0] sm:$0xff] %vm3362, %v3295
    %3426 = vst.msk [vmem:[#allocation2 + $0x1f8] sm:$0xff] %vm3362, %v3297
    %v3427 = vld [vmem:[#allocation2] sm:$0xff]
    %v3428 = vld [vmem:[#allocation2 + $0x8] sm:$0xff]
    %v3429 = vld [vmem:[#allocation2 + $0x10] sm:$0xff]
    %v3430 = vld [vmem:[#allocation2 + $0x18] sm:$0xff]
    %v3431 = vld [vmem:[#allocation2 + $0x20] sm:$0xff]
    %v3432 = vld [vmem:[#allocation2 + $0x28] sm:$0xff]
    %v3433 = vld [vmem:[#allocation2 + $0x30] sm:$0xff]
    %v3434 = vld [vmem:[#allocation2 + $0x38] sm:$0xff]
    %v3435 = vld [vmem:[#allocation2 + $0x40] sm:$0xff]
    %v3436 = vld [vmem:[#allocation2 + $0x48] sm:$0xff]
    %v3437 = vld [vmem:[#allocation2 + $0x50] sm:$0xff]
    %v3438 = vld [vmem:[#allocation2 + $0x58] sm:$0xff]
    %v3439 = vld [vmem:[#allocation2 + $0x60] sm:$0xff]
    %v3440 = vld [vmem:[#allocation2 + $0x68] sm:$0xff]
    %v3441 = vld [vmem:[#allocation2 + $0x70] sm:$0xff]
    %v3442 = vld [vmem:[#allocation2 + $0x78] sm:$0xff]
    %v3443 = vld [vmem:[#allocation2 + $0x80] sm:$0xff]
    %v3444 = vld [vmem:[#allocation2 + $0x88] sm:$0xff]
    %v3445 = vld [vmem:[#allocation2 + $0x90] sm:$0xff]
    %v3446 = vld [vmem:[#allocation2 + $0x98] sm:$0xff]
    %v3447 = vld [vmem:[#allocation2 + $0xa0] sm:$0xff]
    %v3448 = vld [vmem:[#allocation2 + $0xa8] sm:$0xff]
    %v3449 = vld [vmem:[#allocation2 + $0xb0] sm:$0xff]
    %v3450 = vld [vmem:[#allocation2 + $0xb8] sm:$0xff]
    %v3451 = vld [vmem:[#allocation2 + $0xc0] sm:$0xff]
    %v3452 = vld [vmem:[#allocation2 + $0xc8] sm:$0xff]
    %v3453 = vld [vmem:[#allocation2 + $0xd0] sm:$0xff]
    %v3454 = vld [vmem:[#allocation2 + $0xd8] sm:$0xff]
    %v3455 = vld [vmem:[#allocation2 + $0xe0] sm:$0xff]
    %v3456 = vld [vmem:[#allocation2 + $0xe8] sm:$0xff]
    %v3457 = vld [vmem:[#allocation2 + $0xf0] sm:$0xff]
    %v3458 = vld [vmem:[#allocation2 + $0xf8] sm:$0xff]
    %v3459 = vld [vmem:[#allocation2 + $0x100] sm:$0xff]
    %v3460 = vld [vmem:[#allocation2 + $0x108] sm:$0xff]
    %v3461 = vld [vmem:[#allocation2 + $0x110] sm:$0xff]
    %v3462 = vld [vmem:[#allocation2 + $0x118] sm:$0xff]
    %v3463 = vld [vmem:[#allocation2 + $0x120] sm:$0xff]
    %v3464 = vld [vmem:[#allocation2 + $0x128] sm:$0xff]
    %v3465 = vld [vmem:[#allocation2 + $0x130] sm:$0xff]
    %v3466 = vld [vmem:[#allocation2 + $0x138] sm:$0xff]
    %v3467 = vld [vmem:[#allocation2 + $0x140] sm:$0xff]
    %v3468 = vld [vmem:[#allocation2 + $0x148] sm:$0xff]
    %v3469 = vld [vmem:[#allocation2 + $0x150] sm:$0xff]
    %v3470 = vld [vmem:[#allocation2 + $0x158] sm:$0xff]
    %v3471 = vld [vmem:[#allocation2 + $0x160] sm:$0xff]
    %v3472 = vld [vmem:[#allocation2 + $0x168] sm:$0xff]
    %v3473 = vld [vmem:[#allocation2 + $0x170] sm:$0xff]
    %v3474 = vld [vmem:[#allocation2 + $0x178] sm:$0xff]
    %v3475 = vld [vmem:[#allocation2 + $0x180] sm:$0xff]
    %v3476 = vld [vmem:[#allocation2 + $0x188] sm:$0xff]
    %v3477 = vld [vmem:[#allocation2 + $0x190] sm:$0xff]
    %v3478 = vld [vmem:[#allocation2 + $0x198] sm:$0xff]
    %v3479 = vld [vmem:[#allocation2 + $0x1a0] sm:$0xff]
    %v3480 = vld [vmem:[#allocation2 + $0x1a8] sm:$0xff]
    %v3481 = vld [vmem:[#allocation2 + $0x1b0] sm:$0xff]
    %v3482 = vld [vmem:[#allocation2 + $0x1b8] sm:$0xff]
    %v3483 = vld [vmem:[#allocation2 + $0x1c0] sm:$0xff]
    %v3484 = vld [vmem:[#allocation2 + $0x1c8] sm:$0xff]
    %v3485 = vld [vmem:[#allocation2 + $0x1d0] sm:$0xff]
    %v3486 = vld [vmem:[#allocation2 + $0x1d8] sm:$0xff]
    %v3487 = vld [vmem:[#allocation2 + $0x1e0] sm:$0xff]
    %v3488 = vld [vmem:[#allocation2 + $0x1e8] sm:$0xff]
    %v3489 = vld [vmem:[#allocation2 + $0x1f0] sm:$0xff]
    %v3490 = vld [vmem:[#allocation2 + $0x1f8] sm:$0xff]
    %v3491 = vpack.c.bf16 %v3428, %v3427
    %v3492 = vpack.c.bf16 %v3430, %v3429
    %v3493 = vpack.c.bf16 %v3432, %v3431
    %v3494 = vpack.c.bf16 %v3434, %v3433
    %v3495 = vpack.c.bf16 %v3436, %v3435
    %v3496 = vpack.c.bf16 %v3438, %v3437
    %v3497 = vpack.c.bf16 %v3440, %v3439
    %v3498 = vpack.c.bf16 %v3442, %v3441
    %v3499 = vpack.c.bf16 %v3444, %v3443
    %v3500 = vpack.c.bf16 %v3446, %v3445
    %v3501 = vpack.c.bf16 %v3448, %v3447
    %v3502 = vpack.c.bf16 %v3450, %v3449
    %v3503 = vpack.c.bf16 %v3452, %v3451
    %v3504 = vpack.c.bf16 %v3454, %v3453
    %v3505 = vpack.c.bf16 %v3456, %v3455
    %v3506 = vpack.c.bf16 %v3458, %v3457
    %v3507 = vpack.c.bf16 %v3460, %v3459
    %v3508 = vpack.c.bf16 %v3462, %v3461
    %v3509 = vpack.c.bf16 %v3464, %v3463
    %v3510 = vpack.c.bf16 %v3466, %v3465
    %v3511 = vpack.c.bf16 %v3468, %v3467
    %v3512 = vpack.c.bf16 %v3470, %v3469
    %v3513 = vpack.c.bf16 %v3472, %v3471
    %v3514 = vpack.c.bf16 %v3474, %v3473
    %v3515 = vpack.c.bf16 %v3476, %v3475
    %v3516 = vpack.c.bf16 %v3478, %v3477
    %v3517 = vpack.c.bf16 %v3480, %v3479
    %v3518 = vpack.c.bf16 %v3482, %v3481
    %v3519 = vpack.c.bf16 %v3484, %v3483
    %v3520 = vpack.c.bf16 %v3486, %v3485
    %v3521 = vpack.c.bf16 %v3488, %v3487
    %v3522 = vpack.c.bf16 %v3490, %v3489
    %v3523 = vld [vmem:[#allocation10] sm:$0xf]
    %v3524 = vld [vmem:[#allocation10 + $0x4] sm:$0xf]
    %v3525 = vld [vmem:[#allocation10 + $0x8] sm:$0xf]
    %v3526 = vld [vmem:[#allocation10 + $0xc] sm:$0xf]
    %v3527 = vld [vmem:[#allocation10 + $0x10] sm:$0x3]
    %v3528 = vld [vmem:[#allocation11] sm:$0x1]
    %v3530 = vlaneseq
    %v3531 = vshrl.u32 %v3530, 7
    %v3532 = vsub.s32 0, %v3531
    %v3533 = vrot.slane %v3528, %v3532
    %v3540 = vunpack.c.l.b16 %v3523
    %v3541 = vunpack.c.l.b16 %v3524
    %v3542 = vunpack.c.l.b16 %v3525
    %v3543 = vunpack.c.l.b16 %v3526
    %v3544 = vunpack.c.l.b16 %v3527
    %v3545 = vpack.c.b16 %v3541, %v3540
    %v3546 = vpack.c.b16 %v3543, %v3542
    %v3547 = vpack.c.b16 %v3544, %v3544
    %vm3550 = vcmask 293888
    %v3552 = vsel %vm3550, %v3491, 0
    %v3555 = vsel %vm3550, %v3492, 0
    %v3558 = vsel %vm3550, %v3493, 0
    %v3561 = vsel %vm3550, %v3494, 0
    %v3564 = vsel %vm3550, %v3495, 0
    %v3567 = vsel %vm3550, %v3496, 0
    %v3570 = vsel %vm3550, %v3497, 0
    %v3573 = vsel %vm3550, %v3498, 0
    %v3576 = vsel %vm3550, %v3499, 0
    %v3579 = vsel %vm3550, %v3500, 0
    %v3582 = vsel %vm3550, %v3501, 0
    %v3585 = vsel %vm3550, %v3502, 0
    %v3588 = vsel %vm3550, %v3503, 0
    %v3591 = vsel %vm3550, %v3504, 0
    %v3594 = vsel %vm3550, %v3505, 0
    %v3597 = vsel %vm3550, %v3506, 0
    %v3600 = vsel %vm3550, %v3507, 0
    %v3603 = vsel %vm3550, %v3508, 0
    %v3606 = vsel %vm3550, %v3509, 0
    %v3609 = vsel %vm3550, %v3510, 0
    %v3612 = vsel %vm3550, %v3511, 0
    %v3615 = vsel %vm3550, %v3512, 0
    %v3618 = vsel %vm3550, %v3513, 0
    %v3621 = vsel %vm3550, %v3514, 0
    %v3624 = vsel %vm3550, %v3515, 0
    %v3627 = vsel %vm3550, %v3516, 0
    %v3630 = vsel %vm3550, %v3517, 0
    %v3633 = vsel %vm3550, %v3518, 0
    %v3636 = vsel %vm3550, %v3519, 0
    %v3639 = vsel %vm3550, %v3520, 0
    %v3642 = vsel %vm3550, %v3521, 0
    %v3645 = vsel %vm3550, %v3522, 0
    %vm3647 = vcmask 1041408
    %v3649 = vsel %vm3647, %v3547, 0
    %3651 = vmatprep.subr.bf16.mxu0 0
    %3652 = vmatpush1.bf16.msra.mxu0 %v3545
    %3653 = vmatprep.subr.bf16.mxu0 0
    %3654 = vmatpush1.bf16.msra.mxu0 %v3546
    %3655 = vmatprep.subr.bf16.mxu0 0
    %3656 = vmatpush1.bf16.msra.mxu0 %v3649
    %3657 = vmatprep.subr.bf16.mxu0 0
    %3658 = vmatpush1.bf16.msra.mxu0 0
    %3659 = vmatprep.subr.bf16.mxu0 0
    %3660 = vmatpush1.bf16.msra.mxu0 0
    %3661 = vmatprep.subr.bf16.mxu0 0
    %3662 = vmatpush1.bf16.msra.mxu0 0
    %3663 = vmatprep.subr.bf16.mxu0 0
    %3664 = vmatpush1.bf16.msra.mxu0 0
    %3665 = vmatprep.subr.bf16.mxu0 0
    %3666 = vmatpush1.bf16.msra.mxu0 0
    %3667 = vmatprep.subr.bf16.mxu0 0
    %3668 = vmatpush1.bf16.msra.mxu0 0
    %3669 = vmatprep.subr.bf16.mxu0 0
    %3670 = vmatpush1.bf16.msra.mxu0 0
    %3671 = vmatprep.subr.bf16.mxu0 0
    %3672 = vmatpush1.bf16.msra.mxu0 0
    %3673 = vmatprep.subr.bf16.mxu0 0
    %3674 = vmatpush1.bf16.msra.mxu0 0
    %3675 = vmatprep.subr.bf16.mxu0 0
    %3676 = vmatpush1.bf16.msra.mxu0 0
    %3677 = vmatprep.subr.bf16.mxu0 0
    %3678 = vmatpush1.bf16.msra.mxu0 0
    %3679 = vmatprep.subr.bf16.mxu0 0
    %3680 = vmatpush1.bf16.msra.mxu0 0
    %3681 = vmatprep.subr.bf16.mxu0 0
    %3682 = vmatpush1.bf16.msra.mxu0 0
    %3683 = vmatprep.mubr.bf16.mxu0 0
    %3684 = vmatmul.mubr.bf16.gmra.mrb[0].mxu0 %v3552
    %v3685 = vpop.f32.mrb[0].mxu0
    %v3686 = vadd.f32 %v3533, %v3685
    %v3687 = vpop.f32.mrb[0].mxu0
    %v3688 = vpop.f32.mrb[0].mxu0
    %v3689 = vadd.f32 %v3533, %v3688
    %v3690 = vpop.f32.mrb[0].mxu0
    %3691 = vmatprep.mubr.bf16.mxu0 0
    %3692 = vmatmul.mubr.bf16.gmra.mrb[0].mxu0 %v3555
    %v3693 = vpop.f32.mrb[0].mxu0
    %v3694 = vadd.f32 %v3533, %v3693
    %v3695 = vpop.f32.mrb[0].mxu0
    %v3696 = vpop.f32.mrb[0].mxu0
    %v3697 = vadd.f32 %v3533, %v3696
    %v3698 = vpop.f32.mrb[0].mxu0
    %3699 = vmatprep.mubr.bf16.mxu0 0
    %3700 = vmatmul.mubr.bf16.gmra.mrb[0].mxu0 %v3558
    %v3701 = vpop.f32.mrb[0].mxu0
    %v3702 = vadd.f32 %v3533, %v3701
    %v3703 = vpop.f32.mrb[0].mxu0
    %v3704 = vpop.f32.mrb[0].mxu0
    %v3705 = vadd.f32 %v3533, %v3704
    %v3706 = vpop.f32.mrb[0].mxu0
    %3707 = vmatprep.mubr.bf16.mxu0 0
    %3708 = vmatmul.mubr.bf16.gmra.mrb[0].mxu0 %v3561
    %v3709 = vpop.f32.mrb[0].mxu0
    %v3710 = vadd.f32 %v3533, %v3709
    %v3711 = vpop.f32.mrb[0].mxu0
    %v3712 = vpop.f32.mrb[0].mxu0
    %v3713 = vadd.f32 %v3533, %v3712
    %v3714 = vpop.f32.mrb[0].mxu0
    %3715 = vmatprep.mubr.bf16.mxu0 0
    %3716 = vmatmul.mubr.bf16.gmra.mrb[0].mxu0 %v3564
    %v3717 = vpop.f32.mrb[0].mxu0
    %v3718 = vadd.f32 %v3533, %v3717
    %v3719 = vpop.f32.mrb[0].mxu0
    %v3720 = vpop.f32.mrb[0].mxu0
    %v3721 = vadd.f32 %v3533, %v3720
    %v3722 = vpop.f32.mrb[0].mxu0
    %3723 = vmatprep.mubr.bf16.mxu0 0
    %3724 = vmatmul.mubr.bf16.gmra.mrb[0].mxu0 %v3567
    %v3725 = vpop.f32.mrb[0].mxu0
    %v3726 = vadd.f32 %v3533, %v3725
    %v3727 = vpop.f32.mrb[0].mxu0
    %v3728 = vpop.f32.mrb[0].mxu0
    %v3729 = vadd.f32 %v3533, %v3728
    %v3730 = vpop.f32.mrb[0].mxu0
    %3731 = vmatprep.mubr.bf16.mxu0 0
    %3732 = vmatmul.mubr.bf16.gmra.mrb[0].mxu0 %v3570
    %v3733 = vpop.f32.mrb[0].mxu0
    %v3734 = vadd.f32 %v3533, %v3733
    %v3735 = vpop.f32.mrb[0].mxu0
    %v3736 = vpop.f32.mrb[0].mxu0
    %v3737 = vadd.f32 %v3533, %v3736
    %v3738 = vpop.f32.mrb[0].mxu0
    %3739 = vmatprep.mubr.bf16.mxu0 0
    %3740 = vmatmul.mubr.bf16.gmra.mrb[0].mxu0 %v3573
    %v3741 = vpop.f32.mrb[0].mxu0
    %v3742 = vadd.f32 %v3533, %v3741
    %v3743 = vpop.f32.mrb[0].mxu0
    %v3744 = vpop.f32.mrb[0].mxu0
    %v3745 = vadd.f32 %v3533, %v3744
    %v3746 = vpop.f32.mrb[0].mxu0
    %3747 = vmatprep.mubr.bf16.mxu0 0
    %3748 = vmatmul.mubr.bf16.gmra.mrb[0].mxu0 %v3576
    %v3749 = vpop.f32.mrb[0].mxu0
    %v3750 = vadd.f32 %v3533, %v3749
    %v3751 = vpop.f32.mrb[0].mxu0
    %v3752 = vpop.f32.mrb[0].mxu0
    %v3753 = vadd.f32 %v3533, %v3752
    %v3754 = vpop.f32.mrb[0].mxu0
    %3755 = vmatprep.mubr.bf16.mxu0 0
    %3756 = vmatmul.mubr.bf16.gmra.mrb[0].mxu0 %v3579
    %v3757 = vpop.f32.mrb[0].mxu0
    %v3758 = vadd.f32 %v3533, %v3757
    %v3759 = vpop.f32.mrb[0].mxu0
    %v3760 = vpop.f32.mrb[0].mxu0
    %v3761 = vadd.f32 %v3533, %v3760
    %v3762 = vpop.f32.mrb[0].mxu0
    %3763 = vmatprep.mubr.bf16.mxu0 0
    %3764 = vmatmul.mubr.bf16.gmra.mrb[0].mxu0 %v3582
    %v3765 = vpop.f32.mrb[0].mxu0
    %v3766 = vadd.f32 %v3533, %v3765
    %v3767 = vpop.f32.mrb[0].mxu0
    %v3768 = vpop.f32.mrb[0].mxu0
    %v3769 = vadd.f32 %v3533, %v3768
    %v3770 = vpop.f32.mrb[0].mxu0
    %3771 = vmatprep.mubr.bf16.mxu0 0
    %3772 = vmatmul.mubr.bf16.gmra.mrb[0].mxu0 %v3585
    %v3773 = vpop.f32.mrb[0].mxu0
    %v3774 = vadd.f32 %v3533, %v3773
    %v3775 = vpop.f32.mrb[0].mxu0
    %v3776 = vpop.f32.mrb[0].mxu0
    %v3777 = vadd.f32 %v3533, %v3776
    %v3778 = vpop.f32.mrb[0].mxu0
    %3779 = vmatprep.mubr.bf16.mxu0 0
    %3780 = vmatmul.mubr.bf16.gmra.mrb[0].mxu0 %v3588
    %v3781 = vpop.f32.mrb[0].mxu0
    %v3782 = vadd.f32 %v3533, %v3781
    %v3783 = vpop.f32.mrb[0].mxu0
    %v3784 = vpop.f32.mrb[0].mxu0
    %v3785 = vadd.f32 %v3533, %v3784
    %v3786 = vpop.f32.mrb[0].mxu0
    %3787 = vmatprep.mubr.bf16.mxu0 0
    %3788 = vmatmul.mubr.bf16.gmra.mrb[0].mxu0 %v3591
    %v3789 = vpop.f32.mrb[0].mxu0
    %v3790 = vadd.f32 %v3533, %v3789
    %v3791 = vpop.f32.mrb[0].mxu0
    %v3792 = vpop.f32.mrb[0].mxu0
    %v3793 = vadd.f32 %v3533, %v3792
    %v3794 = vpop.f32.mrb[0].mxu0
    %3795 = vmatprep.mubr.bf16.mxu0 0
    %3796 = vmatmul.mubr.bf16.gmra.mrb[0].mxu0 %v3594
    %v3797 = vpop.f32.mrb[0].mxu0
    %v3798 = vadd.f32 %v3533, %v3797
    %v3799 = vpop.f32.mrb[0].mxu0
    %v3800 = vpop.f32.mrb[0].mxu0
    %v3801 = vadd.f32 %v3533, %v3800
    %v3802 = vpop.f32.mrb[0].mxu0
    %3803 = vmatprep.mubr.bf16.mxu0 0
    %3804 = vmatmul.mubr.bf16.gmra.mrb[0].mxu0 %v3597
    %v3805 = vpop.f32.mrb[0].mxu0
    %v3806 = vadd.f32 %v3533, %v3805
    %v3807 = vpop.f32.mrb[0].mxu0
    %v3808 = vpop.f32.mrb[0].mxu0
    %v3809 = vadd.f32 %v3533, %v3808
    %v3810 = vpop.f32.mrb[0].mxu0
    %3811 = vmatprep.mubr.bf16.mxu0 0
    %3812 = vmatmul.mubr.bf16.gmra.mrb[0].mxu0 %v3600
    %v3813 = vpop.f32.mrb[0].mxu0
    %v3814 = vadd.f32 %v3533, %v3813
    %v3815 = vpop.f32.mrb[0].mxu0
    %v3816 = vpop.f32.mrb[0].mxu0
    %v3817 = vadd.f32 %v3533, %v3816
    %v3818 = vpop.f32.mrb[0].mxu0
    %3819 = vmatprep.mubr.bf16.mxu0 0
    %3820 = vmatmul.mubr.bf16.gmra.mrb[0].mxu0 %v3603
    %v3821 = vpop.f32.mrb[0].mxu0
    %v3822 = vadd.f32 %v3533, %v3821
    %v3823 = vpop.f32.mrb[0].mxu0
    %v3824 = vpop.f32.mrb[0].mxu0
    %v3825 = vadd.f32 %v3533, %v3824
    %v3826 = vpop.f32.mrb[0].mxu0
    %3827 = vmatprep.mubr.bf16.mxu0 0
    %3828 = vmatmul.mubr.bf16.gmra.mrb[0].mxu0 %v3606
    %v3829 = vpop.f32.mrb[0].mxu0
    %v3830 = vadd.f32 %v3533, %v3829
    %v3831 = vpop.f32.mrb[0].mxu0
    %v3832 = vpop.f32.mrb[0].mxu0
    %v3833 = vadd.f32 %v3533, %v3832
    %v3834 = vpop.f32.mrb[0].mxu0
    %3835 = vmatprep.mubr.bf16.mxu0 0
    %3836 = vmatmul.mubr.bf16.gmra.mrb[0].mxu0 %v3609
    %v3837 = vpop.f32.mrb[0].mxu0
    %v3838 = vadd.f32 %v3533, %v3837
    %v3839 = vpop.f32.mrb[0].mxu0
    %v3840 = vpop.f32.mrb[0].mxu0
    %v3841 = vadd.f32 %v3533, %v3840
    %v3842 = vpop.f32.mrb[0].mxu0
    %3843 = vmatprep.mubr.bf16.mxu0 0
    %3844 = vmatmul.mubr.bf16.gmra.mrb[0].mxu0 %v3612
    %v3845 = vpop.f32.mrb[0].mxu0
    %v3846 = vadd.f32 %v3533, %v3845
    %v3847 = vpop.f32.mrb[0].mxu0
    %v3848 = vpop.f32.mrb[0].mxu0
    %v3849 = vadd.f32 %v3533, %v3848
    %v3850 = vpop.f32.mrb[0].mxu0
    %3851 = vmatprep.mubr.bf16.mxu0 0
    %3852 = vmatmul.mubr.bf16.gmra.mrb[0].mxu0 %v3615
    %v3853 = vpop.f32.mrb[0].mxu0
    %v3854 = vadd.f32 %v3533, %v3853
    %v3855 = vpop.f32.mrb[0].mxu0
    %v3856 = vpop.f32.mrb[0].mxu0
    %v3857 = vadd.f32 %v3533, %v3856
    %v3858 = vpop.f32.mrb[0].mxu0
    %3859 = vmatprep.mubr.bf16.mxu0 0
    %3860 = vmatmul.mubr.bf16.gmra.mrb[0].mxu0 %v3618
    %v3861 = vpop.f32.mrb[0].mxu0
    %v3862 = vadd.f32 %v3533, %v3861
    %v3863 = vpop.f32.mrb[0].mxu0
    %v3864 = vpop.f32.mrb[0].mxu0
    %v3865 = vadd.f32 %v3533, %v3864
    %v3866 = vpop.f32.mrb[0].mxu0
    %3867 = vmatprep.mubr.bf16.mxu0 0
    %3868 = vmatmul.mubr.bf16.gmra.mrb[0].mxu0 %v3621
    %v3869 = vpop.f32.mrb[0].mxu0
    %v3870 = vadd.f32 %v3533, %v3869
    %v3871 = vpop.f32.mrb[0].mxu0
    %v3872 = vpop.f32.mrb[0].mxu0
    %v3873 = vadd.f32 %v3533, %v3872
    %v3874 = vpop.f32.mrb[0].mxu0
    %3875 = vmatprep.mubr.bf16.mxu0 0
    %3876 = vmatmul.mubr.bf16.gmra.mrb[0].mxu0 %v3624
    %v3877 = vpop.f32.mrb[0].mxu0
    %v3878 = vadd.f32 %v3533, %v3877
    %v3879 = vpop.f32.mrb[0].mxu0
    %v3880 = vpop.f32.mrb[0].mxu0
    %v3881 = vadd.f32 %v3533, %v3880
    %v3882 = vpop.f32.mrb[0].mxu0
    %3883 = vmatprep.mubr.bf16.mxu0 0
    %3884 = vmatmul.mubr.bf16.gmra.mrb[0].mxu0 %v3627
    %v3885 = vpop.f32.mrb[0].mxu0
    %v3886 = vadd.f32 %v3533, %v3885
    %v3887 = vpop.f32.mrb[0].mxu0
    %v3888 = vpop.f32.mrb[0].mxu0
    %v3889 = vadd.f32 %v3533, %v3888
    %v3890 = vpop.f32.mrb[0].mxu0
    %3891 = vmatprep.mubr.bf16.mxu0 0
    %3892 = vmatmul.mubr.bf16.gmra.mrb[0].mxu0 %v3630
    %v3893 = vpop.f32.mrb[0].mxu0
    %v3894 = vadd.f32 %v3533, %v3893
    %v3895 = vpop.f32.mrb[0].mxu0
    %v3896 = vpop.f32.mrb[0].mxu0
    %v3897 = vadd.f32 %v3533, %v3896
    %v3898 = vpop.f32.mrb[0].mxu0
    %3899 = vmatprep.mubr.bf16.mxu0 0
    %3900 = vmatmul.mubr.bf16.gmra.mrb[0].mxu0 %v3633
    %v3901 = vpop.f32.mrb[0].mxu0
    %v3902 = vadd.f32 %v3533, %v3901
    %v3903 = vpop.f32.mrb[0].mxu0
    %v3904 = vpop.f32.mrb[0].mxu0
    %v3905 = vadd.f32 %v3533, %v3904
    %v3906 = vpop.f32.mrb[0].mxu0
    %3907 = vmatprep.mubr.bf16.mxu0 0
    %3908 = vmatmul.mubr.bf16.gmra.mrb[0].mxu0 %v3636
    %v3909 = vpop.f32.mrb[0].mxu0
    %v3910 = vadd.f32 %v3533, %v3909
    %v3911 = vpop.f32.mrb[0].mxu0
    %v3912 = vpop.f32.mrb[0].mxu0
    %v3913 = vadd.f32 %v3533, %v3912
    %v3914 = vpop.f32.mrb[0].mxu0
    %3915 = vmatprep.mubr.bf16.mxu0 0
    %3916 = vmatmul.mubr.bf16.gmra.mrb[0].mxu0 %v3639
    %v3917 = vpop.f32.mrb[0].mxu0
    %v3918 = vadd.f32 %v3533, %v3917
    %v3919 = vpop.f32.mrb[0].mxu0
    %v3920 = vpop.f32.mrb[0].mxu0
    %v3921 = vadd.f32 %v3533, %v3920
    %v3922 = vpop.f32.mrb[0].mxu0
    %3923 = vmatprep.mubr.bf16.mxu0 0
    %3924 = vmatmul.mubr.bf16.gmra.mrb[0].mxu0 %v3642
    %v3925 = vpop.f32.mrb[0].mxu0
    %v3926 = vadd.f32 %v3533, %v3925
    %v3927 = vpop.f32.mrb[0].mxu0
    %v3928 = vpop.f32.mrb[0].mxu0
    %v3929 = vadd.f32 %v3533, %v3928
    %v3930 = vpop.f32.mrb[0].mxu0
    %3931 = vmatprep.mubr.bf16.mxu0 0
    %3932 = vmatmul.mubr.bf16.gmra.mrb[0].mxu0 %v3645
    %v3933 = vpop.f32.mrb[0].mxu0
    %v3934 = vadd.f32 %v3533, %v3933
    %v3935 = vpop.f32.mrb[0].mxu0
    %v3936 = vpop.f32.mrb[0].mxu0
    %v3937 = vadd.f32 %v3533, %v3936
    %v3938 = vpop.f32.mrb[0].mxu0
    %3939 = vdwg.mxu0
    %v3940 = vmax.f32 %v3686, 0.0
    %v3941 = vmax.f32 %v3689, 0.0
    %v3942 = vmax.f32 %v3694, 0.0
    %v3943 = vmax.f32 %v3697, 0.0
    %v3944 = vmax.f32 %v3702, 0.0
    %v3945 = vmax.f32 %v3705, 0.0
    %v3946 = vmax.f32 %v3710, 0.0
    %v3947 = vmax.f32 %v3713, 0.0
    %v3948 = vmax.f32 %v3718, 0.0
    %v3949 = vmax.f32 %v3721, 0.0
    %v3950 = vmax.f32 %v3726, 0.0
    %v3951 = vmax.f32 %v3729, 0.0
    %v3952 = vmax.f32 %v3734, 0.0
    %v3953 = vmax.f32 %v3737, 0.0
    %v3954 = vmax.f32 %v3742, 0.0
    %v3955 = vmax.f32 %v3745, 0.0
    %v3956 = vmax.f32 %v3750, 0.0
    %v3957 = vmax.f32 %v3753, 0.0
    %v3958 = vmax.f32 %v3758, 0.0
    %v3959 = vmax.f32 %v3761, 0.0
    %v3960 = vmax.f32 %v3766, 0.0
    %v3961 = vmax.f32 %v3769, 0.0
    %v3962 = vmax.f32 %v3774, 0.0
    %v3963 = vmax.f32 %v3777, 0.0
    %v3964 = vmax.f32 %v3782, 0.0
    %v3965 = vmax.f32 %v3785, 0.0
    %v3966 = vmax.f32 %v3790, 0.0
    %v3967 = vmax.f32 %v3793, 0.0
    %v3968 = vmax.f32 %v3798, 0.0
    %v3969 = vmax.f32 %v3801, 0.0
    %v3970 = vmax.f32 %v3806, 0.0
    %v3971 = vmax.f32 %v3809, 0.0
    %v3972 = vmax.f32 %v3814, 0.0
    %v3973 = vmax.f32 %v3817, 0.0
    %v3974 = vmax.f32 %v3822, 0.0
    %v3975 = vmax.f32 %v3825, 0.0
    %v3976 = vmax.f32 %v3830, 0.0
    %v3977 = vmax.f32 %v3833, 0.0
    %v3978 = vmax.f32 %v3838, 0.0
    %v3979 = vmax.f32 %v3841, 0.0
    %v3980 = vmax.f32 %v3846, 0.0
    %v3981 = vmax.f32 %v3849, 0.0
    %v3982 = vmax.f32 %v3854, 0.0
    %v3983 = vmax.f32 %v3857, 0.0
    %v3984 = vmax.f32 %v3862, 0.0
    %v3985 = vmax.f32 %v3865, 0.0
    %v3986 = vmax.f32 %v3870, 0.0
    %v3987 = vmax.f32 %v3873, 0.0
    %v3988 = vmax.f32 %v3878, 0.0
    %v3989 = vmax.f32 %v3881, 0.0
    %v3990 = vmax.f32 %v3886, 0.0
    %v3991 = vmax.f32 %v3889, 0.0
    %v3992 = vmax.f32 %v3894, 0.0
    %v3993 = vmax.f32 %v3897, 0.0
    %v3994 = vmax.f32 %v3902, 0.0
    %v3995 = vmax.f32 %v3905, 0.0
    %v3996 = vmax.f32 %v3910, 0.0
    %v3997 = vmax.f32 %v3913, 0.0
    %v3998 = vmax.f32 %v3918, 0.0
    %v3999 = vmax.f32 %v3921, 0.0
    %v4000 = vmax.f32 %v3926, 0.0
    %v4001 = vmax.f32 %v3929, 0.0
    %v4002 = vmax.f32 %v3934, 0.0
    %v4003 = vmax.f32 %v3937, 0.0
    %v4004 = vld [vmem:[#allocation5] sm:$0xff]
    %v4006 = vcombine.high %v4004, %v4004
    %v4008 = vunpack.c.l.s4 1983009808
    %v4009 = vunpack.c.0.s8 %v4008
    %v4010 = vlaneseq
    %v4011 = vshrl.u32 %v4010, 7
    %v4012 = vsub.s32 %v4009, %v4011
    %v4013 = vrot.slane %v4004, %v4012
    %v4015 = vunpack.c.l.s4 1983009808
    %v4016 = vunpack.c.0.s8 %v4015
    %v4017 = vlaneseq
    %v4018 = vshrl.u32 %v4017, 7
    %v4019 = vsub.s32 %v4016, %v4018
    %v4020 = vrot.slane %v4006, %v4019
    %v4021 = vcombine.high %v4013, %v4013
    %v4022 = vcombine.high %v4020, %v4020
    %4027 = vmatprep.subr.mxu0 0.0
    %4028 = vmatpush1.msra.mxu0 %v3940
    %4029 = vmatprep.subr.mxu0 0.0
    %4030 = vmatpush1.msra.mxu0 %v3941
    %4031 = vmatprep.subr.mxu0 0.0
    %4032 = vmatpush1.msra.mxu0 %v3942
    %4033 = vmatprep.subr.mxu0 0.0
    %4034 = vmatpush1.msra.mxu0 %v3943
    %4035 = vmatprep.subr.mxu0 0.0
    %4036 = vmatpush1.msra.mxu0 %v3944
    %4037 = vmatprep.subr.mxu0 0.0
    %4038 = vmatpush1.msra.mxu0 %v3945
    %4039 = vmatprep.subr.mxu0 0.0
    %4040 = vmatpush1.msra.mxu0 %v3946
    %4041 = vmatprep.subr.mxu0 0.0
    %4042 = vmatpush1.msra.mxu0 %v3947
    %4043 = vmatprep.subr.mxu0 0.0
    %4044 = vmatpush1.msra.mxu0 %v3948
    %4045 = vmatprep.subr.mxu0 0.0
    %4046 = vmatpush1.msra.mxu0 %v3949
    %4047 = vmatprep.subr.mxu0 0.0
    %4048 = vmatpush1.msra.mxu0 %v3950
    %4049 = vmatprep.subr.mxu0 0.0
    %4050 = vmatpush1.msra.mxu0 %v3951
    %4051 = vmatprep.subr.mxu0 0.0
    %4052 = vmatpush1.msra.mxu0 %v3952
    %4053 = vmatprep.subr.mxu0 0.0
    %4054 = vmatpush1.msra.mxu0 %v3953
    %4055 = vmatprep.subr.mxu0 0.0
    %4056 = vmatpush1.msra.mxu0 %v3954
    %4057 = vmatprep.subr.mxu0 0.0
    %4058 = vmatpush1.msra.mxu0 %v3955
    %4059 = vmatprep.subr.mxu0 0.0
    %4060 = vmatpush1.msra.mxu0 %v3956
    %4061 = vmatprep.subr.mxu0 0.0
    %4062 = vmatpush1.msra.mxu0 %v3957
    %4063 = vmatprep.subr.mxu0 0.0
    %4064 = vmatpush1.msra.mxu0 %v3958
    %4065 = vmatprep.subr.mxu0 0.0
    %4066 = vmatpush1.msra.mxu0 %v3959
    %4067 = vmatprep.subr.mxu0 0.0
    %4068 = vmatpush1.msra.mxu0 %v3960
    %4069 = vmatprep.subr.mxu0 0.0
    %4070 = vmatpush1.msra.mxu0 %v3961
    %4071 = vmatprep.subr.mxu0 0.0
    %4072 = vmatpush1.msra.mxu0 %v3962
    %4073 = vmatprep.subr.mxu0 0.0
    %4074 = vmatpush1.msra.mxu0 %v3963
    %4075 = vmatprep.subr.mxu0 0.0
    %4076 = vmatpush1.msra.mxu0 %v3964
    %4077 = vmatprep.subr.mxu0 0.0
    %4078 = vmatpush1.msra.mxu0 %v3965
    %4079 = vmatprep.subr.mxu0 0.0
    %4080 = vmatpush1.msra.mxu0 %v3966
    %4081 = vmatprep.subr.mxu0 0.0
    %4082 = vmatpush1.msra.mxu0 %v3967
    %4083 = vmatprep.subr.mxu0 0.0
    %4084 = vmatpush1.msra.mxu0 %v3968
    %4085 = vmatprep.subr.mxu0 0.0
    %4086 = vmatpush1.msra.mxu0 %v3969
    %4087 = vmatprep.subr.mxu0 0.0
    %4088 = vmatpush1.msra.mxu0 %v3970
    %4089 = vmatprep.subr.mxu0 0.0
    %4090 = vmatpush1.msra.mxu0 %v3971
    %4091 = vmatprep.mubr.f32.mxu0 %v4021
    %4092 = vmatmul.mubr.f32.gmra.mrb[0].mxu0 %v4013
    %v4093 = vpop.f32.mrb[0].mxu0
    %v4094 = vadd.f32 0.0, %v4093
    %v4095 = vpop.f32.mrb[0].mxu0
    %4096 = vdwg.mxu0
    %4097 = vmatprep.subr.mxu0 0.0
    %4098 = vmatpush1.msra.mxu0 %v3972
    %4099 = vmatprep.subr.mxu0 0.0
    %4100 = vmatpush1.msra.mxu0 %v3973
    %4101 = vmatprep.subr.mxu0 0.0
    %4102 = vmatpush1.msra.mxu0 %v3974
    %4103 = vmatprep.subr.mxu0 0.0
    %4104 = vmatpush1.msra.mxu0 %v3975
    %4105 = vmatprep.subr.mxu0 0.0
    %4106 = vmatpush1.msra.mxu0 %v3976
    %4107 = vmatprep.subr.mxu0 0.0
    %4108 = vmatpush1.msra.mxu0 %v3977
    %4109 = vmatprep.subr.mxu0 0.0
    %4110 = vmatpush1.msra.mxu0 %v3978
    %4111 = vmatprep.subr.mxu0 0.0
    %4112 = vmatpush1.msra.mxu0 %v3979
    %4113 = vmatprep.subr.mxu0 0.0
    %4114 = vmatpush1.msra.mxu0 %v3980
    %4115 = vmatprep.subr.mxu0 0.0
    %4116 = vmatpush1.msra.mxu0 %v3981
    %4117 = vmatprep.subr.mxu0 0.0
    %4118 = vmatpush1.msra.mxu0 %v3982
    %4119 = vmatprep.subr.mxu0 0.0
    %4120 = vmatpush1.msra.mxu0 %v3983
    %4121 = vmatprep.subr.mxu0 0.0
    %4122 = vmatpush1.msra.mxu0 %v3984
    %4123 = vmatprep.subr.mxu0 0.0
    %4124 = vmatpush1.msra.mxu0 %v3985
    %4125 = vmatprep.subr.mxu0 0.0
    %4126 = vmatpush1.msra.mxu0 %v3986
    %4127 = vmatprep.subr.mxu0 0.0
    %4128 = vmatpush1.msra.mxu0 %v3987
    %4129 = vmatprep.subr.mxu0 0.0
    %4130 = vmatpush1.msra.mxu0 %v3988
    %4131 = vmatprep.subr.mxu0 0.0
    %4132 = vmatpush1.msra.mxu0 %v3989
    %4133 = vmatprep.subr.mxu0 0.0
    %4134 = vmatpush1.msra.mxu0 %v3990
    %4135 = vmatprep.subr.mxu0 0.0
    %4136 = vmatpush1.msra.mxu0 %v3991
    %4137 = vmatprep.subr.mxu0 0.0
    %4138 = vmatpush1.msra.mxu0 %v3992
    %4139 = vmatprep.subr.mxu0 0.0
    %4140 = vmatpush1.msra.mxu0 %v3993
    %4141 = vmatprep.subr.mxu0 0.0
    %4142 = vmatpush1.msra.mxu0 %v3994
    %4143 = vmatprep.subr.mxu0 0.0
    %4144 = vmatpush1.msra.mxu0 %v3995
    %4145 = vmatprep.subr.mxu0 0.0
    %4146 = vmatpush1.msra.mxu0 %v3996
    %4147 = vmatprep.subr.mxu0 0.0
    %4148 = vmatpush1.msra.mxu0 %v3997
    %4149 = vmatprep.subr.mxu0 0.0
    %4150 = vmatpush1.msra.mxu0 %v3998
    %4151 = vmatprep.subr.mxu0 0.0
    %4152 = vmatpush1.msra.mxu0 %v3999
    %4153 = vmatprep.subr.mxu0 0.0
    %4154 = vmatpush1.msra.mxu0 %v4000
    %4155 = vmatprep.subr.mxu0 0.0
    %4156 = vmatpush1.msra.mxu0 %v4001
    %4157 = vmatprep.subr.mxu0 0.0
    %4158 = vmatpush1.msra.mxu0 %v4002
    %4159 = vmatprep.subr.mxu0 0.0
    %4160 = vmatpush1.msra.mxu0 %v4003
    %4161 = vmatprep.mubr.f32.mxu0 %v4022
    %4162 = vmatmul.mubr.f32.gmra.mrb[0].mxu0 %v4020
    %v4163 = vpop.f32.mrb[0].mxu0
    %v4164 = vadd.f32 %v4094, %v4163
    %v4165 = vpop.f32.mrb[0].mxu0
    %4166 = vdwg.mxu0
    %v4167 = vld [vmem:[#allocation13] sm:$0xff]
    %v4168 = vld [vmem:[#allocation13 + $0x8] sm:$0xff]
    %v4169 = vld [vmem:[#allocation13 + $0x10] sm:$0xff]
    %v4170 = vld [vmem:[#allocation13 + $0x18] sm:$0xff]
    %v4171 = vld [vmem:[#allocation13 + $0x20] sm:$0xff]
    %v4172 = vld [vmem:[#allocation13 + $0x28] sm:$0xff]
    %v4173 = vld [vmem:[#allocation13 + $0x30] sm:$0xff]
    %v4174 = vld [vmem:[#allocation13 + $0x38] sm:$0xff]
    %v4175 = vld [vmem:[#allocation13 + $0x40] sm:$0xff]
    %v4176 = vld [vmem:[#allocation13 + $0x48] sm:$0xff]
    %v4177 = vld [vmem:[#allocation13 + $0x50] sm:$0xff]
    %v4178 = vld [vmem:[#allocation13 + $0x58] sm:$0xff]
    %v4179 = vld [vmem:[#allocation13 + $0x60] sm:$0xff]
    %v4180 = vld [vmem:[#allocation13 + $0x68] sm:$0xff]
    %v4181 = vld [vmem:[#allocation13 + $0x70] sm:$0xff]
    %v4182 = vld [vmem:[#allocation13 + $0x78] sm:$0xff]
    %v4183 = vld [vmem:[#allocation13 + $0x80] sm:$0xff]
    %v4184 = vld [vmem:[#allocation13 + $0x88] sm:$0xff]
    %v4185 = vld [vmem:[#allocation13 + $0x90] sm:$0xff]
    %v4186 = vld [vmem:[#allocation13 + $0x98] sm:$0xff]
    %v4187 = vld [vmem:[#allocation13 + $0xa0] sm:$0xff]
    %v4188 = vld [vmem:[#allocation13 + $0xa8] sm:$0xff]
    %v4189 = vld [vmem:[#allocation13 + $0xb0] sm:$0xff]
    %v4190 = vld [vmem:[#allocation13 + $0xb8] sm:$0xff]
    %v4191 = vld [vmem:[#allocation13 + $0xc0] sm:$0xff]
    %v4192 = vld [vmem:[#allocation13 + $0xc8] sm:$0xff]
    %v4193 = vld [vmem:[#allocation13 + $0xd0] sm:$0xff]
    %v4194 = vld [vmem:[#allocation13 + $0xd8] sm:$0xff]
    %v4195 = vld [vmem:[#allocation13 + $0xe0] sm:$0xff]
    %v4196 = vld [vmem:[#allocation13 + $0xe8] sm:$0xff]
    %v4197 = vld [vmem:[#allocation13 + $0xf0] sm:$0xff]
    %v4198 = vld [vmem:[#allocation13 + $0xf8] sm:$0xff]
    %v4199 = vld [vmem:[#allocation14] sm:$0xff]
    %v4201 = vlaneseq
    %v4202 = vshrl.u32 %v4201, 7
    %v4203 = vsub.s32 0, %v4202
    %v4204 = vrot.slane %v4199, %v4203
    %v4205 = vlaneseq
    %v4206 = vshrl.u32 %v4205, 7
    %v4207 = vsub.s32 1, %v4206
    %v4208 = vrot.slane %v4199, %v4207
    %v4209 = vlaneseq
    %v4210 = vshrl.u32 %v4209, 7
    %v4211 = vsub.s32 2, %v4210
    %v4212 = vrot.slane %v4199, %v4211
    %v4213 = vlaneseq
    %v4214 = vshrl.u32 %v4213, 7
    %v4215 = vsub.s32 3, %v4214
    %v4216 = vrot.slane %v4199, %v4215
    %v4217 = vlaneseq
    %v4218 = vshrl.u32 %v4217, 7
    %v4219 = vsub.s32 4, %v4218
    %v4220 = vrot.slane %v4199, %v4219
    %v4221 = vlaneseq
    %v4222 = vshrl.u32 %v4221, 7
    %v4223 = vsub.s32 5, %v4222
    %v4224 = vrot.slane %v4199, %v4223
    %v4225 = vlaneseq
    %v4226 = vshrl.u32 %v4225, 7
    %v4227 = vsub.s32 6, %v4226
    %v4228 = vrot.slane %v4199, %v4227
    %v4229 = vlaneseq
    %v4230 = vshrl.u32 %v4229, 7
    %v4231 = vsub.s32 7, %v4230
    %v4232 = vrot.slane %v4199, %v4231
    %vm4241 = vcmask 261120
    %v4243 = vsel %vm4241, %v4164, 0
    %4245 = vmatprep.subr.mxu0 %v4168
    %4246 = vmatpush1.msra.mxu0 %v4167
    %4247 = vmatprep.subr.mxu0 %v4176
    %4248 = vmatpush1.msra.mxu0 %v4175
    %4249 = vmatprep.subr.mxu0 %v4184
    %4250 = vmatpush1.msra.mxu0 %v4183
    %4251 = vmatprep.subr.mxu0 %v4192
    %4252 = vmatpush1.msra.mxu0 %v4191
    %4253 = vmatprep.subr.mxu0 0.0
    %4254 = vmatpush1.msra.mxu0 0.0
    %4255 = vmatprep.subr.mxu0 0.0
    %4256 = vmatpush1.msra.mxu0 0.0
    %4257 = vmatprep.subr.mxu0 0.0
    %4258 = vmatpush1.msra.mxu0 0.0
    %4259 = vmatprep.subr.mxu0 0.0
    %4260 = vmatpush1.msra.mxu0 0.0
    %4261 = vmatprep.subr.mxu0 0.0
    %4262 = vmatpush1.msra.mxu0 0.0
    %4263 = vmatprep.subr.mxu0 0.0
    %4264 = vmatpush1.msra.mxu0 0.0
    %4265 = vmatprep.subr.mxu0 0.0
    %4266 = vmatpush1.msra.mxu0 0.0
    %4267 = vmatprep.subr.mxu0 0.0
    %4268 = vmatpush1.msra.mxu0 0.0
    %4269 = vmatprep.subr.mxu0 0.0
    %4270 = vmatpush1.msra.mxu0 0.0
    %4271 = vmatprep.subr.mxu0 0.0
    %4272 = vmatpush1.msra.mxu0 0.0
    %4273 = vmatprep.subr.mxu0 0.0
    %4274 = vmatpush1.msra.mxu0 0.0
    %4275 = vmatprep.subr.mxu0 0.0
    %4276 = vmatpush1.msra.mxu0 0.0
    %4277 = vmatprep.subr.mxu0 0.0
    %4278 = vmatpush1.msra.mxu0 0.0
    %4279 = vmatprep.subr.mxu0 0.0
    %4280 = vmatpush1.msra.mxu0 0.0
    %4281 = vmatprep.subr.mxu0 0.0
    %4282 = vmatpush1.msra.mxu0 0.0
    %4283 = vmatprep.subr.mxu0 0.0
    %4284 = vmatpush1.msra.mxu0 0.0
    %4285 = vmatprep.subr.mxu0 0.0
    %4286 = vmatpush1.msra.mxu0 0.0
    %4287 = vmatprep.subr.mxu0 0.0
    %4288 = vmatpush1.msra.mxu0 0.0
    %4289 = vmatprep.subr.mxu0 0.0
    %4290 = vmatpush1.msra.mxu0 0.0
    %4291 = vmatprep.subr.mxu0 0.0
    %4292 = vmatpush1.msra.mxu0 0.0
    %4293 = vmatprep.subr.mxu0 0.0
    %4294 = vmatpush1.msra.mxu0 0.0
    %4295 = vmatprep.subr.mxu0 0.0
    %4296 = vmatpush1.msra.mxu0 0.0
    %4297 = vmatprep.subr.mxu0 0.0
    %4298 = vmatpush1.msra.mxu0 0.0
    %4299 = vmatprep.subr.mxu0 0.0
    %4300 = vmatpush1.msra.mxu0 0.0
    %4301 = vmatprep.subr.mxu0 0.0
    %4302 = vmatpush1.msra.mxu0 0.0
    %4303 = vmatprep.subr.mxu0 0.0
    %4304 = vmatpush1.msra.mxu0 0.0
    %4305 = vmatprep.subr.mxu0 0.0
    %4306 = vmatpush1.msra.mxu0 0.0
    %4307 = vmatprep.subr.mxu0 0.0
    %4308 = vmatpush1.msra.mxu0 0.0
    %4309 = vmatprep.mubr.f32.mxu0 0.0
    %4310 = vmatmul.mubr.f32.gmra.mrb[0].mxu0 %v4243
    %v4311 = vpop.f32.mrb[0].mxu0
    %v4312 = vadd.f32 %v4204, %v4311
    %v4313 = vpop.f32.mrb[0].mxu0
    %v4314 = vadd.f32 %v4208, %v4313
    %4315 = vdwg.mxu0
    %4316 = vmatprep.subr.mxu0 %v4170
    %4317 = vmatpush1.msra.mxu0 %v4169
    %4318 = vmatprep.subr.mxu0 %v4178
    %4319 = vmatpush1.msra.mxu0 %v4177
    %4320 = vmatprep.subr.mxu0 %v4186
    %4321 = vmatpush1.msra.mxu0 %v4185
    %4322 = vmatprep.subr.mxu0 %v4194
    %4323 = vmatpush1.msra.mxu0 %v4193
    %4324 = vmatprep.subr.mxu0 0.0
    %4325 = vmatpush1.msra.mxu0 0.0
    %4326 = vmatprep.subr.mxu0 0.0
    %4327 = vmatpush1.msra.mxu0 0.0
    %4328 = vmatprep.subr.mxu0 0.0
    %4329 = vmatpush1.msra.mxu0 0.0
    %4330 = vmatprep.subr.mxu0 0.0
    %4331 = vmatpush1.msra.mxu0 0.0
    %4332 = vmatprep.subr.mxu0 0.0
    %4333 = vmatpush1.msra.mxu0 0.0
    %4334 = vmatprep.subr.mxu0 0.0
    %4335 = vmatpush1.msra.mxu0 0.0
    %4336 = vmatprep.subr.mxu0 0.0
    %4337 = vmatpush1.msra.mxu0 0.0
    %4338 = vmatprep.subr.mxu0 0.0
    %4339 = vmatpush1.msra.mxu0 0.0
    %4340 = vmatprep.subr.mxu0 0.0
    %4341 = vmatpush1.msra.mxu0 0.0
    %4342 = vmatprep.subr.mxu0 0.0
    %4343 = vmatpush1.msra.mxu0 0.0
    %4344 = vmatprep.subr.mxu0 0.0
    %4345 = vmatpush1.msra.mxu0 0.0
    %4346 = vmatprep.subr.mxu0 0.0
    %4347 = vmatpush1.msra.mxu0 0.0
    %4348 = vmatprep.subr.mxu0 0.0
    %4349 = vmatpush1.msra.mxu0 0.0
    %4350 = vmatprep.subr.mxu0 0.0
    %4351 = vmatpush1.msra.mxu0 0.0
    %4352 = vmatprep.subr.mxu0 0.0
    %4353 = vmatpush1.msra.mxu0 0.0
    %4354 = vmatprep.subr.mxu0 0.0
    %4355 = vmatpush1.msra.mxu0 0.0
    %4356 = vmatprep.subr.mxu0 0.0
    %4357 = vmatpush1.msra.mxu0 0.0
    %4358 = vmatprep.subr.mxu0 0.0
    %4359 = vmatpush1.msra.mxu0 0.0
    %4360 = vmatprep.subr.mxu0 0.0
    %4361 = vmatpush1.msra.mxu0 0.0
    %4362 = vmatprep.subr.mxu0 0.0
    %4363 = vmatpush1.msra.mxu0 0.0
    %4364 = vmatprep.subr.mxu0 0.0
    %4365 = vmatpush1.msra.mxu0 0.0
    %4366 = vmatprep.subr.mxu0 0.0
    %4367 = vmatpush1.msra.mxu0 0.0
    %4368 = vmatprep.subr.mxu0 0.0
    %4369 = vmatpush1.msra.mxu0 0.0
    %4370 = vmatprep.subr.mxu0 0.0
    %4371 = vmatpush1.msra.mxu0 0.0
    %4372 = vmatprep.subr.mxu0 0.0
    %4373 = vmatpush1.msra.mxu0 0.0
    %4374 = vmatprep.subr.mxu0 0.0
    %4375 = vmatpush1.msra.mxu0 0.0
    %4376 = vmatprep.subr.mxu0 0.0
    %4377 = vmatpush1.msra.mxu0 0.0
    %4378 = vmatprep.subr.mxu0 0.0
    %4379 = vmatpush1.msra.mxu0 0.0
    %4380 = vmatprep.mubr.f32.mxu0 0.0
    %4381 = vmatmul.mubr.f32.gmra.mrb[0].mxu0 %v4243
    %v4382 = vpop.f32.mrb[0].mxu0
    %v4383 = vadd.f32 %v4212, %v4382
    %v4384 = vpop.f32.mrb[0].mxu0
    %v4385 = vadd.f32 %v4216, %v4384
    %4386 = vdwg.mxu0
    %4387 = vmatprep.subr.mxu0 %v4172
    %4388 = vmatpush1.msra.mxu0 %v4171
    %4389 = vmatprep.subr.mxu0 %v4180
    %4390 = vmatpush1.msra.mxu0 %v4179
    %4391 = vmatprep.subr.mxu0 %v4188
    %4392 = vmatpush1.msra.mxu0 %v4187
    %4393 = vmatprep.subr.mxu0 %v4196
    %4394 = vmatpush1.msra.mxu0 %v4195
    %4395 = vmatprep.subr.mxu0 0.0
    %4396 = vmatpush1.msra.mxu0 0.0
    %4397 = vmatprep.subr.mxu0 0.0
    %4398 = vmatpush1.msra.mxu0 0.0
    %4399 = vmatprep.subr.mxu0 0.0
    %4400 = vmatpush1.msra.mxu0 0.0
    %4401 = vmatprep.subr.mxu0 0.0
    %4402 = vmatpush1.msra.mxu0 0.0
    %4403 = vmatprep.subr.mxu0 0.0
    %4404 = vmatpush1.msra.mxu0 0.0
    %4405 = vmatprep.subr.mxu0 0.0
    %4406 = vmatpush1.msra.mxu0 0.0
    %4407 = vmatprep.subr.mxu0 0.0
    %4408 = vmatpush1.msra.mxu0 0.0
    %4409 = vmatprep.subr.mxu0 0.0
    %4410 = vmatpush1.msra.mxu0 0.0
    %4411 = vmatprep.subr.mxu0 0.0
    %4412 = vmatpush1.msra.mxu0 0.0
    %4413 = vmatprep.subr.mxu0 0.0
    %4414 = vmatpush1.msra.mxu0 0.0
    %4415 = vmatprep.subr.mxu0 0.0
    %4416 = vmatpush1.msra.mxu0 0.0
    %4417 = vmatprep.subr.mxu0 0.0
    %4418 = vmatpush1.msra.mxu0 0.0
    %4419 = vmatprep.subr.mxu0 0.0
    %4420 = vmatpush1.msra.mxu0 0.0
    %4421 = vmatprep.subr.mxu0 0.0
    %4422 = vmatpush1.msra.mxu0 0.0
    %4423 = vmatprep.subr.mxu0 0.0
    %4424 = vmatpush1.msra.mxu0 0.0
    %4425 = vmatprep.subr.mxu0 0.0
    %4426 = vmatpush1.msra.mxu0 0.0
    %4427 = vmatprep.subr.mxu0 0.0
    %4428 = vmatpush1.msra.mxu0 0.0
    %4429 = vmatprep.subr.mxu0 0.0
    %4430 = vmatpush1.msra.mxu0 0.0
    %4431 = vmatprep.subr.mxu0 0.0
    %4432 = vmatpush1.msra.mxu0 0.0
    %4433 = vmatprep.subr.mxu0 0.0
    %4434 = vmatpush1.msra.mxu0 0.0
    %4435 = vmatprep.subr.mxu0 0.0
    %4436 = vmatpush1.msra.mxu0 0.0
    %4437 = vmatprep.subr.mxu0 0.0
    %4438 = vmatpush1.msra.mxu0 0.0
    %4439 = vmatprep.subr.mxu0 0.0
    %4440 = vmatpush1.msra.mxu0 0.0
    %4441 = vmatprep.subr.mxu0 0.0
    %4442 = vmatpush1.msra.mxu0 0.0
    %4443 = vmatprep.subr.mxu0 0.0
    %4444 = vmatpush1.msra.mxu0 0.0
    %4445 = vmatprep.subr.mxu0 0.0
    %4446 = vmatpush1.msra.mxu0 0.0
    %4447 = vmatprep.subr.mxu0 0.0
    %4448 = vmatpush1.msra.mxu0 0.0
    %4449 = vmatprep.subr.mxu0 0.0
    %4450 = vmatpush1.msra.mxu0 0.0
    %4451 = vmatprep.mubr.f32.mxu0 0.0
    %4452 = vmatmul.mubr.f32.gmra.mrb[0].mxu0 %v4243
    %v4453 = vpop.f32.mrb[0].mxu0
    %v4454 = vadd.f32 %v4220, %v4453
    %v4455 = vpop.f32.mrb[0].mxu0
    %v4456 = vadd.f32 %v4224, %v4455
    %4457 = vdwg.mxu0
    %4458 = vmatprep.subr.mxu0 %v4174
    %4459 = vmatpush1.msra.mxu0 %v4173
    %4460 = vmatprep.subr.mxu0 %v4182
    %4461 = vmatpush1.msra.mxu0 %v4181
    %4462 = vmatprep.subr.mxu0 %v4190
    %4463 = vmatpush1.msra.mxu0 %v4189
    %4464 = vmatprep.subr.mxu0 %v4198
    %4465 = vmatpush1.msra.mxu0 %v4197
    %4466 = vmatprep.subr.mxu0 0.0
    %4467 = vmatpush1.msra.mxu0 0.0
    %4468 = vmatprep.subr.mxu0 0.0
    %4469 = vmatpush1.msra.mxu0 0.0
    %4470 = vmatprep.subr.mxu0 0.0
    %4471 = vmatpush1.msra.mxu0 0.0
    %4472 = vmatprep.subr.mxu0 0.0
    %4473 = vmatpush1.msra.mxu0 0.0
    %4474 = vmatprep.subr.mxu0 0.0
    %4475 = vmatpush1.msra.mxu0 0.0
    %4476 = vmatprep.subr.mxu0 0.0
    %4477 = vmatpush1.msra.mxu0 0.0
    %4478 = vmatprep.subr.mxu0 0.0
    %4479 = vmatpush1.msra.mxu0 0.0
    %4480 = vmatprep.subr.mxu0 0.0
    %4481 = vmatpush1.msra.mxu0 0.0
    %4482 = vmatprep.subr.mxu0 0.0
    %4483 = vmatpush1.msra.mxu0 0.0
    %4484 = vmatprep.subr.mxu0 0.0
    %4485 = vmatpush1.msra.mxu0 0.0
    %4486 = vmatprep.subr.mxu0 0.0
    %4487 = vmatpush1.msra.mxu0 0.0
    %4488 = vmatprep.subr.mxu0 0.0
    %4489 = vmatpush1.msra.mxu0 0.0
    %4490 = vmatprep.subr.mxu0 0.0
    %4491 = vmatpush1.msra.mxu0 0.0
    %4492 = vmatprep.subr.mxu0 0.0
    %4493 = vmatpush1.msra.mxu0 0.0
    %4494 = vmatprep.subr.mxu0 0.0
    %4495 = vmatpush1.msra.mxu0 0.0
    %4496 = vmatprep.subr.mxu0 0.0
    %4497 = vmatpush1.msra.mxu0 0.0
    %4498 = vmatprep.subr.mxu0 0.0
    %4499 = vmatpush1.msra.mxu0 0.0
    %4500 = vmatprep.subr.mxu0 0.0
    %4501 = vmatpush1.msra.mxu0 0.0
    %4502 = vmatprep.subr.mxu0 0.0
    %4503 = vmatpush1.msra.mxu0 0.0
    %4504 = vmatprep.subr.mxu0 0.0
    %4505 = vmatpush1.msra.mxu0 0.0
    %4506 = vmatprep.subr.mxu0 0.0
    %4507 = vmatpush1.msra.mxu0 0.0
    %4508 = vmatprep.subr.mxu0 0.0
    %4509 = vmatpush1.msra.mxu0 0.0
    %4510 = vmatprep.subr.mxu0 0.0
    %4511 = vmatpush1.msra.mxu0 0.0
    %4512 = vmatprep.subr.mxu0 0.0
    %4513 = vmatpush1.msra.mxu0 0.0
    %4514 = vmatprep.subr.mxu0 0.0
    %4515 = vmatpush1.msra.mxu0 0.0
    %4516 = vmatprep.subr.mxu0 0.0
    %4517 = vmatpush1.msra.mxu0 0.0
    %4518 = vmatprep.subr.mxu0 0.0
    %4519 = vmatpush1.msra.mxu0 0.0
    %4520 = vmatprep.subr.mxu0 0.0
    %4521 = vmatpush1.msra.mxu0 0.0
    %4522 = vmatprep.mubr.f32.mxu0 0.0
    %4523 = vmatmul.mubr.f32.gmra.mrb[0].mxu0 %v4243
    %v4524 = vpop.f32.mrb[0].mxu0
    %v4525 = vadd.f32 %v4228, %v4524
    %v4526 = vpop.f32.mrb[0].mxu0
    %v4527 = vadd.f32 %v4232, %v4526
    %4528 = vdwg.mxu0
    %v4529 = vmax.f32 %v4312, 0.0
    %v4530 = vmax.f32 %v4314, 0.0
    %v4531 = vmax.f32 %v4383, 0.0
    %v4532 = vmax.f32 %v4385, 0.0
    %v4533 = vmax.f32 %v4454, 0.0
    %v4534 = vmax.f32 %v4456, 0.0
    %v4535 = vmax.f32 %v4525, 0.0
    %v4536 = vmax.f32 %v4527, 0.0
    %v4537 = vpack.c.bf16 %v4529, %v4529
    %v4538 = vpack.c.bf16 %v4530, %v4530
    %v4539 = vpack.c.bf16 %v4531, %v4531
    %v4540 = vpack.c.bf16 %v4532, %v4532
    %v4541 = vpack.c.bf16 %v4533, %v4533
    %v4542 = vpack.c.bf16 %v4534, %v4534
    %v4543 = vpack.c.bf16 %v4535, %v4535
    %v4544 = vpack.c.bf16 %v4536, %v4536
    %s4545 = smul.u32 4, 128
    %s4546 = smul.u32 %s4545, 8
    %s4547 = sshll.u32 %s4546, 4
    %4548 = dma.done [#allocation4], %s4547
    %v4549 = vld [vmem:[#allocation3] sm:$0xff]
    %v4550 = vld [vmem:[#allocation3 + $0x8] sm:$0xff]
    %v4551 = vld [vmem:[#allocation3 + $0x10] sm:$0xff]
    %v4552 = vld [vmem:[#allocation3 + $0x18] sm:$0xff]
    %v4553 = vld [vmem:[#allocation3 + $0x20] sm:$0xff]
    %v4554 = vld [vmem:[#allocation3 + $0x28] sm:$0xff]
    %v4555 = vld [vmem:[#allocation3 + $0x30] sm:$0xff]
    %v4556 = vld [vmem:[#allocation3 + $0x38] sm:$0xff]
    %v4557 = vld [vmem:[#allocation3 + $0x40] sm:$0xff]
    %v4558 = vld [vmem:[#allocation3 + $0x48] sm:$0xff]
    %v4559 = vld [vmem:[#allocation3 + $0x50] sm:$0xff]
    %v4560 = vld [vmem:[#allocation3 + $0x58] sm:$0xff]
    %v4561 = vld [vmem:[#allocation3 + $0x60] sm:$0xff]
    %v4562 = vld [vmem:[#allocation3 + $0x68] sm:$0xff]
    %v4563 = vld [vmem:[#allocation3 + $0x70] sm:$0xff]
    %v4564 = vld [vmem:[#allocation3 + $0x78] sm:$0xff]
    %v4565 = vld [vmem:[#allocation3 + $0x80] sm:$0xff]
    %v4566 = vld [vmem:[#allocation3 + $0x88] sm:$0xff]
    %v4567 = vld [vmem:[#allocation3 + $0x90] sm:$0xff]
    %v4568 = vld [vmem:[#allocation3 + $0x98] sm:$0xff]
    %v4569 = vld [vmem:[#allocation3 + $0xa0] sm:$0xff]
    %v4570 = vld [vmem:[#allocation3 + $0xa8] sm:$0xff]
    %v4571 = vld [vmem:[#allocation3 + $0xb0] sm:$0xff]
    %v4572 = vld [vmem:[#allocation3 + $0xb8] sm:$0xff]
    %v4573 = vld [vmem:[#allocation3 + $0xc0] sm:$0xff]
    %v4574 = vld [vmem:[#allocation3 + $0xc8] sm:$0xff]
    %v4575 = vld [vmem:[#allocation3 + $0xd0] sm:$0xff]
    %v4576 = vld [vmem:[#allocation3 + $0xd8] sm:$0xff]
    %v4577 = vld [vmem:[#allocation3 + $0xe0] sm:$0xff]
    %v4578 = vld [vmem:[#allocation3 + $0xe8] sm:$0xff]
    %v4579 = vld [vmem:[#allocation3 + $0xf0] sm:$0xff]
    %v4580 = vld [vmem:[#allocation3 + $0xf8] sm:$0xff]
    %v4581 = vld [vmem:[#allocation3 + $0x100] sm:$0xff]
    %v4582 = vld [vmem:[#allocation3 + $0x108] sm:$0xff]
    %v4583 = vld [vmem:[#allocation3 + $0x110] sm:$0xff]
    %v4584 = vld [vmem:[#allocation3 + $0x118] sm:$0xff]
    %v4585 = vld [vmem:[#allocation3 + $0x120] sm:$0xff]
    %v4586 = vld [vmem:[#allocation3 + $0x128] sm:$0xff]
    %v4587 = vld [vmem:[#allocation3 + $0x130] sm:$0xff]
    %v4588 = vld [vmem:[#allocation3 + $0x138] sm:$0xff]
    %v4589 = vld [vmem:[#allocation3 + $0x140] sm:$0xff]
    %v4590 = vld [vmem:[#allocation3 + $0x148] sm:$0xff]
    %v4591 = vld [vmem:[#allocation3 + $0x150] sm:$0xff]
    %v4592 = vld [vmem:[#allocation3 + $0x158] sm:$0xff]
    %v4593 = vld [vmem:[#allocation3 + $0x160] sm:$0xff]
    %v4594 = vld [vmem:[#allocation3 + $0x168] sm:$0xff]
    %v4595 = vld [vmem:[#allocation3 + $0x170] sm:$0xff]
    %v4596 = vld [vmem:[#allocation3 + $0x178] sm:$0xff]
    %v4597 = vld [vmem:[#allocation3 + $0x180] sm:$0xff]
    %v4598 = vld [vmem:[#allocation3 + $0x188] sm:$0xff]
    %v4599 = vld [vmem:[#allocation3 + $0x190] sm:$0xff]
    %v4600 = vld [vmem:[#allocation3 + $0x198] sm:$0xff]
    %v4601 = vld [vmem:[#allocation3 + $0x1a0] sm:$0xff]
    %v4602 = vld [vmem:[#allocation3 + $0x1a8] sm:$0xff]
    %v4603 = vld [vmem:[#allocation3 + $0x1b0] sm:$0xff]
    %v4604 = vld [vmem:[#allocation3 + $0x1b8] sm:$0xff]
    %v4605 = vld [vmem:[#allocation3 + $0x1c0] sm:$0xff]
    %v4606 = vld [vmem:[#allocation3 + $0x1c8] sm:$0xff]
    %v4607 = vld [vmem:[#allocation3 + $0x1d0] sm:$0xff]
    %v4608 = vld [vmem:[#allocation3 + $0x1d8] sm:$0xff]
    %v4609 = vld [vmem:[#allocation3 + $0x1e0] sm:$0xff]
    %v4610 = vld [vmem:[#allocation3 + $0x1e8] sm:$0xff]
    %v4611 = vld [vmem:[#allocation3 + $0x1f0] sm:$0xff]
    %v4612 = vld [vmem:[#allocation3 + $0x1f8] sm:$0xff]
    %v4613 = vld [vmem:[#allocation3 + $0x200] sm:$0xff]
    %v4614 = vld [vmem:[#allocation3 + $0x208] sm:$0xff]
    %v4615 = vld [vmem:[#allocation3 + $0x210] sm:$0xff]
    %v4616 = vld [vmem:[#allocation3 + $0x218] sm:$0xff]
    %v4617 = vld [vmem:[#allocation3 + $0x220] sm:$0xff]
    %v4618 = vld [vmem:[#allocation3 + $0x228] sm:$0xff]
    %v4619 = vld [vmem:[#allocation3 + $0x230] sm:$0xff]
    %v4620 = vld [vmem:[#allocation3 + $0x238] sm:$0xff]
    %v4621 = vld [vmem:[#allocation3 + $0x240] sm:$0xff]
    %v4622 = vld [vmem:[#allocation3 + $0x248] sm:$0xff]
    %v4623 = vld [vmem:[#allocation3 + $0x250] sm:$0xff]
    %v4624 = vld [vmem:[#allocation3 + $0x258] sm:$0xff]
    %v4625 = vld [vmem:[#allocation3 + $0x260] sm:$0xff]
    %v4626 = vld [vmem:[#allocation3 + $0x268] sm:$0xff]
    %v4627 = vld [vmem:[#allocation3 + $0x270] sm:$0xff]
    %v4628 = vld [vmem:[#allocation3 + $0x278] sm:$0xff]
    %v4629 = vld [vmem:[#allocation3 + $0x280] sm:$0xff]
    %v4630 = vld [vmem:[#allocation3 + $0x288] sm:$0xff]
    %v4631 = vld [vmem:[#allocation3 + $0x290] sm:$0xff]
    %v4632 = vld [vmem:[#allocation3 + $0x298] sm:$0xff]
    %v4633 = vld [vmem:[#allocation3 + $0x2a0] sm:$0xff]
    %v4634 = vld [vmem:[#allocation3 + $0x2a8] sm:$0xff]
    %v4635 = vld [vmem:[#allocation3 + $0x2b0] sm:$0xff]
    %v4636 = vld [vmem:[#allocation3 + $0x2b8] sm:$0xff]
    %v4637 = vld [vmem:[#allocation3 + $0x2c0] sm:$0xff]
    %v4638 = vld [vmem:[#allocation3 + $0x2c8] sm:$0xff]
    %v4639 = vld [vmem:[#allocation3 + $0x2d0] sm:$0xff]
    %v4640 = vld [vmem:[#allocation3 + $0x2d8] sm:$0xff]
    %v4641 = vld [vmem:[#allocation3 + $0x2e0] sm:$0xff]
    %v4642 = vld [vmem:[#allocation3 + $0x2e8] sm:$0xff]
    %v4643 = vld [vmem:[#allocation3 + $0x2f0] sm:$0xff]
    %v4644 = vld [vmem:[#allocation3 + $0x2f8] sm:$0xff]
    %v4645 = vld [vmem:[#allocation3 + $0x300] sm:$0xff]
    %v4646 = vld [vmem:[#allocation3 + $0x308] sm:$0xff]
    %v4647 = vld [vmem:[#allocation3 + $0x310] sm:$0xff]
    %v4648 = vld [vmem:[#allocation3 + $0x318] sm:$0xff]
    %v4649 = vld [vmem:[#allocation3 + $0x320] sm:$0xff]
    %v4650 = vld [vmem:[#allocation3 + $0x328] sm:$0xff]
    %v4651 = vld [vmem:[#allocation3 + $0x330] sm:$0xff]
    %v4652 = vld [vmem:[#allocation3 + $0x338] sm:$0xff]
    %v4653 = vld [vmem:[#allocation3 + $0x340] sm:$0xff]
    %v4654 = vld [vmem:[#allocation3 + $0x348] sm:$0xff]
    %v4655 = vld [vmem:[#allocation3 + $0x350] sm:$0xff]
    %v4656 = vld [vmem:[#allocation3 + $0x358] sm:$0xff]
    %v4657 = vld [vmem:[#allocation3 + $0x360] sm:$0xff]
    %v4658 = vld [vmem:[#allocation3 + $0x368] sm:$0xff]
    %v4659 = vld [vmem:[#allocation3 + $0x370] sm:$0xff]
    %v4660 = vld [vmem:[#allocation3 + $0x378] sm:$0xff]
    %v4661 = vld [vmem:[#allocation3 + $0x380] sm:$0xff]
    %v4662 = vld [vmem:[#allocation3 + $0x388] sm:$0xff]
    %v4663 = vld [vmem:[#allocation3 + $0x390] sm:$0xff]
    %v4664 = vld [vmem:[#allocation3 + $0x398] sm:$0xff]
    %v4665 = vld [vmem:[#allocation3 + $0x3a0] sm:$0xff]
    %v4666 = vld [vmem:[#allocation3 + $0x3a8] sm:$0xff]
    %v4667 = vld [vmem:[#allocation3 + $0x3b0] sm:$0xff]
    %v4668 = vld [vmem:[#allocation3 + $0x3b8] sm:$0xff]
    %v4669 = vld [vmem:[#allocation3 + $0x3c0] sm:$0xff]
    %v4670 = vld [vmem:[#allocation3 + $0x3c8] sm:$0xff]
    %v4671 = vld [vmem:[#allocation3 + $0x3d0] sm:$0xff]
    %v4672 = vld [vmem:[#allocation3 + $0x3d8] sm:$0xff]
    %v4673 = vld [vmem:[#allocation3 + $0x3e0] sm:$0xff]
    %v4674 = vld [vmem:[#allocation3 + $0x3e8] sm:$0xff]
    %v4675 = vld [vmem:[#allocation3 + $0x3f0] sm:$0xff]
    %v4676 = vld [vmem:[#allocation3 + $0x3f8] sm:$0xff]
    %v4677 = vld [vmem:[#allocation3 + $0x400] sm:$0xff]
    %v4678 = vld [vmem:[#allocation3 + $0x408] sm:$0xff]
    %v4679 = vld [vmem:[#allocation3 + $0x410] sm:$0xff]
    %v4680 = vld [vmem:[#allocation3 + $0x418] sm:$0xff]
    %v4681 = vld [vmem:[#allocation3 + $0x420] sm:$0xff]
    %v4682 = vld [vmem:[#allocation3 + $0x428] sm:$0xff]
    %v4683 = vld [vmem:[#allocation3 + $0x430] sm:$0xff]
    %v4684 = vld [vmem:[#allocation3 + $0x438] sm:$0xff]
    %v4685 = vld [vmem:[#allocation3 + $0x440] sm:$0xff]
    %v4686 = vld [vmem:[#allocation3 + $0x448] sm:$0xff]
    %v4687 = vld [vmem:[#allocation3 + $0x450] sm:$0xff]
    %v4688 = vld [vmem:[#allocation3 + $0x458] sm:$0xff]
    %v4689 = vld [vmem:[#allocation3 + $0x460] sm:$0xff]
    %v4690 = vld [vmem:[#allocation3 + $0x468] sm:$0xff]
    %v4691 = vld [vmem:[#allocation3 + $0x470] sm:$0xff]
    %v4692 = vld [vmem:[#allocation3 + $0x478] sm:$0xff]
    %v4693 = vld [vmem:[#allocation3 + $0x480] sm:$0xff]
    %v4694 = vld [vmem:[#allocation3 + $0x488] sm:$0xff]
    %v4695 = vld [vmem:[#allocation3 + $0x490] sm:$0xff]
    %v4696 = vld [vmem:[#allocation3 + $0x498] sm:$0xff]
    %v4697 = vld [vmem:[#allocation3 + $0x4a0] sm:$0xff]
    %v4698 = vld [vmem:[#allocation3 + $0x4a8] sm:$0xff]
    %v4699 = vld [vmem:[#allocation3 + $0x4b0] sm:$0xff]
    %v4700 = vld [vmem:[#allocation3 + $0x4b8] sm:$0xff]
    %v4701 = vld [vmem:[#allocation3 + $0x4c0] sm:$0xff]
    %v4702 = vld [vmem:[#allocation3 + $0x4c8] sm:$0xff]
    %v4703 = vld [vmem:[#allocation3 + $0x4d0] sm:$0xff]
    %v4704 = vld [vmem:[#allocation3 + $0x4d8] sm:$0xff]
    %v4705 = vld [vmem:[#allocation3 + $0x4e0] sm:$0xff]
    %v4706 = vld [vmem:[#allocation3 + $0x4e8] sm:$0xff]
    %v4707 = vld [vmem:[#allocation3 + $0x4f0] sm:$0xff]
    %v4708 = vld [vmem:[#allocation3 + $0x4f8] sm:$0xff]
    %v4709 = vld [vmem:[#allocation3 + $0x500] sm:$0xff]
    %v4710 = vld [vmem:[#allocation3 + $0x508] sm:$0xff]
    %v4711 = vld [vmem:[#allocation3 + $0x510] sm:$0xff]
    %v4712 = vld [vmem:[#allocation3 + $0x518] sm:$0xff]
    %v4713 = vld [vmem:[#allocation3 + $0x520] sm:$0xff]
    %v4714 = vld [vmem:[#allocation3 + $0x528] sm:$0xff]
    %v4715 = vld [vmem:[#allocation3 + $0x530] sm:$0xff]
    %v4716 = vld [vmem:[#allocation3 + $0x538] sm:$0xff]
    %v4717 = vld [vmem:[#allocation3 + $0x540] sm:$0xff]
    %v4718 = vld [vmem:[#allocation3 + $0x548] sm:$0xff]
    %v4719 = vld [vmem:[#allocation3 + $0x550] sm:$0xff]
    %v4720 = vld [vmem:[#allocation3 + $0x558] sm:$0xff]
    %v4721 = vld [vmem:[#allocation3 + $0x560] sm:$0xff]
    %v4722 = vld [vmem:[#allocation3 + $0x568] sm:$0xff]
    %v4723 = vld [vmem:[#allocation3 + $0x570] sm:$0xff]
    %v4724 = vld [vmem:[#allocation3 + $0x578] sm:$0xff]
    %v4725 = vld [vmem:[#allocation3 + $0x580] sm:$0xff]
    %v4726 = vld [vmem:[#allocation3 + $0x588] sm:$0xff]
    %v4727 = vld [vmem:[#allocation3 + $0x590] sm:$0xff]
    %v4728 = vld [vmem:[#allocation3 + $0x598] sm:$0xff]
    %v4729 = vld [vmem:[#allocation3 + $0x5a0] sm:$0xff]
    %v4730 = vld [vmem:[#allocation3 + $0x5a8] sm:$0xff]
    %v4731 = vld [vmem:[#allocation3 + $0x5b0] sm:$0xff]
    %v4732 = vld [vmem:[#allocation3 + $0x5b8] sm:$0xff]
    %v4733 = vld [vmem:[#allocation3 + $0x5c0] sm:$0xff]
    %v4734 = vld [vmem:[#allocation3 + $0x5c8] sm:$0xff]
    %v4735 = vld [vmem:[#allocation3 + $0x5d0] sm:$0xff]
    %v4736 = vld [vmem:[#allocation3 + $0x5d8] sm:$0xff]
    %v4737 = vld [vmem:[#allocation3 + $0x5e0] sm:$0xff]
    %v4738 = vld [vmem:[#allocation3 + $0x5e8] sm:$0xff]
    %v4739 = vld [vmem:[#allocation3 + $0x5f0] sm:$0xff]
    %v4740 = vld [vmem:[#allocation3 + $0x5f8] sm:$0xff]
    %v4741 = vld [vmem:[#allocation3 + $0x600] sm:$0xff]
    %v4742 = vld [vmem:[#allocation3 + $0x608] sm:$0xff]
    %v4743 = vld [vmem:[#allocation3 + $0x610] sm:$0xff]
    %v4744 = vld [vmem:[#allocation3 + $0x618] sm:$0xff]
    %v4745 = vld [vmem:[#allocation3 + $0x620] sm:$0xff]
    %v4746 = vld [vmem:[#allocation3 + $0x628] sm:$0xff]
    %v4747 = vld [vmem:[#allocation3 + $0x630] sm:$0xff]
    %v4748 = vld [vmem:[#allocation3 + $0x638] sm:$0xff]
    %v4749 = vld [vmem:[#allocation3 + $0x640] sm:$0xff]
    %v4750 = vld [vmem:[#allocation3 + $0x648] sm:$0xff]
    %v4751 = vld [vmem:[#allocation3 + $0x650] sm:$0xff]
    %v4752 = vld [vmem:[#allocation3 + $0x658] sm:$0xff]
    %v4753 = vld [vmem:[#allocation3 + $0x660] sm:$0xff]
    %v4754 = vld [vmem:[#allocation3 + $0x668] sm:$0xff]
    %v4755 = vld [vmem:[#allocation3 + $0x670] sm:$0xff]
    %v4756 = vld [vmem:[#allocation3 + $0x678] sm:$0xff]
    %v4757 = vld [vmem:[#allocation3 + $0x680] sm:$0xff]
    %v4758 = vld [vmem:[#allocation3 + $0x688] sm:$0xff]
    %v4759 = vld [vmem:[#allocation3 + $0x690] sm:$0xff]
    %v4760 = vld [vmem:[#allocation3 + $0x698] sm:$0xff]
    %v4761 = vld [vmem:[#allocation3 + $0x6a0] sm:$0xff]
    %v4762 = vld [vmem:[#allocation3 + $0x6a8] sm:$0xff]
    %v4763 = vld [vmem:[#allocation3 + $0x6b0] sm:$0xff]
    %v4764 = vld [vmem:[#allocation3 + $0x6b8] sm:$0xff]
    %v4765 = vld [vmem:[#allocation3 + $0x6c0] sm:$0xff]
    %v4766 = vld [vmem:[#allocation3 + $0x6c8] sm:$0xff]
    %v4767 = vld [vmem:[#allocation3 + $0x6d0] sm:$0xff]
    %v4768 = vld [vmem:[#allocation3 + $0x6d8] sm:$0xff]
    %v4769 = vld [vmem:[#allocation3 + $0x6e0] sm:$0xff]
    %v4770 = vld [vmem:[#allocation3 + $0x6e8] sm:$0xff]
    %v4771 = vld [vmem:[#allocation3 + $0x6f0] sm:$0xff]
    %v4772 = vld [vmem:[#allocation3 + $0x6f8] sm:$0xff]
    %v4773 = vld [vmem:[#allocation3 + $0x700] sm:$0xff]
    %v4774 = vld [vmem:[#allocation3 + $0x708] sm:$0xff]
    %v4775 = vld [vmem:[#allocation3 + $0x710] sm:$0xff]
    %v4776 = vld [vmem:[#allocation3 + $0x718] sm:$0xff]
    %v4777 = vld [vmem:[#allocation3 + $0x720] sm:$0xff]
    %v4778 = vld [vmem:[#allocation3 + $0x728] sm:$0xff]
    %v4779 = vld [vmem:[#allocation3 + $0x730] sm:$0xff]
    %v4780 = vld [vmem:[#allocation3 + $0x738] sm:$0xff]
    %v4781 = vld [vmem:[#allocation3 + $0x740] sm:$0xff]
    %v4782 = vld [vmem:[#allocation3 + $0x748] sm:$0xff]
    %v4783 = vld [vmem:[#allocation3 + $0x750] sm:$0xff]
    %v4784 = vld [vmem:[#allocation3 + $0x758] sm:$0xff]
    %v4785 = vld [vmem:[#allocation3 + $0x760] sm:$0xff]
    %v4786 = vld [vmem:[#allocation3 + $0x768] sm:$0xff]
    %v4787 = vld [vmem:[#allocation3 + $0x770] sm:$0xff]
    %v4788 = vld [vmem:[#allocation3 + $0x778] sm:$0xff]
    %v4789 = vld [vmem:[#allocation3 + $0x780] sm:$0xff]
    %v4790 = vld [vmem:[#allocation3 + $0x788] sm:$0xff]
    %v4791 = vld [vmem:[#allocation3 + $0x790] sm:$0xff]
    %v4792 = vld [vmem:[#allocation3 + $0x798] sm:$0xff]
    %v4793 = vld [vmem:[#allocation3 + $0x7a0] sm:$0xff]
    %v4794 = vld [vmem:[#allocation3 + $0x7a8] sm:$0xff]
    %v4795 = vld [vmem:[#allocation3 + $0x7b0] sm:$0xff]
    %v4796 = vld [vmem:[#allocation3 + $0x7b8] sm:$0xff]
    %v4797 = vld [vmem:[#allocation3 + $0x7c0] sm:$0xff]
    %v4798 = vld [vmem:[#allocation3 + $0x7c8] sm:$0xff]
    %v4799 = vld [vmem:[#allocation3 + $0x7d0] sm:$0xff]
    %v4800 = vld [vmem:[#allocation3 + $0x7d8] sm:$0xff]
    %v4801 = vld [vmem:[#allocation3 + $0x7e0] sm:$0xff]
    %v4802 = vld [vmem:[#allocation3 + $0x7e8] sm:$0xff]
    %v4803 = vld [vmem:[#allocation3 + $0x7f0] sm:$0xff]
    %v4804 = vld [vmem:[#allocation3 + $0x7f8] sm:$0xff]
    %v4805 = vld [vmem:[#allocation3 + $0x800] sm:$0xff]
    %v4806 = vld [vmem:[#allocation3 + $0x808] sm:$0xff]
    %v4807 = vld [vmem:[#allocation3 + $0x810] sm:$0xff]
    %v4808 = vld [vmem:[#allocation3 + $0x818] sm:$0xff]
    %v4809 = vld [vmem:[#allocation3 + $0x820] sm:$0xff]
    %v4810 = vld [vmem:[#allocation3 + $0x828] sm:$0xff]
    %v4811 = vld [vmem:[#allocation3 + $0x830] sm:$0xff]
    %v4812 = vld [vmem:[#allocation3 + $0x838] sm:$0xff]
    %v4813 = vld [vmem:[#allocation3 + $0x840] sm:$0xff]
    %v4814 = vld [vmem:[#allocation3 + $0x848] sm:$0xff]
    %v4815 = vld [vmem:[#allocation3 + $0x850] sm:$0xff]
    %v4816 = vld [vmem:[#allocation3 + $0x858] sm:$0xff]
    %v4817 = vld [vmem:[#allocation3 + $0x860] sm:$0xff]
    %v4818 = vld [vmem:[#allocation3 + $0x868] sm:$0xff]
    %v4819 = vld [vmem:[#allocation3 + $0x870] sm:$0xff]
    %v4820 = vld [vmem:[#allocation3 + $0x878] sm:$0xff]
    %v4821 = vld [vmem:[#allocation3 + $0x880] sm:$0xff]
    %v4822 = vld [vmem:[#allocation3 + $0x888] sm:$0xff]
    %v4823 = vld [vmem:[#allocation3 + $0x890] sm:$0xff]
    %v4824 = vld [vmem:[#allocation3 + $0x898] sm:$0xff]
    %v4825 = vld [vmem:[#allocation3 + $0x8a0] sm:$0xff]
    %v4826 = vld [vmem:[#allocation3 + $0x8a8] sm:$0xff]
    %v4827 = vld [vmem:[#allocation3 + $0x8b0] sm:$0xff]
    %v4828 = vld [vmem:[#allocation3 + $0x8b8] sm:$0xff]
    %v4829 = vld [vmem:[#allocation3 + $0x8c0] sm:$0xff]
    %v4830 = vld [vmem:[#allocation3 + $0x8c8] sm:$0xff]
    %v4831 = vld [vmem:[#allocation3 + $0x8d0] sm:$0xff]
    %v4832 = vld [vmem:[#allocation3 + $0x8d8] sm:$0xff]
    %v4833 = vld [vmem:[#allocation3 + $0x8e0] sm:$0xff]
    %v4834 = vld [vmem:[#allocation3 + $0x8e8] sm:$0xff]
    %v4835 = vld [vmem:[#allocation3 + $0x8f0] sm:$0xff]
    %v4836 = vld [vmem:[#allocation3 + $0x8f8] sm:$0xff]
    %v4837 = vld [vmem:[#allocation3 + $0x900] sm:$0xff]
    %v4838 = vld [vmem:[#allocation3 + $0x908] sm:$0xff]
    %v4839 = vld [vmem:[#allocation3 + $0x910] sm:$0xff]
    %v4840 = vld [vmem:[#allocation3 + $0x918] sm:$0xff]
    %v4841 = vld [vmem:[#allocation3 + $0x920] sm:$0xff]
    %v4842 = vld [vmem:[#allocation3 + $0x928] sm:$0xff]
    %v4843 = vld [vmem:[#allocation3 + $0x930] sm:$0xff]
    %v4844 = vld [vmem:[#allocation3 + $0x938] sm:$0xff]
    %v4845 = vld [vmem:[#allocation3 + $0x940] sm:$0xff]
    %v4846 = vld [vmem:[#allocation3 + $0x948] sm:$0xff]
    %v4847 = vld [vmem:[#allocation3 + $0x950] sm:$0xff]
    %v4848 = vld [vmem:[#allocation3 + $0x958] sm:$0xff]
    %v4849 = vld [vmem:[#allocation3 + $0x960] sm:$0xff]
    %v4850 = vld [vmem:[#allocation3 + $0x968] sm:$0xff]
    %v4851 = vld [vmem:[#allocation3 + $0x970] sm:$0xff]
    %v4852 = vld [vmem:[#allocation3 + $0x978] sm:$0xff]
    %v4853 = vld [vmem:[#allocation3 + $0x980] sm:$0xff]
    %v4854 = vld [vmem:[#allocation3 + $0x988] sm:$0xff]
    %v4855 = vld [vmem:[#allocation3 + $0x990] sm:$0xff]
    %v4856 = vld [vmem:[#allocation3 + $0x998] sm:$0xff]
    %v4857 = vld [vmem:[#allocation3 + $0x9a0] sm:$0xff]
    %v4858 = vld [vmem:[#allocation3 + $0x9a8] sm:$0xff]
    %v4859 = vld [vmem:[#allocation3 + $0x9b0] sm:$0xff]
    %v4860 = vld [vmem:[#allocation3 + $0x9b8] sm:$0xff]
    %v4861 = vld [vmem:[#allocation3 + $0x9c0] sm:$0xff]
    %v4862 = vld [vmem:[#allocation3 + $0x9c8] sm:$0xff]
    %v4863 = vld [vmem:[#allocation3 + $0x9d0] sm:$0xff]
    %v4864 = vld [vmem:[#allocation3 + $0x9d8] sm:$0xff]
    %v4865 = vld [vmem:[#allocation3 + $0x9e0] sm:$0xff]
    %v4866 = vld [vmem:[#allocation3 + $0x9e8] sm:$0xff]
    %v4867 = vld [vmem:[#allocation3 + $0x9f0] sm:$0xff]
    %v4868 = vld [vmem:[#allocation3 + $0x9f8] sm:$0xff]
    %v4869 = vld [vmem:[#allocation3 + $0xa00] sm:$0xff]
    %v4870 = vld [vmem:[#allocation3 + $0xa08] sm:$0xff]
    %v4871 = vld [vmem:[#allocation3 + $0xa10] sm:$0xff]
    %v4872 = vld [vmem:[#allocation3 + $0xa18] sm:$0xff]
    %v4873 = vld [vmem:[#allocation3 + $0xa20] sm:$0xff]
    %v4874 = vld [vmem:[#allocation3 + $0xa28] sm:$0xff]
    %v4875 = vld [vmem:[#allocation3 + $0xa30] sm:$0xff]
    %v4876 = vld [vmem:[#allocation3 + $0xa38] sm:$0xff]
    %v4877 = vld [vmem:[#allocation3 + $0xa40] sm:$0xff]
    %v4878 = vld [vmem:[#allocation3 + $0xa48] sm:$0xff]
    %v4879 = vld [vmem:[#allocation3 + $0xa50] sm:$0xff]
    %v4880 = vld [vmem:[#allocation3 + $0xa58] sm:$0xff]
    %v4881 = vld [vmem:[#allocation3 + $0xa60] sm:$0xff]
    %v4882 = vld [vmem:[#allocation3 + $0xa68] sm:$0xff]
    %v4883 = vld [vmem:[#allocation3 + $0xa70] sm:$0xff]
    %v4884 = vld [vmem:[#allocation3 + $0xa78] sm:$0xff]
    %v4885 = vld [vmem:[#allocation3 + $0xa80] sm:$0xff]
    %v4886 = vld [vmem:[#allocation3 + $0xa88] sm:$0xff]
    %v4887 = vld [vmem:[#allocation3 + $0xa90] sm:$0xff]
    %v4888 = vld [vmem:[#allocation3 + $0xa98] sm:$0xff]
    %v4889 = vld [vmem:[#allocation3 + $0xaa0] sm:$0xff]
    %v4890 = vld [vmem:[#allocation3 + $0xaa8] sm:$0xff]
    %v4891 = vld [vmem:[#allocation3 + $0xab0] sm:$0xff]
    %v4892 = vld [vmem:[#allocation3 + $0xab8] sm:$0xff]
    %v4893 = vld [vmem:[#allocation3 + $0xac0] sm:$0xff]
    %v4894 = vld [vmem:[#allocation3 + $0xac8] sm:$0xff]
    %v4895 = vld [vmem:[#allocation3 + $0xad0] sm:$0xff]
    %v4896 = vld [vmem:[#allocation3 + $0xad8] sm:$0xff]
    %v4897 = vld [vmem:[#allocation3 + $0xae0] sm:$0xff]
    %v4898 = vld [vmem:[#allocation3 + $0xae8] sm:$0xff]
    %v4899 = vld [vmem:[#allocation3 + $0xaf0] sm:$0xff]
    %v4900 = vld [vmem:[#allocation3 + $0xaf8] sm:$0xff]
    %v4901 = vld [vmem:[#allocation3 + $0xb00] sm:$0xff]
    %v4902 = vld [vmem:[#allocation3 + $0xb08] sm:$0xff]
    %v4903 = vld [vmem:[#allocation3 + $0xb10] sm:$0xff]
    %v4904 = vld [vmem:[#allocation3 + $0xb18] sm:$0xff]
    %v4905 = vld [vmem:[#allocation3 + $0xb20] sm:$0xff]
    %v4906 = vld [vmem:[#allocation3 + $0xb28] sm:$0xff]
    %v4907 = vld [vmem:[#allocation3 + $0xb30] sm:$0xff]
    %v4908 = vld [vmem:[#allocation3 + $0xb38] sm:$0xff]
    %v4909 = vld [vmem:[#allocation3 + $0xb40] sm:$0xff]
    %v4910 = vld [vmem:[#allocation3 + $0xb48] sm:$0xff]
    %v4911 = vld [vmem:[#allocation3 + $0xb50] sm:$0xff]
    %v4912 = vld [vmem:[#allocation3 + $0xb58] sm:$0xff]
    %v4913 = vld [vmem:[#allocation3 + $0xb60] sm:$0xff]
    %v4914 = vld [vmem:[#allocation3 + $0xb68] sm:$0xff]
    %v4915 = vld [vmem:[#allocation3 + $0xb70] sm:$0xff]
    %v4916 = vld [vmem:[#allocation3 + $0xb78] sm:$0xff]
    %v4917 = vld [vmem:[#allocation3 + $0xb80] sm:$0xff]
    %v4918 = vld [vmem:[#allocation3 + $0xb88] sm:$0xff]
    %v4919 = vld [vmem:[#allocation3 + $0xb90] sm:$0xff]
    %v4920 = vld [vmem:[#allocation3 + $0xb98] sm:$0xff]
    %v4921 = vld [vmem:[#allocation3 + $0xba0] sm:$0xff]
    %v4922 = vld [vmem:[#allocation3 + $0xba8] sm:$0xff]
    %v4923 = vld [vmem:[#allocation3 + $0xbb0] sm:$0xff]
    %v4924 = vld [vmem:[#allocation3 + $0xbb8] sm:$0xff]
    %v4925 = vld [vmem:[#allocation3 + $0xbc0] sm:$0xff]
    %v4926 = vld [vmem:[#allocation3 + $0xbc8] sm:$0xff]
    %v4927 = vld [vmem:[#allocation3 + $0xbd0] sm:$0xff]
    %v4928 = vld [vmem:[#allocation3 + $0xbd8] sm:$0xff]
    %v4929 = vld [vmem:[#allocation3 + $0xbe0] sm:$0xff]
    %v4930 = vld [vmem:[#allocation3 + $0xbe8] sm:$0xff]
    %v4931 = vld [vmem:[#allocation3 + $0xbf0] sm:$0xff]
    %v4932 = vld [vmem:[#allocation3 + $0xbf8] sm:$0xff]
    %v4933 = vld [vmem:[#allocation3 + $0xc00] sm:$0xff]
    %v4934 = vld [vmem:[#allocation3 + $0xc08] sm:$0xff]
    %v4935 = vld [vmem:[#allocation3 + $0xc10] sm:$0xff]
    %v4936 = vld [vmem:[#allocation3 + $0xc18] sm:$0xff]
    %v4937 = vld [vmem:[#allocation3 + $0xc20] sm:$0xff]
    %v4938 = vld [vmem:[#allocation3 + $0xc28] sm:$0xff]
    %v4939 = vld [vmem:[#allocation3 + $0xc30] sm:$0xff]
    %v4940 = vld [vmem:[#allocation3 + $0xc38] sm:$0xff]
    %v4941 = vld [vmem:[#allocation3 + $0xc40] sm:$0xff]
    %v4942 = vld [vmem:[#allocation3 + $0xc48] sm:$0xff]
    %v4943 = vld [vmem:[#allocation3 + $0xc50] sm:$0xff]
    %v4944 = vld [vmem:[#allocation3 + $0xc58] sm:$0xff]
    %v4945 = vld [vmem:[#allocation3 + $0xc60] sm:$0xff]
    %v4946 = vld [vmem:[#allocation3 + $0xc68] sm:$0xff]
    %v4947 = vld [vmem:[#allocation3 + $0xc70] sm:$0xff]
    %v4948 = vld [vmem:[#allocation3 + $0xc78] sm:$0xff]
    %v4949 = vld [vmem:[#allocation3 + $0xc80] sm:$0xff]
    %v4950 = vld [vmem:[#allocation3 + $0xc88] sm:$0xff]
    %v4951 = vld [vmem:[#allocation3 + $0xc90] sm:$0xff]
    %v4952 = vld [vmem:[#allocation3 + $0xc98] sm:$0xff]
    %v4953 = vld [vmem:[#allocation3 + $0xca0] sm:$0xff]
    %v4954 = vld [vmem:[#allocation3 + $0xca8] sm:$0xff]
    %v4955 = vld [vmem:[#allocation3 + $0xcb0] sm:$0xff]
    %v4956 = vld [vmem:[#allocation3 + $0xcb8] sm:$0xff]
    %v4957 = vld [vmem:[#allocation3 + $0xcc0] sm:$0xff]
    %v4958 = vld [vmem:[#allocation3 + $0xcc8] sm:$0xff]
    %v4959 = vld [vmem:[#allocation3 + $0xcd0] sm:$0xff]
    %v4960 = vld [vmem:[#allocation3 + $0xcd8] sm:$0xff]
    %v4961 = vld [vmem:[#allocation3 + $0xce0] sm:$0xff]
    %v4962 = vld [vmem:[#allocation3 + $0xce8] sm:$0xff]
    %v4963 = vld [vmem:[#allocation3 + $0xcf0] sm:$0xff]
    %v4964 = vld [vmem:[#allocation3 + $0xcf8] sm:$0xff]
    %v4965 = vld [vmem:[#allocation3 + $0xd00] sm:$0xff]
    %v4966 = vld [vmem:[#allocation3 + $0xd08] sm:$0xff]
    %v4967 = vld [vmem:[#allocation3 + $0xd10] sm:$0xff]
    %v4968 = vld [vmem:[#allocation3 + $0xd18] sm:$0xff]
    %v4969 = vld [vmem:[#allocation3 + $0xd20] sm:$0xff]
    %v4970 = vld [vmem:[#allocation3 + $0xd28] sm:$0xff]
    %v4971 = vld [vmem:[#allocation3 + $0xd30] sm:$0xff]
    %v4972 = vld [vmem:[#allocation3 + $0xd38] sm:$0xff]
    %v4973 = vld [vmem:[#allocation3 + $0xd40] sm:$0xff]
    %v4974 = vld [vmem:[#allocation3 + $0xd48] sm:$0xff]
    %v4975 = vld [vmem:[#allocation3 + $0xd50] sm:$0xff]
    %v4976 = vld [vmem:[#allocation3 + $0xd58] sm:$0xff]
    %v4977 = vld [vmem:[#allocation3 + $0xd60] sm:$0xff]
    %v4978 = vld [vmem:[#allocation3 + $0xd68] sm:$0xff]
    %v4979 = vld [vmem:[#allocation3 + $0xd70] sm:$0xff]
    %v4980 = vld [vmem:[#allocation3 + $0xd78] sm:$0xff]
    %v4981 = vld [vmem:[#allocation3 + $0xd80] sm:$0xff]
    %v4982 = vld [vmem:[#allocation3 + $0xd88] sm:$0xff]
    %v4983 = vld [vmem:[#allocation3 + $0xd90] sm:$0xff]
    %v4984 = vld [vmem:[#allocation3 + $0xd98] sm:$0xff]
    %v4985 = vld [vmem:[#allocation3 + $0xda0] sm:$0xff]
    %v4986 = vld [vmem:[#allocation3 + $0xda8] sm:$0xff]
    %v4987 = vld [vmem:[#allocation3 + $0xdb0] sm:$0xff]
    %v4988 = vld [vmem:[#allocation3 + $0xdb8] sm:$0xff]
    %v4989 = vld [vmem:[#allocation3 + $0xdc0] sm:$0xff]
    %v4990 = vld [vmem:[#allocation3 + $0xdc8] sm:$0xff]
    %v4991 = vld [vmem:[#allocation3 + $0xdd0] sm:$0xff]
    %v4992 = vld [vmem:[#allocation3 + $0xdd8] sm:$0xff]
    %v4993 = vld [vmem:[#allocation3 + $0xde0] sm:$0xff]
    %v4994 = vld [vmem:[#allocation3 + $0xde8] sm:$0xff]
    %v4995 = vld [vmem:[#allocation3 + $0xdf0] sm:$0xff]
    %v4996 = vld [vmem:[#allocation3 + $0xdf8] sm:$0xff]
    %v4997 = vld [vmem:[#allocation3 + $0xe00] sm:$0xff]
    %v4998 = vld [vmem:[#allocation3 + $0xe08] sm:$0xff]
    %v4999 = vld [vmem:[#allocation3 + $0xe10] sm:$0xff]
    %v5000 = vld [vmem:[#allocation3 + $0xe18] sm:$0xff]
    %v5001 = vld [vmem:[#allocation3 + $0xe20] sm:$0xff]
    %v5002 = vld [vmem:[#allocation3 + $0xe28] sm:$0xff]
    %v5003 = vld [vmem:[#allocation3 + $0xe30] sm:$0xff]
    %v5004 = vld [vmem:[#allocation3 + $0xe38] sm:$0xff]
    %v5005 = vld [vmem:[#allocation3 + $0xe40] sm:$0xff]
    %v5006 = vld [vmem:[#allocation3 + $0xe48] sm:$0xff]
    %v5007 = vld [vmem:[#allocation3 + $0xe50] sm:$0xff]
    %v5008 = vld [vmem:[#allocation3 + $0xe58] sm:$0xff]
    %v5009 = vld [vmem:[#allocation3 + $0xe60] sm:$0xff]
    %v5010 = vld [vmem:[#allocation3 + $0xe68] sm:$0xff]
    %v5011 = vld [vmem:[#allocation3 + $0xe70] sm:$0xff]
    %v5012 = vld [vmem:[#allocation3 + $0xe78] sm:$0xff]
    %v5013 = vld [vmem:[#allocation3 + $0xe80] sm:$0xff]
    %v5014 = vld [vmem:[#allocation3 + $0xe88] sm:$0xff]
    %v5015 = vld [vmem:[#allocation3 + $0xe90] sm:$0xff]
    %v5016 = vld [vmem:[#allocation3 + $0xe98] sm:$0xff]
    %v5017 = vld [vmem:[#allocation3 + $0xea0] sm:$0xff]
    %v5018 = vld [vmem:[#allocation3 + $0xea8] sm:$0xff]
    %v5019 = vld [vmem:[#allocation3 + $0xeb0] sm:$0xff]
    %v5020 = vld [vmem:[#allocation3 + $0xeb8] sm:$0xff]
    %v5021 = vld [vmem:[#allocation3 + $0xec0] sm:$0xff]
    %v5022 = vld [vmem:[#allocation3 + $0xec8] sm:$0xff]
    %v5023 = vld [vmem:[#allocation3 + $0xed0] sm:$0xff]
    %v5024 = vld [vmem:[#allocation3 + $0xed8] sm:$0xff]
    %v5025 = vld [vmem:[#allocation3 + $0xee0] sm:$0xff]
    %v5026 = vld [vmem:[#allocation3 + $0xee8] sm:$0xff]
    %v5027 = vld [vmem:[#allocation3 + $0xef0] sm:$0xff]
    %v5028 = vld [vmem:[#allocation3 + $0xef8] sm:$0xff]
    %v5029 = vld [vmem:[#allocation3 + $0xf00] sm:$0xff]
    %v5030 = vld [vmem:[#allocation3 + $0xf08] sm:$0xff]
    %v5031 = vld [vmem:[#allocation3 + $0xf10] sm:$0xff]
    %v5032 = vld [vmem:[#allocation3 + $0xf18] sm:$0xff]
    %v5033 = vld [vmem:[#allocation3 + $0xf20] sm:$0xff]
    %v5034 = vld [vmem:[#allocation3 + $0xf28] sm:$0xff]
    %v5035 = vld [vmem:[#allocation3 + $0xf30] sm:$0xff]
    %v5036 = vld [vmem:[#allocation3 + $0xf38] sm:$0xff]
    %v5037 = vld [vmem:[#allocation3 + $0xf40] sm:$0xff]
    %v5038 = vld [vmem:[#allocation3 + $0xf48] sm:$0xff]
    %v5039 = vld [vmem:[#allocation3 + $0xf50] sm:$0xff]
    %v5040 = vld [vmem:[#allocation3 + $0xf58] sm:$0xff]
    %v5041 = vld [vmem:[#allocation3 + $0xf60] sm:$0xff]
    %v5042 = vld [vmem:[#allocation3 + $0xf68] sm:$0xff]
    %v5043 = vld [vmem:[#allocation3 + $0xf70] sm:$0xff]
    %v5044 = vld [vmem:[#allocation3 + $0xf78] sm:$0xff]
    %v5045 = vld [vmem:[#allocation3 + $0xf80] sm:$0xff]
    %v5046 = vld [vmem:[#allocation3 + $0xf88] sm:$0xff]
    %v5047 = vld [vmem:[#allocation3 + $0xf90] sm:$0xff]
    %v5048 = vld [vmem:[#allocation3 + $0xf98] sm:$0xff]
    %v5049 = vld [vmem:[#allocation3 + $0xfa0] sm:$0xff]
    %v5050 = vld [vmem:[#allocation3 + $0xfa8] sm:$0xff]
    %v5051 = vld [vmem:[#allocation3 + $0xfb0] sm:$0xff]
    %v5052 = vld [vmem:[#allocation3 + $0xfb8] sm:$0xff]
    %v5053 = vld [vmem:[#allocation3 + $0xfc0] sm:$0xff]
    %v5054 = vld [vmem:[#allocation3 + $0xfc8] sm:$0xff]
    %v5055 = vld [vmem:[#allocation3 + $0xfd0] sm:$0xff]
    %v5056 = vld [vmem:[#allocation3 + $0xfd8] sm:$0xff]
    %v5057 = vld [vmem:[#allocation3 + $0xfe0] sm:$0xff]
    %v5058 = vld [vmem:[#allocation3 + $0xfe8] sm:$0xff]
    %v5059 = vld [vmem:[#allocation3 + $0xff0] sm:$0xff]
    %v5060 = vld [vmem:[#allocation3 + $0xff8] sm:$0xff]
    %v5061 = vld [vmem:[#allocation16] sm:$0xff]
    %v5063 = vlaneseq
    %v5064 = vshrl.u32 %v5063, 7
    %v5065 = vsub.s32 0, %v5064
    %v5066 = vrot.slane %v5061, %v5065
    %v5067 = vlaneseq
    %v5068 = vshrl.u32 %v5067, 7
    %v5069 = vsub.s32 1, %v5068
    %v5070 = vrot.slane %v5061, %v5069
    %v5071 = vlaneseq
    %v5072 = vshrl.u32 %v5071, 7
    %v5073 = vsub.s32 2, %v5072
    %v5074 = vrot.slane %v5061, %v5073
    %v5075 = vlaneseq
    %v5076 = vshrl.u32 %v5075, 7
    %v5077 = vsub.s32 3, %v5076
    %v5078 = vrot.slane %v5061, %v5077
    %v5079 = vlaneseq
    %v5080 = vshrl.u32 %v5079, 7
    %v5081 = vsub.s32 4, %v5080
    %v5082 = vrot.slane %v5061, %v5081
    %v5083 = vlaneseq
    %v5084 = vshrl.u32 %v5083, 7
    %v5085 = vsub.s32 5, %v5084
    %v5086 = vrot.slane %v5061, %v5085
    %v5087 = vlaneseq
    %v5088 = vshrl.u32 %v5087, 7
    %v5089 = vsub.s32 6, %v5088
    %v5090 = vrot.slane %v5061, %v5089
    %v5091 = vlaneseq
    %v5092 = vshrl.u32 %v5091, 7
    %v5093 = vsub.s32 7, %v5092
    %v5094 = vrot.slane %v5061, %v5093
    %5103 = vmatprep.subr.bf16.mxu0 %v4550
    %5104 = vmatpush1.bf16.msra.mxu0 %v4549
    %5105 = vmatprep.subr.bf16.mxu0 %v4558
    %5106 = vmatpush1.bf16.msra.mxu0 %v4557
    %5107 = vmatprep.subr.bf16.mxu0 %v4566
    %5108 = vmatpush1.bf16.msra.mxu0 %v4565
    %5109 = vmatprep.subr.bf16.mxu0 %v4574
    %5110 = vmatpush1.bf16.msra.mxu0 %v4573
    %5111 = vmatprep.subr.bf16.mxu0 %v4582
    %5112 = vmatpush1.bf16.msra.mxu0 %v4581
    %5113 = vmatprep.subr.bf16.mxu0 %v4590
    %5114 = vmatpush1.bf16.msra.mxu0 %v4589
    %5115 = vmatprep.subr.bf16.mxu0 %v4598
    %5116 = vmatpush1.bf16.msra.mxu0 %v4597
    %5117 = vmatprep.subr.bf16.mxu0 %v4606
    %5118 = vmatpush1.bf16.msra.mxu0 %v4605
    %5119 = vmatprep.subr.bf16.mxu0 %v4614
    %5120 = vmatpush1.bf16.msra.mxu0 %v4613
    %5121 = vmatprep.subr.bf16.mxu0 %v4622
    %5122 = vmatpush1.bf16.msra.mxu0 %v4621
    %5123 = vmatprep.subr.bf16.mxu0 %v4630
    %5124 = vmatpush1.bf16.msra.mxu0 %v4629
    %5125 = vmatprep.subr.bf16.mxu0 %v4638
    %5126 = vmatpush1.bf16.msra.mxu0 %v4637
    %5127 = vmatprep.subr.bf16.mxu0 %v4646
    %5128 = vmatpush1.bf16.msra.mxu0 %v4645
    %5129 = vmatprep.subr.bf16.mxu0 %v4654
    %5130 = vmatpush1.bf16.msra.mxu0 %v4653
    %5131 = vmatprep.subr.bf16.mxu0 %v4662
    %5132 = vmatpush1.bf16.msra.mxu0 %v4661
    %5133 = vmatprep.subr.bf16.mxu0 %v4670
    %5134 = vmatpush1.bf16.msra.mxu0 %v4669
    %5135 = vmatprep.mubr.bf16.mxu0 %v4538
    %5136 = vmatmul.mubr.bf16.gmra.mrb[0].mxu0 %v4537
    %v5137 = vpop.f32.mrb[0].mxu0
    %v5138 = vadd.f32 %v5066, %v5137
    %v5139 = vpop.f32.mrb[0].mxu0
    %v5140 = vadd.f32 %v5070, %v5139
    %v5141 = vpop.f32.mrb[0].mxu0
    %v5142 = vpop.f32.mrb[0].mxu0
    %5143 = vdwg.mxu0
    %5144 = vmatprep.subr.bf16.mxu0 %v4678
    %5145 = vmatpush1.bf16.msra.mxu0 %v4677
    %5146 = vmatprep.subr.bf16.mxu0 %v4686
    %5147 = vmatpush1.bf16.msra.mxu0 %v4685
    %5148 = vmatprep.subr.bf16.mxu0 %v4694
    %5149 = vmatpush1.bf16.msra.mxu0 %v4693
    %5150 = vmatprep.subr.bf16.mxu0 %v4702
    %5151 = vmatpush1.bf16.msra.mxu0 %v4701
    %5152 = vmatprep.subr.bf16.mxu0 %v4710
    %5153 = vmatpush1.bf16.msra.mxu0 %v4709
    %5154 = vmatprep.subr.bf16.mxu0 %v4718
    %5155 = vmatpush1.bf16.msra.mxu0 %v4717
    %5156 = vmatprep.subr.bf16.mxu0 %v4726
    %5157 = vmatpush1.bf16.msra.mxu0 %v4725
    %5158 = vmatprep.subr.bf16.mxu0 %v4734
    %5159 = vmatpush1.bf16.msra.mxu0 %v4733
    %5160 = vmatprep.subr.bf16.mxu0 %v4742
    %5161 = vmatpush1.bf16.msra.mxu0 %v4741
    %5162 = vmatprep.subr.bf16.mxu0 %v4750
    %5163 = vmatpush1.bf16.msra.mxu0 %v4749
    %5164 = vmatprep.subr.bf16.mxu0 %v4758
    %5165 = vmatpush1.bf16.msra.mxu0 %v4757
    %5166 = vmatprep.subr.bf16.mxu0 %v4766
    %5167 = vmatpush1.bf16.msra.mxu0 %v4765
    %5168 = vmatprep.subr.bf16.mxu0 %v4774
    %5169 = vmatpush1.bf16.msra.mxu0 %v4773
    %5170 = vmatprep.subr.bf16.mxu0 %v4782
    %5171 = vmatpush1.bf16.msra.mxu0 %v4781
    %5172 = vmatprep.subr.bf16.mxu0 %v4790
    %5173 = vmatpush1.bf16.msra.mxu0 %v4789
    %5174 = vmatprep.subr.bf16.mxu0 %v4798
    %5175 = vmatpush1.bf16.msra.mxu0 %v4797
    %5176 = vmatprep.mubr.bf16.mxu0 %v4540
    %5177 = vmatmul.mubr.bf16.gmra.mrb[0].mxu0 %v4539
    %v5178 = vpop.f32.mrb[0].mxu0
    %v5179 = vadd.f32 %v5138, %v5178
    %v5180 = vpop.f32.mrb[0].mxu0
    %v5181 = vadd.f32 %v5140, %v5180
    %v5182 = vpop.f32.mrb[0].mxu0
    %v5183 = vpop.f32.mrb[0].mxu0
    %5184 = vdwg.mxu0
    %5185 = vmatprep.subr.bf16.mxu0 %v4806
    %5186 = vmatpush1.bf16.msra.mxu0 %v4805
    %5187 = vmatprep.subr.bf16.mxu0 %v4814
    %5188 = vmatpush1.bf16.msra.mxu0 %v4813
    %5189 = vmatprep.subr.bf16.mxu0 %v4822
    %5190 = vmatpush1.bf16.msra.mxu0 %v4821
    %5191 = vmatprep.subr.bf16.mxu0 %v4830
    %5192 = vmatpush1.bf16.msra.mxu0 %v4829
    %5193 = vmatprep.subr.bf16.mxu0 %v4838
    %5194 = vmatpush1.bf16.msra.mxu0 %v4837
    %5195 = vmatprep.subr.bf16.mxu0 %v4846
    %5196 = vmatpush1.bf16.msra.mxu0 %v4845
    %5197 = vmatprep.subr.bf16.mxu0 %v4854
    %5198 = vmatpush1.bf16.msra.mxu0 %v4853
    %5199 = vmatprep.subr.bf16.mxu0 %v4862
    %5200 = vmatpush1.bf16.msra.mxu0 %v4861
    %5201 = vmatprep.subr.bf16.mxu0 %v4870
    %5202 = vmatpush1.bf16.msra.mxu0 %v4869
    %5203 = vmatprep.subr.bf16.mxu0 %v4878
    %5204 = vmatpush1.bf16.msra.mxu0 %v4877
    %5205 = vmatprep.subr.bf16.mxu0 %v4886
    %5206 = vmatpush1.bf16.msra.mxu0 %v4885
    %5207 = vmatprep.subr.bf16.mxu0 %v4894
    %5208 = vmatpush1.bf16.msra.mxu0 %v4893
    %5209 = vmatprep.subr.bf16.mxu0 %v4902
    %5210 = vmatpush1.bf16.msra.mxu0 %v4901
    %5211 = vmatprep.subr.bf16.mxu0 %v4910
    %5212 = vmatpush1.bf16.msra.mxu0 %v4909
    %5213 = vmatprep.subr.bf16.mxu0 %v4918
    %5214 = vmatpush1.bf16.msra.mxu0 %v4917
    %5215 = vmatprep.subr.bf16.mxu0 %v4926
    %5216 = vmatpush1.bf16.msra.mxu0 %v4925
    %5217 = vmatprep.mubr.bf16.mxu0 %v4542
    %5218 = vmatmul.mubr.bf16.gmra.mrb[0].mxu0 %v4541
    %v5219 = vpop.f32.mrb[0].mxu0
    %v5220 = vadd.f32 %v5179, %v5219
    %v5221 = vpop.f32.mrb[0].mxu0
    %v5222 = vadd.f32 %v5181, %v5221
    %v5223 = vpop.f32.mrb[0].mxu0
    %v5224 = vpop.f32.mrb[0].mxu0
    %5225 = vdwg.mxu0
    %5226 = vmatprep.subr.bf16.mxu0 %v4934
    %5227 = vmatpush1.bf16.msra.mxu0 %v4933
    %5228 = vmatprep.subr.bf16.mxu0 %v4942
    %5229 = vmatpush1.bf16.msra.mxu0 %v4941
    %5230 = vmatprep.subr.bf16.mxu0 %v4950
    %5231 = vmatpush1.bf16.msra.mxu0 %v4949
    %5232 = vmatprep.subr.bf16.mxu0 %v4958
    %5233 = vmatpush1.bf16.msra.mxu0 %v4957
    %5234 = vmatprep.subr.bf16.mxu0 %v4966
    %5235 = vmatpush1.bf16.msra.mxu0 %v4965
    %5236 = vmatprep.subr.bf16.mxu0 %v4974
    %5237 = vmatpush1.bf16.msra.mxu0 %v4973
    %5238 = vmatprep.subr.bf16.mxu0 %v4982
    %5239 = vmatpush1.bf16.msra.mxu0 %v4981
    %5240 = vmatprep.subr.bf16.mxu0 %v4990
    %5241 = vmatpush1.bf16.msra.mxu0 %v4989
    %5242 = vmatprep.subr.bf16.mxu0 %v4998
    %5243 = vmatpush1.bf16.msra.mxu0 %v4997
    %5244 = vmatprep.subr.bf16.mxu0 %v5006
    %5245 = vmatpush1.bf16.msra.mxu0 %v5005
    %5246 = vmatprep.subr.bf16.mxu0 %v5014
    %5247 = vmatpush1.bf16.msra.mxu0 %v5013
    %5248 = vmatprep.subr.bf16.mxu0 %v5022
    %5249 = vmatpush1.bf16.msra.mxu0 %v5021
    %5250 = vmatprep.subr.bf16.mxu0 %v5030
    %5251 = vmatpush1.bf16.msra.mxu0 %v5029
    %5252 = vmatprep.subr.bf16.mxu0 %v5038
    %5253 = vmatpush1.bf16.msra.mxu0 %v5037
    %5254 = vmatprep.subr.bf16.mxu0 %v5046
    %5255 = vmatpush1.bf16.msra.mxu0 %v5045
    %5256 = vmatprep.subr.bf16.mxu0 %v5054
    %5257 = vmatpush1.bf16.msra.mxu0 %v5053
    %5258 = vmatprep.mubr.bf16.mxu0 %v4544
    %5259 = vmatmul.mubr.bf16.gmra.mrb[0].mxu0 %v4543
    %v5260 = vpop.f32.mrb[0].mxu0
    %v5261 = vadd.f32 %v5220, %v5260
    %v5262 = vpop.f32.mrb[0].mxu0
    %v5263 = vadd.f32 %v5222, %v5262
    %v5264 = vpop.f32.mrb[0].mxu0
    %v5265 = vpop.f32.mrb[0].mxu0
    %5266 = vdwg.mxu0
    %5267 = vmatprep.subr.bf16.mxu0 %v4552
    %5268 = vmatpush1.bf16.msra.mxu0 %v4551
    %5269 = vmatprep.subr.bf16.mxu0 %v4560
    %5270 = vmatpush1.bf16.msra.mxu0 %v4559
    %5271 = vmatprep.subr.bf16.mxu0 %v4568
    %5272 = vmatpush1.bf16.msra.mxu0 %v4567
    %5273 = vmatprep.subr.bf16.mxu0 %v4576
    %5274 = vmatpush1.bf16.msra.mxu0 %v4575
    %5275 = vmatprep.subr.bf16.mxu0 %v4584
    %5276 = vmatpush1.bf16.msra.mxu0 %v4583
    %5277 = vmatprep.subr.bf16.mxu0 %v4592
    %5278 = vmatpush1.bf16.msra.mxu0 %v4591
    %5279 = vmatprep.subr.bf16.mxu0 %v4600
    %5280 = vmatpush1.bf16.msra.mxu0 %v4599
    %5281 = vmatprep.subr.bf16.mxu0 %v4608
    %5282 = vmatpush1.bf16.msra.mxu0 %v4607
    %5283 = vmatprep.subr.bf16.mxu0 %v4616
    %5284 = vmatpush1.bf16.msra.mxu0 %v4615
    %5285 = vmatprep.subr.bf16.mxu0 %v4624
    %5286 = vmatpush1.bf16.msra.mxu0 %v4623
    %5287 = vmatprep.subr.bf16.mxu0 %v4632
    %5288 = vmatpush1.bf16.msra.mxu0 %v4631
    %5289 = vmatprep.subr.bf16.mxu0 %v4640
    %5290 = vmatpush1.bf16.msra.mxu0 %v4639
    %5291 = vmatprep.subr.bf16.mxu0 %v4648
    %5292 = vmatpush1.bf16.msra.mxu0 %v4647
    %5293 = vmatprep.subr.bf16.mxu0 %v4656
    %5294 = vmatpush1.bf16.msra.mxu0 %v4655
    %5295 = vmatprep.subr.bf16.mxu0 %v4664
    %5296 = vmatpush1.bf16.msra.mxu0 %v4663
    %5297 = vmatprep.subr.bf16.mxu0 %v4672
    %5298 = vmatpush1.bf16.msra.mxu0 %v4671
    %5299 = vmatprep.mubr.bf16.mxu0 %v4538
    %5300 = vmatmul.mubr.bf16.gmra.mrb[0].mxu0 %v4537
    %v5301 = vpop.f32.mrb[0].mxu0
    %v5302 = vadd.f32 %v5074, %v5301
    %v5303 = vpop.f32.mrb[0].mxu0
    %v5304 = vadd.f32 %v5078, %v5303
    %v5305 = vpop.f32.mrb[0].mxu0
    %v5306 = vpop.f32.mrb[0].mxu0
    %5307 = vdwg.mxu0
    %5308 = vmatprep.subr.bf16.mxu0 %v4680
    %5309 = vmatpush1.bf16.msra.mxu0 %v4679
    %5310 = vmatprep.subr.bf16.mxu0 %v4688
    %5311 = vmatpush1.bf16.msra.mxu0 %v4687
    %5312 = vmatprep.subr.bf16.mxu0 %v4696
    %5313 = vmatpush1.bf16.msra.mxu0 %v4695
    %5314 = vmatprep.subr.bf16.mxu0 %v4704
    %5315 = vmatpush1.bf16.msra.mxu0 %v4703
    %5316 = vmatprep.subr.bf16.mxu0 %v4712
    %5317 = vmatpush1.bf16.msra.mxu0 %v4711
    %5318 = vmatprep.subr.bf16.mxu0 %v4720
    %5319 = vmatpush1.bf16.msra.mxu0 %v4719
    %5320 = vmatprep.subr.bf16.mxu0 %v4728
    %5321 = vmatpush1.bf16.msra.mxu0 %v4727
    %5322 = vmatprep.subr.bf16.mxu0 %v4736
    %5323 = vmatpush1.bf16.msra.mxu0 %v4735
    %5324 = vmatprep.subr.bf16.mxu0 %v4744
    %5325 = vmatpush1.bf16.msra.mxu0 %v4743
    %5326 = vmatprep.subr.bf16.mxu0 %v4752
    %5327 = vmatpush1.bf16.msra.mxu0 %v4751
    %5328 = vmatprep.subr.bf16.mxu0 %v4760
    %5329 = vmatpush1.bf16.msra.mxu0 %v4759
    %5330 = vmatprep.subr.bf16.mxu0 %v4768
    %5331 = vmatpush1.bf16.msra.mxu0 %v4767
    %5332 = vmatprep.subr.bf16.mxu0 %v4776
    %5333 = vmatpush1.bf16.msra.mxu0 %v4775
    %5334 = vmatprep.subr.bf16.mxu0 %v4784
    %5335 = vmatpush1.bf16.msra.mxu0 %v4783
    %5336 = vmatprep.subr.bf16.mxu0 %v4792
    %5337 = vmatpush1.bf16.msra.mxu0 %v4791
    %5338 = vmatprep.subr.bf16.mxu0 %v4800
    %5339 = vmatpush1.bf16.msra.mxu0 %v4799
    %5340 = vmatprep.mubr.bf16.mxu0 %v4540
    %5341 = vmatmul.mubr.bf16.gmra.mrb[0].mxu0 %v4539
    %v5342 = vpop.f32.mrb[0].mxu0
    %v5343 = vadd.f32 %v5302, %v5342
    %v5344 = vpop.f32.mrb[0].mxu0
    %v5345 = vadd.f32 %v5304, %v5344
    %v5346 = vpop.f32.mrb[0].mxu0
    %v5347 = vpop.f32.mrb[0].mxu0
    %5348 = vdwg.mxu0
    %5349 = vmatprep.subr.bf16.mxu0 %v4808
    %5350 = vmatpush1.bf16.msra.mxu0 %v4807
    %5351 = vmatprep.subr.bf16.mxu0 %v4816
    %5352 = vmatpush1.bf16.msra.mxu0 %v4815
    %5353 = vmatprep.subr.bf16.mxu0 %v4824
    %5354 = vmatpush1.bf16.msra.mxu0 %v4823
    %5355 = vmatprep.subr.bf16.mxu0 %v4832
    %5356 = vmatpush1.bf16.msra.mxu0 %v4831
    %5357 = vmatprep.subr.bf16.mxu0 %v4840
    %5358 = vmatpush1.bf16.msra.mxu0 %v4839
    %5359 = vmatprep.subr.bf16.mxu0 %v4848
    %5360 = vmatpush1.bf16.msra.mxu0 %v4847
    %5361 = vmatprep.subr.bf16.mxu0 %v4856
    %5362 = vmatpush1.bf16.msra.mxu0 %v4855
    %5363 = vmatprep.subr.bf16.mxu0 %v4864
    %5364 = vmatpush1.bf16.msra.mxu0 %v4863
    %5365 = vmatprep.subr.bf16.mxu0 %v4872
    %5366 = vmatpush1.bf16.msra.mxu0 %v4871
    %5367 = vmatprep.subr.bf16.mxu0 %v4880
    %5368 = vmatpush1.bf16.msra.mxu0 %v4879
    %5369 = vmatprep.subr.bf16.mxu0 %v4888
    %5370 = vmatpush1.bf16.msra.mxu0 %v4887
    %5371 = vmatprep.subr.bf16.mxu0 %v4896
    %5372 = vmatpush1.bf16.msra.mxu0 %v4895
    %5373 = vmatprep.subr.bf16.mxu0 %v4904
    %5374 = vmatpush1.bf16.msra.mxu0 %v4903
    %5375 = vmatprep.subr.bf16.mxu0 %v4912
    %5376 = vmatpush1.bf16.msra.mxu0 %v4911
    %5377 = vmatprep.subr.bf16.mxu0 %v4920
    %5378 = vmatpush1.bf16.msra.mxu0 %v4919
    %5379 = vmatprep.subr.bf16.mxu0 %v4928
    %5380 = vmatpush1.bf16.msra.mxu0 %v4927
    %5381 = vmatprep.mubr.bf16.mxu0 %v4542
    %5382 = vmatmul.mubr.bf16.gmra.mrb[0].mxu0 %v4541
    %v5383 = vpop.f32.mrb[0].mxu0
    %v5384 = vadd.f32 %v5343, %v5383
    %v5385 = vpop.f32.mrb[0].mxu0
    %v5386 = vadd.f32 %v5345, %v5385
    %v5387 = vpop.f32.mrb[0].mxu0
    %v5388 = vpop.f32.mrb[0].mxu0
    %5389 = vdwg.mxu0
    %5390 = vmatprep.subr.bf16.mxu0 %v4936
    %5391 = vmatpush1.bf16.msra.mxu0 %v4935
    %5392 = vmatprep.subr.bf16.mxu0 %v4944
    %5393 = vmatpush1.bf16.msra.mxu0 %v4943
    %5394 = vmatprep.subr.bf16.mxu0 %v4952
    %5395 = vmatpush1.bf16.msra.mxu0 %v4951
    %5396 = vmatprep.subr.bf16.mxu0 %v4960
    %5397 = vmatpush1.bf16.msra.mxu0 %v4959
    %5398 = vmatprep.subr.bf16.mxu0 %v4968
    %5399 = vmatpush1.bf16.msra.mxu0 %v4967
    %5400 = vmatprep.subr.bf16.mxu0 %v4976
    %5401 = vmatpush1.bf16.msra.mxu0 %v4975
    %5402 = vmatprep.subr.bf16.mxu0 %v4984
    %5403 = vmatpush1.bf16.msra.mxu0 %v4983
    %5404 = vmatprep.subr.bf16.mxu0 %v4992
    %5405 = vmatpush1.bf16.msra.mxu0 %v4991
    %5406 = vmatprep.subr.bf16.mxu0 %v5000
    %5407 = vmatpush1.bf16.msra.mxu0 %v4999
    %5408 = vmatprep.subr.bf16.mxu0 %v5008
    %5409 = vmatpush1.bf16.msra.mxu0 %v5007
    %5410 = vmatprep.subr.bf16.mxu0 %v5016
    %5411 = vmatpush1.bf16.msra.mxu0 %v5015
    %5412 = vmatprep.subr.bf16.mxu0 %v5024
    %5413 = vmatpush1.bf16.msra.mxu0 %v5023
    %5414 = vmatprep.subr.bf16.mxu0 %v5032
    %5415 = vmatpush1.bf16.msra.mxu0 %v5031
    %5416 = vmatprep.subr.bf16.mxu0 %v5040
    %5417 = vmatpush1.bf16.msra.mxu0 %v5039
    %5418 = vmatprep.subr.bf16.mxu0 %v5048
    %5419 = vmatpush1.bf16.msra.mxu0 %v5047
    %5420 = vmatprep.subr.bf16.mxu0 %v5056
    %5421 = vmatpush1.bf16.msra.mxu0 %v5055
    %5422 = vmatprep.mubr.bf16.mxu0 %v4544
    %5423 = vmatmul.mubr.bf16.gmra.mrb[0].mxu0 %v4543
    %v5424 = vpop.f32.mrb[0].mxu0
    %v5425 = vadd.f32 %v5384, %v5424
    %v5426 = vpop.f32.mrb[0].mxu0
    %v5427 = vadd.f32 %v5386, %v5426
    %v5428 = vpop.f32.mrb[0].mxu0
    %v5429 = vpop.f32.mrb[0].mxu0
    %5430 = vdwg.mxu0
    %5431 = vmatprep.subr.bf16.mxu0 %v4554
    %5432 = vmatpush1.bf16.msra.mxu0 %v4553
    %5433 = vmatprep.subr.bf16.mxu0 %v4562
    %5434 = vmatpush1.bf16.msra.mxu0 %v4561
    %5435 = vmatprep.subr.bf16.mxu0 %v4570
    %5436 = vmatpush1.bf16.msra.mxu0 %v4569
    %5437 = vmatprep.subr.bf16.mxu0 %v4578
    %5438 = vmatpush1.bf16.msra.mxu0 %v4577
    %5439 = vmatprep.subr.bf16.mxu0 %v4586
    %5440 = vmatpush1.bf16.msra.mxu0 %v4585
    %5441 = vmatprep.subr.bf16.mxu0 %v4594
    %5442 = vmatpush1.bf16.msra.mxu0 %v4593
    %5443 = vmatprep.subr.bf16.mxu0 %v4602
    %5444 = vmatpush1.bf16.msra.mxu0 %v4601
    %5445 = vmatprep.subr.bf16.mxu0 %v4610
    %5446 = vmatpush1.bf16.msra.mxu0 %v4609
    %5447 = vmatprep.subr.bf16.mxu0 %v4618
    %5448 = vmatpush1.bf16.msra.mxu0 %v4617
    %5449 = vmatprep.subr.bf16.mxu0 %v4626
    %5450 = vmatpush1.bf16.msra.mxu0 %v4625
    %5451 = vmatprep.subr.bf16.mxu0 %v4634
    %5452 = vmatpush1.bf16.msra.mxu0 %v4633
    %5453 = vmatprep.subr.bf16.mxu0 %v4642
    %5454 = vmatpush1.bf16.msra.mxu0 %v4641
    %5455 = vmatprep.subr.bf16.mxu0 %v4650
    %5456 = vmatpush1.bf16.msra.mxu0 %v4649
    %5457 = vmatprep.subr.bf16.mxu0 %v4658
    %5458 = vmatpush1.bf16.msra.mxu0 %v4657
    %5459 = vmatprep.subr.bf16.mxu0 %v4666
    %5460 = vmatpush1.bf16.msra.mxu0 %v4665
    %5461 = vmatprep.subr.bf16.mxu0 %v4674
    %5462 = vmatpush1.bf16.msra.mxu0 %v4673
    %5463 = vmatprep.mubr.bf16.mxu0 %v4538
    %5464 = vmatmul.mubr.bf16.gmra.mrb[0].mxu0 %v4537
    %v5465 = vpop.f32.mrb[0].mxu0
    %v5466 = vadd.f32 %v5082, %v5465
    %v5467 = vpop.f32.mrb[0].mxu0
    %v5468 = vadd.f32 %v5086, %v5467
    %v5469 = vpop.f32.mrb[0].mxu0
    %v5470 = vpop.f32.mrb[0].mxu0
    %5471 = vdwg.mxu0
    %5472 = vmatprep.subr.bf16.mxu0 %v4682
    %5473 = vmatpush1.bf16.msra.mxu0 %v4681
    %5474 = vmatprep.subr.bf16.mxu0 %v4690
    %5475 = vmatpush1.bf16.msra.mxu0 %v4689
    %5476 = vmatprep.subr.bf16.mxu0 %v4698
    %5477 = vmatpush1.bf16.msra.mxu0 %v4697
    %5478 = vmatprep.subr.bf16.mxu0 %v4706
    %5479 = vmatpush1.bf16.msra.mxu0 %v4705
    %5480 = vmatprep.subr.bf16.mxu0 %v4714
    %5481 = vmatpush1.bf16.msra.mxu0 %v4713
    %5482 = vmatprep.subr.bf16.mxu0 %v4722
    %5483 = vmatpush1.bf16.msra.mxu0 %v4721
    %5484 = vmatprep.subr.bf16.mxu0 %v4730
    %5485 = vmatpush1.bf16.msra.mxu0 %v4729
    %5486 = vmatprep.subr.bf16.mxu0 %v4738
    %5487 = vmatpush1.bf16.msra.mxu0 %v4737
    %5488 = vmatprep.subr.bf16.mxu0 %v4746
    %5489 = vmatpush1.bf16.msra.mxu0 %v4745
    %5490 = vmatprep.subr.bf16.mxu0 %v4754
    %5491 = vmatpush1.bf16.msra.mxu0 %v4753
    %5492 = vmatprep.subr.bf16.mxu0 %v4762
    %5493 = vmatpush1.bf16.msra.mxu0 %v4761
    %5494 = vmatprep.subr.bf16.mxu0 %v4770
    %5495 = vmatpush1.bf16.msra.mxu0 %v4769
    %5496 = vmatprep.subr.bf16.mxu0 %v4778
    %5497 = vmatpush1.bf16.msra.mxu0 %v4777
    %5498 = vmatprep.subr.bf16.mxu0 %v4786
    %5499 = vmatpush1.bf16.msra.mxu0 %v4785
    %5500 = vmatprep.subr.bf16.mxu0 %v4794
    %5501 = vmatpush1.bf16.msra.mxu0 %v4793
    %5502 = vmatprep.subr.bf16.mxu0 %v4802
    %5503 = vmatpush1.bf16.msra.mxu0 %v4801
    %5504 = vmatprep.mubr.bf16.mxu0 %v4540
    %5505 = vmatmul.mubr.bf16.gmra.mrb[0].mxu0 %v4539
    %v5506 = vpop.f32.mrb[0].mxu0
    %v5507 = vadd.f32 %v5466, %v5506
    %v5508 = vpop.f32.mrb[0].mxu0
    %v5509 = vadd.f32 %v5468, %v5508
    %v5510 = vpop.f32.mrb[0].mxu0
    %v5511 = vpop.f32.mrb[0].mxu0
    %5512 = vdwg.mxu0
    %5513 = vmatprep.subr.bf16.mxu0 %v4810
    %5514 = vmatpush1.bf16.msra.mxu0 %v4809
    %5515 = vmatprep.subr.bf16.mxu0 %v4818
    %5516 = vmatpush1.bf16.msra.mxu0 %v4817
    %5517 = vmatprep.subr.bf16.mxu0 %v4826
    %5518 = vmatpush1.bf16.msra.mxu0 %v4825
    %5519 = vmatprep.subr.bf16.mxu0 %v4834
    %5520 = vmatpush1.bf16.msra.mxu0 %v4833
    %5521 = vmatprep.subr.bf16.mxu0 %v4842
    %5522 = vmatpush1.bf16.msra.mxu0 %v4841
    %5523 = vmatprep.subr.bf16.mxu0 %v4850
    %5524 = vmatpush1.bf16.msra.mxu0 %v4849
    %5525 = vmatprep.subr.bf16.mxu0 %v4858
    %5526 = vmatpush1.bf16.msra.mxu0 %v4857
    %5527 = vmatprep.subr.bf16.mxu0 %v4866
    %5528 = vmatpush1.bf16.msra.mxu0 %v4865
    %5529 = vmatprep.subr.bf16.mxu0 %v4874
    %5530 = vmatpush1.bf16.msra.mxu0 %v4873
    %5531 = vmatprep.subr.bf16.mxu0 %v4882
    %5532 = vmatpush1.bf16.msra.mxu0 %v4881
    %5533 = vmatprep.subr.bf16.mxu0 %v4890
    %5534 = vmatpush1.bf16.msra.mxu0 %v4889
    %5535 = vmatprep.subr.bf16.mxu0 %v4898
    %5536 = vmatpush1.bf16.msra.mxu0 %v4897
    %5537 = vmatprep.subr.bf16.mxu0 %v4906
    %5538 = vmatpush1.bf16.msra.mxu0 %v4905
    %5539 = vmatprep.subr.bf16.mxu0 %v4914
    %5540 = vmatpush1.bf16.msra.mxu0 %v4913
    %5541 = vmatprep.subr.bf16.mxu0 %v4922
    %5542 = vmatpush1.bf16.msra.mxu0 %v4921
    %5543 = vmatprep.subr.bf16.mxu0 %v4930
    %5544 = vmatpush1.bf16.msra.mxu0 %v4929
    %5545 = vmatprep.mubr.bf16.mxu0 %v4542
    %5546 = vmatmul.mubr.bf16.gmra.mrb[0].mxu0 %v4541
    %v5547 = vpop.f32.mrb[0].mxu0
    %v5548 = vadd.f32 %v5507, %v5547
    %v5549 = vpop.f32.mrb[0].mxu0
    %v5550 = vadd.f32 %v5509, %v5549
    %v5551 = vpop.f32.mrb[0].mxu0
    %v5552 = vpop.f32.mrb[0].mxu0
    %5553 = vdwg.mxu0
    %5554 = vmatprep.subr.bf16.mxu0 %v4938
    %5555 = vmatpush1.bf16.msra.mxu0 %v4937
    %5556 = vmatprep.subr.bf16.mxu0 %v4946
    %5557 = vmatpush1.bf16.msra.mxu0 %v4945
    %5558 = vmatprep.subr.bf16.mxu0 %v4954
    %5559 = vmatpush1.bf16.msra.mxu0 %v4953
    %5560 = vmatprep.subr.bf16.mxu0 %v4962
    %5561 = vmatpush1.bf16.msra.mxu0 %v4961
    %5562 = vmatprep.subr.bf16.mxu0 %v4970
    %5563 = vmatpush1.bf16.msra.mxu0 %v4969
    %5564 = vmatprep.subr.bf16.mxu0 %v4978
    %5565 = vmatpush1.bf16.msra.mxu0 %v4977
    %5566 = vmatprep.subr.bf16.mxu0 %v4986
    %5567 = vmatpush1.bf16.msra.mxu0 %v4985
    %5568 = vmatprep.subr.bf16.mxu0 %v4994
    %5569 = vmatpush1.bf16.msra.mxu0 %v4993
    %5570 = vmatprep.subr.bf16.mxu0 %v5002
    %5571 = vmatpush1.bf16.msra.mxu0 %v5001
    %5572 = vmatprep.subr.bf16.mxu0 %v5010
    %5573 = vmatpush1.bf16.msra.mxu0 %v5009
    %5574 = vmatprep.subr.bf16.mxu0 %v5018
    %5575 = vmatpush1.bf16.msra.mxu0 %v5017
    %5576 = vmatprep.subr.bf16.mxu0 %v5026
    %5577 = vmatpush1.bf16.msra.mxu0 %v5025
    %5578 = vmatprep.subr.bf16.mxu0 %v5034
    %5579 = vmatpush1.bf16.msra.mxu0 %v5033
    %5580 = vmatprep.subr.bf16.mxu0 %v5042
    %5581 = vmatpush1.bf16.msra.mxu0 %v5041
    %5582 = vmatprep.subr.bf16.mxu0 %v5050
    %5583 = vmatpush1.bf16.msra.mxu0 %v5049
    %5584 = vmatprep.subr.bf16.mxu0 %v5058
    %5585 = vmatpush1.bf16.msra.mxu0 %v5057
    %5586 = vmatprep.mubr.bf16.mxu0 %v4544
    %5587 = vmatmul.mubr.bf16.gmra.mrb[0].mxu0 %v4543
    %v5588 = vpop.f32.mrb[0].mxu0
    %v5589 = vadd.f32 %v5548, %v5588
    %v5590 = vpop.f32.mrb[0].mxu0
    %v5591 = vadd.f32 %v5550, %v5590
    %v5592 = vpop.f32.mrb[0].mxu0
    %v5593 = vpop.f32.mrb[0].mxu0
    %5594 = vdwg.mxu0
    %5595 = vmatprep.subr.bf16.mxu0 %v4556
    %5596 = vmatpush1.bf16.msra.mxu0 %v4555
    %5597 = vmatprep.subr.bf16.mxu0 %v4564
    %5598 = vmatpush1.bf16.msra.mxu0 %v4563
    %5599 = vmatprep.subr.bf16.mxu0 %v4572
    %5600 = vmatpush1.bf16.msra.mxu0 %v4571
    %5601 = vmatprep.subr.bf16.mxu0 %v4580
    %5602 = vmatpush1.bf16.msra.mxu0 %v4579
    %5603 = vmatprep.subr.bf16.mxu0 %v4588
    %5604 = vmatpush1.bf16.msra.mxu0 %v4587
    %5605 = vmatprep.subr.bf16.mxu0 %v4596
    %5606 = vmatpush1.bf16.msra.mxu0 %v4595
    %5607 = vmatprep.subr.bf16.mxu0 %v4604
    %5608 = vmatpush1.bf16.msra.mxu0 %v4603
    %5609 = vmatprep.subr.bf16.mxu0 %v4612
    %5610 = vmatpush1.bf16.msra.mxu0 %v4611
    %5611 = vmatprep.subr.bf16.mxu0 %v4620
    %5612 = vmatpush1.bf16.msra.mxu0 %v4619
    %5613 = vmatprep.subr.bf16.mxu0 %v4628
    %5614 = vmatpush1.bf16.msra.mxu0 %v4627
    %5615 = vmatprep.subr.bf16.mxu0 %v4636
    %5616 = vmatpush1.bf16.msra.mxu0 %v4635
    %5617 = vmatprep.subr.bf16.mxu0 %v4644
    %5618 = vmatpush1.bf16.msra.mxu0 %v4643
    %5619 = vmatprep.subr.bf16.mxu0 %v4652
    %5620 = vmatpush1.bf16.msra.mxu0 %v4651
    %5621 = vmatprep.subr.bf16.mxu0 %v4660
    %5622 = vmatpush1.bf16.msra.mxu0 %v4659
    %5623 = vmatprep.subr.bf16.mxu0 %v4668
    %5624 = vmatpush1.bf16.msra.mxu0 %v4667
    %5625 = vmatprep.subr.bf16.mxu0 %v4676
    %5626 = vmatpush1.bf16.msra.mxu0 %v4675
    %5627 = vmatprep.mubr.bf16.mxu0 %v4538
    %5628 = vmatmul.mubr.bf16.gmra.mrb[0].mxu0 %v4537
    %v5629 = vpop.f32.mrb[0].mxu0
    %v5630 = vadd.f32 %v5090, %v5629
    %v5631 = vpop.f32.mrb[0].mxu0
    %v5632 = vadd.f32 %v5094, %v5631
    %v5633 = vpop.f32.mrb[0].mxu0
    %v5634 = vpop.f32.mrb[0].mxu0
    %5635 = vdwg.mxu0
    %5636 = vmatprep.subr.bf16.mxu0 %v4684
    %5637 = vmatpush1.bf16.msra.mxu0 %v4683
    %5638 = vmatprep.subr.bf16.mxu0 %v4692
    %5639 = vmatpush1.bf16.msra.mxu0 %v4691
    %5640 = vmatprep.subr.bf16.mxu0 %v4700
    %5641 = vmatpush1.bf16.msra.mxu0 %v4699
    %5642 = vmatprep.subr.bf16.mxu0 %v4708
    %5643 = vmatpush1.bf16.msra.mxu0 %v4707
    %5644 = vmatprep.subr.bf16.mxu0 %v4716
    %5645 = vmatpush1.bf16.msra.mxu0 %v4715
    %5646 = vmatprep.subr.bf16.mxu0 %v4724
    %5647 = vmatpush1.bf16.msra.mxu0 %v4723
    %5648 = vmatprep.subr.bf16.mxu0 %v4732
    %5649 = vmatpush1.bf16.msra.mxu0 %v4731
    %5650 = vmatprep.subr.bf16.mxu0 %v4740
    %5651 = vmatpush1.bf16.msra.mxu0 %v4739
    %5652 = vmatprep.subr.bf16.mxu0 %v4748
    %5653 = vmatpush1.bf16.msra.mxu0 %v4747
    %5654 = vmatprep.subr.bf16.mxu0 %v4756
    %5655 = vmatpush1.bf16.msra.mxu0 %v4755
    %5656 = vmatprep.subr.bf16.mxu0 %v4764
    %5657 = vmatpush1.bf16.msra.mxu0 %v4763
    %5658 = vmatprep.subr.bf16.mxu0 %v4772
    %5659 = vmatpush1.bf16.msra.mxu0 %v4771
    %5660 = vmatprep.subr.bf16.mxu0 %v4780
    %5661 = vmatpush1.bf16.msra.mxu0 %v4779
    %5662 = vmatprep.subr.bf16.mxu0 %v4788
    %5663 = vmatpush1.bf16.msra.mxu0 %v4787
    %5664 = vmatprep.subr.bf16.mxu0 %v4796
    %5665 = vmatpush1.bf16.msra.mxu0 %v4795
    %5666 = vmatprep.subr.bf16.mxu0 %v4804
    %5667 = vmatpush1.bf16.msra.mxu0 %v4803
    %5668 = vmatprep.mubr.bf16.mxu0 %v4540
    %5669 = vmatmul.mubr.bf16.gmra.mrb[0].mxu0 %v4539
    %v5670 = vpop.f32.mrb[0].mxu0
    %v5671 = vadd.f32 %v5630, %v5670
    %v5672 = vpop.f32.mrb[0].mxu0
    %v5673 = vadd.f32 %v5632, %v5672
    %v5674 = vpop.f32.mrb[0].mxu0
    %v5675 = vpop.f32.mrb[0].mxu0
    %5676 = vdwg.mxu0
    %5677 = vmatprep.subr.bf16.mxu0 %v4812
    %5678 = vmatpush1.bf16.msra.mxu0 %v4811
    %5679 = vmatprep.subr.bf16.mxu0 %v4820
    %5680 = vmatpush1.bf16.msra.mxu0 %v4819
    %5681 = vmatprep.subr.bf16.mxu0 %v4828
    %5682 = vmatpush1.bf16.msra.mxu0 %v4827
    %5683 = vmatprep.subr.bf16.mxu0 %v4836
    %5684 = vmatpush1.bf16.msra.mxu0 %v4835
    %5685 = vmatprep.subr.bf16.mxu0 %v4844
    %5686 = vmatpush1.bf16.msra.mxu0 %v4843
    %5687 = vmatprep.subr.bf16.mxu0 %v4852
    %5688 = vmatpush1.bf16.msra.mxu0 %v4851
    %5689 = vmatprep.subr.bf16.mxu0 %v4860
    %5690 = vmatpush1.bf16.msra.mxu0 %v4859
    %5691 = vmatprep.subr.bf16.mxu0 %v4868
    %5692 = vmatpush1.bf16.msra.mxu0 %v4867
    %5693 = vmatprep.subr.bf16.mxu0 %v4876
    %5694 = vmatpush1.bf16.msra.mxu0 %v4875
    %5695 = vmatprep.subr.bf16.mxu0 %v4884
    %5696 = vmatpush1.bf16.msra.mxu0 %v4883
    %5697 = vmatprep.subr.bf16.mxu0 %v4892
    %5698 = vmatpush1.bf16.msra.mxu0 %v4891
    %5699 = vmatprep.subr.bf16.mxu0 %v4900
    %5700 = vmatpush1.bf16.msra.mxu0 %v4899
    %5701 = vmatprep.subr.bf16.mxu0 %v4908
    %5702 = vmatpush1.bf16.msra.mxu0 %v4907
    %5703 = vmatprep.subr.bf16.mxu0 %v4916
    %5704 = vmatpush1.bf16.msra.mxu0 %v4915
    %5705 = vmatprep.subr.bf16.mxu0 %v4924
    %5706 = vmatpush1.bf16.msra.mxu0 %v4923
    %5707 = vmatprep.subr.bf16.mxu0 %v4932
    %5708 = vmatpush1.bf16.msra.mxu0 %v4931
    %5709 = vmatprep.mubr.bf16.mxu0 %v4542
    %5710 = vmatmul.mubr.bf16.gmra.mrb[0].mxu0 %v4541
    %v5711 = vpop.f32.mrb[0].mxu0
    %v5712 = vadd.f32 %v5671, %v5711
    %v5713 = vpop.f32.mrb[0].mxu0
    %v5714 = vadd.f32 %v5673, %v5713
    %v5715 = vpop.f32.mrb[0].mxu0
    %v5716 = vpop.f32.mrb[0].mxu0
    %5717 = vdwg.mxu0
    %5718 = vmatprep.subr.bf16.mxu0 %v4940
    %5719 = vmatpush1.bf16.msra.mxu0 %v4939
    %5720 = vmatprep.subr.bf16.mxu0 %v4948
    %5721 = vmatpush1.bf16.msra.mxu0 %v4947
    %5722 = vmatprep.subr.bf16.mxu0 %v4956
    %5723 = vmatpush1.bf16.msra.mxu0 %v4955
    %5724 = vmatprep.subr.bf16.mxu0 %v4964
    %5725 = vmatpush1.bf16.msra.mxu0 %v4963
    %5726 = vmatprep.subr.bf16.mxu0 %v4972
    %5727 = vmatpush1.bf16.msra.mxu0 %v4971
    %5728 = vmatprep.subr.bf16.mxu0 %v4980
    %5729 = vmatpush1.bf16.msra.mxu0 %v4979
    %5730 = vmatprep.subr.bf16.mxu0 %v4988
    %5731 = vmatpush1.bf16.msra.mxu0 %v4987
    %5732 = vmatprep.subr.bf16.mxu0 %v4996
    %5733 = vmatpush1.bf16.msra.mxu0 %v4995
    %5734 = vmatprep.subr.bf16.mxu0 %v5004
    %5735 = vmatpush1.bf16.msra.mxu0 %v5003
    %5736 = vmatprep.subr.bf16.mxu0 %v5012
    %5737 = vmatpush1.bf16.msra.mxu0 %v5011
    %5738 = vmatprep.subr.bf16.mxu0 %v5020
    %5739 = vmatpush1.bf16.msra.mxu0 %v5019
    %5740 = vmatprep.subr.bf16.mxu0 %v5028
    %5741 = vmatpush1.bf16.msra.mxu0 %v5027
    %5742 = vmatprep.subr.bf16.mxu0 %v5036
    %5743 = vmatpush1.bf16.msra.mxu0 %v5035
    %5744 = vmatprep.subr.bf16.mxu0 %v5044
    %5745 = vmatpush1.bf16.msra.mxu0 %v5043
    %5746 = vmatprep.subr.bf16.mxu0 %v5052
    %5747 = vmatpush1.bf16.msra.mxu0 %v5051
    %5748 = vmatprep.subr.bf16.mxu0 %v5060
    %5749 = vmatpush1.bf16.msra.mxu0 %v5059
    %5750 = vmatprep.mubr.bf16.mxu0 %v4544
    %5751 = vmatmul.mubr.bf16.gmra.mrb[0].mxu0 %v4543
    %v5752 = vpop.f32.mrb[0].mxu0
    %v5753 = vadd.f32 %v5712, %v5752
    %v5754 = vpop.f32.mrb[0].mxu0
    %v5755 = vadd.f32 %v5714, %v5754
    %v5756 = vpop.f32.mrb[0].mxu0
    %v5757 = vpop.f32.mrb[0].mxu0
    %5758 = vdwg.mxu0
    %v5759 = vmax.f32 %v5261, 0.0
    %v5760 = vmax.f32 %v5263, 0.0
    %v5761 = vmax.f32 %v5425, 0.0
    %v5762 = vmax.f32 %v5427, 0.0
    %v5763 = vmax.f32 %v5589, 0.0
    %v5764 = vmax.f32 %v5591, 0.0
    %v5765 = vmax.f32 %v5753, 0.0
    %v5766 = vmax.f32 %v5755, 0.0
    %v5767 = vpack.c.bf16 %v5759, %v5759
    %v5768 = vpack.c.bf16 %v5760, %v5760
    %v5769 = vpack.c.bf16 %v5761, %v5761
    %v5770 = vpack.c.bf16 %v5762, %v5762
    %v5771 = vpack.c.bf16 %v5763, %v5763
    %v5772 = vpack.c.bf16 %v5764, %v5764
    %v5773 = vpack.c.bf16 %v5765, %v5765
    %v5774 = vpack.c.bf16 %v5766, %v5766
    %v5775 = vld [vmem:[#allocation17] sm:$0xf]
    %v5776 = vld [vmem:[#allocation17 + $0x4] sm:$0xf]
    %v5777 = vld [vmem:[#allocation17 + $0x8] sm:$0xf]
    %v5778 = vld [vmem:[#allocation17 + $0xc] sm:$0xf]
    %v5779 = vld [vmem:[#allocation17 + $0x10] sm:$0xf]
    %v5780 = vld [vmem:[#allocation17 + $0x14] sm:$0xf]
    %v5781 = vld [vmem:[#allocation17 + $0x18] sm:$0xf]
    %v5782 = vld [vmem:[#allocation17 + $0x1c] sm:$0xf]
    %v5783 = vld [vmem:[#allocation17 + $0x20] sm:$0xf]
    %v5784 = vld [vmem:[#allocation17 + $0x24] sm:$0xf]
    %v5785 = vld [vmem:[#allocation17 + $0x28] sm:$0xf]
    %v5786 = vld [vmem:[#allocation17 + $0x2c] sm:$0xf]
    %v5787 = vld [vmem:[#allocation17 + $0x30] sm:$0xf]
    %v5788 = vld [vmem:[#allocation17 + $0x34] sm:$0xf]
    %v5789 = vld [vmem:[#allocation17 + $0x38] sm:$0xf]
    %v5790 = vld [vmem:[#allocation17 + $0x3c] sm:$0xf]
    %v5791 = vld [vmem:[#allocation17 + $0x40] sm:$0xf]
    %v5792 = vld [vmem:[#allocation17 + $0x44] sm:$0xf]
    %v5793 = vld [vmem:[#allocation17 + $0x48] sm:$0xf]
    %v5794 = vld [vmem:[#allocation17 + $0x4c] sm:$0xf]
    %v5795 = vld [vmem:[#allocation17 + $0x50] sm:$0xf]
    %v5796 = vld [vmem:[#allocation17 + $0x54] sm:$0xf]
    %v5797 = vld [vmem:[#allocation17 + $0x58] sm:$0xf]
    %v5798 = vld [vmem:[#allocation17 + $0x5c] sm:$0xf]
    %v5799 = vld [vmem:[#allocation17 + $0x60] sm:$0xf]
    %v5800 = vld [vmem:[#allocation17 + $0x64] sm:$0xf]
    %v5801 = vld [vmem:[#allocation17 + $0x68] sm:$0xf]
    %v5802 = vld [vmem:[#allocation17 + $0x6c] sm:$0xf]
    %v5803 = vld [vmem:[#allocation17 + $0x70] sm:$0xf]
    %v5804 = vld [vmem:[#allocation17 + $0x74] sm:$0xf]
    %v5805 = vld [vmem:[#allocation17 + $0x78] sm:$0xf]
    %v5806 = vld [vmem:[#allocation17 + $0x7c] sm:$0xf]
    %v5807 = vld [vmem:[#allocation17 + $0x80] sm:$0xf]
    %v5808 = vld [vmem:[#allocation17 + $0x84] sm:$0xf]
    %v5809 = vld [vmem:[#allocation17 + $0x88] sm:$0xf]
    %v5810 = vld [vmem:[#allocation17 + $0x8c] sm:$0xf]
    %v5811 = vld [vmem:[#allocation17 + $0x90] sm:$0xf]
    %v5812 = vld [vmem:[#allocation17 + $0x94] sm:$0xf]
    %v5813 = vld [vmem:[#allocation17 + $0x98] sm:$0xf]
    %v5814 = vld [vmem:[#allocation17 + $0x9c] sm:$0xf]
    %v5815 = vld [vmem:[#allocation17 + $0xa0] sm:$0xf]
    %v5816 = vld [vmem:[#allocation17 + $0xa4] sm:$0xf]
    %v5817 = vld [vmem:[#allocation17 + $0xa8] sm:$0xf]
    %v5818 = vld [vmem:[#allocation17 + $0xac] sm:$0xf]
    %v5819 = vld [vmem:[#allocation17 + $0xb0] sm:$0xf]
    %v5820 = vld [vmem:[#allocation17 + $0xb4] sm:$0xf]
    %v5821 = vld [vmem:[#allocation17 + $0xb8] sm:$0xf]
    %v5822 = vld [vmem:[#allocation17 + $0xbc] sm:$0xf]
    %v5823 = vld [vmem:[#allocation17 + $0xc0] sm:$0xf]
    %v5824 = vld [vmem:[#allocation17 + $0xc4] sm:$0xf]
    %v5825 = vld [vmem:[#allocation17 + $0xc8] sm:$0xf]
    %v5826 = vld [vmem:[#allocation17 + $0xcc] sm:$0xf]
    %v5827 = vld [vmem:[#allocation17 + $0xd0] sm:$0xf]
    %v5828 = vld [vmem:[#allocation17 + $0xd4] sm:$0xf]
    %v5829 = vld [vmem:[#allocation17 + $0xd8] sm:$0xf]
    %v5830 = vld [vmem:[#allocation17 + $0xdc] sm:$0xf]
    %v5831 = vld [vmem:[#allocation17 + $0xe0] sm:$0xf]
    %v5832 = vld [vmem:[#allocation17 + $0xe4] sm:$0xf]
    %v5833 = vld [vmem:[#allocation17 + $0xe8] sm:$0xf]
    %v5834 = vld [vmem:[#allocation17 + $0xec] sm:$0xf]
    %v5835 = vld [vmem:[#allocation17 + $0xf0] sm:$0xf]
    %v5836 = vld [vmem:[#allocation17 + $0xf4] sm:$0xf]
    %v5837 = vld [vmem:[#allocation17 + $0xf8] sm:$0xf]
    %v5838 = vld [vmem:[#allocation17 + $0xfc] sm:$0xf]
    %v5839 = vld [vmem:[#allocation17 + $0x100] sm:$0xf]
    %v5840 = vld [vmem:[#allocation17 + $0x104] sm:$0xf]
    %v5841 = vld [vmem:[#allocation17 + $0x108] sm:$0xf]
    %v5842 = vld [vmem:[#allocation17 + $0x10c] sm:$0xf]
    %v5843 = vld [vmem:[#allocation17 + $0x110] sm:$0xf]
    %v5844 = vld [vmem:[#allocation17 + $0x114] sm:$0xf]
    %v5845 = vld [vmem:[#allocation17 + $0x118] sm:$0xf]
    %v5846 = vld [vmem:[#allocation17 + $0x11c] sm:$0xf]
    %v5847 = vld [vmem:[#allocation17 + $0x120] sm:$0xf]
    %v5848 = vld [vmem:[#allocation17 + $0x124] sm:$0xf]
    %v5849 = vld [vmem:[#allocation17 + $0x128] sm:$0xf]
    %v5850 = vld [vmem:[#allocation17 + $0x12c] sm:$0xf]
    %v5851 = vld [vmem:[#allocation17 + $0x130] sm:$0xf]
    %v5852 = vld [vmem:[#allocation17 + $0x134] sm:$0xf]
    %v5853 = vld [vmem:[#allocation17 + $0x138] sm:$0xf]
    %v5854 = vld [vmem:[#allocation17 + $0x13c] sm:$0xf]
    %v5855 = vld [vmem:[#allocation17 + $0x140] sm:$0xf]
    %v5856 = vld [vmem:[#allocation17 + $0x144] sm:$0xf]
    %v5857 = vld [vmem:[#allocation17 + $0x148] sm:$0xf]
    %v5858 = vld [vmem:[#allocation17 + $0x14c] sm:$0xf]
    %v5859 = vld [vmem:[#allocation17 + $0x150] sm:$0xf]
    %v5860 = vld [vmem:[#allocation17 + $0x154] sm:$0xf]
    %v5861 = vld [vmem:[#allocation17 + $0x158] sm:$0xf]
    %v5862 = vld [vmem:[#allocation17 + $0x15c] sm:$0xf]
    %v5863 = vld [vmem:[#allocation17 + $0x160] sm:$0xf]
    %v5864 = vld [vmem:[#allocation17 + $0x164] sm:$0xf]
    %v5865 = vld [vmem:[#allocation17 + $0x168] sm:$0xf]
    %v5866 = vld [vmem:[#allocation17 + $0x16c] sm:$0xf]
    %v5867 = vld [vmem:[#allocation17 + $0x170] sm:$0xf]
    %v5868 = vld [vmem:[#allocation17 + $0x174] sm:$0xf]
    %v5869 = vld [vmem:[#allocation17 + $0x178] sm:$0xf]
    %v5870 = vld [vmem:[#allocation17 + $0x17c] sm:$0xf]
    %v5871 = vld [vmem:[#allocation17 + $0x180] sm:$0xf]
    %v5872 = vld [vmem:[#allocation17 + $0x184] sm:$0xf]
    %v5873 = vld [vmem:[#allocation17 + $0x188] sm:$0xf]
    %v5874 = vld [vmem:[#allocation17 + $0x18c] sm:$0xf]
    %v5875 = vld [vmem:[#allocation17 + $0x190] sm:$0xf]
    %v5876 = vld [vmem:[#allocation17 + $0x194] sm:$0xf]
    %v5877 = vld [vmem:[#allocation17 + $0x198] sm:$0xf]
    %v5878 = vld [vmem:[#allocation17 + $0x19c] sm:$0xf]
    %v5879 = vld [vmem:[#allocation17 + $0x1a0] sm:$0xf]
    %v5880 = vld [vmem:[#allocation17 + $0x1a4] sm:$0xf]
    %v5881 = vld [vmem:[#allocation17 + $0x1a8] sm:$0xf]
    %v5882 = vld [vmem:[#allocation17 + $0x1ac] sm:$0xf]
    %v5883 = vld [vmem:[#allocation17 + $0x1b0] sm:$0xf]
    %v5884 = vld [vmem:[#allocation17 + $0x1b4] sm:$0xf]
    %v5885 = vld [vmem:[#allocation17 + $0x1b8] sm:$0xf]
    %v5886 = vld [vmem:[#allocation17 + $0x1bc] sm:$0xf]
    %v5887 = vld [vmem:[#allocation17 + $0x1c0] sm:$0xf]
    %v5888 = vld [vmem:[#allocation17 + $0x1c4] sm:$0xf]
    %v5889 = vld [vmem:[#allocation17 + $0x1c8] sm:$0xf]
    %v5890 = vld [vmem:[#allocation17 + $0x1cc] sm:$0xf]
    %v5891 = vld [vmem:[#allocation17 + $0x1d0] sm:$0xf]
    %v5892 = vld [vmem:[#allocation17 + $0x1d4] sm:$0xf]
    %v5893 = vld [vmem:[#allocation17 + $0x1d8] sm:$0xf]
    %v5894 = vld [vmem:[#allocation17 + $0x1dc] sm:$0xf]
    %v5895 = vld [vmem:[#allocation17 + $0x1e0] sm:$0xf]
    %v5896 = vld [vmem:[#allocation17 + $0x1e4] sm:$0xf]
    %v5897 = vld [vmem:[#allocation17 + $0x1e8] sm:$0xf]
    %v5898 = vld [vmem:[#allocation17 + $0x1ec] sm:$0xf]
    %v5899 = vld [vmem:[#allocation17 + $0x1f0] sm:$0xf]
    %v5900 = vld [vmem:[#allocation17 + $0x1f4] sm:$0xf]
    %v5901 = vld [vmem:[#allocation17 + $0x1f8] sm:$0xf]
    %v5902 = vld [vmem:[#allocation17 + $0x1fc] sm:$0xf]
    %v5903 = vld [vmem:[#allocation22] sm:$0x1]
    %v5905 = vlaneseq
    %v5906 = vshrl.u32 %v5905, 7
    %v5907 = vsub.s32 0, %v5906
    %v5908 = vrot.slane %v5903, %v5907
    %v6038 = vunpack.c.l.b16 %v5775
    %v6039 = vunpack.c.l.b16 %v5776
    %v6040 = vunpack.c.l.b16 %v5777
    %v6041 = vunpack.c.l.b16 %v5778
    %v6042 = vunpack.c.l.b16 %v5779
    %v6043 = vunpack.c.l.b16 %v5780
    %v6044 = vunpack.c.l.b16 %v5781
    %v6045 = vunpack.c.l.b16 %v5782
    %v6046 = vunpack.c.l.b16 %v5783
    %v6047 = vunpack.c.l.b16 %v5784
    %v6048 = vunpack.c.l.b16 %v5785
    %v6049 = vunpack.c.l.b16 %v5786
    %v6050 = vunpack.c.l.b16 %v5787
    %v6051 = vunpack.c.l.b16 %v5788
    %v6052 = vunpack.c.l.b16 %v5789
    %v6053 = vunpack.c.l.b16 %v5790
    %v6054 = vunpack.c.l.b16 %v5791
    %v6055 = vunpack.c.l.b16 %v5792
    %v6056 = vunpack.c.l.b16 %v5793
    %v6057 = vunpack.c.l.b16 %v5794
    %v6058 = vunpack.c.l.b16 %v5795
    %v6059 = vunpack.c.l.b16 %v5796
    %v6060 = vunpack.c.l.b16 %v5797
    %v6061 = vunpack.c.l.b16 %v5798
    %v6062 = vunpack.c.l.b16 %v5799
    %v6063 = vunpack.c.l.b16 %v5800
    %v6064 = vunpack.c.l.b16 %v5801
    %v6065 = vunpack.c.l.b16 %v5802
    %v6066 = vunpack.c.l.b16 %v5803
    %v6067 = vunpack.c.l.b16 %v5804
    %v6068 = vunpack.c.l.b16 %v5805
    %v6069 = vunpack.c.l.b16 %v5806
    %v6070 = vunpack.c.l.b16 %v5807
    %v6071 = vunpack.c.l.b16 %v5808
    %v6072 = vunpack.c.l.b16 %v5809
    %v6073 = vunpack.c.l.b16 %v5810
    %v6074 = vunpack.c.l.b16 %v5811
    %v6075 = vunpack.c.l.b16 %v5812
    %v6076 = vunpack.c.l.b16 %v5813
    %v6077 = vunpack.c.l.b16 %v5814
    %v6078 = vunpack.c.l.b16 %v5815
    %v6079 = vunpack.c.l.b16 %v5816
    %v6080 = vunpack.c.l.b16 %v5817
    %v6081 = vunpack.c.l.b16 %v5818
    %v6082 = vunpack.c.l.b16 %v5819
    %v6083 = vunpack.c.l.b16 %v5820
    %v6084 = vunpack.c.l.b16 %v5821
    %v6085 = vunpack.c.l.b16 %v5822
    %v6086 = vunpack.c.l.b16 %v5823
    %v6087 = vunpack.c.l.b16 %v5824
    %v6088 = vunpack.c.l.b16 %v5825
    %v6089 = vunpack.c.l.b16 %v5826
    %v6090 = vunpack.c.l.b16 %v5827
    %v6091 = vunpack.c.l.b16 %v5828
    %v6092 = vunpack.c.l.b16 %v5829
    %v6093 = vunpack.c.l.b16 %v5830
    %v6094 = vunpack.c.l.b16 %v5831
    %v6095 = vunpack.c.l.b16 %v5832
    %v6096 = vunpack.c.l.b16 %v5833
    %v6097 = vunpack.c.l.b16 %v5834
    %v6098 = vunpack.c.l.b16 %v5835
    %v6099 = vunpack.c.l.b16 %v5836
    %v6100 = vunpack.c.l.b16 %v5837
    %v6101 = vunpack.c.l.b16 %v5838
    %v6102 = vunpack.c.l.b16 %v5839
    %v6103 = vunpack.c.l.b16 %v5840
    %v6104 = vunpack.c.l.b16 %v5841
    %v6105 = vunpack.c.l.b16 %v5842
    %v6106 = vunpack.c.l.b16 %v5843
    %v6107 = vunpack.c.l.b16 %v5844
    %v6108 = vunpack.c.l.b16 %v5845
    %v6109 = vunpack.c.l.b16 %v5846
    %v6110 = vunpack.c.l.b16 %v5847
    %v6111 = vunpack.c.l.b16 %v5848
    %v6112 = vunpack.c.l.b16 %v5849
    %v6113 = vunpack.c.l.b16 %v5850
    %v6114 = vunpack.c.l.b16 %v5851
    %v6115 = vunpack.c.l.b16 %v5852
    %v6116 = vunpack.c.l.b16 %v5853
    %v6117 = vunpack.c.l.b16 %v5854
    %v6118 = vunpack.c.l.b16 %v5855
    %v6119 = vunpack.c.l.b16 %v5856
    %v6120 = vunpack.c.l.b16 %v5857
    %v6121 = vunpack.c.l.b16 %v5858
    %v6122 = vunpack.c.l.b16 %v5859
    %v6123 = vunpack.c.l.b16 %v5860
    %v6124 = vunpack.c.l.b16 %v5861
    %v6125 = vunpack.c.l.b16 %v5862
    %v6126 = vunpack.c.l.b16 %v5863
    %v6127 = vunpack.c.l.b16 %v5864
    %v6128 = vunpack.c.l.b16 %v5865
    %v6129 = vunpack.c.l.b16 %v5866
    %v6130 = vunpack.c.l.b16 %v5867
    %v6131 = vunpack.c.l.b16 %v5868
    %v6132 = vunpack.c.l.b16 %v5869
    %v6133 = vunpack.c.l.b16 %v5870
    %v6134 = vunpack.c.l.b16 %v5871
    %v6135 = vunpack.c.l.b16 %v5872
    %v6136 = vunpack.c.l.b16 %v5873
    %v6137 = vunpack.c.l.b16 %v5874
    %v6138 = vunpack.c.l.b16 %v5875
    %v6139 = vunpack.c.l.b16 %v5876
    %v6140 = vunpack.c.l.b16 %v5877
    %v6141 = vunpack.c.l.b16 %v5878
    %v6142 = vunpack.c.l.b16 %v5879
    %v6143 = vunpack.c.l.b16 %v5880
    %v6144 = vunpack.c.l.b16 %v5881
    %v6145 = vunpack.c.l.b16 %v5882
    %v6146 = vunpack.c.l.b16 %v5883
    %v6147 = vunpack.c.l.b16 %v5884
    %v6148 = vunpack.c.l.b16 %v5885
    %v6149 = vunpack.c.l.b16 %v5886
    %v6150 = vunpack.c.l.b16 %v5887
    %v6151 = vunpack.c.l.b16 %v5888
    %v6152 = vunpack.c.l.b16 %v5889
    %v6153 = vunpack.c.l.b16 %v5890
    %v6154 = vunpack.c.l.b16 %v5891
    %v6155 = vunpack.c.l.b16 %v5892
    %v6156 = vunpack.c.l.b16 %v5893
    %v6157 = vunpack.c.l.b16 %v5894
    %v6158 = vunpack.c.l.b16 %v5895
    %v6159 = vunpack.c.l.b16 %v5896
    %v6160 = vunpack.c.l.b16 %v5897
    %v6161 = vunpack.c.l.b16 %v5898
    %v6162 = vunpack.c.l.b16 %v5899
    %v6163 = vunpack.c.l.b16 %v5900
    %v6164 = vunpack.c.l.b16 %v5901
    %v6165 = vunpack.c.l.b16 %v5902
    %v6166 = vpack.c.b16 %v6039, %v6038
    %v6167 = vpack.c.b16 %v6041, %v6040
    %v6168 = vpack.c.b16 %v6043, %v6042
    %v6169 = vpack.c.b16 %v6045, %v6044
    %v6170 = vpack.c.b16 %v6047, %v6046
    %v6171 = vpack.c.b16 %v6049, %v6048
    %v6172 = vpack.c.b16 %v6051, %v6050
    %v6173 = vpack.c.b16 %v6053, %v6052
    %v6174 = vpack.c.b16 %v6055, %v6054
    %v6175 = vpack.c.b16 %v6057, %v6056
    %v6176 = vpack.c.b16 %v6059, %v6058
    %v6177 = vpack.c.b16 %v6061, %v6060
    %v6178 = vpack.c.b16 %v6063, %v6062
    %v6179 = vpack.c.b16 %v6065, %v6064
    %v6180 = vpack.c.b16 %v6067, %v6066
    %v6181 = vpack.c.b16 %v6069, %v6068
    %v6182 = vpack.c.b16 %v6071, %v6070
    %v6183 = vpack.c.b16 %v6073, %v6072
    %v6184 = vpack.c.b16 %v6075, %v6074
    %v6185 = vpack.c.b16 %v6077, %v6076
    %v6186 = vpack.c.b16 %v6079, %v6078
    %v6187 = vpack.c.b16 %v6081, %v6080
    %v6188 = vpack.c.b16 %v6083, %v6082
    %v6189 = vpack.c.b16 %v6085, %v6084
    %v6190 = vpack.c.b16 %v6087, %v6086
    %v6191 = vpack.c.b16 %v6089, %v6088
    %v6192 = vpack.c.b16 %v6091, %v6090
    %v6193 = vpack.c.b16 %v6093, %v6092
    %v6194 = vpack.c.b16 %v6095, %v6094
    %v6195 = vpack.c.b16 %v6097, %v6096
    %v6196 = vpack.c.b16 %v6099, %v6098
    %v6197 = vpack.c.b16 %v6101, %v6100
    %v6198 = vpack.c.b16 %v6103, %v6102
    %v6199 = vpack.c.b16 %v6105, %v6104
    %v6200 = vpack.c.b16 %v6107, %v6106
    %v6201 = vpack.c.b16 %v6109, %v6108
    %v6202 = vpack.c.b16 %v6111, %v6110
    %v6203 = vpack.c.b16 %v6113, %v6112
    %v6204 = vpack.c.b16 %v6115, %v6114
    %v6205 = vpack.c.b16 %v6117, %v6116
    %v6206 = vpack.c.b16 %v6119, %v6118
    %v6207 = vpack.c.b16 %v6121, %v6120
    %v6208 = vpack.c.b16 %v6123, %v6122
    %v6209 = vpack.c.b16 %v6125, %v6124
    %v6210 = vpack.c.b16 %v6127, %v6126
    %v6211 = vpack.c.b16 %v6129, %v6128
    %v6212 = vpack.c.b16 %v6131, %v6130
    %v6213 = vpack.c.b16 %v6133, %v6132
    %v6214 = vpack.c.b16 %v6135, %v6134
    %v6215 = vpack.c.b16 %v6137, %v6136
    %v6216 = vpack.c.b16 %v6139, %v6138
    %v6217 = vpack.c.b16 %v6141, %v6140
    %v6218 = vpack.c.b16 %v6143, %v6142
    %v6219 = vpack.c.b16 %v6145, %v6144
    %v6220 = vpack.c.b16 %v6147, %v6146
    %v6221 = vpack.c.b16 %v6149, %v6148
    %v6222 = vpack.c.b16 %v6151, %v6150
    %v6223 = vpack.c.b16 %v6153, %v6152
    %v6224 = vpack.c.b16 %v6155, %v6154
    %v6225 = vpack.c.b16 %v6157, %v6156
    %v6226 = vpack.c.b16 %v6159, %v6158
    %v6227 = vpack.c.b16 %v6161, %v6160
    %v6228 = vpack.c.b16 %v6163, %v6162
    %v6229 = vpack.c.b16 %v6165, %v6164
    %6294 = vmatprep.subr.bf16.mxu0 0
    %6295 = vmatpush1.bf16.msra.mxu0 %v6166
    %6296 = vmatprep.subr.bf16.mxu0 0
    %6297 = vmatpush1.bf16.msra.mxu0 %v6167
    %6298 = vmatprep.subr.bf16.mxu0 0
    %6299 = vmatpush1.bf16.msra.mxu0 %v6168
    %6300 = vmatprep.subr.bf16.mxu0 0
    %6301 = vmatpush1.bf16.msra.mxu0 %v6169
    %6302 = vmatprep.subr.bf16.mxu0 0
    %6303 = vmatpush1.bf16.msra.mxu0 %v6170
    %6304 = vmatprep.subr.bf16.mxu0 0
    %6305 = vmatpush1.bf16.msra.mxu0 %v6171
    %6306 = vmatprep.subr.bf16.mxu0 0
    %6307 = vmatpush1.bf16.msra.mxu0 %v6172
    %6308 = vmatprep.subr.bf16.mxu0 0
    %6309 = vmatpush1.bf16.msra.mxu0 %v6173
    %6310 = vmatprep.subr.bf16.mxu0 0
    %6311 = vmatpush1.bf16.msra.mxu0 %v6174
    %6312 = vmatprep.subr.bf16.mxu0 0
    %6313 = vmatpush1.bf16.msra.mxu0 %v6175
    %6314 = vmatprep.subr.bf16.mxu0 0
    %6315 = vmatpush1.bf16.msra.mxu0 %v6176
    %6316 = vmatprep.subr.bf16.mxu0 0
    %6317 = vmatpush1.bf16.msra.mxu0 %v6177
    %6318 = vmatprep.subr.bf16.mxu0 0
    %6319 = vmatpush1.bf16.msra.mxu0 %v6178
    %6320 = vmatprep.subr.bf16.mxu0 0
    %6321 = vmatpush1.bf16.msra.mxu0 %v6179
    %6322 = vmatprep.subr.bf16.mxu0 0
    %6323 = vmatpush1.bf16.msra.mxu0 %v6180
    %6324 = vmatprep.subr.bf16.mxu0 0
    %6325 = vmatpush1.bf16.msra.mxu0 %v6181
    %6326 = vmatprep.mubr.bf16.mxu0 %v5768
    %6327 = vmatmul.mubr.bf16.gmra.mrb[0].mxu0 %v5767
    %v6328 = vpop.f32.mrb[0].mxu0
    %v6329 = vadd.f32 %v5908, %v6328
    %v6330 = vpop.f32.mrb[0].mxu0
    %v6331 = vpop.f32.mrb[0].mxu0
    %v6332 = vpop.f32.mrb[0].mxu0
    %6333 = vdwg.mxu0
    %6334 = vmatprep.subr.bf16.mxu0 0
    %6335 = vmatpush1.bf16.msra.mxu0 %v6182
    %6336 = vmatprep.subr.bf16.mxu0 0
    %6337 = vmatpush1.bf16.msra.mxu0 %v6183
    %6338 = vmatprep.subr.bf16.mxu0 0
    %6339 = vmatpush1.bf16.msra.mxu0 %v6184
    %6340 = vmatprep.subr.bf16.mxu0 0
    %6341 = vmatpush1.bf16.msra.mxu0 %v6185
    %6342 = vmatprep.subr.bf16.mxu0 0
    %6343 = vmatpush1.bf16.msra.mxu0 %v6186
    %6344 = vmatprep.subr.bf16.mxu0 0
    %6345 = vmatpush1.bf16.msra.mxu0 %v6187
    %6346 = vmatprep.subr.bf16.mxu0 0
    %6347 = vmatpush1.bf16.msra.mxu0 %v6188
    %6348 = vmatprep.subr.bf16.mxu0 0
    %6349 = vmatpush1.bf16.msra.mxu0 %v6189
    %6350 = vmatprep.subr.bf16.mxu0 0
    %6351 = vmatpush1.bf16.msra.mxu0 %v6190
    %6352 = vmatprep.subr.bf16.mxu0 0
    %6353 = vmatpush1.bf16.msra.mxu0 %v6191
    %6354 = vmatprep.subr.bf16.mxu0 0
    %6355 = vmatpush1.bf16.msra.mxu0 %v6192
    %6356 = vmatprep.subr.bf16.mxu0 0
    %6357 = vmatpush1.bf16.msra.mxu0 %v6193
    %6358 = vmatprep.subr.bf16.mxu0 0
    %6359 = vmatpush1.bf16.msra.mxu0 %v6194
    %6360 = vmatprep.subr.bf16.mxu0 0
    %6361 = vmatpush1.bf16.msra.mxu0 %v6195
    %6362 = vmatprep.subr.bf16.mxu0 0
    %6363 = vmatpush1.bf16.msra.mxu0 %v6196
    %6364 = vmatprep.subr.bf16.mxu0 0
    %6365 = vmatpush1.bf16.msra.mxu0 %v6197
    %6366 = vmatprep.mubr.bf16.mxu0 %v5770
    %6367 = vmatmul.mubr.bf16.gmra.mrb[0].mxu0 %v5769
    %v6368 = vpop.f32.mrb[0].mxu0
    %v6369 = vadd.f32 %v6329, %v6368
    %v6370 = vpop.f32.mrb[0].mxu0
    %v6371 = vpop.f32.mrb[0].mxu0
    %v6372 = vpop.f32.mrb[0].mxu0
    %6373 = vdwg.mxu0
    %6374 = vmatprep.subr.bf16.mxu0 0
    %6375 = vmatpush1.bf16.msra.mxu0 %v6198
    %6376 = vmatprep.subr.bf16.mxu0 0
    %6377 = vmatpush1.bf16.msra.mxu0 %v6199
    %6378 = vmatprep.subr.bf16.mxu0 0
    %6379 = vmatpush1.bf16.msra.mxu0 %v6200
    %6380 = vmatprep.subr.bf16.mxu0 0
    %6381 = vmatpush1.bf16.msra.mxu0 %v6201
    %6382 = vmatprep.subr.bf16.mxu0 0
    %6383 = vmatpush1.bf16.msra.mxu0 %v6202
    %6384 = vmatprep.subr.bf16.mxu0 0
    %6385 = vmatpush1.bf16.msra.mxu0 %v6203
    %6386 = vmatprep.subr.bf16.mxu0 0
    %6387 = vmatpush1.bf16.msra.mxu0 %v6204
    %6388 = vmatprep.subr.bf16.mxu0 0
    %6389 = vmatpush1.bf16.msra.mxu0 %v6205
    %6390 = vmatprep.subr.bf16.mxu0 0
    %6391 = vmatpush1.bf16.msra.mxu0 %v6206
    %6392 = vmatprep.subr.bf16.mxu0 0
    %6393 = vmatpush1.bf16.msra.mxu0 %v6207
    %6394 = vmatprep.subr.bf16.mxu0 0
    %6395 = vmatpush1.bf16.msra.mxu0 %v6208
    %6396 = vmatprep.subr.bf16.mxu0 0
    %6397 = vmatpush1.bf16.msra.mxu0 %v6209
    %6398 = vmatprep.subr.bf16.mxu0 0
    %6399 = vmatpush1.bf16.msra.mxu0 %v6210
    %6400 = vmatprep.subr.bf16.mxu0 0
    %6401 = vmatpush1.bf16.msra.mxu0 %v6211
    %6402 = vmatprep.subr.bf16.mxu0 0
    %6403 = vmatpush1.bf16.msra.mxu0 %v6212
    %6404 = vmatprep.subr.bf16.mxu0 0
    %6405 = vmatpush1.bf16.msra.mxu0 %v6213
    %6406 = vmatprep.mubr.bf16.mxu0 %v5772
    %6407 = vmatmul.mubr.bf16.gmra.mrb[0].mxu0 %v5771
    %v6408 = vpop.f32.mrb[0].mxu0
    %v6409 = vadd.f32 %v6369, %v6408
    %v6410 = vpop.f32.mrb[0].mxu0
    %v6411 = vpop.f32.mrb[0].mxu0
    %v6412 = vpop.f32.mrb[0].mxu0
    %6413 = vdwg.mxu0
    %6414 = vmatprep.subr.bf16.mxu0 0
    %6415 = vmatpush1.bf16.msra.mxu0 %v6214
    %6416 = vmatprep.subr.bf16.mxu0 0
    %6417 = vmatpush1.bf16.msra.mxu0 %v6215
    %6418 = vmatprep.subr.bf16.mxu0 0
    %6419 = vmatpush1.bf16.msra.mxu0 %v6216
    %6420 = vmatprep.subr.bf16.mxu0 0
    %6421 = vmatpush1.bf16.msra.mxu0 %v6217
    %6422 = vmatprep.subr.bf16.mxu0 0
    %6423 = vmatpush1.bf16.msra.mxu0 %v6218
    %6424 = vmatprep.subr.bf16.mxu0 0
    %6425 = vmatpush1.bf16.msra.mxu0 %v6219
    %6426 = vmatprep.subr.bf16.mxu0 0
    %6427 = vmatpush1.bf16.msra.mxu0 %v6220
    %6428 = vmatprep.subr.bf16.mxu0 0
    %6429 = vmatpush1.bf16.msra.mxu0 %v6221
    %6430 = vmatprep.subr.bf16.mxu0 0
    %6431 = vmatpush1.bf16.msra.mxu0 %v6222
    %6432 = vmatprep.subr.bf16.mxu0 0
    %6433 = vmatpush1.bf16.msra.mxu0 %v6223
    %6434 = vmatprep.subr.bf16.mxu0 0
    %6435 = vmatpush1.bf16.msra.mxu0 %v6224
    %6436 = vmatprep.subr.bf16.mxu0 0
    %6437 = vmatpush1.bf16.msra.mxu0 %v6225
    %6438 = vmatprep.subr.bf16.mxu0 0
    %6439 = vmatpush1.bf16.msra.mxu0 %v6226
    %6440 = vmatprep.subr.bf16.mxu0 0
    %6441 = vmatpush1.bf16.msra.mxu0 %v6227
    %6442 = vmatprep.subr.bf16.mxu0 0
    %6443 = vmatpush1.bf16.msra.mxu0 %v6228
    %6444 = vmatprep.subr.bf16.mxu0 0
    %6445 = vmatpush1.bf16.msra.mxu0 %v6229
    %6446 = vmatprep.mubr.bf16.mxu0 %v5774
    %6447 = vmatmul.mubr.bf16.gmra.mrb[0].mxu0 %v5773
    %v6448 = vpop.f32.mrb[0].mxu0
    %v6449 = vadd.f32 %v6409, %v6448
    %v6450 = vpop.f32.mrb[0].mxu0
    %v6451 = vpop.f32.mrb[0].mxu0
    %v6452 = vpop.f32.mrb[0].mxu0
    %6453 = vdwg.mxu0
    %v6454 = vld [vmem:[#allocation8] sm:$0x3]
    %v6455 = vld [vmem:[#allocation19] sm:$0xff]
    %v6456 = vld [vmem:[#allocation19 + $0x8] sm:$0xff]
    %v6457 = vld [vmem:[#allocation19 + $0x10] sm:$0xff]
    %v6458 = vld [vmem:[#allocation19 + $0x18] sm:$0xff]
    %v6459 = vld [vmem:[#allocation19 + $0x20] sm:$0xff]
    %v6460 = vld [vmem:[#allocation19 + $0x28] sm:$0xff]
    %v6461 = vld [vmem:[#allocation19 + $0x30] sm:$0xff]
    %v6462 = vld [vmem:[#allocation19 + $0x38] sm:$0xff]
    %v6463 = vld [vmem:[#allocation19 + $0x40] sm:$0xff]
    %v6464 = vld [vmem:[#allocation19 + $0x48] sm:$0xff]
    %v6465 = vld [vmem:[#allocation19 + $0x50] sm:$0xff]
    %v6466 = vld [vmem:[#allocation19 + $0x58] sm:$0xff]
    %v6467 = vld [vmem:[#allocation19 + $0x60] sm:$0xff]
    %v6468 = vld [vmem:[#allocation19 + $0x68] sm:$0xff]
    %v6469 = vld [vmem:[#allocation19 + $0x70] sm:$0xff]
    %v6470 = vld [vmem:[#allocation19 + $0x78] sm:$0xff]
    %v6471 = vld [vmem:[#allocation20] sm:$0xff]
    %v6472 = vld [vmem:[#allocation20 + $0x8] sm:$0xff]
    %v6473 = vld [vmem:[#allocation20 + $0x10] sm:$0xff]
    %v6474 = vld [vmem:[#allocation20 + $0x18] sm:$0xff]
    %v6475 = vld [vmem:[#allocation20 + $0x20] sm:$0xff]
    %v6476 = vld [vmem:[#allocation20 + $0x28] sm:$0xff]
    %v6477 = vld [vmem:[#allocation20 + $0x30] sm:$0xff]
    %v6478 = vld [vmem:[#allocation20 + $0x38] sm:$0xff]
    %v6479 = vld [vmem:[#allocation20 + $0x40] sm:$0xff]
    %v6480 = vld [vmem:[#allocation20 + $0x48] sm:$0xff]
    %v6481 = vld [vmem:[#allocation20 + $0x50] sm:$0xff]
    %v6482 = vld [vmem:[#allocation20 + $0x58] sm:$0xff]
    %v6483 = vld [vmem:[#allocation20 + $0x60] sm:$0xff]
    %v6484 = vld [vmem:[#allocation20 + $0x68] sm:$0xff]
    %v6485 = vld [vmem:[#allocation20 + $0x70] sm:$0xff]
    %v6486 = vld [vmem:[#allocation20 + $0x78] sm:$0xff]
    %6487 = vmatprep.subr.mxu0 0.0
    %6488 = vmatpush1.msra.mxu0 %v6471
    %6489 = vmatprep.subr.mxu0 0.0
    %6490 = vmatpush1.msra.mxu0 %v6472
    %6491 = vmatprep.subr.mxu0 0.0
    %6492 = vmatpush1.msra.mxu0 %v6473
    %6493 = vmatprep.subr.mxu0 0.0
    %6494 = vmatpush1.msra.mxu0 %v6474
    %6495 = vmatprep.subr.mxu0 0.0
    %6496 = vmatpush1.msra.mxu0 %v6475
    %6497 = vmatprep.subr.mxu0 0.0
    %6498 = vmatpush1.msra.mxu0 %v6476
    %6499 = vmatprep.subr.mxu0 0.0
    %6500 = vmatpush1.msra.mxu0 %v6477
    %6501 = vmatprep.subr.mxu0 0.0
    %6502 = vmatpush1.msra.mxu0 %v6478
    %6503 = vmatprep.subr.mxu0 0.0
    %6504 = vmatpush1.msra.mxu0 %v6479
    %6505 = vmatprep.subr.mxu0 0.0
    %6506 = vmatpush1.msra.mxu0 %v6480
    %6507 = vmatprep.subr.mxu0 0.0
    %6508 = vmatpush1.msra.mxu0 %v6481
    %6509 = vmatprep.subr.mxu0 0.0
    %6510 = vmatpush1.msra.mxu0 %v6482
    %6511 = vmatprep.subr.mxu0 0.0
    %6512 = vmatpush1.msra.mxu0 %v6483
    %6513 = vmatprep.subr.mxu0 0.0
    %6514 = vmatpush1.msra.mxu0 %v6484
    %6515 = vmatprep.subr.mxu0 0.0
    %6516 = vmatpush1.msra.mxu0 %v6485
    %6517 = vmatprep.subr.mxu0 0.0
    %6518 = vmatpush1.msra.mxu0 %v6486
    %6519 = vmatprep.subr.mxu0 0.0
    %6520 = vmatpush1.msra.mxu0 0.0
    %6521 = vmatprep.subr.mxu0 0.0
    %6522 = vmatpush1.msra.mxu0 0.0
    %6523 = vmatprep.subr.mxu0 0.0
    %6524 = vmatpush1.msra.mxu0 0.0
    %6525 = vmatprep.subr.mxu0 0.0
    %6526 = vmatpush1.msra.mxu0 0.0
    %6527 = vmatprep.subr.mxu0 0.0
    %6528 = vmatpush1.msra.mxu0 0.0
    %6529 = vmatprep.subr.mxu0 0.0
    %6530 = vmatpush1.msra.mxu0 0.0
    %6531 = vmatprep.subr.mxu0 0.0
    %6532 = vmatpush1.msra.mxu0 0.0
    %6533 = vmatprep.subr.mxu0 0.0
    %6534 = vmatpush1.msra.mxu0 0.0
    %6535 = vmatprep.subr.mxu0 0.0
    %6536 = vmatpush1.msra.mxu0 0.0
    %6537 = vmatprep.subr.mxu0 0.0
    %6538 = vmatpush1.msra.mxu0 0.0
    %6539 = vmatprep.subr.mxu0 0.0
    %6540 = vmatpush1.msra.mxu0 0.0
    %6541 = vmatprep.subr.mxu0 0.0
    %6542 = vmatpush1.msra.mxu0 0.0
    %6543 = vmatprep.subr.mxu0 0.0
    %6544 = vmatpush1.msra.mxu0 0.0
    %6545 = vmatprep.subr.mxu0 0.0
    %6546 = vmatpush1.msra.mxu0 0.0
    %6547 = vmatprep.subr.mxu0 0.0
    %6548 = vmatpush1.msra.mxu0 0.0
    %6549 = vmatprep.subr.mxu0 0.0
    %6550 = vmatpush1.msra.mxu0 0.0
    %6551 = vmatprep.mubr.f32.mxu0 0.0
    %6552 = vmatmul.mubr.f32.gmra.mrb[0].mxu0 %v6449
    %v6553 = vpop.f32.mrb[0].mxu0
    %v6554 = vadd.f32 0.0, %v6553
    %v6555 = vpop.f32.mrb[0].mxu0
    %6556 = vdwg.mxu0
    %6557 = vmatprep.subr.mxu0 0.0
    %6558 = vmatpush1.msra.mxu0 %v6455
    %6559 = vmatprep.subr.mxu0 0.0
    %6560 = vmatpush1.msra.mxu0 %v6456
    %6561 = vmatprep.subr.mxu0 0.0
    %6562 = vmatpush1.msra.mxu0 %v6457
    %6563 = vmatprep.subr.mxu0 0.0
    %6564 = vmatpush1.msra.mxu0 %v6458
    %6565 = vmatprep.subr.mxu0 0.0
    %6566 = vmatpush1.msra.mxu0 %v6459
    %6567 = vmatprep.subr.mxu0 0.0
    %6568 = vmatpush1.msra.mxu0 %v6460
    %6569 = vmatprep.subr.mxu0 0.0
    %6570 = vmatpush1.msra.mxu0 %v6461
    %6571 = vmatprep.subr.mxu0 0.0
    %6572 = vmatpush1.msra.mxu0 %v6462
    %6573 = vmatprep.subr.mxu0 0.0
    %6574 = vmatpush1.msra.mxu0 %v6463
    %6575 = vmatprep.subr.mxu0 0.0
    %6576 = vmatpush1.msra.mxu0 %v6464
    %6577 = vmatprep.subr.mxu0 0.0
    %6578 = vmatpush1.msra.mxu0 %v6465
    %6579 = vmatprep.subr.mxu0 0.0
    %6580 = vmatpush1.msra.mxu0 %v6466
    %6581 = vmatprep.subr.mxu0 0.0
    %6582 = vmatpush1.msra.mxu0 %v6467
    %6583 = vmatprep.subr.mxu0 0.0
    %6584 = vmatpush1.msra.mxu0 %v6468
    %6585 = vmatprep.subr.mxu0 0.0
    %6586 = vmatpush1.msra.mxu0 %v6469
    %6587 = vmatprep.subr.mxu0 0.0
    %6588 = vmatpush1.msra.mxu0 %v6470
    %6589 = vmatprep.subr.mxu0 0.0
    %6590 = vmatpush1.msra.mxu0 0.0
    %6591 = vmatprep.subr.mxu0 0.0
    %6592 = vmatpush1.msra.mxu0 0.0
    %6593 = vmatprep.subr.mxu0 0.0
    %6594 = vmatpush1.msra.mxu0 0.0
    %6595 = vmatprep.subr.mxu0 0.0
    %6596 = vmatpush1.msra.mxu0 0.0
    %6597 = vmatprep.subr.mxu0 0.0
    %6598 = vmatpush1.msra.mxu0 0.0
    %6599 = vmatprep.subr.mxu0 0.0
    %6600 = vmatpush1.msra.mxu0 0.0
    %6601 = vmatprep.subr.mxu0 0.0
    %6602 = vmatpush1.msra.mxu0 0.0
    %6603 = vmatprep.subr.mxu0 0.0
    %6604 = vmatpush1.msra.mxu0 0.0
    %6605 = vmatprep.subr.mxu0 0.0
    %6606 = vmatpush1.msra.mxu0 0.0
    %6607 = vmatprep.subr.mxu0 0.0
    %6608 = vmatpush1.msra.mxu0 0.0
    %6609 = vmatprep.subr.mxu0 0.0
    %6610 = vmatpush1.msra.mxu0 0.0
    %6611 = vmatprep.subr.mxu0 0.0
    %6612 = vmatpush1.msra.mxu0 0.0
    %6613 = vmatprep.subr.mxu0 0.0
    %6614 = vmatpush1.msra.mxu0 0.0
    %6615 = vmatprep.subr.mxu0 0.0
    %6616 = vmatpush1.msra.mxu0 0.0
    %6617 = vmatprep.subr.mxu0 0.0
    %6618 = vmatpush1.msra.mxu0 0.0
    %6619 = vmatprep.subr.mxu0 0.0
    %6620 = vmatpush1.msra.mxu0 0.0
    %6621 = vmatprep.mubr.f32.mxu0 0.0
    %6622 = vmatmul.mubr.f32.gmra.mrb[0].mxu0 %v6454
    %v6623 = vpop.f32.mrb[0].mxu0
    %v6624 = vadd.f32 %v6554, %v6623
    %v6625 = vpop.f32.mrb[0].mxu0
    %6626 = vdwg.mxu0
    %6627 = vst [vmem:[#allocation23] sm:$0x3] %v6624
    // Predicated region
    $region94: #{tpu_custom_call.1} parent=1 // pred_check
      _
    $region95: #{tpu_custom_call.1} parent=1 // pred_check_branch
      %6629 = sbr.rel (0) target = $region97
    $region96: #{tpu_custom_call.1} parent=1 // pred_region
      %s6631 = ssub.s32 32, 32
      %6632 = vsyncadd [#allocation7], %s6631
      %s6634 = sshll.u32 [#allocation23], 4
      %s6635 = int_to_ptr.vmem [resolvable:$true] %s6634
      %6637 = dma.vmem_to_hbm [thread:$0]  %s6635, 32, %s13, [#allocation7]
    $region97: #{tpu_custom_call.1} parent=1 // pred_fallthru
      _
    // Predicated region
    $region98: #{tpu_custom_call.1} parent=1 // pred_check
      _
    $region99: #{tpu_custom_call.1} parent=1 // pred_check_branch
      %6639 = sbr.rel (0) target = $region101
    $region100: #{tpu_custom_call.1} parent=1 // pred_region
      %6640 = dma.done [#allocation7], 32
    $region101: #{tpu_custom_call.1} parent=1 // pred_fallthru
      _
    %6641 = vsyncpa [#allocation6], 1
    %6642 = vsyncpa [#allocation9], 1
    %6643 = vsyncpa [#allocation12], 1
    %6644 = vsyncpa [#allocation15], 1
    %6645 = vsyncpa [#allocation18], 1
    %6646 = vsyncpa [#allocation21], 1
    %6647 = vsyncpa [#allocation7], 1
  %6648 = vsyncmov [#allocation4]
  %s6649 = vpop.sfrf %6648
  %p6650 = scmp.eq.s32.totalorder %s6649, 0
  %p6651 = pneg %p6650
  %6653 = shalt.err (%p6651)

</llo_original>
